<compile_context>
chip_gen: v7x
topology: tpu7x:2x2x1
jax: 0.10.0
libtpu: 0.0.40
codegen_flags: <defaults>
</compile_context>

<pallas_src>
import functools

import jax
import jax.numpy as jnp
from jax.experimental import pallas as pl
from jax.experimental.pallas import tpu as pltpu

EPS = 1e-5                       # nn.BatchNorm2d default eps
LANE = 128                       # TPU lane width (pad channel dims to this)


def _round_up(x, m):
    return (x + m - 1) // m * m


def _vmem_limit_bytes():
    # v5e/v6e: 128 MiB physical -> ~96 MiB scoped; v7x: 64 MiB -> ~48 MiB.
    try:
        cap = int(pltpu.get_tpu_info().vmem_capacity_bytes)
    except Exception:
        cap = 64 * 1024 * 1024
    return min((cap // 4) * 3, 100 * 1024 * 1024)


VMEM_LIMIT = _vmem_limit_bytes()


def _choose_tile_rows(H, Wp_a, Cin_p, Cout_p, budget_bytes):
    """Largest divisor of H whose row-band working set fits the VMEM budget."""
    per_row = Wp_a * (2 * 2 * Cin_p      # bf16 input band, double-buffered
                      + 2 * 2 * Cout_p   # bf16 y band, double-buffered
                      + 4 * Cout_p)      # f32 accumulation chain
    fixed = 2 * 9 * Cin_p * Cout_p * 2 + 2 * 8 * Cout_p * 4
    target = max(1, (budget_bytes - fixed) // max(per_row, 1))
    target = int(min(target, H))
    tr = 1
    for d in range(1, H + 1):
        if H % d == 0 and d <= target:
            tr = d
    return tr


# ---------------------------------------------------------------------------
# Pass 1: 3x3 conv (no bias) as 9 shifted matmuls on a flattened, zero-padded
# row band (halo baked in), plus per-step partial BN statistics.
# ---------------------------------------------------------------------------
def _conv_stats_kernel(x_ref, w_ref, y_ref, st_ref, *, Wp_a, W, M_t):
    # x_ref:  (BR, Cin_p)      bf16  flattened padded row band (TR+2 rows)
    # w_ref:  (9, Cin_p, Cout_p) bf16
    # y_ref:  (M_t, Cout_p)    bf16  conv output on the TR x Wp_a grid
    # st_ref: (8, Cout_p)      f32   row 0 = partial sum, row 1 = partial ssq
    #
    # Value-chain tap accumulation: 9 bf16 matmuls with f32 accumulation, a
    # single store at the end (no read-modify-write of the output block).
    acc = jnp.dot(x_ref[0:M_t, :], w_ref[0],
                  preferred_element_type=jnp.float32)
    for kh in range(3):
        for kw in range(3):
            if kh == 0 and kw == 0:
                continue
            off = kh * Wp_a + kw        # static, kh*Wp_a is sublane-aligned
            acc = acc + jnp.dot(x_ref[off:off + M_t, :], w_ref[kh * 3 + kw],
                                preferred_element_type=jnp.float32)

    # BN partial statistics from the f32 accumulator, junk columns (j >= W)
    # masked via an in-kernel (M_t, 1) predicate (broadcast along lanes).
    col = jax.lax.broadcasted_iota(jnp.int32, (M_t, 1), 0) % Wp_a
    valid = (col < W).astype(jnp.float32)
    yv = acc * valid
    st_ref[0:1, :] = jnp.sum(yv, axis=0, keepdims=True)
    st_ref[1:2, :] = jnp.sum(yv * yv, axis=0, keepdims=True)

    y_ref[...] = acc.astype(y_ref.dtype)       # bf16 intermediate


# ---------------------------------------------------------------------------
# Pass 2: folded BatchNorm affine + ReLU; strips the junk columns in-kernel
# and writes a dense (TR, W, Cout_p) block.
# ---------------------------------------------------------------------------
def _bn_relu_kernel(scale_ref, shift_ref, y_ref, o_ref, *, TR, Wp_a, W):
    z = jnp.maximum(
        y_ref[...].astype(jnp.float32) * scale_ref[...] + shift_ref[...], 0.0)
    z = z.reshape(TR, Wp_a, z.shape[-1])       # layout-free: Wp_a % 8 == 0
    o_ref[...] = z[:, :W, :].astype(o_ref.dtype)


def _bilinear_matrix(n_in, n_out):
    """(n_out, n_in) interpolation matrix: bilinear, align_corners=True."""
    if n_in == 1:
        return jnp.ones((n_out, 1), jnp.float32)
    s = jnp.arange(n_out, dtype=jnp.float32) * (n_in - 1) / (n_out - 1)
    i0 = jnp.floor(s).astype(jnp.int32)
    frac = s - i0.astype(jnp.float32)
    i1 = jnp.minimum(i0 + 1, n_in - 1)
    return (jax.nn.one_hot(i0, n_in, dtype=jnp.float32) * (1.0 - frac)[:, None]
            + jax.nn.one_hot(i1, n_in, dtype=jnp.float32) * frac[:, None])


@jax.jit
def up_forward(x1, x2, w, gamma, beta):
    """up.forward: bilinear 2x upsample of x1 (align_corners=True), pad to x2's
    spatial size, concat [x2, x1] on channels, Conv3x3(pad=1, no bias) ->
    BatchNorm2d (training-mode batch stats) -> ReLU.  NCHW in, NCHW out."""
    N, C1, H1, W1 = x1.shape
    _, C2, H2, W2 = x2.shape
    Cout, Cin, KH, KW = w.shape
    assert (KH, KW) == (3, 3) and Cin == C1 + C2

    # --- NCHW -> NHWC; bilinear 2x upsample; pad; concat ---------------------
    # TODO(synk): this prep (upsample / skip-pad / concat / band-stacking) is
    # XLA wrapper glue over the Cin-sized activation; fusing it into pass 1
    # (two bf16 inputs + weight split along K, or manual halo DMA) would drop
    # ~2 more HBM passes.
    x1h = jnp.transpose(x1, (0, 2, 3, 1))
    x2h = jnp.transpose(x2, (0, 2, 3, 1))
    Hu, Wu = 2 * H1, 2 * W1
    x1u = jnp.einsum('nhwc,Hh,Ww->nHWc', x1h,
                     _bilinear_matrix(H1, Hu), _bilinear_matrix(W1, Wu))
    dY, dX = H2 - Hu, W2 - Wu        # assumed >= 0 (standard UNet decoder)
    x1u = jnp.pad(x1u, ((0, 0), (dY // 2, dY - dY // 2),
                        (dX // 2, dX - dX // 2), (0, 0)))
    x = jnp.concatenate([x2h, x1u], axis=-1).astype(jnp.bfloat16)
    H, W = H2, W2

    # --- layout for the Pallas conv ------------------------------------------
    # TODO(synk): for tiny channel counts (demo Cin=Cout=8) the 128-lane pad
    # wastes MXU work; packing the 9 taps along K would cut MXU pushes 9x.
    Cin_p = _round_up(Cin, LANE)
    Cout_p = _round_up(Cout, LANE)
    Wp_a = _round_up(W + 2, 8)              # padded row stride, sublane-aligned
    TR = _choose_tile_rows(H, Wp_a, Cin_p, Cout_p, VMEM_LIMIT // 3)
    nt = H // TR                            # TR divides H by construction
    M_t = TR * Wp_a                         # flattened output rows per band
    BR = _round_up((TR + 2) * Wp_a + 2, 8)  # band rows incl. last-tap overread

    # zero-pad: 1-row halo top/bottom, 1 col left, rest right, channels to Cin_p
    xpad = jnp.pad(x, ((0, 0), (1, 1), (1, Wp_a - W - 1), (0, Cin_p - Cin)))
    # bake the 2-row halo into non-overlapping row bands -> plain Blocked specs
    xb = jnp.stack([xpad[:, t * TR:t * TR + TR + 2] for t in range(nt)], axis=1)
    xb = xb.reshape(N, nt, (TR + 2) * Wp_a, Cin_p)
    xb = jnp.pad(xb, ((0, 0), (0, 0), (0, BR - (TR + 2) * Wp_a), (0, 0)))

    wk = jnp.transpose(w, (2, 3, 1, 0))     # (3, 3, Cin, Cout)
    wk = jnp.pad(wk, ((0, 0), (0, 0), (0, Cin_p - Cin), (0, Cout_p - Cout)))
    wk = wk.reshape(9, Cin_p, Cout_p).astype(jnp.bfloat16)

    # --- pass 1: conv (bf16 out) + per-step partial BN stats -----------------
    # Every grid step writes disjoint blocks -> both axes "parallel" (v7x 2 TC).
    y, stats = pl.pallas_call(
        functools.partial(_conv_stats_kernel, Wp_a=Wp_a, W=W, M_t=M_t),
        out_shape=(jax.ShapeDtypeStruct((N, nt, M_t, Cout_p), jnp.bfloat16),
                   jax.ShapeDtypeStruct((N, nt, 8, Cout_p), jnp.float32)),
        grid=(N, nt),
        in_specs=[pl.BlockSpec((None, None, BR, Cin_p),
                               lambda n, t: (n, t, 0, 0)),
                  pl.BlockSpec((9, Cin_p, Cout_p), lambda n, t: (0, 0, 0))],
        out_specs=(pl.BlockSpec((None, None, M_t, Cout_p),
                                lambda n, t: (n, t, 0, 0)),
                   pl.BlockSpec((None, None, 8, Cout_p),
                                lambda n, t: (n, t, 0, 0))),
        compiler_params=pltpu.CompilerParams(
            dimension_semantics=("parallel", "parallel"),
            vmem_limit_bytes=VMEM_LIMIT),
    )(xb, wk)

    # --- fold BN into one per-channel scale/shift (tiny XLA reduction) -------
    cnt = jnp.float32(N * H * W)
    csum = jnp.sum(stats[:, :, 0, :], axis=(0, 1))
    cssq = jnp.sum(stats[:, :, 1, :], axis=(0, 1))
    mean = csum / cnt
    var = cssq / cnt - mean * mean          # biased var, training-mode BN
    g = jnp.pad(gamma.astype(jnp.float32), (0, Cout_p - Cout))
    b = jnp.pad(beta.astype(jnp.float32), (0, Cout_p - Cout))
    inv = jax.lax.rsqrt(var + EPS)
    scale = (g * inv).reshape(1, Cout_p)
    shift = (b - mean * g * inv).reshape(1, Cout_p)
    # TODO(synk): BatchNorm2d running_mean/var updates are training bookkeeping
    # and do not affect this forward output; not reproduced here.

    # --- pass 2: y*scale + shift, ReLU; junk columns stripped in-kernel ------
    z = pl.pallas_call(
        functools.partial(_bn_relu_kernel, TR=TR, Wp_a=Wp_a, W=W),
        out_shape=jax.ShapeDtypeStruct((N, H, W, Cout_p), jnp.float32),
        grid=(N, nt),
        in_specs=[pl.BlockSpec((1, Cout_p), lambda n, t: (0, 0)),
                  pl.BlockSpec((1, Cout_p), lambda n, t: (0, 0)),
                  pl.BlockSpec((None, None, M_t, Cout_p),
                               lambda n, t: (n, t, 0, 0))],
        out_specs=pl.BlockSpec((None, TR, W, Cout_p),
                               lambda n, t: (n, t, 0, 0)),
        compiler_params=pltpu.CompilerParams(
            dimension_semantics=("parallel", "parallel"),
            vmem_limit_bytes=VMEM_LIMIT),
    )(scale, shift, y)

    # --- drop channel padding, back to NCHW -----------------------------------
    return jnp.transpose(z[..., :Cout], (0, 3, 1, 2)).astype(x1.dtype)


def reference_up(x1, x2, w, gamma, beta):
    """Pure-JAX reference matching the PyTorch forward (training-mode BN)."""
    N, C1, H1, W1 = x1.shape
    Ho, Wo = 2 * H1, 2 * W1
    ys = jnp.arange(Ho) * (H1 - 1) / (Ho - 1)
    xs = jnp.arange(Wo) * (W1 - 1) / (Wo - 1)
    y0 = jnp.floor(ys).astype(jnp.int32)
    y1 = jnp.minimum(y0 + 1, H1 - 1)
    fy = (ys - y0)[None, None, :, None]
    x0 = jnp.floor(xs).astype(jnp.int32)
    x1i = jnp.minimum(x0 + 1, W1 - 1)
    fx = (xs - x0)[None, None, None, :]
    rows = x1[:, :, y0, :] * (1 - fy) + x1[:, :, y1, :] * fy
    up = rows[:, :, :, x0] * (1 - fx) + rows[:, :, :, x1i] * fx

    H2, W2 = x2.shape[2], x2.shape[3]
    dY, dX = H2 - Ho, W2 - Wo
    up = jnp.pad(up, ((0, 0), (0, 0), (dY // 2, dY - dY // 2),
                      (dX // 2, dX - dX // 2)))
    xin = jnp.concatenate([x2, up], axis=1)

    y = jax.lax.conv_general_dilated(
        xin, w, window_strides=(1, 1), padding=((1, 1), (1, 1)),
        dimension_numbers=("NCHW", "OIHW", "NCHW"))
    mean = jnp.mean(y, axis=(0, 2, 3), keepdims=True)
    var = jnp.mean((y - mean) ** 2, axis=(0, 2, 3), keepdims=True)
    z = (y - mean) * jax.lax.rsqrt(var + EPS) * gamma.reshape(1, -1, 1, 1) \
        + beta.reshape(1, -1, 1, 1)
    return jnp.maximum(z, 0.0)


if __name__ == "__main__":
    key = jax.random.PRNGKey(0)
    k1, k2, k3, k4, k5 = jax.random.split(key, 5)

    N = 2
    C1, C2 = 4, 4                 # x1 (decoder) / x2 (skip) channels
    H1 = W1 = 8                   # x1 spatial; x2 is the 2x-larger skip: 16x16
    Cin, Cout = C1 + C2, 8        # up(in_channels=8, out_channels=8, adqc=None)

    x1 = jax.random.normal(k1, (N, C1, H1, W1), jnp.float32)
    x2 = jax.random.normal(k2, (N, C2, 2 * H1, 2 * W1), jnp.float32)
    w = jax.random.normal(k3, (Cout, Cin, 3, 3), jnp.float32) * 0.1
    gamma = 1.0 + 0.1 * jax.random.normal(k4, (Cout,), jnp.float32)
    beta = 0.1 * jax.random.normal(k5, (Cout,), jnp.float32)

    out = jax.block_until_ready(up_forward(x1, x2, w, gamma, beta))
    assert out.shape == (N, Cout, 2 * H1, 2 * W1), out.shape

    ref = jax.block_until_ready(reference_up(x1, x2, w, gamma, beta))
    max_err = float(jnp.max(jnp.abs(out - ref)))
    assert jnp.allclose(out, ref, atol=3e-2, rtol=3e-2), f"max_err={max_err}"

    print("KERNEL_OK")
</pallas_src>

<mosaic_0001>
module attributes {stable_mosaic.version = 11 : i64} {
  func.func @_conv_stats_kernel(%arg0: i32, %arg1: i32, %arg2: memref<1x1x440x128xbf16, #tpu.memory_space<vmem>>, %arg3: memref<9x128x128xbf16, #tpu.memory_space<vmem>>, %arg4: memref<1x1x384x128xbf16, #tpu.memory_space<vmem>>, %arg5: memref<1x1x8x128xf32, #tpu.memory_space<vmem>>) attributes {dimension_semantics = [#tpu.dimension_semantics<parallel>, #tpu.dimension_semantics<parallel>], iteration_bounds = array<i64: 2, 1>, scalar_prefetch = 0 : i64, scratch_operands = 0 : i64, tpu.core_type = #tpu.core_type<tc>, window_params = [{transform_indices = @transform_0, window_bounds = array<i64: 1, 1, 440, 128>}, {pipeline_mode = #tpu.pipeline_mode<synchronous>, transform_indices = @transform_1, window_bounds = array<i64: 9, 128, 128>}, {transform_indices = @transform_2, window_bounds = array<i64: 1, 1, 384, 128>}, {transform_indices = @transform_3, window_bounds = array<i64: 1, 1, 8, 128>}]} {
    %c0 = arith.constant 0 : index
    %c0_0 = arith.constant 0 : index
    %c0_1 = arith.constant 0 : index
    %c0_2 = arith.constant 0 : index
    %0 = vector.load %arg2[%c0, %c0_0, %c0_1, %c0_2] : memref<1x1x440x128xbf16, #tpu.memory_space<vmem>>, vector<1x1x384x128xbf16>
    %1 = vector.shape_cast %0 : vector<1x1x384x128xbf16> to vector<384x128xbf16>
    %c0_3 = arith.constant 0 : index
    %c0_4 = arith.constant 0 : index
    %c0_5 = arith.constant 0 : index
    %2 = vector.load %arg3[%c0_3, %c0_4, %c0_5] : memref<9x128x128xbf16, #tpu.memory_space<vmem>>, vector<1x128x128xbf16>
    %3 = vector.shape_cast %2 : vector<1x128x128xbf16> to vector<128x128xbf16>
    %cst = arith.constant dense<0.000000e+00> : vector<384x128xf32>
    %4 = tpu.matmul %1, %3, %cst {dimension_numbers = #tpu.dot_dimension_numbers<[1], [0], [0], [1], [0, 0, 1, 1], [], []>} : vector<384x128xbf16>, vector<128x128xbf16>, vector<384x128xf32> -> vector<384x128xf32>
    %c0_6 = arith.constant 0 : index
    %c0_7 = arith.constant 0 : index
    %c1 = arith.constant 1 : index
    %c0_8 = arith.constant 0 : index
    %5 = vector.load %arg2[%c0_6, %c0_7, %c1, %c0_8] : memref<1x1x440x128xbf16, #tpu.memory_space<vmem>>, vector<1x1x384x128xbf16>
    %6 = vector.shape_cast %5 : vector<1x1x384x128xbf16> to vector<384x128xbf16>
    %c1_9 = arith.constant 1 : index
    %c0_10 = arith.constant 0 : index
    %c0_11 = arith.constant 0 : index
    %7 = vector.load %arg3[%c1_9, %c0_10, %c0_11] : memref<9x128x128xbf16, #tpu.memory_space<vmem>>, vector<1x128x128xbf16>
    %8 = vector.shape_cast %7 : vector<1x128x128xbf16> to vector<128x128xbf16>
    %cst_12 = arith.constant dense<0.000000e+00> : vector<384x128xf32>
    %9 = tpu.matmul %6, %8, %cst_12 {dimension_numbers = #tpu.dot_dimension_numbers<[1], [0], [0], [1], [0, 0, 1, 1], [], []>} : vector<384x128xbf16>, vector<128x128xbf16>, vector<384x128xf32> -> vector<384x128xf32>
    %10 = arith.addf %4, %9 : vector<384x128xf32>
    %c0_13 = arith.constant 0 : index
    %c0_14 = arith.constant 0 : index
    %c2 = arith.constant 2 : index
    %c0_15 = arith.constant 0 : index
    %11 = vector.load %arg2[%c0_13, %c0_14, %c2, %c0_15] : memref<1x1x440x128xbf16, #tpu.memory_space<vmem>>, vector<1x1x384x128xbf16>
    %12 = vector.shape_cast %11 : vector<1x1x384x128xbf16> to vector<384x128xbf16>
    %c2_16 = arith.constant 2 : index
    %c0_17 = arith.constant 0 : index
    %c0_18 = arith.constant 0 : index
    %13 = vector.load %arg3[%c2_16, %c0_17, %c0_18] : memref<9x128x128xbf16, #tpu.memory_space<vmem>>, vector<1x128x128xbf16>
    %14 = vector.shape_cast %13 : vector<1x128x128xbf16> to vector<128x128xbf16>
    %cst_19 = arith.constant dense<0.000000e+00> : vector<384x128xf32>
    %15 = tpu.matmul %12, %14, %cst_19 {dimension_numbers = #tpu.dot_dimension_numbers<[1], [0], [0], [1], [0, 0, 1, 1], [], []>} : vector<384x128xbf16>, vector<128x128xbf16>, vector<384x128xf32> -> vector<384x128xf32>
    %16 = arith.addf %10, %15 : vector<384x128xf32>
    %c0_20 = arith.constant 0 : index
    %c0_21 = arith.constant 0 : index
    %c24 = arith.constant 24 : index
    %c0_22 = arith.constant 0 : index
    %17 = vector.load %arg2[%c0_20, %c0_21, %c24, %c0_22] : memref<1x1x440x128xbf16, #tpu.memory_space<vmem>>, vector<1x1x384x128xbf16>
    %18 = vector.shape_cast %17 : vector<1x1x384x128xbf16> to vector<384x128xbf16>
    %c3 = arith.constant 3 : index
    %c0_23 = arith.constant 0 : index
    %c0_24 = arith.constant 0 : index
    %19 = vector.load %arg3[%c3, %c0_23, %c0_24] : memref<9x128x128xbf16, #tpu.memory_space<vmem>>, vector<1x128x128xbf16>
    %20 = vector.shape_cast %19 : vector<1x128x128xbf16> to vector<128x128xbf16>
    %cst_25 = arith.constant dense<0.000000e+00> : vector<384x128xf32>
    %21 = tpu.matmul %18, %20, %cst_25 {dimension_numbers = #tpu.dot_dimension_numbers<[1], [0], [0], [1], [0, 0, 1, 1], [], []>} : vector<384x128xbf16>, vector<128x128xbf16>, vector<384x128xf32> -> vector<384x128xf32>
    %22 = arith.addf %16, %21 : vector<384x128xf32>
    %c0_26 = arith.constant 0 : index
    %c0_27 = arith.constant 0 : index
    %c25 = arith.constant 25 : index
    %c0_28 = arith.constant 0 : index
    %23 = vector.load %arg2[%c0_26, %c0_27, %c25, %c0_28] : memref<1x1x440x128xbf16, #tpu.memory_space<vmem>>, vector<1x1x384x128xbf16>
    %24 = vector.shape_cast %23 : vector<1x1x384x128xbf16> to vector<384x128xbf16>
    %c4 = arith.constant 4 : index
    %c0_29 = arith.constant 0 : index
    %c0_30 = arith.constant 0 : index
    %25 = vector.load %arg3[%c4, %c0_29, %c0_30] : memref<9x128x128xbf16, #tpu.memory_space<vmem>>, vector<1x128x128xbf16>
    %26 = vector.shape_cast %25 : vector<1x128x128xbf16> to vector<128x128xbf16>
    %cst_31 = arith.constant dense<0.000000e+00> : vector<384x128xf32>
    %27 = tpu.matmul %24, %26, %cst_31 {dimension_numbers = #tpu.dot_dimension_numbers<[1], [0], [0], [1], [0, 0, 1, 1], [], []>} : vector<384x128xbf16>, vector<128x128xbf16>, vector<384x128xf32> -> vector<384x128xf32>
    %28 = arith.addf %22, %27 : vector<384x128xf32>
    %c0_32 = arith.constant 0 : index
    %c0_33 = arith.constant 0 : index
    %c26 = arith.constant 26 : index
    %c0_34 = arith.constant 0 : index
    %29 = vector.load %arg2[%c0_32, %c0_33, %c26, %c0_34] : memref<1x1x440x128xbf16, #tpu.memory_space<vmem>>, vector<1x1x384x128xbf16>
    %30 = vector.shape_cast %29 : vector<1x1x384x128xbf16> to vector<384x128xbf16>
    %c5 = arith.constant 5 : index
    %c0_35 = arith.constant 0 : index
    %c0_36 = arith.constant 0 : index
    %31 = vector.load %arg3[%c5, %c0_35, %c0_36] : memref<9x128x128xbf16, #tpu.memory_space<vmem>>, vector<1x128x128xbf16>
    %32 = vector.shape_cast %31 : vector<1x128x128xbf16> to vector<128x128xbf16>
    %cst_37 = arith.constant dense<0.000000e+00> : vector<384x128xf32>
    %33 = tpu.matmul %30, %32, %cst_37 {dimension_numbers = #tpu.dot_dimension_numbers<[1], [0], [0], [1], [0, 0, 1, 1], [], []>} : vector<384x128xbf16>, vector<128x128xbf16>, vector<384x128xf32> -> vector<384x128xf32>
    %34 = arith.addf %28, %33 : vector<384x128xf32>
    %c0_38 = arith.constant 0 : index
    %c0_39 = arith.constant 0 : index
    %c48 = arith.constant 48 : index
    %c0_40 = arith.constant 0 : index
    %35 = vector.load %arg2[%c0_38, %c0_39, %c48, %c0_40] : memref<1x1x440x128xbf16, #tpu.memory_space<vmem>>, vector<1x1x384x128xbf16>
    %36 = vector.shape_cast %35 : vector<1x1x384x128xbf16> to vector<384x128xbf16>
    %c6 = arith.constant 6 : index
    %c0_41 = arith.constant 0 : index
    %c0_42 = arith.constant 0 : index
    %37 = vector.load %arg3[%c6, %c0_41, %c0_42] : memref<9x128x128xbf16, #tpu.memory_space<vmem>>, vector<1x128x128xbf16>
    %38 = vector.shape_cast %37 : vector<1x128x128xbf16> to vector<128x128xbf16>
    %cst_43 = arith.constant dense<0.000000e+00> : vector<384x128xf32>
    %39 = tpu.matmul %36, %38, %cst_43 {dimension_numbers = #tpu.dot_dimension_numbers<[1], [0], [0], [1], [0, 0, 1, 1], [], []>} : vector<384x128xbf16>, vector<128x128xbf16>, vector<384x128xf32> -> vector<384x128xf32>
    %40 = arith.addf %34, %39 : vector<384x128xf32>
    %c0_44 = arith.constant 0 : index
    %c0_45 = arith.constant 0 : index
    %c49 = arith.constant 49 : index
    %c0_46 = arith.constant 0 : index
    %41 = vector.load %arg2[%c0_44, %c0_45, %c49, %c0_46] : memref<1x1x440x128xbf16, #tpu.memory_space<vmem>>, vector<1x1x384x128xbf16>
    %42 = vector.shape_cast %41 : vector<1x1x384x128xbf16> to vector<384x128xbf16>
    %c7 = arith.constant 7 : index
    %c0_47 = arith.constant 0 : index
    %c0_48 = arith.constant 0 : index
    %43 = vector.load %arg3[%c7, %c0_47, %c0_48] : memref<9x128x128xbf16, #tpu.memory_space<vmem>>, vector<1x128x128xbf16>
    %44 = vector.shape_cast %43 : vector<1x128x128xbf16> to vector<128x128xbf16>
    %cst_49 = arith.constant dense<0.000000e+00> : vector<384x128xf32>
    %45 = tpu.matmul %42, %44, %cst_49 {dimension_numbers = #tpu.dot_dimension_numbers<[1], [0], [0], [1], [0, 0, 1, 1], [], []>} : vector<384x128xbf16>, vector<128x128xbf16>, vector<384x128xf32> -> vector<384x128xf32>
    %46 = arith.addf %40, %45 : vector<384x128xf32>
    %c0_50 = arith.constant 0 : index
    %c0_51 = arith.constant 0 : index
    %c50 = arith.constant 50 : index
    %c0_52 = arith.constant 0 : index
    %47 = vector.load %arg2[%c0_50, %c0_51, %c50, %c0_52] : memref<1x1x440x128xbf16, #tpu.memory_space<vmem>>, vector<1x1x384x128xbf16>
    %48 = vector.shape_cast %47 : vector<1x1x384x128xbf16> to vector<384x128xbf16>
    %c8 = arith.constant 8 : index
    %c0_53 = arith.constant 0 : index
    %c0_54 = arith.constant 0 : index
    %49 = vector.load %arg3[%c8, %c0_53, %c0_54] : memref<9x128x128xbf16, #tpu.memory_space<vmem>>, vector<1x128x128xbf16>
    %50 = vector.shape_cast %49 : vector<1x128x128xbf16> to vector<128x128xbf16>
    %cst_55 = arith.constant dense<0.000000e+00> : vector<384x128xf32>
    %51 = tpu.matmul %48, %50, %cst_55 {dimension_numbers = #tpu.dot_dimension_numbers<[1], [0], [0], [1], [0, 0, 1, 1], [], []>} : vector<384x128xbf16>, vector<128x128xbf16>, vector<384x128xf32> -> vector<384x128xf32>
    %52 = arith.addf %46, %51 : vector<384x128xf32>
    %53 = tpu.iota {dimensions = array<i32: 0>} : vector<384x1xi32>
    %c24_i32 = arith.constant 24 : i32
    %c0_i32 = arith.constant 0 : i32
    %54 = arith.cmpi eq, %c24_i32, %c0_i32 : i32
    %c1_i32 = arith.constant 1 : i32
    %55 = arith.select %54, %c1_i32, %c24_i32 : i32
    %56 = vector.broadcast %55 : i32 to vector<384x1xi32>
    %57 = arith.remsi %53, %56 : vector<384x1xi32>
    %c0_i32_56 = arith.constant 0 : i32
    %58 = vector.broadcast %c0_i32_56 : i32 to vector<384x1xi32>
    %59 = arith.cmpi ne, %57, %58 : vector<384x1xi32>
    %c0_i32_57 = arith.constant 0 : i32
    %60 = vector.broadcast %c0_i32_57 : i32 to vector<384x1xi32>
    %61 = arith.cmpi slt, %57, %60 : vector<384x1xi32>
    %c0_i32_58 = arith.constant 0 : i32
    %62 = arith.cmpi slt, %55, %c0_i32_58 : i32
    %63 = vector.broadcast %62 : i1 to vector<384x1xi1>
    %64 = vector.broadcast %63 : vector<384x1xi1> to vector<384x1xi1>
    %65 = arith.xori %61, %64 : vector<384x1xi1>
    %66 = arith.andi %65, %59 : vector<384x1xi1>
    %67 = vector.broadcast %55 : i32 to vector<384x1xi32>
    %68 = arith.addi %57, %67 : vector<384x1xi32>
    %69 = arith.select %66, %68, %57 : vector<384x1xi1>, vector<384x1xi32>
    %c16_i32 = arith.constant 16 : i32
    %70 = vector.broadcast %c16_i32 : i32 to vector<384x1xi32>
    %71 = arith.cmpi slt, %69, %70 : vector<384x1xi32>
    %72 = arith.extui %71 : vector<384x1xi1> to vector<384x1xi32>
    %73 = arith.sitofp %72 : vector<384x1xi32> to vector<384x1xf32>
    %74 = vector.broadcast %73 : vector<384x1xf32> to vector<384x128xf32>
    %75 = arith.mulf %52, %74 : vector<384x128xf32>
    %cst_59 = arith.constant dense<0.000000e+00> : vector<128xf32>
    %76 = vector.multi_reduction <add>, %75, %cst_59 [0] : vector<384x128xf32> to vector<128xf32>
    %77 = vector.shape_cast %76 : vector<128xf32> to vector<1x128xf32>
    %c0_60 = arith.constant 0 : index
    %c0_61 = arith.constant 0 : index
    %c0_62 = arith.constant 0 : index
    %c0_63 = arith.constant 0 : index
    %78 = vector.load %arg5[%c0_60, %c0_61, %c0_62, %c0_63] : memref<1x1x8x128xf32, #tpu.memory_space<vmem>>, vector<1x1x1x128xf32>
    %79 = vector.shape_cast %78 : vector<1x1x1x128xf32> to vector<1x128xf32>
    %80 = vector.shape_cast %77 : vector<1x128xf32> to vector<1x1x1x128xf32>
    tpu.vector_store %arg5[%c0_60, %c0_61, %c0_62, %c0_63], %80 {strides = array<i32>} : memref<1x1x8x128xf32, #tpu.memory_space<vmem>>, vector<1x1x1x128xf32>,
    %81 = arith.mulf %75, %75 : vector<384x128xf32>
    %cst_64 = arith.constant dense<0.000000e+00> : vector<128xf32>
    %82 = vector.multi_reduction <add>, %81, %cst_64 [0] : vector<384x128xf32> to vector<128xf32>
    %83 = vector.shape_cast %82 : vector<128xf32> to vector<1x128xf32>
    %c0_65 = arith.constant 0 : index
    %c0_66 = arith.constant 0 : index
    %c1_67 = arith.constant 1 : index
    %c0_68 = arith.constant 0 : index
    %84 = vector.load %arg5[%c0_65, %c0_66, %c1_67, %c0_68] : memref<1x1x8x128xf32, #tpu.memory_space<vmem>>, vector<1x1x1x128xf32>
    %85 = vector.shape_cast %84 : vector<1x1x1x128xf32> to vector<1x128xf32>
    %86 = vector.shape_cast %83 : vector<1x128xf32> to vector<1x1x1x128xf32>
    tpu.vector_store %arg5[%c0_65, %c0_66, %c1_67, %c0_68], %86 {strides = array<i32>} : memref<1x1x8x128xf32, #tpu.memory_space<vmem>>, vector<1x1x1x128xf32>,
    %87 = arith.truncf %52 : vector<384x128xf32> to vector<384x128xbf16>
    %c0_69 = arith.constant 0 : index
    %c0_70 = arith.constant 0 : index
    %c0_71 = arith.constant 0 : index
    %c0_72 = arith.constant 0 : index
    %88 = vector.load %arg4[%c0_69, %c0_70, %c0_71, %c0_72] : memref<1x1x384x128xbf16, #tpu.memory_space<vmem>>, vector<1x1x384x128xbf16>
    %89 = vector.shape_cast %88 : vector<1x1x384x128xbf16> to vector<384x128xbf16>
    %90 = vector.shape_cast %87 : vector<384x128xbf16> to vector<1x1x384x128xbf16>
    tpu.vector_store %arg4[%c0_69, %c0_70, %c0_71, %c0_72], %90 {strides = array<i32>} : memref<1x1x384x128xbf16, #tpu.memory_space<vmem>>, vector<1x1x384x128xbf16>,
    return
  }
  func.func @transform_0(%arg0: i32, %arg1: i32) -> (i32, i32, i32, i32) {
    %c0_i32 = arith.constant 0 : i32
    %c0_i32_0 = arith.constant 0 : i32
    %c0_i32_1 = arith.constant 0 : i32
    return %arg0, %arg1, %c0_i32, %c0_i32_0 : i32, i32, i32, i32
  }
  func.func @transform_1(%arg0: i32, %arg1: i32) -> (i32, i32, i32) {
    %c0_i32 = arith.constant 0 : i32
    %c0_i32_0 = arith.constant 0 : i32
    %c0_i32_1 = arith.constant 0 : i32
    %c0_i32_2 = arith.constant 0 : i32
    return %c0_i32, %c0_i32_0, %c0_i32_1 : i32, i32, i32
  }
  func.func @transform_2(%arg0: i32, %arg1: i32) -> (i32, i32, i32, i32) {
    %c0_i32 = arith.constant 0 : i32
    %c0_i32_0 = arith.constant 0 : i32
    %c0_i32_1 = arith.constant 0 : i32
    return %arg0, %arg1, %c0_i32, %c0_i32_0 : i32, i32, i32, i32
  }
  func.func @transform_3(%arg0: i32, %arg1: i32) -> (i32, i32, i32, i32) {
    %c0_i32 = arith.constant 0 : i32
    %c0_i32_0 = arith.constant 0 : i32
    %c0_i32_1 = arith.constant 0 : i32
    return %arg0, %arg1, %c0_i32, %c0_i32_0 : i32, i32, i32, i32
  }
}

module attributes {stable_mosaic.version = 11 : i64} {
  func.func @_bn_relu_kernel(%arg0: i32, %arg1: i32, %arg2: memref<1x128xf32, #tpu.memory_space<vmem>>, %arg3: memref<1x128xf32, #tpu.memory_space<vmem>>, %arg4: memref<1x1x384x128xbf16, #tpu.memory_space<vmem>>, %arg5: memref<1x16x16x128xf32, #tpu.memory_space<vmem>>) attributes {dimension_semantics = [#tpu.dimension_semantics<parallel>, #tpu.dimension_semantics<parallel>], iteration_bounds = array<i64: 2, 1>, scalar_prefetch = 0 : i64, scratch_operands = 0 : i64, tpu.core_type = #tpu.core_type<tc>, window_params = [{pipeline_mode = #tpu.pipeline_mode<synchronous>, transform_indices = @transform_0, window_bounds = array<i64: 1, 128>}, {pipeline_mode = #tpu.pipeline_mode<synchronous>, transform_indices = @transform_1, window_bounds = array<i64: 1, 128>}, {transform_indices = @transform_2, window_bounds = array<i64: 1, 1, 384, 128>}, {transform_indices = @transform_3, window_bounds = array<i64: 1, 16, 16, 128>}]} {
    %c0 = arith.constant 0 : index
    %c0_0 = arith.constant 0 : index
    %c0_1 = arith.constant 0 : index
    %c0_2 = arith.constant 0 : index
    %0 = vector.load %arg4[%c0, %c0_0, %c0_1, %c0_2] : memref<1x1x384x128xbf16, #tpu.memory_space<vmem>>, vector<1x1x384x128xbf16>
    %1 = vector.shape_cast %0 : vector<1x1x384x128xbf16> to vector<384x128xbf16>
    %2 = arith.extf %1 : vector<384x128xbf16> to vector<384x128xf32>
    %c0_3 = arith.constant 0 : index
    %c0_4 = arith.constant 0 : index
    %3 = vector.load %arg2[%c0_3, %c0_4] : memref<1x128xf32, #tpu.memory_space<vmem>>, vector<1x128xf32>
    %4 = vector.broadcast %3 : vector<1x128xf32> to vector<384x128xf32>
    %5 = arith.mulf %2, %4 : vector<384x128xf32>
    %c0_5 = arith.constant 0 : index
    %c0_6 = arith.constant 0 : index
    %6 = vector.load %arg3[%c0_5, %c0_6] : memref<1x128xf32, #tpu.memory_space<vmem>>, vector<1x128xf32>
    %7 = vector.broadcast %6 : vector<1x128xf32> to vector<384x128xf32>
    %8 = arith.addf %5, %7 : vector<384x128xf32>
    %cst = arith.constant 0.000000e+00 : f32
    %9 = vector.broadcast %cst : f32 to vector<384x128xf32>
    %10 = arith.maximumf %8, %9 : vector<384x128xf32>
    %11 = vector.shape_cast %10 : vector<384x128xf32> to vector<16x24x128xf32>
    %12 = vector.extract_strided_slice %11 {offsets = [0, 0, 0], sizes = [16, 16, 128], strides = [1, 1, 1]} : vector<16x24x128xf32> to vector<16x16x128xf32>
    %c0_7 = arith.constant 0 : index
    %c0_8 = arith.constant 0 : index
    %c0_9 = arith.constant 0 : index
    %c0_10 = arith.constant 0 : index
    %13 = vector.load %arg5[%c0_7, %c0_8, %c0_9, %c0_10] : memref<1x16x16x128xf32, #tpu.memory_space<vmem>>, vector<1x16x16x128xf32>
    %14 = vector.shape_cast %13 : vector<1x16x16x128xf32> to vector<16x16x128xf32>
    %15 = vector.shape_cast %12 : vector<16x16x128xf32> to vector<1x16x16x128xf32>
    tpu.vector_store %arg5[%c0_7, %c0_8, %c0_9, %c0_10], %15 {strides = array<i32>} : memref<1x16x16x128xf32, #tpu.memory_space<vmem>>, vector<1x16x16x128xf32>,
    return
  }
  func.func @transform_0(%arg0: i32, %arg1: i32) -> (i32, i32) {
    %c0_i32 = arith.constant 0 : i32
    %c0_i32_0 = arith.constant 0 : i32
    %c0_i32_1 = arith.constant 0 : i32
    return %c0_i32, %c0_i32_0 : i32, i32
  }
  func.func @transform_1(%arg0: i32, %arg1: i32) -> (i32, i32) {
    %c0_i32 = arith.constant 0 : i32
    %c0_i32_0 = arith.constant 0 : i32
    %c0_i32_1 = arith.constant 0 : i32
    return %c0_i32, %c0_i32_0 : i32, i32
  }
  func.func @transform_2(%arg0: i32, %arg1: i32) -> (i32, i32, i32, i32) {
    %c0_i32 = arith.constant 0 : i32
    %c0_i32_0 = arith.constant 0 : i32
    %c0_i32_1 = arith.constant 0 : i32
    return %arg0, %arg1, %c0_i32, %c0_i32_0 : i32, i32, i32, i32
  }
  func.func @transform_3(%arg0: i32, %arg1: i32) -> (i32, i32, i32, i32) {
    %c0_i32 = arith.constant 0 : i32
    %c0_i32_0 = arith.constant 0 : i32
    %c0_i32_1 = arith.constant 0 : i32
    return %arg0, %arg1, %c0_i32, %c0_i32_0 : i32, i32, i32, i32
  }
}

</mosaic_0001>

<llo_original>
// kernel: up_forward.3
$region0: #{up_forward.3}
  #allocation0 [shape = 'u32[]', space=smem, size = 0x4, offset = 0x4, fixed_abs, tag = 'smem constant byte address 0x4 - core index']
  #allocation1 [shape = 'u32[144,128]{1,0:T(1,128)}', space=vmem, size = 0x12000, scoped, tag = 'internal scratch']
  %s0 = inlined_call_operand.vmem [shape: f32[1,128], index: 0, kind: input, shape index: {}]
  %s1 = inlined_call_operand.vmem [shape: f32[1,128], index: 1, kind: input, shape index: {}]
  %s2 = inlined_call_operand.vmem [shape: bf16[2,1,384,128], index: 2, kind: input, shape index: {}]
  %s3 = inlined_call_operand.vmem [shape: f32[2,16,16,128], index: 3, kind: output, shape index: {}]
  %s4 = sld [smem:[#allocation0]]
  $region45: #{up_forward.3} parent=0
    _
  %s6 = ssub.s32 1, %s4
  %s7 = scalar_select 0, %s6, %s4
  loop: start=0, step=1, limit=4
  $region2: #{up_forward.3} parent=0 // loop_pre_header
    _
  $region3: #{up_forward.3} parent=0 // loop_header
    %s9 = sphi 0, %s13
    %p10 = scmp.ge.s32.totalorder %s9, 4
    %s16 = sphi 0, %s28
    %s17 = sphi 0, %s24
    %s18 = sphi 0, %s16
    %s19 = sphi 0, %s17
    %s20 = sphi 0, %s18
    %s21 = sphi 0, %s19
    %s29 = sphi 0, %s29
    %s31 = sphi 0, %s29
    %s32 = sphi 0, %s31
    %s46 = sphi 0, %s32
    %s50 = sphi 0, %s50
    %s52 = sphi 0, %s50
    %s53 = sphi 0, %s52
    %s67 = sphi 0, %s53
    %s75 = sphi 0, %s77
    %s78 = sphi 0, %s75
    %s79 = sphi 0, %s78
    %s95 = sphi 0, %s79
    %s103 = sphi 0, %s105
    %s106 = sphi 0, %s103
    %s107 = sphi 0, %s106
    %s123 = sphi 0, %s107
  $region4: #{up_forward.3} parent=0 // loop_header_branch
    %12 = sbr.rel (%p10) target = $region8
  $region5: #{up_forward.3} parent=0 // loop_body
    %s14 = ssub.s32 %s9, 1
    %s15 = ssub.s32 %s9, 2
    %s22 = sadd.s32 1, %s17
    %p23 = scmp.ge.s32.totalorder %s22, 1
    %s24 = scalar_select %p23, 0, %s22
    %s25 = sadd.s32 1, %s16
    %s26 = scalar_select %p23, %s25, %s16
    %p27 = scmp.ge.s32.totalorder %s26, 2
    %s28 = scalar_select %p27, 0, %s26
    %s30 = sadd.s32 %s29, 1
    %p33 = scmp.eq.s32.totalorder %s9, 1
    %p34 = scmp.ne.s32.totalorder %s29, %s31
    %p35 = scmp.eq.s32.totalorder %s9, 0
    %p36 = por %p34, %p35
    %p37 = scmp.ne.s32.totalorder %s29, %s31
    %p38 = scmp.eq.s32.totalorder %s14, 1
    %p39 = por %p37, %p38
    %p40 = scmp.ne.s32.totalorder %s31, %s32
    %p41 = scmp.eq.s32.totalorder %s14, 0
    %p42 = por %p40, %p41
    %p43 = scmp.ne.s32.totalorder %s31, %s32
    %p44 = scmp.eq.s32.totalorder %s15, 1
    %p45 = por %p43, %p44
    %p47 = scmp.ne.s32.totalorder %s32, %s46
    %p48 = scmp.eq.s32.totalorder %s15, 0
    %p49 = por %p47, %p48
    %s51 = sadd.s32 %s50, 1
    %p54 = scmp.eq.s32.totalorder %s9, 1
    %p55 = scmp.ne.s32.totalorder %s50, %s52
    %p56 = scmp.eq.s32.totalorder %s9, 0
    %p57 = por %p55, %p56
    %p58 = scmp.ne.s32.totalorder %s50, %s52
    %p59 = scmp.eq.s32.totalorder %s14, 1
    %p60 = por %p58, %p59
    %p61 = scmp.ne.s32.totalorder %s52, %s53
    %p62 = scmp.eq.s32.totalorder %s14, 0
    %p63 = por %p61, %p62
    %p64 = scmp.ne.s32.totalorder %s52, %s53
    %p65 = scmp.eq.s32.totalorder %s15, 1
    %p66 = por %p64, %p65
    %p68 = scmp.ne.s32.totalorder %s53, %s67
    %p69 = scmp.eq.s32.totalorder %s15, 0
    %p70 = por %p68, %p69
    %s71 = ssub.s32 %s16, %s28
    %s72 = ssub.s32 %s17, %s24
    %s73 = sor.u32 %s71, %s72
    %p74 = scmp.eq.s32.totalorder %s73, 0
    %s76 = sadd.s32 %s75, 1
    %s77 = scalar_select %p74, %s75, %s76
    %p80 = pneg %p74
    %p81 = scmp.eq.s32.totalorder %s9, 1
    %p82 = por %p80, %p81
    %p83 = scmp.ne.s32.totalorder %s75, %s78
    %p84 = scmp.eq.s32.totalorder %s9, 0
    %p85 = por %p83, %p84
    %p86 = scmp.ne.s32.totalorder %s75, %s78
    %p87 = scmp.eq.s32.totalorder %s14, 1
    %p88 = por %p86, %p87
    %p89 = scmp.ne.s32.totalorder %s78, %s79
    %p90 = scmp.eq.s32.totalorder %s14, 0
    %p91 = por %p89, %p90
    %p92 = scmp.ne.s32.totalorder %s78, %s79
    %p93 = scmp.eq.s32.totalorder %s15, 1
    %p94 = por %p92, %p93
    %p96 = scmp.ne.s32.totalorder %s79, %s95
    %p97 = scmp.eq.s32.totalorder %s15, 0
    %p98 = por %p96, %p97
    %s99 = ssub.s32 %s16, %s28
    %s100 = ssub.s32 %s17, %s24
    %s101 = sor.u32 %s99, %s100
    %p102 = scmp.eq.s32.totalorder %s101, 0
    %s104 = sadd.s32 %s103, 1
    %s105 = scalar_select %p102, %s103, %s104
    %p108 = pneg %p102
    %p109 = scmp.eq.s32.totalorder %s9, 1
    %p110 = por %p108, %p109
    %p111 = scmp.ne.s32.totalorder %s103, %s106
    %p112 = scmp.eq.s32.totalorder %s9, 0
    %p113 = por %p111, %p112
    %p114 = scmp.ne.s32.totalorder %s103, %s106
    %p115 = scmp.eq.s32.totalorder %s14, 1
    %p116 = por %p114, %p115
    %p117 = scmp.ne.s32.totalorder %s106, %s107
    %p118 = scmp.eq.s32.totalorder %s14, 0
    %p119 = por %p117, %p118
    %p120 = scmp.ne.s32.totalorder %s106, %s107
    %p121 = scmp.eq.s32.totalorder %s15, 1
    %p122 = por %p120, %p121
    %p124 = scmp.ne.s32.totalorder %s107, %s123
    %p125 = scmp.eq.s32.totalorder %s15, 0
    %p126 = por %p124, %p125
    %p127 = scmp.le.s32.totalorder 1, %s9
    %p128 = scmp.lt.s32.totalorder %s9, 3
    %p129 = pnand %p127, %p128
    %p130 = pneg %p129
    // Predicated region
    $region9: #{up_forward.3} parent=5 // pred_check
      _
    $region10: #{up_forward.3} parent=5 // pred_check_branch
      %132 = sbr.rel (%p129) target = $region12
    $region11: #{up_forward.3} parent=5 // pred_region
      %s133 = ssub.s32 %s9, 1
      // Predicated region
      $region13: #{up_forward.3} parent=11 // pred_check
        %p134 = pneg %p42
      $region14: #{up_forward.3} parent=11 // pred_check_branch
        %136 = sbr.rel (%p134) target = $region16
      $region15: #{up_forward.3} parent=11 // pred_region
        _
      $region16: #{up_forward.3} parent=11 // pred_fallthru
        _
      // Predicated region
      $region17: #{up_forward.3} parent=11 // pred_check
        %p137 = pneg %p63
      $region18: #{up_forward.3} parent=11 // pred_check_branch
        %139 = sbr.rel (%p137) target = $region20
      $region19: #{up_forward.3} parent=11 // pred_region
        _
      $region20: #{up_forward.3} parent=11 // pred_fallthru
        _
    $region12: #{up_forward.3} parent=5 // pred_fallthru
      _
    %p140 = scmp.lt.s32.totalorder %s9, 2
    // Predicated region
    $region21: #{up_forward.3} parent=5 // pred_check
      %p141 = pneg %p140
    $region22: #{up_forward.3} parent=5 // pred_check_branch
      %143 = sbr.rel (%p141) target = $region24
    $region23: #{up_forward.3} parent=5 // pred_region
      // Predicated region
      $region25: #{up_forward.3} parent=23 // pred_check
        %p144 = pneg %p85
      $region26: #{up_forward.3} parent=23 // pred_check_branch
        %146 = sbr.rel (%p144) target = $region28
      $region27: #{up_forward.3} parent=23 // pred_region
        %p147 = scmp.lt.s32.totalorder %s16, 1
        %s148 = scalar_select %p147, %s16, 1
        %p149 = scmp.lt.s32.totalorder %s17, 0
        %s150 = scalar_select %p149, %s17, 0
        %s151 = smul.addr %s150, 48
        %s152 = smul.addr %s148, 48
        %s153 = sadd.s32 %s151, %s152
        %s154 = smul.addr %s153, 4
        %s155 = scalar_lea.vmem %s2, %s154
      $region28: #{up_forward.3} parent=23 // pred_fallthru
        _
    $region24: #{up_forward.3} parent=5 // pred_fallthru
      _
    %p156 = scmp.le.s32.totalorder 1, %s9
    %p157 = scmp.lt.s32.totalorder %s9, 3
    %p158 = pnand %p156, %p157
    %p159 = pneg %p158
    // Predicated region
    $region29: #{up_forward.3} parent=5 // pred_check
      _
    $region30: #{up_forward.3} parent=5 // pred_check_branch
      %161 = sbr.rel (%p158) target = $region32
    $region31: #{up_forward.3} parent=5 // pred_region
      %s162 = ssub.s32 %s9, 1
      %p163 = pneg %p42
      %p164 = pneg %p39
      %p165 = pneg %p63
      %p166 = pneg %p60
      %p167 = scmp.lt.s32.totalorder %s18, 1
      %s168 = scalar_select %p167, %s18, 1
      %p169 = scmp.lt.s32.totalorder %s19, 0
      %s170 = scalar_select %p169, %s19, 0
      %s171 = smul.addr %s170, 48
      %s172 = smul.addr %s168, 48
      %s173 = sadd.s32 %s171, %s172
      %s174 = smul.addr %s173, 4
      %s175 = scalar_lea.vmem %s2, %s174
      %p176 = pneg %p91
      %p177 = pneg %p88
      %p178 = pneg %p119
      %p179 = pneg %p116
      %s180 = smul.u32 16, %s19
      %p181 = scmp.lt.s32.totalorder %s18, 1
      %s182 = scalar_select %p181, %s18, 1
      %p183 = scmp.lt.s32.totalorder %s180, 15
      %s184 = scalar_select %p183, %s180, 15
      %s185 = smul.addr %s184, 2
      %s186 = smul.addr %s182, 32
      %s187 = sadd.s32 %s185, %s186
      %s188 = smul.addr %s187, 8
      %s189 = scalar_lea.vmem %s3, %s188
      %p190 = scmp.lt.s32.totalorder %s18, 1
      %s191 = scalar_select %p190, %s18, 1
      %p192 = scmp.lt.s32.totalorder %s19, 0
      %s193 = scalar_select %p192, %s19, 0
      %s194 = smul.addr %s193, 48
      %s195 = smul.addr %s191, 48
      %s196 = sadd.s32 %s194, %s195
      %s197 = smul.addr %s196, 4
      %s198 = scalar_lea.vmem %s2, %s197
      %s199 = smul.u32 16, %s19
      %p200 = scmp.lt.s32.totalorder %s18, 1
      %s201 = scalar_select %p200, %s18, 1
      %p202 = scmp.lt.s32.totalorder %s199, 15
      %s203 = scalar_select %p202, %s199, 15
      %s204 = smul.addr %s203, 2
      %s205 = smul.addr %s201, 32
      %s206 = sadd.s32 %s204, %s205
      %s207 = smul.addr %s206, 8
      %s208 = scalar_lea.vmem %s3, %s207
      %s209 = smul.u32 16, %s19
      %v210 = vld [vmem:[%s198] sm:$0xf]
      %v211 = vld [vmem:[%s198 + $0x4] sm:$0xf]
      %v212 = vld [vmem:[%s198 + $0xc] sm:$0xf]
      %v213 = vld [vmem:[%s198 + $0x10] sm:$0xf]
      %v214 = vld [vmem:[%s198 + $0x18] sm:$0xf]
      %v215 = vld [vmem:[%s198 + $0x1c] sm:$0xf]
      %v216 = vld [vmem:[%s198 + $0x24] sm:$0xf]
      %v217 = vld [vmem:[%s198 + $0x28] sm:$0xf]
      %v218 = vld [vmem:[%s198 + $0x30] sm:$0xf]
      %v219 = vld [vmem:[%s198 + $0x34] sm:$0xf]
      %v220 = vld [vmem:[%s198 + $0x3c] sm:$0xf]
      %v221 = vld [vmem:[%s198 + $0x40] sm:$0xf]
      %v222 = vld [vmem:[%s198 + $0x48] sm:$0xf]
      %v223 = vld [vmem:[%s198 + $0x4c] sm:$0xf]
      %v224 = vld [vmem:[%s198 + $0x54] sm:$0xf]
      %v225 = vld [vmem:[%s198 + $0x58] sm:$0xf]
      %v226 = vld [vmem:[%s198 + $0x60] sm:$0xf]
      %v227 = vld [vmem:[%s198 + $0x64] sm:$0xf]
      %v228 = vld [vmem:[%s198 + $0x6c] sm:$0xf]
      %v229 = vld [vmem:[%s198 + $0x70] sm:$0xf]
      %v230 = vld [vmem:[%s198 + $0x78] sm:$0xf]
      %v231 = vld [vmem:[%s198 + $0x7c] sm:$0xf]
      %v232 = vld [vmem:[%s198 + $0x84] sm:$0xf]
      %v233 = vld [vmem:[%s198 + $0x88] sm:$0xf]
      %v234 = vld [vmem:[%s198 + $0x90] sm:$0xf]
      %v235 = vld [vmem:[%s198 + $0x94] sm:$0xf]
      %v236 = vld [vmem:[%s198 + $0x9c] sm:$0xf]
      %v237 = vld [vmem:[%s198 + $0xa0] sm:$0xf]
      %v238 = vld [vmem:[%s198 + $0xa8] sm:$0xf]
      %v239 = vld [vmem:[%s198 + $0xac] sm:$0xf]
      %v240 = vld [vmem:[%s198 + $0xb4] sm:$0xf]
      %v241 = vld [vmem:[%s198 + $0xb8] sm:$0xf]
      %v242 = vunpack.c.l.bf16 %v210
      %v243 = vunpack.c.l.bf16 %v211
      %v244 = vunpack.c.l.bf16 %v212
      %v245 = vunpack.c.l.bf16 %v213
      %v246 = vunpack.c.l.bf16 %v214
      %v247 = vunpack.c.l.bf16 %v215
      %v248 = vunpack.c.l.bf16 %v216
      %v249 = vunpack.c.l.bf16 %v217
      %v250 = vunpack.c.l.bf16 %v218
      %v251 = vunpack.c.l.bf16 %v219
      %v252 = vunpack.c.l.bf16 %v220
      %v253 = vunpack.c.l.bf16 %v221
      %v254 = vunpack.c.l.bf16 %v222
      %v255 = vunpack.c.l.bf16 %v223
      %v256 = vunpack.c.l.bf16 %v224
      %v257 = vunpack.c.l.bf16 %v225
      %v258 = vunpack.c.l.bf16 %v226
      %v259 = vunpack.c.l.bf16 %v227
      %v260 = vunpack.c.l.bf16 %v228
      %v261 = vunpack.c.l.bf16 %v229
      %v262 = vunpack.c.l.bf16 %v230
      %v263 = vunpack.c.l.bf16 %v231
      %v264 = vunpack.c.l.bf16 %v232
      %v265 = vunpack.c.l.bf16 %v233
      %v266 = vunpack.c.l.bf16 %v234
      %v267 = vunpack.c.l.bf16 %v235
      %v268 = vunpack.c.l.bf16 %v236
      %v269 = vunpack.c.l.bf16 %v237
      %v270 = vunpack.c.l.bf16 %v238
      %v271 = vunpack.c.l.bf16 %v239
      %v272 = vunpack.c.l.bf16 %v240
      %v273 = vunpack.c.l.bf16 %v241
      %v274 = vld [vmem:[%s0] sm:$0x1]
      %v276 = vlaneseq
      %v277 = vshrl.u32 %v276, 7
      %v278 = vsub.s32 0, %v277
      %v279 = vrot.slane %v274, %v278
      %v281 = vmul.f32 %v242, %v279
      %v282 = vmul.f32 %v243, %v279
      %v283 = vmul.f32 %v244, %v279
      %v284 = vmul.f32 %v245, %v279
      %v285 = vmul.f32 %v246, %v279
      %v286 = vmul.f32 %v247, %v279
      %v287 = vmul.f32 %v248, %v279
      %v288 = vmul.f32 %v249, %v279
      %v289 = vmul.f32 %v250, %v279
      %v290 = vmul.f32 %v251, %v279
      %v291 = vmul.f32 %v252, %v279
      %v292 = vmul.f32 %v253, %v279
      %v293 = vmul.f32 %v254, %v279
      %v294 = vmul.f32 %v255, %v279
      %v295 = vmul.f32 %v256, %v279
      %v296 = vmul.f32 %v257, %v279
      %v297 = vmul.f32 %v258, %v279
      %v298 = vmul.f32 %v259, %v279
      %v299 = vmul.f32 %v260, %v279
      %v300 = vmul.f32 %v261, %v279
      %v301 = vmul.f32 %v262, %v279
      %v302 = vmul.f32 %v263, %v279
      %v303 = vmul.f32 %v264, %v279
      %v304 = vmul.f32 %v265, %v279
      %v305 = vmul.f32 %v266, %v279
      %v306 = vmul.f32 %v267, %v279
      %v307 = vmul.f32 %v268, %v279
      %v308 = vmul.f32 %v269, %v279
      %v309 = vmul.f32 %v270, %v279
      %v310 = vmul.f32 %v271, %v279
      %v311 = vmul.f32 %v272, %v279
      %v312 = vmul.f32 %v273, %v279
      %v313 = vld [vmem:[%s1] sm:$0x1]
      %v315 = vlaneseq
      %v316 = vshrl.u32 %v315, 7
      %v317 = vsub.s32 0, %v316
      %v318 = vrot.slane %v313, %v317
      %v320 = vadd.f32 %v281, %v318
      %v321 = vadd.f32 %v282, %v318
      %v322 = vadd.f32 %v283, %v318
      %v323 = vadd.f32 %v284, %v318
      %v324 = vadd.f32 %v285, %v318
      %v325 = vadd.f32 %v286, %v318
      %v326 = vadd.f32 %v287, %v318
      %v327 = vadd.f32 %v288, %v318
      %v328 = vadd.f32 %v289, %v318
      %v329 = vadd.f32 %v290, %v318
      %v330 = vadd.f32 %v291, %v318
      %v331 = vadd.f32 %v292, %v318
      %v332 = vadd.f32 %v293, %v318
      %v333 = vadd.f32 %v294, %v318
      %v334 = vadd.f32 %v295, %v318
      %v335 = vadd.f32 %v296, %v318
      %v336 = vadd.f32 %v297, %v318
      %v337 = vadd.f32 %v298, %v318
      %v338 = vadd.f32 %v299, %v318
      %v339 = vadd.f32 %v300, %v318
      %v340 = vadd.f32 %v301, %v318
      %v341 = vadd.f32 %v302, %v318
      %v342 = vadd.f32 %v303, %v318
      %v343 = vadd.f32 %v304, %v318
      %v344 = vadd.f32 %v305, %v318
      %v345 = vadd.f32 %v306, %v318
      %v346 = vadd.f32 %v307, %v318
      %v347 = vadd.f32 %v308, %v318
      %v348 = vadd.f32 %v309, %v318
      %v349 = vadd.f32 %v310, %v318
      %v350 = vadd.f32 %v311, %v318
      %v351 = vadd.f32 %v312, %v318
      %v352 = vmax.f32 %v320, 0.0
      %v353 = vmax.f32 %v321, 0.0
      %v354 = vmax.f32 %v322, 0.0
      %v355 = vmax.f32 %v323, 0.0
      %v356 = vmax.f32 %v324, 0.0
      %v357 = vmax.f32 %v325, 0.0
      %v358 = vmax.f32 %v326, 0.0
      %v359 = vmax.f32 %v327, 0.0
      %v360 = vmax.f32 %v328, 0.0
      %v361 = vmax.f32 %v329, 0.0
      %v362 = vmax.f32 %v330, 0.0
      %v363 = vmax.f32 %v331, 0.0
      %v364 = vmax.f32 %v332, 0.0
      %v365 = vmax.f32 %v333, 0.0
      %v366 = vmax.f32 %v334, 0.0
      %v367 = vmax.f32 %v335, 0.0
      %v368 = vmax.f32 %v336, 0.0
      %v369 = vmax.f32 %v337, 0.0
      %v370 = vmax.f32 %v338, 0.0
      %v371 = vmax.f32 %v339, 0.0
      %v372 = vmax.f32 %v340, 0.0
      %v373 = vmax.f32 %v341, 0.0
      %v374 = vmax.f32 %v342, 0.0
      %v375 = vmax.f32 %v343, 0.0
      %v376 = vmax.f32 %v344, 0.0
      %v377 = vmax.f32 %v345, 0.0
      %v378 = vmax.f32 %v346, 0.0
      %v379 = vmax.f32 %v347, 0.0
      %v380 = vmax.f32 %v348, 0.0
      %v381 = vmax.f32 %v349, 0.0
      %v382 = vmax.f32 %v350, 0.0
      %v383 = vmax.f32 %v351, 0.0
      %384 = vst [vmem:[%s208] sm:$0xff] %v352
      %385 = vst [vmem:[%s208 + $0x8] sm:$0xff] %v353
      %386 = vst [vmem:[%s208 + $0x10] sm:$0xff] %v354
      %387 = vst [vmem:[%s208 + $0x18] sm:$0xff] %v355
      %388 = vst [vmem:[%s208 + $0x20] sm:$0xff] %v356
      %389 = vst [vmem:[%s208 + $0x28] sm:$0xff] %v357
      %390 = vst [vmem:[%s208 + $0x30] sm:$0xff] %v358
      %391 = vst [vmem:[%s208 + $0x38] sm:$0xff] %v359
      %392 = vst [vmem:[%s208 + $0x40] sm:$0xff] %v360
      %393 = vst [vmem:[%s208 + $0x48] sm:$0xff] %v361
      %394 = vst [vmem:[%s208 + $0x50] sm:$0xff] %v362
      %395 = vst [vmem:[%s208 + $0x58] sm:$0xff] %v363
      %396 = vst [vmem:[%s208 + $0x60] sm:$0xff] %v364
      %397 = vst [vmem:[%s208 + $0x68] sm:$0xff] %v365
      %398 = vst [vmem:[%s208 + $0x70] sm:$0xff] %v366
      %399 = vst [vmem:[%s208 + $0x78] sm:$0xff] %v367
      %400 = vst [vmem:[%s208 + $0x80] sm:$0xff] %v368
      %401 = vst [vmem:[%s208 + $0x88] sm:$0xff] %v369
      %402 = vst [vmem:[%s208 + $0x90] sm:$0xff] %v370
      %403 = vst [vmem:[%s208 + $0x98] sm:$0xff] %v371
      %404 = vst [vmem:[%s208 + $0xa0] sm:$0xff] %v372
      %405 = vst [vmem:[%s208 + $0xa8] sm:$0xff] %v373
      %406 = vst [vmem:[%s208 + $0xb0] sm:$0xff] %v374
      %407 = vst [vmem:[%s208 + $0xb8] sm:$0xff] %v375
      %408 = vst [vmem:[%s208 + $0xc0] sm:$0xff] %v376
      %409 = vst [vmem:[%s208 + $0xc8] sm:$0xff] %v377
      %410 = vst [vmem:[%s208 + $0xd0] sm:$0xff] %v378
      %411 = vst [vmem:[%s208 + $0xd8] sm:$0xff] %v379
      %412 = vst [vmem:[%s208 + $0xe0] sm:$0xff] %v380
      %413 = vst [vmem:[%s208 + $0xe8] sm:$0xff] %v381
      %414 = vst [vmem:[%s208 + $0xf0] sm:$0xff] %v382
      %415 = vst [vmem:[%s208 + $0xf8] sm:$0xff] %v383
      %s416 = smul.u32 16, %s19
      %p417 = scmp.lt.s32.totalorder %s18, 1
      %s418 = scalar_select %p417, %s18, 1
      %p419 = scmp.lt.s32.totalorder %s416, 15
      %s420 = scalar_select %p419, %s416, 15
      %s421 = smul.addr %s420, 2
      %s422 = smul.addr %s418, 32
      %s423 = sadd.s32 %s421, %s422
      %s424 = smul.addr %s423, 8
      %s425 = scalar_lea.vmem %s3, %s424
      // Predicated region
      $region33: #{up_forward.3} parent=31 // pred_check
        %p426 = pneg %p116
      $region34: #{up_forward.3} parent=31 // pred_check_branch
        %428 = sbr.rel (%p426) target = $region36
      $region35: #{up_forward.3} parent=31 // pred_region
        %s429 = smul.u32 16, %s19
      $region36: #{up_forward.3} parent=31 // pred_fallthru
        _
    $region32: #{up_forward.3} parent=5 // pred_fallthru
      _
    %p430 = scmp.le.s32.totalorder 2, %s9
    // Predicated region
    $region37: #{up_forward.3} parent=5 // pred_check
      %p431 = pneg %p430
    $region38: #{up_forward.3} parent=5 // pred_check_branch
      %433 = sbr.rel (%p431) target = $region40
    $region39: #{up_forward.3} parent=5 // pred_region
      %s434 = ssub.s32 %s9, 2
      // Predicated region
      $region41: #{up_forward.3} parent=39 // pred_check
        %p435 = pneg %p122
      $region42: #{up_forward.3} parent=39 // pred_check_branch
        %437 = sbr.rel (%p435) target = $region44
      $region43: #{up_forward.3} parent=39 // pred_region
        %s438 = smul.u32 16, %s21
        %p439 = scmp.lt.s32.totalorder %s20, 1
        %s440 = scalar_select %p439, %s20, 1
        %p441 = scmp.lt.s32.totalorder %s438, 15
        %s442 = scalar_select %p441, %s438, 15
        %s443 = smul.addr %s442, 2
        %s444 = smul.addr %s440, 32
        %s445 = sadd.s32 %s443, %s444
        %s446 = smul.addr %s445, 8
        %s447 = scalar_lea.vmem %s3, %s446
      $region44: #{up_forward.3} parent=39 // pred_fallthru
        _
    $region40: #{up_forward.3} parent=5 // pred_fallthru
      _
  $region6: #{up_forward.3} parent=0 // loop_footer
    %s13 = sadd.s32 1, %s9
  $region7: #{up_forward.3} parent=0 // loop_footer_branch
    %8 = sbr.rel target = $region3
  $region8: #{up_forward.3} parent=0 // loop_exit
    _

// kernel: up_forward.2
$region0: #{up_forward.2}
  #allocation0 [shape = 'u32[]', space=smem, size = 0x4, offset = 0x4, fixed_abs, tag = 'smem constant byte address 0x4 - core index']
  #allocation1 [shape = 'u32[144,128]{1,0:T(1,128)}', space=vmem, size = 0x12000, scoped, tag = 'internal scratch']
  %s0 = inlined_call_operand.vmem [shape: bf16[2,1,440,128], index: 0, kind: input, shape index: {}]
  %s1 = inlined_call_operand.vmem [shape: bf16[9,128,128], index: 1, kind: input, shape index: {}]
  %s2 = inlined_call_operand.vmem [shape: bf16[2,1,384,128], index: 2, kind: output, shape index: {0}]
  %s3 = inlined_call_operand.vmem [shape: f32[2,1,8,128], index: 3, kind: output, shape index: {1}]
  %4 = xla_tuple %s2, %s3
  %s5 = sld [smem:[#allocation0]]
  $region49: #{up_forward.2} parent=0
    _
  %s7 = ssub.s32 1, %s5
  %s8 = scalar_select 0, %s7, %s5
  loop: start=0, step=1, limit=4
  $region2: #{up_forward.2} parent=0 // loop_pre_header
    _
  $region3: #{up_forward.2} parent=0 // loop_header
    %s10 = sphi 0, %s14
    %p11 = scmp.ge.s32.totalorder %s10, 4
    %s17 = sphi 0, %s29
    %s18 = sphi 0, %s25
    %s19 = sphi 0, %s17
    %s20 = sphi 0, %s18
    %s21 = sphi 0, %s19
    %s22 = sphi 0, %s20
    %s34 = sphi 0, %s36
    %s37 = sphi 0, %s34
    %s38 = sphi 0, %s37
    %s54 = sphi 0, %s38
    %s58 = sphi 0, %s58
    %s60 = sphi 0, %s58
    %s61 = sphi 0, %s60
    %s75 = sphi 0, %s61
    %s83 = sphi 0, %s85
    %s86 = sphi 0, %s83
    %s87 = sphi 0, %s86
    %s103 = sphi 0, %s87
    %s111 = sphi 0, %s113
    %s114 = sphi 0, %s111
    %s115 = sphi 0, %s114
    %s131 = sphi 0, %s115
  $region4: #{up_forward.2} parent=0 // loop_header_branch
    %13 = sbr.rel (%p11) target = $region8
  $region5: #{up_forward.2} parent=0 // loop_body
    %s15 = ssub.s32 %s10, 1
    %s16 = ssub.s32 %s10, 2
    %s23 = sadd.s32 1, %s18
    %p24 = scmp.ge.s32.totalorder %s23, 1
    %s25 = scalar_select %p24, 0, %s23
    %s26 = sadd.s32 1, %s17
    %s27 = scalar_select %p24, %s26, %s17
    %p28 = scmp.ge.s32.totalorder %s27, 2
    %s29 = scalar_select %p28, 0, %s27
    %s30 = ssub.s32 %s17, %s29
    %s31 = ssub.s32 %s18, %s25
    %s32 = sor.u32 %s30, %s31
    %p33 = scmp.eq.s32.totalorder %s32, 0
    %s35 = sadd.s32 %s34, 1
    %s36 = scalar_select %p33, %s34, %s35
    %p39 = pneg %p33
    %p40 = scmp.eq.s32.totalorder %s10, 1
    %p41 = por %p39, %p40
    %p42 = scmp.ne.s32.totalorder %s34, %s37
    %p43 = scmp.eq.s32.totalorder %s10, 0
    %p44 = por %p42, %p43
    %p45 = scmp.ne.s32.totalorder %s34, %s37
    %p46 = scmp.eq.s32.totalorder %s15, 1
    %p47 = por %p45, %p46
    %p48 = scmp.ne.s32.totalorder %s37, %s38
    %p49 = scmp.eq.s32.totalorder %s15, 0
    %p50 = por %p48, %p49
    %p51 = scmp.ne.s32.totalorder %s37, %s38
    %p52 = scmp.eq.s32.totalorder %s16, 1
    %p53 = por %p51, %p52
    %p55 = scmp.ne.s32.totalorder %s38, %s54
    %p56 = scmp.eq.s32.totalorder %s16, 0
    %p57 = por %p55, %p56
    %s59 = sadd.s32 %s58, 1
    %p62 = scmp.eq.s32.totalorder %s10, 1
    %p63 = scmp.ne.s32.totalorder %s58, %s60
    %p64 = scmp.eq.s32.totalorder %s10, 0
    %p65 = por %p63, %p64
    %p66 = scmp.ne.s32.totalorder %s58, %s60
    %p67 = scmp.eq.s32.totalorder %s15, 1
    %p68 = por %p66, %p67
    %p69 = scmp.ne.s32.totalorder %s60, %s61
    %p70 = scmp.eq.s32.totalorder %s15, 0
    %p71 = por %p69, %p70
    %p72 = scmp.ne.s32.totalorder %s60, %s61
    %p73 = scmp.eq.s32.totalorder %s16, 1
    %p74 = por %p72, %p73
    %p76 = scmp.ne.s32.totalorder %s61, %s75
    %p77 = scmp.eq.s32.totalorder %s16, 0
    %p78 = por %p76, %p77
    %s79 = ssub.s32 %s17, %s29
    %s80 = ssub.s32 %s18, %s25
    %s81 = sor.u32 %s79, %s80
    %p82 = scmp.eq.s32.totalorder %s81, 0
    %s84 = sadd.s32 %s83, 1
    %s85 = scalar_select %p82, %s83, %s84
    %p88 = pneg %p82
    %p89 = scmp.eq.s32.totalorder %s10, 1
    %p90 = por %p88, %p89
    %p91 = scmp.ne.s32.totalorder %s83, %s86
    %p92 = scmp.eq.s32.totalorder %s10, 0
    %p93 = por %p91, %p92
    %p94 = scmp.ne.s32.totalorder %s83, %s86
    %p95 = scmp.eq.s32.totalorder %s15, 1
    %p96 = por %p94, %p95
    %p97 = scmp.ne.s32.totalorder %s86, %s87
    %p98 = scmp.eq.s32.totalorder %s15, 0
    %p99 = por %p97, %p98
    %p100 = scmp.ne.s32.totalorder %s86, %s87
    %p101 = scmp.eq.s32.totalorder %s16, 1
    %p102 = por %p100, %p101
    %p104 = scmp.ne.s32.totalorder %s87, %s103
    %p105 = scmp.eq.s32.totalorder %s16, 0
    %p106 = por %p104, %p105
    %s107 = ssub.s32 %s17, %s29
    %s108 = ssub.s32 %s18, %s25
    %s109 = sor.u32 %s107, %s108
    %p110 = scmp.eq.s32.totalorder %s109, 0
    %s112 = sadd.s32 %s111, 1
    %s113 = scalar_select %p110, %s111, %s112
    %p116 = pneg %p110
    %p117 = scmp.eq.s32.totalorder %s10, 1
    %p118 = por %p116, %p117
    %p119 = scmp.ne.s32.totalorder %s111, %s114
    %p120 = scmp.eq.s32.totalorder %s10, 0
    %p121 = por %p119, %p120
    %p122 = scmp.ne.s32.totalorder %s111, %s114
    %p123 = scmp.eq.s32.totalorder %s15, 1
    %p124 = por %p122, %p123
    %p125 = scmp.ne.s32.totalorder %s114, %s115
    %p126 = scmp.eq.s32.totalorder %s15, 0
    %p127 = por %p125, %p126
    %p128 = scmp.ne.s32.totalorder %s114, %s115
    %p129 = scmp.eq.s32.totalorder %s16, 1
    %p130 = por %p128, %p129
    %p132 = scmp.ne.s32.totalorder %s115, %s131
    %p133 = scmp.eq.s32.totalorder %s16, 0
    %p134 = por %p132, %p133
    %p135 = scmp.le.s32.totalorder 1, %s10
    %p136 = scmp.lt.s32.totalorder %s10, 3
    %p137 = pnand %p135, %p136
    %p138 = pneg %p137
    // Predicated region
    $region9: #{up_forward.2} parent=5 // pred_check
      _
    $region10: #{up_forward.2} parent=5 // pred_check_branch
      %140 = sbr.rel (%p137) target = $region12
    $region11: #{up_forward.2} parent=5 // pred_region
      %s141 = ssub.s32 %s10, 1
      // Predicated region
      $region13: #{up_forward.2} parent=11 // pred_check
        %p142 = pneg %p71
      $region14: #{up_forward.2} parent=11 // pred_check_branch
        %144 = sbr.rel (%p142) target = $region16
      $region15: #{up_forward.2} parent=11 // pred_region
        _
      $region16: #{up_forward.2} parent=11 // pred_fallthru
        _
    $region12: #{up_forward.2} parent=5 // pred_fallthru
      _
    %p145 = scmp.lt.s32.totalorder %s10, 2
    // Predicated region
    $region17: #{up_forward.2} parent=5 // pred_check
      %p146 = pneg %p145
    $region18: #{up_forward.2} parent=5 // pred_check_branch
      %148 = sbr.rel (%p146) target = $region20
    $region19: #{up_forward.2} parent=5 // pred_region
      // Predicated region
      $region21: #{up_forward.2} parent=19 // pred_check
        %p149 = pneg %p44
      $region22: #{up_forward.2} parent=19 // pred_check_branch
        %151 = sbr.rel (%p149) target = $region24
      $region23: #{up_forward.2} parent=19 // pred_region
        %p152 = scmp.lt.s32.totalorder %s17, 1
        %s153 = scalar_select %p152, %s17, 1
        %p154 = scmp.lt.s32.totalorder %s18, 0
        %s155 = scalar_select %p154, %s18, 0
        %s156 = smul.addr %s155, 55
        %s157 = smul.addr %s153, 55
        %s158 = sadd.s32 %s156, %s157
        %s159 = smul.addr %s158, 4
        %s160 = scalar_lea.vmem %s0, %s159
      $region24: #{up_forward.2} parent=19 // pred_fallthru
        _
    $region20: #{up_forward.2} parent=5 // pred_fallthru
      _
    %p161 = scmp.le.s32.totalorder 1, %s10
    %p162 = scmp.lt.s32.totalorder %s10, 3
    %p163 = pnand %p161, %p162
    %p164 = pneg %p163
    // Predicated region
    $region25: #{up_forward.2} parent=5 // pred_check
      _
    $region26: #{up_forward.2} parent=5 // pred_check_branch
      %166 = sbr.rel (%p163) target = $region28
    $region27: #{up_forward.2} parent=5 // pred_region
      %s167 = ssub.s32 %s10, 1
      %p168 = scmp.lt.s32.totalorder %s19, 1
      %s169 = scalar_select %p168, %s19, 1
      %p170 = scmp.lt.s32.totalorder %s20, 0
      %s171 = scalar_select %p170, %s20, 0
      %s172 = smul.addr %s171, 55
      %s173 = smul.addr %s169, 55
      %s174 = sadd.s32 %s172, %s173
      %s175 = smul.addr %s174, 4
      %s176 = scalar_lea.vmem %s0, %s175
      %p177 = pneg %p50
      %p178 = pneg %p47
      %p179 = pneg %p71
      %p180 = pneg %p68
      %p181 = pneg %p99
      %p182 = pneg %p96
      %p183 = scmp.lt.s32.totalorder %s19, 1
      %s184 = scalar_select %p183, %s19, 1
      %p185 = scmp.lt.s32.totalorder %s20, 0
      %s186 = scalar_select %p185, %s20, 0
      %s187 = smul.addr %s186, 48
      %s188 = smul.addr %s184, 48
      %s189 = sadd.s32 %s187, %s188
      %s190 = smul.addr %s189, 4
      %s191 = scalar_lea.vmem %s2, %s190
      %p192 = pneg %p127
      %p193 = pneg %p124
      %p194 = scmp.lt.s32.totalorder %s19, 1
      %s195 = scalar_select %p194, %s19, 1
      %p196 = scmp.lt.s32.totalorder %s20, 0
      %s197 = scalar_select %p196, %s20, 0
      %s198 = sadd.s32 %s197, %s195
      %s199 = smul.addr %s198, 8
      %s200 = scalar_lea.vmem %s3, %s199
      %p201 = scmp.lt.s32.totalorder %s19, 1
      %s202 = scalar_select %p201, %s19, 1
      %p203 = scmp.lt.s32.totalorder %s20, 0
      %s204 = scalar_select %p203, %s20, 0
      %s205 = smul.addr %s204, 55
      %s206 = smul.addr %s202, 55
      %s207 = sadd.s32 %s205, %s206
      %s208 = smul.addr %s207, 4
      %s209 = scalar_lea.vmem %s0, %s208
      %p210 = scmp.lt.s32.totalorder %s19, 1
      %s211 = scalar_select %p210, %s19, 1
      %p212 = scmp.lt.s32.totalorder %s20, 0
      %s213 = scalar_select %p212, %s20, 0
      %s214 = smul.addr %s213, 48
      %s215 = smul.addr %s211, 48
      %s216 = sadd.s32 %s214, %s215
      %s217 = smul.addr %s216, 4
      %s218 = scalar_lea.vmem %s2, %s217
      %p219 = scmp.lt.s32.totalorder %s19, 1
      %s220 = scalar_select %p219, %s19, 1
      %p221 = scmp.lt.s32.totalorder %s20, 0
      %s222 = scalar_select %p221, %s20, 0
      %s223 = sadd.s32 %s222, %s220
      %s224 = smul.addr %s223, 8
      %s225 = scalar_lea.vmem %s3, %s224
      %v227 = vld [vmem:[%s209] sm:$0xf]
      %v228 = vld [vmem:[%s209 + $0x4] sm:$0xf]
      %v229 = vld [vmem:[%s209 + $0x8] sm:$0xf]
      %v230 = vld [vmem:[%s209 + $0xc] sm:$0xf]
      %v231 = vld [vmem:[%s209 + $0x10] sm:$0xf]
      %v232 = vld [vmem:[%s209 + $0x14] sm:$0xf]
      %v233 = vld [vmem:[%s209 + $0x18] sm:$0xf]
      %v234 = vld [vmem:[%s209 + $0x1c] sm:$0xf]
      %v235 = vld [vmem:[%s209 + $0x20] sm:$0xf]
      %v236 = vld [vmem:[%s209 + $0x24] sm:$0xf]
      %v237 = vld [vmem:[%s209 + $0x28] sm:$0xf]
      %v238 = vld [vmem:[%s209 + $0x2c] sm:$0xf]
      %v239 = vld [vmem:[%s209 + $0x30] sm:$0xf]
      %v240 = vld [vmem:[%s209 + $0x34] sm:$0xf]
      %v241 = vld [vmem:[%s209 + $0x38] sm:$0xf]
      %v242 = vld [vmem:[%s209 + $0x3c] sm:$0xf]
      %v243 = vld [vmem:[%s209 + $0x40] sm:$0xf]
      %v244 = vld [vmem:[%s209 + $0x44] sm:$0xf]
      %v245 = vld [vmem:[%s209 + $0x48] sm:$0xf]
      %v246 = vld [vmem:[%s209 + $0x4c] sm:$0xf]
      %v247 = vld [vmem:[%s209 + $0x50] sm:$0xf]
      %v248 = vld [vmem:[%s209 + $0x54] sm:$0xf]
      %v249 = vld [vmem:[%s209 + $0x58] sm:$0xf]
      %v250 = vld [vmem:[%s209 + $0x5c] sm:$0xf]
      %v251 = vld [vmem:[%s209 + $0x60] sm:$0xf]
      %v252 = vld [vmem:[%s209 + $0x64] sm:$0xf]
      %v253 = vld [vmem:[%s209 + $0x68] sm:$0xf]
      %v254 = vld [vmem:[%s209 + $0x6c] sm:$0xf]
      %v255 = vld [vmem:[%s209 + $0x70] sm:$0xf]
      %v256 = vld [vmem:[%s209 + $0x74] sm:$0xf]
      %v257 = vld [vmem:[%s209 + $0x78] sm:$0xf]
      %v258 = vld [vmem:[%s209 + $0x7c] sm:$0xf]
      %v259 = vld [vmem:[%s209 + $0x80] sm:$0xf]
      %v260 = vld [vmem:[%s209 + $0x84] sm:$0xf]
      %v261 = vld [vmem:[%s209 + $0x88] sm:$0xf]
      %v262 = vld [vmem:[%s209 + $0x8c] sm:$0xf]
      %v263 = vld [vmem:[%s209 + $0x90] sm:$0xf]
      %v264 = vld [vmem:[%s209 + $0x94] sm:$0xf]
      %v265 = vld [vmem:[%s209 + $0x98] sm:$0xf]
      %v266 = vld [vmem:[%s209 + $0x9c] sm:$0xf]
      %v267 = vld [vmem:[%s209 + $0xa0] sm:$0xf]
      %v268 = vld [vmem:[%s209 + $0xa4] sm:$0xf]
      %v269 = vld [vmem:[%s209 + $0xa8] sm:$0xf]
      %v270 = vld [vmem:[%s209 + $0xac] sm:$0xf]
      %v271 = vld [vmem:[%s209 + $0xb0] sm:$0xf]
      %v272 = vld [vmem:[%s209 + $0xb4] sm:$0xf]
      %v273 = vld [vmem:[%s209 + $0xb8] sm:$0xf]
      %v274 = vld [vmem:[%s209 + $0xbc] sm:$0xf]
      %v275 = vld [vmem:[%s1] sm:$0xf]
      %v276 = vld [vmem:[%s1 + $0x4] sm:$0xf]
      %v277 = vld [vmem:[%s1 + $0x8] sm:$0xf]
      %v278 = vld [vmem:[%s1 + $0xc] sm:$0xf]
      %v279 = vld [vmem:[%s1 + $0x10] sm:$0xf]
      %v280 = vld [vmem:[%s1 + $0x14] sm:$0xf]
      %v281 = vld [vmem:[%s1 + $0x18] sm:$0xf]
      %v282 = vld [vmem:[%s1 + $0x1c] sm:$0xf]
      %v283 = vld [vmem:[%s1 + $0x20] sm:$0xf]
      %v284 = vld [vmem:[%s1 + $0x24] sm:$0xf]
      %v285 = vld [vmem:[%s1 + $0x28] sm:$0xf]
      %v286 = vld [vmem:[%s1 + $0x2c] sm:$0xf]
      %v287 = vld [vmem:[%s1 + $0x30] sm:$0xf]
      %v288 = vld [vmem:[%s1 + $0x34] sm:$0xf]
      %v289 = vld [vmem:[%s1 + $0x38] sm:$0xf]
      %v290 = vld [vmem:[%s1 + $0x3c] sm:$0xf]
      %v291 = vld [vmem:[%s209 + $0xc0] sm:$0x1]
      %s292 = scalar_lea.vmem %s1, 64
      %v293 = vld [vmem:[%s292] sm:$0xf]
      %v294 = vld [vmem:[%s292 + $0x4] sm:$0xf]
      %v295 = vld [vmem:[%s292 + $0x8] sm:$0xf]
      %v296 = vld [vmem:[%s292 + $0xc] sm:$0xf]
      %v297 = vld [vmem:[%s292 + $0x10] sm:$0xf]
      %v298 = vld [vmem:[%s292 + $0x14] sm:$0xf]
      %v299 = vld [vmem:[%s292 + $0x18] sm:$0xf]
      %v300 = vld [vmem:[%s292 + $0x1c] sm:$0xf]
      %v301 = vld [vmem:[%s292 + $0x20] sm:$0xf]
      %v302 = vld [vmem:[%s292 + $0x24] sm:$0xf]
      %v303 = vld [vmem:[%s292 + $0x28] sm:$0xf]
      %v304 = vld [vmem:[%s292 + $0x2c] sm:$0xf]
      %v305 = vld [vmem:[%s292 + $0x30] sm:$0xf]
      %v306 = vld [vmem:[%s292 + $0x34] sm:$0xf]
      %v307 = vld [vmem:[%s292 + $0x38] sm:$0xf]
      %v308 = vld [vmem:[%s292 + $0x3c] sm:$0xf]
      %v358 = vunpack.c.l.b16 %v227
      %v359 = vunpack.c.l.b16 %v228
      %v360 = vunpack.c.l.b16 %v229
      %v361 = vunpack.c.l.b16 %v230
      %v362 = vunpack.c.l.b16 %v231
      %v363 = vunpack.c.l.b16 %v232
      %v364 = vunpack.c.l.b16 %v233
      %v365 = vunpack.c.l.b16 %v234
      %v366 = vunpack.c.l.b16 %v235
      %v367 = vunpack.c.l.b16 %v236
      %v368 = vunpack.c.l.b16 %v237
      %v369 = vunpack.c.l.b16 %v238
      %v370 = vunpack.c.l.b16 %v239
      %v371 = vunpack.c.l.b16 %v240
      %v372 = vunpack.c.l.b16 %v241
      %v373 = vunpack.c.l.b16 %v242
      %v374 = vunpack.c.l.b16 %v243
      %v375 = vunpack.c.l.b16 %v244
      %v376 = vunpack.c.l.b16 %v245
      %v377 = vunpack.c.l.b16 %v246
      %v378 = vunpack.c.l.b16 %v247
      %v379 = vunpack.c.l.b16 %v248
      %v380 = vunpack.c.l.b16 %v249
      %v381 = vunpack.c.l.b16 %v250
      %v382 = vunpack.c.l.b16 %v251
      %v383 = vunpack.c.l.b16 %v252
      %v384 = vunpack.c.l.b16 %v253
      %v385 = vunpack.c.l.b16 %v254
      %v386 = vunpack.c.l.b16 %v255
      %v387 = vunpack.c.l.b16 %v256
      %v388 = vunpack.c.l.b16 %v257
      %v389 = vunpack.c.l.b16 %v258
      %v390 = vunpack.c.l.b16 %v259
      %v391 = vunpack.c.l.b16 %v260
      %v392 = vunpack.c.l.b16 %v261
      %v393 = vunpack.c.l.b16 %v262
      %v394 = vunpack.c.l.b16 %v263
      %v395 = vunpack.c.l.b16 %v264
      %v396 = vunpack.c.l.b16 %v265
      %v397 = vunpack.c.l.b16 %v266
      %v398 = vunpack.c.l.b16 %v267
      %v399 = vunpack.c.l.b16 %v268
      %v400 = vunpack.c.l.b16 %v269
      %v401 = vunpack.c.l.b16 %v270
      %v402 = vunpack.c.l.b16 %v271
      %v403 = vunpack.c.l.b16 %v272
      %v404 = vunpack.c.l.b16 %v273
      %v405 = vunpack.c.l.b16 %v274
      %v406 = vunpack.c.l.b16 %v291
      %v407 = vpack.c.b16 %v359, %v358
      %v408 = vpack.c.b16 %v361, %v360
      %v409 = vpack.c.b16 %v363, %v362
      %v410 = vpack.c.b16 %v365, %v364
      %v411 = vpack.c.b16 %v367, %v366
      %v412 = vpack.c.b16 %v369, %v368
      %v413 = vpack.c.b16 %v371, %v370
      %v414 = vpack.c.b16 %v373, %v372
      %v415 = vpack.c.b16 %v375, %v374
      %v416 = vpack.c.b16 %v377, %v376
      %v417 = vpack.c.b16 %v379, %v378
      %v418 = vpack.c.b16 %v381, %v380
      %v419 = vpack.c.b16 %v383, %v382
      %v420 = vpack.c.b16 %v385, %v384
      %v421 = vpack.c.b16 %v387, %v386
      %v422 = vpack.c.b16 %v389, %v388
      %v423 = vpack.c.b16 %v391, %v390
      %v424 = vpack.c.b16 %v393, %v392
      %v425 = vpack.c.b16 %v395, %v394
      %v426 = vpack.c.b16 %v397, %v396
      %v427 = vpack.c.b16 %v399, %v398
      %v428 = vpack.c.b16 %v401, %v400
      %v429 = vpack.c.b16 %v403, %v402
      %v430 = vpack.c.b16 %v405, %v404
      %v431 = vpack.c.b16 %v406, %v406
      %vm432 = vsmask.f32 7424
      %v434 = vshrl.u32 %v407, 16
      %v436 = vshll.u32 %v407, 16
      %v438 = vrot.slane %v436, 1
      %v439 = vor.u32 %v434, %v438
      %v441 = vshll.u32 %v408, 16
      %v443 = vrot.slane %v441, 1
      %v444 = vsel %vm432, %v439, %v443
      %v445 = vshrl.u32 %v408, 16
      %v447 = vor.u32 %v445, %v443
      %v449 = vshll.u32 %v409, 16
      %v451 = vrot.slane %v449, 1
      %v452 = vsel %vm432, %v447, %v451
      %v453 = vshrl.u32 %v409, 16
      %v455 = vor.u32 %v453, %v451
      %v457 = vshll.u32 %v410, 16
      %v459 = vrot.slane %v457, 1
      %v460 = vsel %vm432, %v455, %v459
      %v461 = vshrl.u32 %v410, 16
      %v463 = vor.u32 %v461, %v459
      %v465 = vshll.u32 %v411, 16
      %v467 = vrot.slane %v465, 1
      %v468 = vsel %vm432, %v463, %v467
      %v469 = vshrl.u32 %v411, 16
      %v471 = vor.u32 %v469, %v467
      %v473 = vshll.u32 %v412, 16
      %v475 = vrot.slane %v473, 1
      %v476 = vsel %vm432, %v471, %v475
      %v477 = vshrl.u32 %v412, 16
      %v479 = vor.u32 %v477, %v475
      %v481 = vshll.u32 %v413, 16
      %v483 = vrot.slane %v481, 1
      %v484 = vsel %vm432, %v479, %v483
      %v485 = vshrl.u32 %v413, 16
      %v487 = vor.u32 %v485, %v483
      %v489 = vshll.u32 %v414, 16
      %v491 = vrot.slane %v489, 1
      %v492 = vsel %vm432, %v487, %v491
      %v493 = vshrl.u32 %v414, 16
      %v495 = vor.u32 %v493, %v491
      %v497 = vshll.u32 %v415, 16
      %v499 = vrot.slane %v497, 1
      %v500 = vsel %vm432, %v495, %v499
      %v501 = vshrl.u32 %v415, 16
      %v503 = vor.u32 %v501, %v499
      %v505 = vshll.u32 %v416, 16
      %v507 = vrot.slane %v505, 1
      %v508 = vsel %vm432, %v503, %v507
      %v509 = vshrl.u32 %v416, 16
      %v511 = vor.u32 %v509, %v507
      %v513 = vshll.u32 %v417, 16
      %v515 = vrot.slane %v513, 1
      %v516 = vsel %vm432, %v511, %v515
      %v517 = vshrl.u32 %v417, 16
      %v519 = vor.u32 %v517, %v515
      %v521 = vshll.u32 %v418, 16
      %v523 = vrot.slane %v521, 1
      %v524 = vsel %vm432, %v519, %v523
      %v525 = vshrl.u32 %v418, 16
      %v527 = vor.u32 %v525, %v523
      %v529 = vshll.u32 %v419, 16
      %v531 = vrot.slane %v529, 1
      %v532 = vsel %vm432, %v527, %v531
      %v533 = vshrl.u32 %v419, 16
      %v535 = vor.u32 %v533, %v531
      %v537 = vshll.u32 %v420, 16
      %v539 = vrot.slane %v537, 1
      %v540 = vsel %vm432, %v535, %v539
      %v541 = vshrl.u32 %v420, 16
      %v543 = vor.u32 %v541, %v539
      %v545 = vshll.u32 %v421, 16
      %v547 = vrot.slane %v545, 1
      %v548 = vsel %vm432, %v543, %v547
      %v549 = vshrl.u32 %v421, 16
      %v551 = vor.u32 %v549, %v547
      %v553 = vshll.u32 %v422, 16
      %v555 = vrot.slane %v553, 1
      %v556 = vsel %vm432, %v551, %v555
      %v557 = vshrl.u32 %v422, 16
      %v559 = vor.u32 %v557, %v555
      %v561 = vshll.u32 %v423, 16
      %v563 = vrot.slane %v561, 1
      %v564 = vsel %vm432, %v559, %v563
      %v565 = vshrl.u32 %v423, 16
      %v567 = vor.u32 %v565, %v563
      %v569 = vshll.u32 %v424, 16
      %v571 = vrot.slane %v569, 1
      %v572 = vsel %vm432, %v567, %v571
      %v573 = vshrl.u32 %v424, 16
      %v575 = vor.u32 %v573, %v571
      %v577 = vshll.u32 %v425, 16
      %v579 = vrot.slane %v577, 1
      %v580 = vsel %vm432, %v575, %v579
      %v581 = vshrl.u32 %v425, 16
      %v583 = vor.u32 %v581, %v579
      %v585 = vshll.u32 %v426, 16
      %v587 = vrot.slane %v585, 1
      %v588 = vsel %vm432, %v583, %v587
      %v589 = vshrl.u32 %v426, 16
      %v591 = vor.u32 %v589, %v587
      %v593 = vshll.u32 %v427, 16
      %v595 = vrot.slane %v593, 1
      %v596 = vsel %vm432, %v591, %v595
      %v597 = vshrl.u32 %v427, 16
      %v599 = vor.u32 %v597, %v595
      %v601 = vshll.u32 %v428, 16
      %v603 = vrot.slane %v601, 1
      %v604 = vsel %vm432, %v599, %v603
      %v605 = vshrl.u32 %v428, 16
      %v607 = vor.u32 %v605, %v603
      %v609 = vshll.u32 %v429, 16
      %v611 = vrot.slane %v609, 1
      %v612 = vsel %vm432, %v607, %v611
      %v613 = vshrl.u32 %v429, 16
      %v615 = vor.u32 %v613, %v611
      %v617 = vshll.u32 %v430, 16
      %v619 = vrot.slane %v617, 1
      %v620 = vsel %vm432, %v615, %v619
      %v621 = vshrl.u32 %v430, 16
      %v623 = vor.u32 %v621, %v619
      %v625 = vshll.u32 %v431, 16
      %v627 = vrot.slane %v625, 1
      %v628 = vsel %vm432, %v623, %v627
      %v669 = vunpack.c.l.b16 %v293
      %v670 = vunpack.c.l.b16 %v294
      %v671 = vunpack.c.l.b16 %v295
      %v672 = vunpack.c.l.b16 %v296
      %v673 = vunpack.c.l.b16 %v297
      %v674 = vunpack.c.l.b16 %v298
      %v675 = vunpack.c.l.b16 %v299
      %v676 = vunpack.c.l.b16 %v300
      %v677 = vunpack.c.l.b16 %v301
      %v678 = vunpack.c.l.b16 %v302
      %v679 = vunpack.c.l.b16 %v303
      %v680 = vunpack.c.l.b16 %v304
      %v681 = vunpack.c.l.b16 %v305
      %v682 = vunpack.c.l.b16 %v306
      %v683 = vunpack.c.l.b16 %v307
      %v684 = vunpack.c.l.b16 %v308
      %v685 = vpack.c.b16 %v670, %v669
      %v686 = vpack.c.b16 %v672, %v671
      %v687 = vpack.c.b16 %v674, %v673
      %v688 = vpack.c.b16 %v676, %v675
      %v689 = vpack.c.b16 %v678, %v677
      %v690 = vpack.c.b16 %v680, %v679
      %v691 = vpack.c.b16 %v682, %v681
      %v692 = vpack.c.b16 %v684, %v683
      %701 = vmatprep.subr.bf16.mxu0 0
      %702 = vmatpush1.bf16.msra.mxu0 %v685
      %703 = vmatprep.subr.bf16.mxu0 0
      %704 = vmatpush1.bf16.msra.mxu0 %v686
      %705 = vmatprep.subr.bf16.mxu0 0
      %706 = vmatpush1.bf16.msra.mxu0 %v687
      %707 = vmatprep.subr.bf16.mxu0 0
      %708 = vmatpush1.bf16.msra.mxu0 %v688
      %709 = vmatprep.subr.bf16.mxu0 0
      %710 = vmatpush1.bf16.msra.mxu0 %v689
      %711 = vmatprep.subr.bf16.mxu0 0
      %712 = vmatpush1.bf16.msra.mxu0 %v690
      %713 = vmatprep.subr.bf16.mxu0 0
      %714 = vmatpush1.bf16.msra.mxu0 %v691
      %715 = vmatprep.subr.bf16.mxu0 0
      %716 = vmatpush1.bf16.msra.mxu0 %v692
      %717 = vmatprep.subr.bf16.mxu0 0
      %718 = vmatpush1.bf16.msra.mxu0 0
      %719 = vmatprep.subr.bf16.mxu0 0
      %720 = vmatpush1.bf16.msra.mxu0 0
      %721 = vmatprep.subr.bf16.mxu0 0
      %722 = vmatpush1.bf16.msra.mxu0 0
      %723 = vmatprep.subr.bf16.mxu0 0
      %724 = vmatpush1.bf16.msra.mxu0 0
      %725 = vmatprep.subr.bf16.mxu0 0
      %726 = vmatpush1.bf16.msra.mxu0 0
      %727 = vmatprep.subr.bf16.mxu0 0
      %728 = vmatpush1.bf16.msra.mxu0 0
      %729 = vmatprep.subr.bf16.mxu0 0
      %730 = vmatpush1.bf16.msra.mxu0 0
      %731 = vmatprep.subr.bf16.mxu0 0
      %732 = vmatpush1.bf16.msra.mxu0 0
      %733 = vmatprep.mubr.bf16.mxu0 0
      %734 = vmatmul.mubr.bf16.gmra.mrb[0].mxu0 %v444
      %v735 = vpop.f32.mrb[0].mxu0
      %v736 = vadd.f32 0.0, %v735
      %v737 = vpop.f32.mrb[0].mxu0
      %v738 = vpop.f32.mrb[0].mxu0
      %v739 = vadd.f32 0.0, %v738
      %v740 = vpop.f32.mrb[0].mxu0
      %741 = vmatprep.mubr.bf16.mxu0 0
      %742 = vmatmul.mubr.bf16.gmra.mrb[0].mxu0 %v452
      %v743 = vpop.f32.mrb[0].mxu0
      %v744 = vadd.f32 0.0, %v743
      %v745 = vpop.f32.mrb[0].mxu0
      %v746 = vpop.f32.mrb[0].mxu0
      %v747 = vadd.f32 0.0, %v746
      %v748 = vpop.f32.mrb[0].mxu0
      %749 = vmatprep.mubr.bf16.mxu0 0
      %750 = vmatmul.mubr.bf16.gmra.mrb[0].mxu0 %v460
      %v751 = vpop.f32.mrb[0].mxu0
      %v752 = vadd.f32 0.0, %v751
      %v753 = vpop.f32.mrb[0].mxu0
      %v754 = vpop.f32.mrb[0].mxu0
      %v755 = vadd.f32 0.0, %v754
      %v756 = vpop.f32.mrb[0].mxu0
      %757 = vmatprep.mubr.bf16.mxu0 0
      %758 = vmatmul.mubr.bf16.gmra.mrb[0].mxu0 %v468
      %v759 = vpop.f32.mrb[0].mxu0
      %v760 = vadd.f32 0.0, %v759
      %v761 = vpop.f32.mrb[0].mxu0
      %v762 = vpop.f32.mrb[0].mxu0
      %v763 = vadd.f32 0.0, %v762
      %v764 = vpop.f32.mrb[0].mxu0
      %765 = vmatprep.mubr.bf16.mxu0 0
      %766 = vmatmul.mubr.bf16.gmra.mrb[0].mxu0 %v476
      %v767 = vpop.f32.mrb[0].mxu0
      %v768 = vadd.f32 0.0, %v767
      %v769 = vpop.f32.mrb[0].mxu0
      %v770 = vpop.f32.mrb[0].mxu0
      %v771 = vadd.f32 0.0, %v770
      %v772 = vpop.f32.mrb[0].mxu0
      %773 = vmatprep.mubr.bf16.mxu0 0
      %774 = vmatmul.mubr.bf16.gmra.mrb[0].mxu0 %v484
      %v775 = vpop.f32.mrb[0].mxu0
      %v776 = vadd.f32 0.0, %v775
      %v777 = vpop.f32.mrb[0].mxu0
      %v778 = vpop.f32.mrb[0].mxu0
      %v779 = vadd.f32 0.0, %v778
      %v780 = vpop.f32.mrb[0].mxu0
      %781 = vmatprep.mubr.bf16.mxu0 0
      %782 = vmatmul.mubr.bf16.gmra.mrb[0].mxu0 %v492
      %v783 = vpop.f32.mrb[0].mxu0
      %v784 = vadd.f32 0.0, %v783
      %v785 = vpop.f32.mrb[0].mxu0
      %v786 = vpop.f32.mrb[0].mxu0
      %v787 = vadd.f32 0.0, %v786
      %v788 = vpop.f32.mrb[0].mxu0
      %789 = vmatprep.mubr.bf16.mxu0 0
      %790 = vmatmul.mubr.bf16.gmra.mrb[0].mxu0 %v500
      %v791 = vpop.f32.mrb[0].mxu0
      %v792 = vadd.f32 0.0, %v791
      %v793 = vpop.f32.mrb[0].mxu0
      %v794 = vpop.f32.mrb[0].mxu0
      %v795 = vadd.f32 0.0, %v794
      %v796 = vpop.f32.mrb[0].mxu0
      %797 = vmatprep.mubr.bf16.mxu0 0
      %798 = vmatmul.mubr.bf16.gmra.mrb[0].mxu0 %v508
      %v799 = vpop.f32.mrb[0].mxu0
      %v800 = vadd.f32 0.0, %v799
      %v801 = vpop.f32.mrb[0].mxu0
      %v802 = vpop.f32.mrb[0].mxu0
      %v803 = vadd.f32 0.0, %v802
      %v804 = vpop.f32.mrb[0].mxu0
      %805 = vmatprep.mubr.bf16.mxu0 0
      %806 = vmatmul.mubr.bf16.gmra.mrb[0].mxu0 %v516
      %v807 = vpop.f32.mrb[0].mxu0
      %v808 = vadd.f32 0.0, %v807
      %v809 = vpop.f32.mrb[0].mxu0
      %v810 = vpop.f32.mrb[0].mxu0
      %v811 = vadd.f32 0.0, %v810
      %v812 = vpop.f32.mrb[0].mxu0
      %813 = vmatprep.mubr.bf16.mxu0 0
      %814 = vmatmul.mubr.bf16.gmra.mrb[0].mxu0 %v524
      %v815 = vpop.f32.mrb[0].mxu0
      %v816 = vadd.f32 0.0, %v815
      %v817 = vpop.f32.mrb[0].mxu0
      %v818 = vpop.f32.mrb[0].mxu0
      %v819 = vadd.f32 0.0, %v818
      %v820 = vpop.f32.mrb[0].mxu0
      %821 = vmatprep.mubr.bf16.mxu0 0
      %822 = vmatmul.mubr.bf16.gmra.mrb[0].mxu0 %v532
      %v823 = vpop.f32.mrb[0].mxu0
      %v824 = vadd.f32 0.0, %v823
      %v825 = vpop.f32.mrb[0].mxu0
      %v826 = vpop.f32.mrb[0].mxu0
      %v827 = vadd.f32 0.0, %v826
      %v828 = vpop.f32.mrb[0].mxu0
      %829 = vmatprep.mubr.bf16.mxu0 0
      %830 = vmatmul.mubr.bf16.gmra.mrb[0].mxu0 %v540
      %v831 = vpop.f32.mrb[0].mxu0
      %v832 = vadd.f32 0.0, %v831
      %v833 = vpop.f32.mrb[0].mxu0
      %v834 = vpop.f32.mrb[0].mxu0
      %v835 = vadd.f32 0.0, %v834
      %v836 = vpop.f32.mrb[0].mxu0
      %837 = vmatprep.mubr.bf16.mxu0 0
      %838 = vmatmul.mubr.bf16.gmra.mrb[0].mxu0 %v548
      %v839 = vpop.f32.mrb[0].mxu0
      %v840 = vadd.f32 0.0, %v839
      %v841 = vpop.f32.mrb[0].mxu0
      %v842 = vpop.f32.mrb[0].mxu0
      %v843 = vadd.f32 0.0, %v842
      %v844 = vpop.f32.mrb[0].mxu0
      %845 = vmatprep.mubr.bf16.mxu0 0
      %846 = vmatmul.mubr.bf16.gmra.mrb[0].mxu0 %v556
      %v847 = vpop.f32.mrb[0].mxu0
      %v848 = vadd.f32 0.0, %v847
      %v849 = vpop.f32.mrb[0].mxu0
      %v850 = vpop.f32.mrb[0].mxu0
      %v851 = vadd.f32 0.0, %v850
      %v852 = vpop.f32.mrb[0].mxu0
      %853 = vmatprep.mubr.bf16.mxu0 0
      %854 = vmatmul.mubr.bf16.gmra.mrb[0].mxu0 %v564
      %v855 = vpop.f32.mrb[0].mxu0
      %v856 = vadd.f32 0.0, %v855
      %v857 = vpop.f32.mrb[0].mxu0
      %v858 = vpop.f32.mrb[0].mxu0
      %v859 = vadd.f32 0.0, %v858
      %v860 = vpop.f32.mrb[0].mxu0
      %861 = vmatprep.mubr.bf16.mxu0 0
      %862 = vmatmul.mubr.bf16.gmra.mrb[0].mxu0 %v572
      %v863 = vpop.f32.mrb[0].mxu0
      %v864 = vadd.f32 0.0, %v863
      %v865 = vpop.f32.mrb[0].mxu0
      %v866 = vpop.f32.mrb[0].mxu0
      %v867 = vadd.f32 0.0, %v866
      %v868 = vpop.f32.mrb[0].mxu0
      %869 = vmatprep.mubr.bf16.mxu0 0
      %870 = vmatmul.mubr.bf16.gmra.mrb[0].mxu0 %v580
      %v871 = vpop.f32.mrb[0].mxu0
      %v872 = vadd.f32 0.0, %v871
      %v873 = vpop.f32.mrb[0].mxu0
      %v874 = vpop.f32.mrb[0].mxu0
      %v875 = vadd.f32 0.0, %v874
      %v876 = vpop.f32.mrb[0].mxu0
      %877 = vmatprep.mubr.bf16.mxu0 0
      %878 = vmatmul.mubr.bf16.gmra.mrb[0].mxu0 %v588
      %v879 = vpop.f32.mrb[0].mxu0
      %v880 = vadd.f32 0.0, %v879
      %v881 = vpop.f32.mrb[0].mxu0
      %v882 = vpop.f32.mrb[0].mxu0
      %v883 = vadd.f32 0.0, %v882
      %v884 = vpop.f32.mrb[0].mxu0
      %885 = vmatprep.mubr.bf16.mxu0 0
      %886 = vmatmul.mubr.bf16.gmra.mrb[0].mxu0 %v596
      %v887 = vpop.f32.mrb[0].mxu0
      %v888 = vadd.f32 0.0, %v887
      %v889 = vpop.f32.mrb[0].mxu0
      %v890 = vpop.f32.mrb[0].mxu0
      %v891 = vadd.f32 0.0, %v890
      %v892 = vpop.f32.mrb[0].mxu0
      %893 = vmatprep.mubr.bf16.mxu0 0
      %894 = vmatmul.mubr.bf16.gmra.mrb[0].mxu0 %v604
      %v895 = vpop.f32.mrb[0].mxu0
      %v896 = vadd.f32 0.0, %v895
      %v897 = vpop.f32.mrb[0].mxu0
      %v898 = vpop.f32.mrb[0].mxu0
      %v899 = vadd.f32 0.0, %v898
      %v900 = vpop.f32.mrb[0].mxu0
      %901 = vmatprep.mubr.bf16.mxu0 0
      %902 = vmatmul.mubr.bf16.gmra.mrb[0].mxu0 %v612
      %v903 = vpop.f32.mrb[0].mxu0
      %v904 = vadd.f32 0.0, %v903
      %v905 = vpop.f32.mrb[0].mxu0
      %v906 = vpop.f32.mrb[0].mxu0
      %v907 = vadd.f32 0.0, %v906
      %v908 = vpop.f32.mrb[0].mxu0
      %909 = vmatprep.mubr.bf16.mxu0 0
      %910 = vmatmul.mubr.bf16.gmra.mrb[0].mxu0 %v620
      %v911 = vpop.f32.mrb[0].mxu0
      %v912 = vadd.f32 0.0, %v911
      %v913 = vpop.f32.mrb[0].mxu0
      %v914 = vpop.f32.mrb[0].mxu0
      %v915 = vadd.f32 0.0, %v914
      %v916 = vpop.f32.mrb[0].mxu0
      %917 = vmatprep.mubr.bf16.mxu0 0
      %918 = vmatmul.mubr.bf16.gmra.mrb[0].mxu0 %v628
      %v919 = vpop.f32.mrb[0].mxu0
      %v920 = vadd.f32 0.0, %v919
      %v921 = vpop.f32.mrb[0].mxu0
      %v922 = vpop.f32.mrb[0].mxu0
      %v923 = vadd.f32 0.0, %v922
      %v924 = vpop.f32.mrb[0].mxu0
      %925 = vdwg.mxu0
      %v966 = vunpack.c.l.b16 %v275
      %v967 = vunpack.c.l.b16 %v276
      %v968 = vunpack.c.l.b16 %v277
      %v969 = vunpack.c.l.b16 %v278
      %v970 = vunpack.c.l.b16 %v279
      %v971 = vunpack.c.l.b16 %v280
      %v972 = vunpack.c.l.b16 %v281
      %v973 = vunpack.c.l.b16 %v282
      %v974 = vunpack.c.l.b16 %v283
      %v975 = vunpack.c.l.b16 %v284
      %v976 = vunpack.c.l.b16 %v285
      %v977 = vunpack.c.l.b16 %v286
      %v978 = vunpack.c.l.b16 %v287
      %v979 = vunpack.c.l.b16 %v288
      %v980 = vunpack.c.l.b16 %v289
      %v981 = vunpack.c.l.b16 %v290
      %v982 = vpack.c.b16 %v967, %v966
      %v983 = vpack.c.b16 %v969, %v968
      %v984 = vpack.c.b16 %v971, %v970
      %v985 = vpack.c.b16 %v973, %v972
      %v986 = vpack.c.b16 %v975, %v974
      %v987 = vpack.c.b16 %v977, %v976
      %v988 = vpack.c.b16 %v979, %v978
      %v989 = vpack.c.b16 %v981, %v980
      %998 = vmatprep.subr.bf16.mxu0 0
      %999 = vmatpush1.bf16.msra.mxu0 %v982
      %1000 = vmatprep.subr.bf16.mxu0 0
      %1001 = vmatpush1.bf16.msra.mxu0 %v983
      %1002 = vmatprep.subr.bf16.mxu0 0
      %1003 = vmatpush1.bf16.msra.mxu0 %v984
      %1004 = vmatprep.subr.bf16.mxu0 0
      %1005 = vmatpush1.bf16.msra.mxu0 %v985
      %1006 = vmatprep.subr.bf16.mxu0 0
      %1007 = vmatpush1.bf16.msra.mxu0 %v986
      %1008 = vmatprep.subr.bf16.mxu0 0
      %1009 = vmatpush1.bf16.msra.mxu0 %v987
      %1010 = vmatprep.subr.bf16.mxu0 0
      %1011 = vmatpush1.bf16.msra.mxu0 %v988
      %1012 = vmatprep.subr.bf16.mxu0 0
      %1013 = vmatpush1.bf16.msra.mxu0 %v989
      %1014 = vmatprep.subr.bf16.mxu0 0
      %1015 = vmatpush1.bf16.msra.mxu0 0
      %1016 = vmatprep.subr.bf16.mxu0 0
      %1017 = vmatpush1.bf16.msra.mxu0 0
      %1018 = vmatprep.subr.bf16.mxu0 0
      %1019 = vmatpush1.bf16.msra.mxu0 0
      %1020 = vmatprep.subr.bf16.mxu0 0
      %1021 = vmatpush1.bf16.msra.mxu0 0
      %1022 = vmatprep.subr.bf16.mxu0 0
      %1023 = vmatpush1.bf16.msra.mxu0 0
      %1024 = vmatprep.subr.bf16.mxu0 0
      %1025 = vmatpush1.bf16.msra.mxu0 0
      %1026 = vmatprep.subr.bf16.mxu0 0
      %1027 = vmatpush1.bf16.msra.mxu0 0
      %1028 = vmatprep.subr.bf16.mxu0 0
      %1029 = vmatpush1.bf16.msra.mxu0 0
      %1030 = vmatprep.mubr.bf16.mxu0 0
      %1031 = vmatmul.mubr.bf16.gmra.mrb[0].mxu0 %v407
      %v1032 = vpop.f32.mrb[0].mxu0
      %v1033 = vadd.f32 %v736, %v1032
      %v1034 = vpop.f32.mrb[0].mxu0
      %v1035 = vpop.f32.mrb[0].mxu0
      %v1036 = vadd.f32 %v739, %v1035
      %v1037 = vpop.f32.mrb[0].mxu0
      %1038 = vmatprep.mubr.bf16.mxu0 0
      %1039 = vmatmul.mubr.bf16.gmra.mrb[0].mxu0 %v408
      %v1040 = vpop.f32.mrb[0].mxu0
      %v1041 = vadd.f32 %v744, %v1040
      %v1042 = vpop.f32.mrb[0].mxu0
      %v1043 = vpop.f32.mrb[0].mxu0
      %v1044 = vadd.f32 %v747, %v1043
      %v1045 = vpop.f32.mrb[0].mxu0
      %1046 = vmatprep.mubr.bf16.mxu0 0
      %1047 = vmatmul.mubr.bf16.gmra.mrb[0].mxu0 %v409
      %v1048 = vpop.f32.mrb[0].mxu0
      %v1049 = vadd.f32 %v752, %v1048
      %v1050 = vpop.f32.mrb[0].mxu0
      %v1051 = vpop.f32.mrb[0].mxu0
      %v1052 = vadd.f32 %v755, %v1051
      %v1053 = vpop.f32.mrb[0].mxu0
      %1054 = vmatprep.mubr.bf16.mxu0 0
      %1055 = vmatmul.mubr.bf16.gmra.mrb[0].mxu0 %v410
      %v1056 = vpop.f32.mrb[0].mxu0
      %v1057 = vadd.f32 %v760, %v1056
      %v1058 = vpop.f32.mrb[0].mxu0
      %v1059 = vpop.f32.mrb[0].mxu0
      %v1060 = vadd.f32 %v763, %v1059
      %v1061 = vpop.f32.mrb[0].mxu0
      %1062 = vmatprep.mubr.bf16.mxu0 0
      %1063 = vmatmul.mubr.bf16.gmra.mrb[0].mxu0 %v411
      %v1064 = vpop.f32.mrb[0].mxu0
      %v1065 = vadd.f32 %v768, %v1064
      %v1066 = vpop.f32.mrb[0].mxu0
      %v1067 = vpop.f32.mrb[0].mxu0
      %v1068 = vadd.f32 %v771, %v1067
      %v1069 = vpop.f32.mrb[0].mxu0
      %1070 = vmatprep.mubr.bf16.mxu0 0
      %1071 = vmatmul.mubr.bf16.gmra.mrb[0].mxu0 %v412
      %v1072 = vpop.f32.mrb[0].mxu0
      %v1073 = vadd.f32 %v776, %v1072
      %v1074 = vpop.f32.mrb[0].mxu0
      %v1075 = vpop.f32.mrb[0].mxu0
      %v1076 = vadd.f32 %v779, %v1075
      %v1077 = vpop.f32.mrb[0].mxu0
      %1078 = vmatprep.mubr.bf16.mxu0 0
      %1079 = vmatmul.mubr.bf16.gmra.mrb[0].mxu0 %v413
      %v1080 = vpop.f32.mrb[0].mxu0
      %v1081 = vadd.f32 %v784, %v1080
      %v1082 = vpop.f32.mrb[0].mxu0
      %v1083 = vpop.f32.mrb[0].mxu0
      %v1084 = vadd.f32 %v787, %v1083
      %v1085 = vpop.f32.mrb[0].mxu0
      %1086 = vmatprep.mubr.bf16.mxu0 0
      %1087 = vmatmul.mubr.bf16.gmra.mrb[0].mxu0 %v414
      %v1088 = vpop.f32.mrb[0].mxu0
      %v1089 = vadd.f32 %v792, %v1088
      %v1090 = vpop.f32.mrb[0].mxu0
      %v1091 = vpop.f32.mrb[0].mxu0
      %v1092 = vadd.f32 %v795, %v1091
      %v1093 = vpop.f32.mrb[0].mxu0
      %1094 = vmatprep.mubr.bf16.mxu0 0
      %1095 = vmatmul.mubr.bf16.gmra.mrb[0].mxu0 %v415
      %v1096 = vpop.f32.mrb[0].mxu0
      %v1097 = vadd.f32 %v800, %v1096
      %v1098 = vpop.f32.mrb[0].mxu0
      %v1099 = vpop.f32.mrb[0].mxu0
      %v1100 = vadd.f32 %v803, %v1099
      %v1101 = vpop.f32.mrb[0].mxu0
      %1102 = vmatprep.mubr.bf16.mxu0 0
      %1103 = vmatmul.mubr.bf16.gmra.mrb[0].mxu0 %v416
      %v1104 = vpop.f32.mrb[0].mxu0
      %v1105 = vadd.f32 %v808, %v1104
      %v1106 = vpop.f32.mrb[0].mxu0
      %v1107 = vpop.f32.mrb[0].mxu0
      %v1108 = vadd.f32 %v811, %v1107
      %v1109 = vpop.f32.mrb[0].mxu0
      %1110 = vmatprep.mubr.bf16.mxu0 0
      %1111 = vmatmul.mubr.bf16.gmra.mrb[0].mxu0 %v417
      %v1112 = vpop.f32.mrb[0].mxu0
      %v1113 = vadd.f32 %v816, %v1112
      %v1114 = vpop.f32.mrb[0].mxu0
      %v1115 = vpop.f32.mrb[0].mxu0
      %v1116 = vadd.f32 %v819, %v1115
      %v1117 = vpop.f32.mrb[0].mxu0
      %1118 = vmatprep.mubr.bf16.mxu0 0
      %1119 = vmatmul.mubr.bf16.gmra.mrb[0].mxu0 %v418
      %v1120 = vpop.f32.mrb[0].mxu0
      %v1121 = vadd.f32 %v824, %v1120
      %v1122 = vpop.f32.mrb[0].mxu0
      %v1123 = vpop.f32.mrb[0].mxu0
      %v1124 = vadd.f32 %v827, %v1123
      %v1125 = vpop.f32.mrb[0].mxu0
      %1126 = vmatprep.mubr.bf16.mxu0 0
      %1127 = vmatmul.mubr.bf16.gmra.mrb[0].mxu0 %v419
      %v1128 = vpop.f32.mrb[0].mxu0
      %v1129 = vadd.f32 %v832, %v1128
      %v1130 = vpop.f32.mrb[0].mxu0
      %v1131 = vpop.f32.mrb[0].mxu0
      %v1132 = vadd.f32 %v835, %v1131
      %v1133 = vpop.f32.mrb[0].mxu0
      %1134 = vmatprep.mubr.bf16.mxu0 0
      %1135 = vmatmul.mubr.bf16.gmra.mrb[0].mxu0 %v420
      %v1136 = vpop.f32.mrb[0].mxu0
      %v1137 = vadd.f32 %v840, %v1136
      %v1138 = vpop.f32.mrb[0].mxu0
      %v1139 = vpop.f32.mrb[0].mxu0
      %v1140 = vadd.f32 %v843, %v1139
      %v1141 = vpop.f32.mrb[0].mxu0
      %1142 = vmatprep.mubr.bf16.mxu0 0
      %1143 = vmatmul.mubr.bf16.gmra.mrb[0].mxu0 %v421
      %v1144 = vpop.f32.mrb[0].mxu0
      %v1145 = vadd.f32 %v848, %v1144
      %v1146 = vpop.f32.mrb[0].mxu0
      %v1147 = vpop.f32.mrb[0].mxu0
      %v1148 = vadd.f32 %v851, %v1147
      %v1149 = vpop.f32.mrb[0].mxu0
      %1150 = vmatprep.mubr.bf16.mxu0 0
      %1151 = vmatmul.mubr.bf16.gmra.mrb[0].mxu0 %v422
      %v1152 = vpop.f32.mrb[0].mxu0
      %v1153 = vadd.f32 %v856, %v1152
      %v1154 = vpop.f32.mrb[0].mxu0
      %v1155 = vpop.f32.mrb[0].mxu0
      %v1156 = vadd.f32 %v859, %v1155
      %v1157 = vpop.f32.mrb[0].mxu0
      %1158 = vmatprep.mubr.bf16.mxu0 0
      %1159 = vmatmul.mubr.bf16.gmra.mrb[0].mxu0 %v423
      %v1160 = vpop.f32.mrb[0].mxu0
      %v1161 = vadd.f32 %v864, %v1160
      %v1162 = vpop.f32.mrb[0].mxu0
      %v1163 = vpop.f32.mrb[0].mxu0
      %v1164 = vadd.f32 %v867, %v1163
      %v1165 = vpop.f32.mrb[0].mxu0
      %1166 = vmatprep.mubr.bf16.mxu0 0
      %1167 = vmatmul.mubr.bf16.gmra.mrb[0].mxu0 %v424
      %v1168 = vpop.f32.mrb[0].mxu0
      %v1169 = vadd.f32 %v872, %v1168
      %v1170 = vpop.f32.mrb[0].mxu0
      %v1171 = vpop.f32.mrb[0].mxu0
      %v1172 = vadd.f32 %v875, %v1171
      %v1173 = vpop.f32.mrb[0].mxu0
      %1174 = vmatprep.mubr.bf16.mxu0 0
      %1175 = vmatmul.mubr.bf16.gmra.mrb[0].mxu0 %v425
      %v1176 = vpop.f32.mrb[0].mxu0
      %v1177 = vadd.f32 %v880, %v1176
      %v1178 = vpop.f32.mrb[0].mxu0
      %v1179 = vpop.f32.mrb[0].mxu0
      %v1180 = vadd.f32 %v883, %v1179
      %v1181 = vpop.f32.mrb[0].mxu0
      %1182 = vmatprep.mubr.bf16.mxu0 0
      %1183 = vmatmul.mubr.bf16.gmra.mrb[0].mxu0 %v426
      %v1184 = vpop.f32.mrb[0].mxu0
      %v1185 = vadd.f32 %v888, %v1184
      %v1186 = vpop.f32.mrb[0].mxu0
      %v1187 = vpop.f32.mrb[0].mxu0
      %v1188 = vadd.f32 %v891, %v1187
      %v1189 = vpop.f32.mrb[0].mxu0
      %1190 = vmatprep.mubr.bf16.mxu0 0
      %1191 = vmatmul.mubr.bf16.gmra.mrb[0].mxu0 %v427
      %v1192 = vpop.f32.mrb[0].mxu0
      %v1193 = vadd.f32 %v896, %v1192
      %v1194 = vpop.f32.mrb[0].mxu0
      %v1195 = vpop.f32.mrb[0].mxu0
      %v1196 = vadd.f32 %v899, %v1195
      %v1197 = vpop.f32.mrb[0].mxu0
      %1198 = vmatprep.mubr.bf16.mxu0 0
      %1199 = vmatmul.mubr.bf16.gmra.mrb[0].mxu0 %v428
      %v1200 = vpop.f32.mrb[0].mxu0
      %v1201 = vadd.f32 %v904, %v1200
      %v1202 = vpop.f32.mrb[0].mxu0
      %v1203 = vpop.f32.mrb[0].mxu0
      %v1204 = vadd.f32 %v907, %v1203
      %v1205 = vpop.f32.mrb[0].mxu0
      %1206 = vmatprep.mubr.bf16.mxu0 0
      %1207 = vmatmul.mubr.bf16.gmra.mrb[0].mxu0 %v429
      %v1208 = vpop.f32.mrb[0].mxu0
      %v1209 = vadd.f32 %v912, %v1208
      %v1210 = vpop.f32.mrb[0].mxu0
      %v1211 = vpop.f32.mrb[0].mxu0
      %v1212 = vadd.f32 %v915, %v1211
      %v1213 = vpop.f32.mrb[0].mxu0
      %1214 = vmatprep.mubr.bf16.mxu0 0
      %1215 = vmatmul.mubr.bf16.gmra.mrb[0].mxu0 %v430
      %v1216 = vpop.f32.mrb[0].mxu0
      %v1217 = vadd.f32 %v920, %v1216
      %v1218 = vpop.f32.mrb[0].mxu0
      %v1219 = vpop.f32.mrb[0].mxu0
      %v1220 = vadd.f32 %v923, %v1219
      %v1221 = vpop.f32.mrb[0].mxu0
      %1222 = vdwg.mxu0
      %v1223 = vld [vmem:[%s209] sm:$0xe]
      %s1224 = scalar_lea.vmem %s1, 128
      %v1225 = vld [vmem:[%s1224] sm:$0xf]
      %v1226 = vld [vmem:[%s1224 + $0x4] sm:$0xf]
      %v1227 = vld [vmem:[%s1224 + $0x8] sm:$0xf]
      %v1228 = vld [vmem:[%s1224 + $0xc] sm:$0xf]
      %v1229 = vld [vmem:[%s1224 + $0x10] sm:$0xf]
      %v1230 = vld [vmem:[%s1224 + $0x14] sm:$0xf]
      %v1231 = vld [vmem:[%s1224 + $0x18] sm:$0xf]
      %v1232 = vld [vmem:[%s1224 + $0x1c] sm:$0xf]
      %v1233 = vld [vmem:[%s1224 + $0x20] sm:$0xf]
      %v1234 = vld [vmem:[%s1224 + $0x24] sm:$0xf]
      %v1235 = vld [vmem:[%s1224 + $0x28] sm:$0xf]
      %v1236 = vld [vmem:[%s1224 + $0x2c] sm:$0xf]
      %v1237 = vld [vmem:[%s1224 + $0x30] sm:$0xf]
      %v1238 = vld [vmem:[%s1224 + $0x34] sm:$0xf]
      %v1239 = vld [vmem:[%s1224 + $0x38] sm:$0xf]
      %v1240 = vld [vmem:[%s1224 + $0x3c] sm:$0xf]
      %v1242 = vunpack.c.l.b16 %v1223
      %v1243 = vpack.c.b16 %v359, %v1242
      %vm1244 = vcmask 1046528
      %v1245 = vrot.slane %v1243, 1
      %v1246 = vrot.slane %v408, 1
      %v1247 = vsel %vm1244, %v1245, %v1246
      %v1248 = vrot.slane %v409, 1
      %v1249 = vsel %vm1244, %v1246, %v1248
      %v1250 = vrot.slane %v410, 1
      %v1251 = vsel %vm1244, %v1248, %v1250
      %v1252 = vrot.slane %v411, 1
      %v1253 = vsel %vm1244, %v1250, %v1252
      %v1254 = vrot.slane %v412, 1
      %v1255 = vsel %vm1244, %v1252, %v1254
      %v1256 = vrot.slane %v413, 1
      %v1257 = vsel %vm1244, %v1254, %v1256
      %v1258 = vrot.slane %v414, 1
      %v1259 = vsel %vm1244, %v1256, %v1258
      %v1260 = vrot.slane %v415, 1
      %v1261 = vsel %vm1244, %v1258, %v1260
      %v1262 = vrot.slane %v416, 1
      %v1263 = vsel %vm1244, %v1260, %v1262
      %v1264 = vrot.slane %v417, 1
      %v1265 = vsel %vm1244, %v1262, %v1264
      %v1266 = vrot.slane %v418, 1
      %v1267 = vsel %vm1244, %v1264, %v1266
      %v1268 = vrot.slane %v419, 1
      %v1269 = vsel %vm1244, %v1266, %v1268
      %v1270 = vrot.slane %v420, 1
      %v1271 = vsel %vm1244, %v1268, %v1270
      %v1272 = vrot.slane %v421, 1
      %v1273 = vsel %vm1244, %v1270, %v1272
      %v1274 = vrot.slane %v422, 1
      %v1275 = vsel %vm1244, %v1272, %v1274
      %v1276 = vrot.slane %v423, 1
      %v1277 = vsel %vm1244, %v1274, %v1276
      %v1278 = vrot.slane %v424, 1
      %v1279 = vsel %vm1244, %v1276, %v1278
      %v1280 = vrot.slane %v425, 1
      %v1281 = vsel %vm1244, %v1278, %v1280
      %v1282 = vrot.slane %v426, 1
      %v1283 = vsel %vm1244, %v1280, %v1282
      %v1284 = vrot.slane %v427, 1
      %v1285 = vsel %vm1244, %v1282, %v1284
      %v1286 = vrot.slane %v428, 1
      %v1287 = vsel %vm1244, %v1284, %v1286
      %v1288 = vrot.slane %v429, 1
      %v1289 = vsel %vm1244, %v1286, %v1288
      %v1290 = vrot.slane %v430, 1
      %v1291 = vsel %vm1244, %v1288, %v1290
      %v1292 = vrot.slane %v431, 1
      %v1293 = vsel %vm1244, %v1290, %v1292
      %v1334 = vunpack.c.l.b16 %v1225
      %v1335 = vunpack.c.l.b16 %v1226
      %v1336 = vunpack.c.l.b16 %v1227
      %v1337 = vunpack.c.l.b16 %v1228
      %v1338 = vunpack.c.l.b16 %v1229
      %v1339 = vunpack.c.l.b16 %v1230
      %v1340 = vunpack.c.l.b16 %v1231
      %v1341 = vunpack.c.l.b16 %v1232
      %v1342 = vunpack.c.l.b16 %v1233
      %v1343 = vunpack.c.l.b16 %v1234
      %v1344 = vunpack.c.l.b16 %v1235
      %v1345 = vunpack.c.l.b16 %v1236
      %v1346 = vunpack.c.l.b16 %v1237
      %v1347 = vunpack.c.l.b16 %v1238
      %v1348 = vunpack.c.l.b16 %v1239
      %v1349 = vunpack.c.l.b16 %v1240
      %v1350 = vpack.c.b16 %v1335, %v1334
      %v1351 = vpack.c.b16 %v1337, %v1336
      %v1352 = vpack.c.b16 %v1339, %v1338
      %v1353 = vpack.c.b16 %v1341, %v1340
      %v1354 = vpack.c.b16 %v1343, %v1342
      %v1355 = vpack.c.b16 %v1345, %v1344
      %v1356 = vpack.c.b16 %v1347, %v1346
      %v1357 = vpack.c.b16 %v1349, %v1348
      %1366 = vmatprep.subr.bf16.mxu0 0
      %1367 = vmatpush1.bf16.msra.mxu0 %v1350
      %1368 = vmatprep.subr.bf16.mxu0 0
      %1369 = vmatpush1.bf16.msra.mxu0 %v1351
      %1370 = vmatprep.subr.bf16.mxu0 0
      %1371 = vmatpush1.bf16.msra.mxu0 %v1352
      %1372 = vmatprep.subr.bf16.mxu0 0
      %1373 = vmatpush1.bf16.msra.mxu0 %v1353
      %1374 = vmatprep.subr.bf16.mxu0 0
      %1375 = vmatpush1.bf16.msra.mxu0 %v1354
      %1376 = vmatprep.subr.bf16.mxu0 0
      %1377 = vmatpush1.bf16.msra.mxu0 %v1355
      %1378 = vmatprep.subr.bf16.mxu0 0
      %1379 = vmatpush1.bf16.msra.mxu0 %v1356
      %1380 = vmatprep.subr.bf16.mxu0 0
      %1381 = vmatpush1.bf16.msra.mxu0 %v1357
      %1382 = vmatprep.subr.bf16.mxu0 0
      %1383 = vmatpush1.bf16.msra.mxu0 0
      %1384 = vmatprep.subr.bf16.mxu0 0
      %1385 = vmatpush1.bf16.msra.mxu0 0
      %1386 = vmatprep.subr.bf16.mxu0 0
      %1387 = vmatpush1.bf16.msra.mxu0 0
      %1388 = vmatprep.subr.bf16.mxu0 0
      %1389 = vmatpush1.bf16.msra.mxu0 0
      %1390 = vmatprep.subr.bf16.mxu0 0
      %1391 = vmatpush1.bf16.msra.mxu0 0
      %1392 = vmatprep.subr.bf16.mxu0 0
      %1393 = vmatpush1.bf16.msra.mxu0 0
      %1394 = vmatprep.subr.bf16.mxu0 0
      %1395 = vmatpush1.bf16.msra.mxu0 0
      %1396 = vmatprep.subr.bf16.mxu0 0
      %1397 = vmatpush1.bf16.msra.mxu0 0
      %1398 = vmatprep.mubr.bf16.mxu0 0
      %1399 = vmatmul.mubr.bf16.gmra.mrb[0].mxu0 %v1247
      %v1400 = vpop.f32.mrb[0].mxu0
      %v1401 = vadd.f32 0.0, %v1400
      %v1402 = vpop.f32.mrb[0].mxu0
      %v1403 = vpop.f32.mrb[0].mxu0
      %v1404 = vadd.f32 0.0, %v1403
      %v1405 = vpop.f32.mrb[0].mxu0
      %1406 = vmatprep.mubr.bf16.mxu0 0
      %1407 = vmatmul.mubr.bf16.gmra.mrb[0].mxu0 %v1249
      %v1408 = vpop.f32.mrb[0].mxu0
      %v1409 = vadd.f32 0.0, %v1408
      %v1410 = vpop.f32.mrb[0].mxu0
      %v1411 = vpop.f32.mrb[0].mxu0
      %v1412 = vadd.f32 0.0, %v1411
      %v1413 = vpop.f32.mrb[0].mxu0
      %1414 = vmatprep.mubr.bf16.mxu0 0
      %1415 = vmatmul.mubr.bf16.gmra.mrb[0].mxu0 %v1251
      %v1416 = vpop.f32.mrb[0].mxu0
      %v1417 = vadd.f32 0.0, %v1416
      %v1418 = vpop.f32.mrb[0].mxu0
      %v1419 = vpop.f32.mrb[0].mxu0
      %v1420 = vadd.f32 0.0, %v1419
      %v1421 = vpop.f32.mrb[0].mxu0
      %1422 = vmatprep.mubr.bf16.mxu0 0
      %1423 = vmatmul.mubr.bf16.gmra.mrb[0].mxu0 %v1253
      %v1424 = vpop.f32.mrb[0].mxu0
      %v1425 = vadd.f32 0.0, %v1424
      %v1426 = vpop.f32.mrb[0].mxu0
      %v1427 = vpop.f32.mrb[0].mxu0
      %v1428 = vadd.f32 0.0, %v1427
      %v1429 = vpop.f32.mrb[0].mxu0
      %1430 = vmatprep.mubr.bf16.mxu0 0
      %1431 = vmatmul.mubr.bf16.gmra.mrb[0].mxu0 %v1255
      %v1432 = vpop.f32.mrb[0].mxu0
      %v1433 = vadd.f32 0.0, %v1432
      %v1434 = vpop.f32.mrb[0].mxu0
      %v1435 = vpop.f32.mrb[0].mxu0
      %v1436 = vadd.f32 0.0, %v1435
      %v1437 = vpop.f32.mrb[0].mxu0
      %1438 = vmatprep.mubr.bf16.mxu0 0
      %1439 = vmatmul.mubr.bf16.gmra.mrb[0].mxu0 %v1257
      %v1440 = vpop.f32.mrb[0].mxu0
      %v1441 = vadd.f32 0.0, %v1440
      %v1442 = vpop.f32.mrb[0].mxu0
      %v1443 = vpop.f32.mrb[0].mxu0
      %v1444 = vadd.f32 0.0, %v1443
      %v1445 = vpop.f32.mrb[0].mxu0
      %1446 = vmatprep.mubr.bf16.mxu0 0
      %1447 = vmatmul.mubr.bf16.gmra.mrb[0].mxu0 %v1259
      %v1448 = vpop.f32.mrb[0].mxu0
      %v1449 = vadd.f32 0.0, %v1448
      %v1450 = vpop.f32.mrb[0].mxu0
      %v1451 = vpop.f32.mrb[0].mxu0
      %v1452 = vadd.f32 0.0, %v1451
      %v1453 = vpop.f32.mrb[0].mxu0
      %1454 = vmatprep.mubr.bf16.mxu0 0
      %1455 = vmatmul.mubr.bf16.gmra.mrb[0].mxu0 %v1261
      %v1456 = vpop.f32.mrb[0].mxu0
      %v1457 = vadd.f32 0.0, %v1456
      %v1458 = vpop.f32.mrb[0].mxu0
      %v1459 = vpop.f32.mrb[0].mxu0
      %v1460 = vadd.f32 0.0, %v1459
      %v1461 = vpop.f32.mrb[0].mxu0
      %1462 = vmatprep.mubr.bf16.mxu0 0
      %1463 = vmatmul.mubr.bf16.gmra.mrb[0].mxu0 %v1263
      %v1464 = vpop.f32.mrb[0].mxu0
      %v1465 = vadd.f32 0.0, %v1464
      %v1466 = vpop.f32.mrb[0].mxu0
      %v1467 = vpop.f32.mrb[0].mxu0
      %v1468 = vadd.f32 0.0, %v1467
      %v1469 = vpop.f32.mrb[0].mxu0
      %1470 = vmatprep.mubr.bf16.mxu0 0
      %1471 = vmatmul.mubr.bf16.gmra.mrb[0].mxu0 %v1265
      %v1472 = vpop.f32.mrb[0].mxu0
      %v1473 = vadd.f32 0.0, %v1472
      %v1474 = vpop.f32.mrb[0].mxu0
      %v1475 = vpop.f32.mrb[0].mxu0
      %v1476 = vadd.f32 0.0, %v1475
      %v1477 = vpop.f32.mrb[0].mxu0
      %1478 = vmatprep.mubr.bf16.mxu0 0
      %1479 = vmatmul.mubr.bf16.gmra.mrb[0].mxu0 %v1267
      %v1480 = vpop.f32.mrb[0].mxu0
      %v1481 = vadd.f32 0.0, %v1480
      %v1482 = vpop.f32.mrb[0].mxu0
      %v1483 = vpop.f32.mrb[0].mxu0
      %v1484 = vadd.f32 0.0, %v1483
      %v1485 = vpop.f32.mrb[0].mxu0
      %1486 = vmatprep.mubr.bf16.mxu0 0
      %1487 = vmatmul.mubr.bf16.gmra.mrb[0].mxu0 %v1269
      %v1488 = vpop.f32.mrb[0].mxu0
      %v1489 = vadd.f32 0.0, %v1488
      %v1490 = vpop.f32.mrb[0].mxu0
      %v1491 = vpop.f32.mrb[0].mxu0
      %v1492 = vadd.f32 0.0, %v1491
      %v1493 = vpop.f32.mrb[0].mxu0
      %1494 = vmatprep.mubr.bf16.mxu0 0
      %1495 = vmatmul.mubr.bf16.gmra.mrb[0].mxu0 %v1271
      %v1496 = vpop.f32.mrb[0].mxu0
      %v1497 = vadd.f32 0.0, %v1496
      %v1498 = vpop.f32.mrb[0].mxu0
      %v1499 = vpop.f32.mrb[0].mxu0
      %v1500 = vadd.f32 0.0, %v1499
      %v1501 = vpop.f32.mrb[0].mxu0
      %1502 = vmatprep.mubr.bf16.mxu0 0
      %1503 = vmatmul.mubr.bf16.gmra.mrb[0].mxu0 %v1273
      %v1504 = vpop.f32.mrb[0].mxu0
      %v1505 = vadd.f32 0.0, %v1504
      %v1506 = vpop.f32.mrb[0].mxu0
      %v1507 = vpop.f32.mrb[0].mxu0
      %v1508 = vadd.f32 0.0, %v1507
      %v1509 = vpop.f32.mrb[0].mxu0
      %1510 = vmatprep.mubr.bf16.mxu0 0
      %1511 = vmatmul.mubr.bf16.gmra.mrb[0].mxu0 %v1275
      %v1512 = vpop.f32.mrb[0].mxu0
      %v1513 = vadd.f32 0.0, %v1512
      %v1514 = vpop.f32.mrb[0].mxu0
      %v1515 = vpop.f32.mrb[0].mxu0
      %v1516 = vadd.f32 0.0, %v1515
      %v1517 = vpop.f32.mrb[0].mxu0
      %1518 = vmatprep.mubr.bf16.mxu0 0
      %1519 = vmatmul.mubr.bf16.gmra.mrb[0].mxu0 %v1277
      %v1520 = vpop.f32.mrb[0].mxu0
      %v1521 = vadd.f32 0.0, %v1520
      %v1522 = vpop.f32.mrb[0].mxu0
      %v1523 = vpop.f32.mrb[0].mxu0
      %v1524 = vadd.f32 0.0, %v1523
      %v1525 = vpop.f32.mrb[0].mxu0
      %1526 = vmatprep.mubr.bf16.mxu0 0
      %1527 = vmatmul.mubr.bf16.gmra.mrb[0].mxu0 %v1279
      %v1528 = vpop.f32.mrb[0].mxu0
      %v1529 = vadd.f32 0.0, %v1528
      %v1530 = vpop.f32.mrb[0].mxu0
      %v1531 = vpop.f32.mrb[0].mxu0
      %v1532 = vadd.f32 0.0, %v1531
      %v1533 = vpop.f32.mrb[0].mxu0
      %1534 = vmatprep.mubr.bf16.mxu0 0
      %1535 = vmatmul.mubr.bf16.gmra.mrb[0].mxu0 %v1281
      %v1536 = vpop.f32.mrb[0].mxu0
      %v1537 = vadd.f32 0.0, %v1536
      %v1538 = vpop.f32.mrb[0].mxu0
      %v1539 = vpop.f32.mrb[0].mxu0
      %v1540 = vadd.f32 0.0, %v1539
      %v1541 = vpop.f32.mrb[0].mxu0
      %1542 = vmatprep.mubr.bf16.mxu0 0
      %1543 = vmatmul.mubr.bf16.gmra.mrb[0].mxu0 %v1283
      %v1544 = vpop.f32.mrb[0].mxu0
      %v1545 = vadd.f32 0.0, %v1544
      %v1546 = vpop.f32.mrb[0].mxu0
      %v1547 = vpop.f32.mrb[0].mxu0
      %v1548 = vadd.f32 0.0, %v1547
      %v1549 = vpop.f32.mrb[0].mxu0
      %1550 = vmatprep.mubr.bf16.mxu0 0
      %1551 = vmatmul.mubr.bf16.gmra.mrb[0].mxu0 %v1285
      %v1552 = vpop.f32.mrb[0].mxu0
      %v1553 = vadd.f32 0.0, %v1552
      %v1554 = vpop.f32.mrb[0].mxu0
      %v1555 = vpop.f32.mrb[0].mxu0
      %v1556 = vadd.f32 0.0, %v1555
      %v1557 = vpop.f32.mrb[0].mxu0
      %1558 = vmatprep.mubr.bf16.mxu0 0
      %1559 = vmatmul.mubr.bf16.gmra.mrb[0].mxu0 %v1287
      %v1560 = vpop.f32.mrb[0].mxu0
      %v1561 = vadd.f32 0.0, %v1560
      %v1562 = vpop.f32.mrb[0].mxu0
      %v1563 = vpop.f32.mrb[0].mxu0
      %v1564 = vadd.f32 0.0, %v1563
      %v1565 = vpop.f32.mrb[0].mxu0
      %1566 = vmatprep.mubr.bf16.mxu0 0
      %1567 = vmatmul.mubr.bf16.gmra.mrb[0].mxu0 %v1289
      %v1568 = vpop.f32.mrb[0].mxu0
      %v1569 = vadd.f32 0.0, %v1568
      %v1570 = vpop.f32.mrb[0].mxu0
      %v1571 = vpop.f32.mrb[0].mxu0
      %v1572 = vadd.f32 0.0, %v1571
      %v1573 = vpop.f32.mrb[0].mxu0
      %1574 = vmatprep.mubr.bf16.mxu0 0
      %1575 = vmatmul.mubr.bf16.gmra.mrb[0].mxu0 %v1291
      %v1576 = vpop.f32.mrb[0].mxu0
      %v1577 = vadd.f32 0.0, %v1576
      %v1578 = vpop.f32.mrb[0].mxu0
      %v1579 = vpop.f32.mrb[0].mxu0
      %v1580 = vadd.f32 0.0, %v1579
      %v1581 = vpop.f32.mrb[0].mxu0
      %1582 = vmatprep.mubr.bf16.mxu0 0
      %1583 = vmatmul.mubr.bf16.gmra.mrb[0].mxu0 %v1293
      %v1584 = vpop.f32.mrb[0].mxu0
      %v1585 = vadd.f32 0.0, %v1584
      %v1586 = vpop.f32.mrb[0].mxu0
      %v1587 = vpop.f32.mrb[0].mxu0
      %v1588 = vadd.f32 0.0, %v1587
      %v1589 = vpop.f32.mrb[0].mxu0
      %1590 = vdwg.mxu0
      %v1591 = vadd.f32 %v1033, %v1401
      %v1592 = vadd.f32 %v1036, %v1404
      %v1593 = vadd.f32 %v1041, %v1409
      %v1594 = vadd.f32 %v1044, %v1412
      %v1595 = vadd.f32 %v1049, %v1417
      %v1596 = vadd.f32 %v1052, %v1420
      %v1597 = vadd.f32 %v1057, %v1425
      %v1598 = vadd.f32 %v1060, %v1428
      %v1599 = vadd.f32 %v1065, %v1433
      %v1600 = vadd.f32 %v1068, %v1436
      %v1601 = vadd.f32 %v1073, %v1441
      %v1602 = vadd.f32 %v1076, %v1444
      %v1603 = vadd.f32 %v1081, %v1449
      %v1604 = vadd.f32 %v1084, %v1452
      %v1605 = vadd.f32 %v1089, %v1457
      %v1606 = vadd.f32 %v1092, %v1460
      %v1607 = vadd.f32 %v1097, %v1465
      %v1608 = vadd.f32 %v1100, %v1468
      %v1609 = vadd.f32 %v1105, %v1473
      %v1610 = vadd.f32 %v1108, %v1476
      %v1611 = vadd.f32 %v1113, %v1481
      %v1612 = vadd.f32 %v1116, %v1484
      %v1613 = vadd.f32 %v1121, %v1489
      %v1614 = vadd.f32 %v1124, %v1492
      %v1615 = vadd.f32 %v1129, %v1497
      %v1616 = vadd.f32 %v1132, %v1500
      %v1617 = vadd.f32 %v1137, %v1505
      %v1618 = vadd.f32 %v1140, %v1508
      %v1619 = vadd.f32 %v1145, %v1513
      %v1620 = vadd.f32 %v1148, %v1516
      %v1621 = vadd.f32 %v1153, %v1521
      %v1622 = vadd.f32 %v1156, %v1524
      %v1623 = vadd.f32 %v1161, %v1529
      %v1624 = vadd.f32 %v1164, %v1532
      %v1625 = vadd.f32 %v1169, %v1537
      %v1626 = vadd.f32 %v1172, %v1540
      %v1627 = vadd.f32 %v1177, %v1545
      %v1628 = vadd.f32 %v1180, %v1548
      %v1629 = vadd.f32 %v1185, %v1553
      %v1630 = vadd.f32 %v1188, %v1556
      %v1631 = vadd.f32 %v1193, %v1561
      %v1632 = vadd.f32 %v1196, %v1564
      %v1633 = vadd.f32 %v1201, %v1569
      %v1634 = vadd.f32 %v1204, %v1572
      %v1635 = vadd.f32 %v1209, %v1577
      %v1636 = vadd.f32 %v1212, %v1580
      %v1637 = vadd.f32 %v1217, %v1585
      %v1638 = vadd.f32 %v1220, %v1588
      %v1639 = vld [vmem:[%s209 + $0xc] sm:$0xf]
      %v1640 = vld [vmem:[%s209 + $0x10] sm:$0xf]
      %v1641 = vld [vmem:[%s209 + $0x14] sm:$0xf]
      %v1642 = vld [vmem:[%s209 + $0x18] sm:$0xf]
      %v1643 = vld [vmem:[%s209 + $0x1c] sm:$0xf]
      %v1644 = vld [vmem:[%s209 + $0x20] sm:$0xf]
      %v1645 = vld [vmem:[%s209 + $0x24] sm:$0xf]
      %v1646 = vld [vmem:[%s209 + $0x28] sm:$0xf]
      %v1647 = vld [vmem:[%s209 + $0x2c] sm:$0xf]
      %v1648 = vld [vmem:[%s209 + $0x30] sm:$0xf]
      %v1649 = vld [vmem:[%s209 + $0x34] sm:$0xf]
      %v1650 = vld [vmem:[%s209 + $0x38] sm:$0xf]
      %v1651 = vld [vmem:[%s209 + $0x3c] sm:$0xf]
      %v1652 = vld [vmem:[%s209 + $0x40] sm:$0xf]
      %v1653 = vld [vmem:[%s209 + $0x44] sm:$0xf]
      %v1654 = vld [vmem:[%s209 + $0x48] sm:$0xf]
      %v1655 = vld [vmem:[%s209 + $0x4c] sm:$0xf]
      %v1656 = vld [vmem:[%s209 + $0x50] sm:$0xf]
      %v1657 = vld [vmem:[%s209 + $0x54] sm:$0xf]
      %v1658 = vld [vmem:[%s209 + $0x58] sm:$0xf]
      %v1659 = vld [vmem:[%s209 + $0x5c] sm:$0xf]
      %v1660 = vld [vmem:[%s209 + $0x60] sm:$0xf]
      %v1661 = vld [vmem:[%s209 + $0x64] sm:$0xf]
      %v1662 = vld [vmem:[%s209 + $0x68] sm:$0xf]
      %v1663 = vld [vmem:[%s209 + $0x6c] sm:$0xf]
      %v1664 = vld [vmem:[%s209 + $0x70] sm:$0xf]
      %v1665 = vld [vmem:[%s209 + $0x74] sm:$0xf]
      %v1666 = vld [vmem:[%s209 + $0x78] sm:$0xf]
      %v1667 = vld [vmem:[%s209 + $0x7c] sm:$0xf]
      %v1668 = vld [vmem:[%s209 + $0x80] sm:$0xf]
      %v1669 = vld [vmem:[%s209 + $0x84] sm:$0xf]
      %v1670 = vld [vmem:[%s209 + $0x88] sm:$0xf]
      %v1671 = vld [vmem:[%s209 + $0x8c] sm:$0xf]
      %v1672 = vld [vmem:[%s209 + $0x90] sm:$0xf]
      %v1673 = vld [vmem:[%s209 + $0x94] sm:$0xf]
      %v1674 = vld [vmem:[%s209 + $0x98] sm:$0xf]
      %v1675 = vld [vmem:[%s209 + $0x9c] sm:$0xf]
      %v1676 = vld [vmem:[%s209 + $0xa0] sm:$0xf]
      %v1677 = vld [vmem:[%s209 + $0xa4] sm:$0xf]
      %v1678 = vld [vmem:[%s209 + $0xa8] sm:$0xf]
      %v1679 = vld [vmem:[%s209 + $0xac] sm:$0xf]
      %v1680 = vld [vmem:[%s209 + $0xb0] sm:$0xf]
      %v1681 = vld [vmem:[%s209 + $0xb4] sm:$0xf]
      %v1682 = vld [vmem:[%s209 + $0xb8] sm:$0xf]
      %v1683 = vld [vmem:[%s209 + $0xbc] sm:$0xf]
      %v1684 = vld [vmem:[%s209 + $0xc0] sm:$0xf]
      %v1685 = vld [vmem:[%s209 + $0xc4] sm:$0xf]
      %v1686 = vld [vmem:[%s209 + $0xc8] sm:$0xf]
      %s1687 = scalar_lea.vmem %s1, 192
      %v1688 = vld [vmem:[%s1687] sm:$0xf]
      %v1689 = vld [vmem:[%s1687 + $0x4] sm:$0xf]
      %v1690 = vld [vmem:[%s1687 + $0x8] sm:$0xf]
      %v1691 = vld [vmem:[%s1687 + $0xc] sm:$0xf]
      %v1692 = vld [vmem:[%s1687 + $0x10] sm:$0xf]
      %v1693 = vld [vmem:[%s1687 + $0x14] sm:$0xf]
      %v1694 = vld [vmem:[%s1687 + $0x18] sm:$0xf]
      %v1695 = vld [vmem:[%s1687 + $0x1c] sm:$0xf]
      %v1696 = vld [vmem:[%s1687 + $0x20] sm:$0xf]
      %v1697 = vld [vmem:[%s1687 + $0x24] sm:$0xf]
      %v1698 = vld [vmem:[%s1687 + $0x28] sm:$0xf]
      %v1699 = vld [vmem:[%s1687 + $0x2c] sm:$0xf]
      %v1700 = vld [vmem:[%s1687 + $0x30] sm:$0xf]
      %v1701 = vld [vmem:[%s1687 + $0x34] sm:$0xf]
      %v1702 = vld [vmem:[%s1687 + $0x38] sm:$0xf]
      %v1703 = vld [vmem:[%s1687 + $0x3c] sm:$0xf]
      %v1752 = vunpack.c.l.b16 %v1639
      %v1753 = vunpack.c.l.b16 %v1640
      %v1754 = vunpack.c.l.b16 %v1641
      %v1755 = vunpack.c.l.b16 %v1642
      %v1756 = vunpack.c.l.b16 %v1643
      %v1757 = vunpack.c.l.b16 %v1644
      %v1758 = vunpack.c.l.b16 %v1645
      %v1759 = vunpack.c.l.b16 %v1646
      %v1760 = vunpack.c.l.b16 %v1647
      %v1761 = vunpack.c.l.b16 %v1648
      %v1762 = vunpack.c.l.b16 %v1649
      %v1763 = vunpack.c.l.b16 %v1650
      %v1764 = vunpack.c.l.b16 %v1651
      %v1765 = vunpack.c.l.b16 %v1652
      %v1766 = vunpack.c.l.b16 %v1653
      %v1767 = vunpack.c.l.b16 %v1654
      %v1768 = vunpack.c.l.b16 %v1655
      %v1769 = vunpack.c.l.b16 %v1656
      %v1770 = vunpack.c.l.b16 %v1657
      %v1771 = vunpack.c.l.b16 %v1658
      %v1772 = vunpack.c.l.b16 %v1659
      %v1773 = vunpack.c.l.b16 %v1660
      %v1774 = vunpack.c.l.b16 %v1661
      %v1775 = vunpack.c.l.b16 %v1662
      %v1776 = vunpack.c.l.b16 %v1663
      %v1777 = vunpack.c.l.b16 %v1664
      %v1778 = vunpack.c.l.b16 %v1665
      %v1779 = vunpack.c.l.b16 %v1666
      %v1780 = vunpack.c.l.b16 %v1667
      %v1781 = vunpack.c.l.b16 %v1668
      %v1782 = vunpack.c.l.b16 %v1669
      %v1783 = vunpack.c.l.b16 %v1670
      %v1784 = vunpack.c.l.b16 %v1671
      %v1785 = vunpack.c.l.b16 %v1672
      %v1786 = vunpack.c.l.b16 %v1673
      %v1787 = vunpack.c.l.b16 %v1674
      %v1788 = vunpack.c.l.b16 %v1675
      %v1789 = vunpack.c.l.b16 %v1676
      %v1790 = vunpack.c.l.b16 %v1677
      %v1791 = vunpack.c.l.b16 %v1678
      %v1792 = vunpack.c.l.b16 %v1679
      %v1793 = vunpack.c.l.b16 %v1680
      %v1794 = vunpack.c.l.b16 %v1681
      %v1795 = vunpack.c.l.b16 %v1682
      %v1796 = vunpack.c.l.b16 %v1683
      %v1797 = vunpack.c.l.b16 %v1684
      %v1798 = vunpack.c.l.b16 %v1685
      %v1799 = vunpack.c.l.b16 %v1686
      %v1800 = vpack.c.b16 %v1753, %v1752
      %v1801 = vpack.c.b16 %v1755, %v1754
      %v1802 = vpack.c.b16 %v1757, %v1756
      %v1803 = vpack.c.b16 %v1759, %v1758
      %v1804 = vpack.c.b16 %v1761, %v1760
      %v1805 = vpack.c.b16 %v1763, %v1762
      %v1806 = vpack.c.b16 %v1765, %v1764
      %v1807 = vpack.c.b16 %v1767, %v1766
      %v1808 = vpack.c.b16 %v1769, %v1768
      %v1809 = vpack.c.b16 %v1771, %v1770
      %v1810 = vpack.c.b16 %v1773, %v1772
      %v1811 = vpack.c.b16 %v1775, %v1774
      %v1812 = vpack.c.b16 %v1777, %v1776
      %v1813 = vpack.c.b16 %v1779, %v1778
      %v1814 = vpack.c.b16 %v1781, %v1780
      %v1815 = vpack.c.b16 %v1783, %v1782
      %v1816 = vpack.c.b16 %v1785, %v1784
      %v1817 = vpack.c.b16 %v1787, %v1786
      %v1818 = vpack.c.b16 %v1789, %v1788
      %v1819 = vpack.c.b16 %v1791, %v1790
      %v1820 = vpack.c.b16 %v1793, %v1792
      %v1821 = vpack.c.b16 %v1795, %v1794
      %v1822 = vpack.c.b16 %v1797, %v1796
      %v1823 = vpack.c.b16 %v1799, %v1798
      %v1864 = vunpack.c.l.b16 %v1688
      %v1865 = vunpack.c.l.b16 %v1689
      %v1866 = vunpack.c.l.b16 %v1690
      %v1867 = vunpack.c.l.b16 %v1691
      %v1868 = vunpack.c.l.b16 %v1692
      %v1869 = vunpack.c.l.b16 %v1693
      %v1870 = vunpack.c.l.b16 %v1694
      %v1871 = vunpack.c.l.b16 %v1695
      %v1872 = vunpack.c.l.b16 %v1696
      %v1873 = vunpack.c.l.b16 %v1697
      %v1874 = vunpack.c.l.b16 %v1698
      %v1875 = vunpack.c.l.b16 %v1699
      %v1876 = vunpack.c.l.b16 %v1700
      %v1877 = vunpack.c.l.b16 %v1701
      %v1878 = vunpack.c.l.b16 %v1702
      %v1879 = vunpack.c.l.b16 %v1703
      %v1880 = vpack.c.b16 %v1865, %v1864
      %v1881 = vpack.c.b16 %v1867, %v1866
      %v1882 = vpack.c.b16 %v1869, %v1868
      %v1883 = vpack.c.b16 %v1871, %v1870
      %v1884 = vpack.c.b16 %v1873, %v1872
      %v1885 = vpack.c.b16 %v1875, %v1874
      %v1886 = vpack.c.b16 %v1877, %v1876
      %v1887 = vpack.c.b16 %v1879, %v1878
      %1896 = vmatprep.subr.bf16.mxu0 0
      %1897 = vmatpush1.bf16.msra.mxu0 %v1880
      %1898 = vmatprep.subr.bf16.mxu0 0
      %1899 = vmatpush1.bf16.msra.mxu0 %v1881
      %1900 = vmatprep.subr.bf16.mxu0 0
      %1901 = vmatpush1.bf16.msra.mxu0 %v1882
      %1902 = vmatprep.subr.bf16.mxu0 0
      %1903 = vmatpush1.bf16.msra.mxu0 %v1883
      %1904 = vmatprep.subr.bf16.mxu0 0
      %1905 = vmatpush1.bf16.msra.mxu0 %v1884
      %1906 = vmatprep.subr.bf16.mxu0 0
      %1907 = vmatpush1.bf16.msra.mxu0 %v1885
      %1908 = vmatprep.subr.bf16.mxu0 0
      %1909 = vmatpush1.bf16.msra.mxu0 %v1886
      %1910 = vmatprep.subr.bf16.mxu0 0
      %1911 = vmatpush1.bf16.msra.mxu0 %v1887
      %1912 = vmatprep.subr.bf16.mxu0 0
      %1913 = vmatpush1.bf16.msra.mxu0 0
      %1914 = vmatprep.subr.bf16.mxu0 0
      %1915 = vmatpush1.bf16.msra.mxu0 0
      %1916 = vmatprep.subr.bf16.mxu0 0
      %1917 = vmatpush1.bf16.msra.mxu0 0
      %1918 = vmatprep.subr.bf16.mxu0 0
      %1919 = vmatpush1.bf16.msra.mxu0 0
      %1920 = vmatprep.subr.bf16.mxu0 0
      %1921 = vmatpush1.bf16.msra.mxu0 0
      %1922 = vmatprep.subr.bf16.mxu0 0
      %1923 = vmatpush1.bf16.msra.mxu0 0
      %1924 = vmatprep.subr.bf16.mxu0 0
      %1925 = vmatpush1.bf16.msra.mxu0 0
      %1926 = vmatprep.subr.bf16.mxu0 0
      %1927 = vmatpush1.bf16.msra.mxu0 0
      %1928 = vmatprep.mubr.bf16.mxu0 0
      %1929 = vmatmul.mubr.bf16.gmra.mrb[0].mxu0 %v1800
      %v1930 = vpop.f32.mrb[0].mxu0
      %v1931 = vadd.f32 0.0, %v1930
      %v1932 = vpop.f32.mrb[0].mxu0
      %v1933 = vpop.f32.mrb[0].mxu0
      %v1934 = vadd.f32 0.0, %v1933
      %v1935 = vpop.f32.mrb[0].mxu0
      %1936 = vmatprep.mubr.bf16.mxu0 0
      %1937 = vmatmul.mubr.bf16.gmra.mrb[0].mxu0 %v1801
      %v1938 = vpop.f32.mrb[0].mxu0
      %v1939 = vadd.f32 0.0, %v1938
      %v1940 = vpop.f32.mrb[0].mxu0
      %v1941 = vpop.f32.mrb[0].mxu0
      %v1942 = vadd.f32 0.0, %v1941
      %v1943 = vpop.f32.mrb[0].mxu0
      %1944 = vmatprep.mubr.bf16.mxu0 0
      %1945 = vmatmul.mubr.bf16.gmra.mrb[0].mxu0 %v1802
      %v1946 = vpop.f32.mrb[0].mxu0
      %v1947 = vadd.f32 0.0, %v1946
      %v1948 = vpop.f32.mrb[0].mxu0
      %v1949 = vpop.f32.mrb[0].mxu0
      %v1950 = vadd.f32 0.0, %v1949
      %v1951 = vpop.f32.mrb[0].mxu0
      %1952 = vmatprep.mubr.bf16.mxu0 0
      %1953 = vmatmul.mubr.bf16.gmra.mrb[0].mxu0 %v1803
      %v1954 = vpop.f32.mrb[0].mxu0
      %v1955 = vadd.f32 0.0, %v1954
      %v1956 = vpop.f32.mrb[0].mxu0
      %v1957 = vpop.f32.mrb[0].mxu0
      %v1958 = vadd.f32 0.0, %v1957
      %v1959 = vpop.f32.mrb[0].mxu0
      %1960 = vmatprep.mubr.bf16.mxu0 0
      %1961 = vmatmul.mubr.bf16.gmra.mrb[0].mxu0 %v1804
      %v1962 = vpop.f32.mrb[0].mxu0
      %v1963 = vadd.f32 0.0, %v1962
      %v1964 = vpop.f32.mrb[0].mxu0
      %v1965 = vpop.f32.mrb[0].mxu0
      %v1966 = vadd.f32 0.0, %v1965
      %v1967 = vpop.f32.mrb[0].mxu0
      %1968 = vmatprep.mubr.bf16.mxu0 0
      %1969 = vmatmul.mubr.bf16.gmra.mrb[0].mxu0 %v1805
      %v1970 = vpop.f32.mrb[0].mxu0
      %v1971 = vadd.f32 0.0, %v1970
      %v1972 = vpop.f32.mrb[0].mxu0
      %v1973 = vpop.f32.mrb[0].mxu0
      %v1974 = vadd.f32 0.0, %v1973
      %v1975 = vpop.f32.mrb[0].mxu0
      %1976 = vmatprep.mubr.bf16.mxu0 0
      %1977 = vmatmul.mubr.bf16.gmra.mrb[0].mxu0 %v1806
      %v1978 = vpop.f32.mrb[0].mxu0
      %v1979 = vadd.f32 0.0, %v1978
      %v1980 = vpop.f32.mrb[0].mxu0
      %v1981 = vpop.f32.mrb[0].mxu0
      %v1982 = vadd.f32 0.0, %v1981
      %v1983 = vpop.f32.mrb[0].mxu0
      %1984 = vmatprep.mubr.bf16.mxu0 0
      %1985 = vmatmul.mubr.bf16.gmra.mrb[0].mxu0 %v1807
      %v1986 = vpop.f32.mrb[0].mxu0
      %v1987 = vadd.f32 0.0, %v1986
      %v1988 = vpop.f32.mrb[0].mxu0
      %v1989 = vpop.f32.mrb[0].mxu0
      %v1990 = vadd.f32 0.0, %v1989
      %v1991 = vpop.f32.mrb[0].mxu0
      %1992 = vmatprep.mubr.bf16.mxu0 0
      %1993 = vmatmul.mubr.bf16.gmra.mrb[0].mxu0 %v1808
      %v1994 = vpop.f32.mrb[0].mxu0
      %v1995 = vadd.f32 0.0, %v1994
      %v1996 = vpop.f32.mrb[0].mxu0
      %v1997 = vpop.f32.mrb[0].mxu0
      %v1998 = vadd.f32 0.0, %v1997
      %v1999 = vpop.f32.mrb[0].mxu0
      %2000 = vmatprep.mubr.bf16.mxu0 0
      %2001 = vmatmul.mubr.bf16.gmra.mrb[0].mxu0 %v1809
      %v2002 = vpop.f32.mrb[0].mxu0
      %v2003 = vadd.f32 0.0, %v2002
      %v2004 = vpop.f32.mrb[0].mxu0
      %v2005 = vpop.f32.mrb[0].mxu0
      %v2006 = vadd.f32 0.0, %v2005
      %v2007 = vpop.f32.mrb[0].mxu0
      %2008 = vmatprep.mubr.bf16.mxu0 0
      %2009 = vmatmul.mubr.bf16.gmra.mrb[0].mxu0 %v1810
      %v2010 = vpop.f32.mrb[0].mxu0
      %v2011 = vadd.f32 0.0, %v2010
      %v2012 = vpop.f32.mrb[0].mxu0
      %v2013 = vpop.f32.mrb[0].mxu0
      %v2014 = vadd.f32 0.0, %v2013
      %v2015 = vpop.f32.mrb[0].mxu0
      %2016 = vmatprep.mubr.bf16.mxu0 0
      %2017 = vmatmul.mubr.bf16.gmra.mrb[0].mxu0 %v1811
      %v2018 = vpop.f32.mrb[0].mxu0
      %v2019 = vadd.f32 0.0, %v2018
      %v2020 = vpop.f32.mrb[0].mxu0
      %v2021 = vpop.f32.mrb[0].mxu0
      %v2022 = vadd.f32 0.0, %v2021
      %v2023 = vpop.f32.mrb[0].mxu0
      %2024 = vmatprep.mubr.bf16.mxu0 0
      %2025 = vmatmul.mubr.bf16.gmra.mrb[0].mxu0 %v1812
      %v2026 = vpop.f32.mrb[0].mxu0
      %v2027 = vadd.f32 0.0, %v2026
      %v2028 = vpop.f32.mrb[0].mxu0
      %v2029 = vpop.f32.mrb[0].mxu0
      %v2030 = vadd.f32 0.0, %v2029
      %v2031 = vpop.f32.mrb[0].mxu0
      %2032 = vmatprep.mubr.bf16.mxu0 0
      %2033 = vmatmul.mubr.bf16.gmra.mrb[0].mxu0 %v1813
      %v2034 = vpop.f32.mrb[0].mxu0
      %v2035 = vadd.f32 0.0, %v2034
      %v2036 = vpop.f32.mrb[0].mxu0
      %v2037 = vpop.f32.mrb[0].mxu0
      %v2038 = vadd.f32 0.0, %v2037
      %v2039 = vpop.f32.mrb[0].mxu0
      %2040 = vmatprep.mubr.bf16.mxu0 0
      %2041 = vmatmul.mubr.bf16.gmra.mrb[0].mxu0 %v1814
      %v2042 = vpop.f32.mrb[0].mxu0
      %v2043 = vadd.f32 0.0, %v2042
      %v2044 = vpop.f32.mrb[0].mxu0
      %v2045 = vpop.f32.mrb[0].mxu0
      %v2046 = vadd.f32 0.0, %v2045
      %v2047 = vpop.f32.mrb[0].mxu0
      %2048 = vmatprep.mubr.bf16.mxu0 0
      %2049 = vmatmul.mubr.bf16.gmra.mrb[0].mxu0 %v1815
      %v2050 = vpop.f32.mrb[0].mxu0
      %v2051 = vadd.f32 0.0, %v2050
      %v2052 = vpop.f32.mrb[0].mxu0
      %v2053 = vpop.f32.mrb[0].mxu0
      %v2054 = vadd.f32 0.0, %v2053
      %v2055 = vpop.f32.mrb[0].mxu0
      %2056 = vmatprep.mubr.bf16.mxu0 0
      %2057 = vmatmul.mubr.bf16.gmra.mrb[0].mxu0 %v1816
      %v2058 = vpop.f32.mrb[0].mxu0
      %v2059 = vadd.f32 0.0, %v2058
      %v2060 = vpop.f32.mrb[0].mxu0
      %v2061 = vpop.f32.mrb[0].mxu0
      %v2062 = vadd.f32 0.0, %v2061
      %v2063 = vpop.f32.mrb[0].mxu0
      %2064 = vmatprep.mubr.bf16.mxu0 0
      %2065 = vmatmul.mubr.bf16.gmra.mrb[0].mxu0 %v1817
      %v2066 = vpop.f32.mrb[0].mxu0
      %v2067 = vadd.f32 0.0, %v2066
      %v2068 = vpop.f32.mrb[0].mxu0
      %v2069 = vpop.f32.mrb[0].mxu0
      %v2070 = vadd.f32 0.0, %v2069
      %v2071 = vpop.f32.mrb[0].mxu0
      %2072 = vmatprep.mubr.bf16.mxu0 0
      %2073 = vmatmul.mubr.bf16.gmra.mrb[0].mxu0 %v1818
      %v2074 = vpop.f32.mrb[0].mxu0
      %v2075 = vadd.f32 0.0, %v2074
      %v2076 = vpop.f32.mrb[0].mxu0
      %v2077 = vpop.f32.mrb[0].mxu0
      %v2078 = vadd.f32 0.0, %v2077
      %v2079 = vpop.f32.mrb[0].mxu0
      %2080 = vmatprep.mubr.bf16.mxu0 0
      %2081 = vmatmul.mubr.bf16.gmra.mrb[0].mxu0 %v1819
      %v2082 = vpop.f32.mrb[0].mxu0
      %v2083 = vadd.f32 0.0, %v2082
      %v2084 = vpop.f32.mrb[0].mxu0
      %v2085 = vpop.f32.mrb[0].mxu0
      %v2086 = vadd.f32 0.0, %v2085
      %v2087 = vpop.f32.mrb[0].mxu0
      %2088 = vmatprep.mubr.bf16.mxu0 0
      %2089 = vmatmul.mubr.bf16.gmra.mrb[0].mxu0 %v1820
      %v2090 = vpop.f32.mrb[0].mxu0
      %v2091 = vadd.f32 0.0, %v2090
      %v2092 = vpop.f32.mrb[0].mxu0
      %v2093 = vpop.f32.mrb[0].mxu0
      %v2094 = vadd.f32 0.0, %v2093
      %v2095 = vpop.f32.mrb[0].mxu0
      %2096 = vmatprep.mubr.bf16.mxu0 0
      %2097 = vmatmul.mubr.bf16.gmra.mrb[0].mxu0 %v1821
      %v2098 = vpop.f32.mrb[0].mxu0
      %v2099 = vadd.f32 0.0, %v2098
      %v2100 = vpop.f32.mrb[0].mxu0
      %v2101 = vpop.f32.mrb[0].mxu0
      %v2102 = vadd.f32 0.0, %v2101
      %v2103 = vpop.f32.mrb[0].mxu0
      %2104 = vmatprep.mubr.bf16.mxu0 0
      %2105 = vmatmul.mubr.bf16.gmra.mrb[0].mxu0 %v1822
      %v2106 = vpop.f32.mrb[0].mxu0
      %v2107 = vadd.f32 0.0, %v2106
      %v2108 = vpop.f32.mrb[0].mxu0
      %v2109 = vpop.f32.mrb[0].mxu0
      %v2110 = vadd.f32 0.0, %v2109
      %v2111 = vpop.f32.mrb[0].mxu0
      %2112 = vmatprep.mubr.bf16.mxu0 0
      %2113 = vmatmul.mubr.bf16.gmra.mrb[0].mxu0 %v1823
      %v2114 = vpop.f32.mrb[0].mxu0
      %v2115 = vadd.f32 0.0, %v2114
      %v2116 = vpop.f32.mrb[0].mxu0
      %v2117 = vpop.f32.mrb[0].mxu0
      %v2118 = vadd.f32 0.0, %v2117
      %v2119 = vpop.f32.mrb[0].mxu0
      %2120 = vdwg.mxu0
      %v2121 = vadd.f32 %v1591, %v1931
      %v2122 = vadd.f32 %v1592, %v1934
      %v2123 = vadd.f32 %v1593, %v1939
      %v2124 = vadd.f32 %v1594, %v1942
      %v2125 = vadd.f32 %v1595, %v1947
      %v2126 = vadd.f32 %v1596, %v1950
      %v2127 = vadd.f32 %v1597, %v1955
      %v2128 = vadd.f32 %v1598, %v1958
      %v2129 = vadd.f32 %v1599, %v1963
      %v2130 = vadd.f32 %v1600, %v1966
      %v2131 = vadd.f32 %v1601, %v1971
      %v2132 = vadd.f32 %v1602, %v1974
      %v2133 = vadd.f32 %v1603, %v1979
      %v2134 = vadd.f32 %v1604, %v1982
      %v2135 = vadd.f32 %v1605, %v1987
      %v2136 = vadd.f32 %v1606, %v1990
      %v2137 = vadd.f32 %v1607, %v1995
      %v2138 = vadd.f32 %v1608, %v1998
      %v2139 = vadd.f32 %v1609, %v2003
      %v2140 = vadd.f32 %v1610, %v2006
      %v2141 = vadd.f32 %v1611, %v2011
      %v2142 = vadd.f32 %v1612, %v2014
      %v2143 = vadd.f32 %v1613, %v2019
      %v2144 = vadd.f32 %v1614, %v2022
      %v2145 = vadd.f32 %v1615, %v2027
      %v2146 = vadd.f32 %v1616, %v2030
      %v2147 = vadd.f32 %v1617, %v2035
      %v2148 = vadd.f32 %v1618, %v2038
      %v2149 = vadd.f32 %v1619, %v2043
      %v2150 = vadd.f32 %v1620, %v2046
      %v2151 = vadd.f32 %v1621, %v2051
      %v2152 = vadd.f32 %v1622, %v2054
      %v2153 = vadd.f32 %v1623, %v2059
      %v2154 = vadd.f32 %v1624, %v2062
      %v2155 = vadd.f32 %v1625, %v2067
      %v2156 = vadd.f32 %v1626, %v2070
      %v2157 = vadd.f32 %v1627, %v2075
      %v2158 = vadd.f32 %v1628, %v2078
      %v2159 = vadd.f32 %v1629, %v2083
      %v2160 = vadd.f32 %v1630, %v2086
      %v2161 = vadd.f32 %v1631, %v2091
      %v2162 = vadd.f32 %v1632, %v2094
      %v2163 = vadd.f32 %v1633, %v2099
      %v2164 = vadd.f32 %v1634, %v2102
      %v2165 = vadd.f32 %v1635, %v2107
      %v2166 = vadd.f32 %v1636, %v2110
      %v2167 = vadd.f32 %v1637, %v2115
      %v2168 = vadd.f32 %v1638, %v2118
      %v2169 = vld [vmem:[%s209 + $0xc] sm:$0xf]
      %v2170 = vld [vmem:[%s209 + $0x10] sm:$0xf]
      %v2171 = vld [vmem:[%s209 + $0x14] sm:$0xf]
      %v2172 = vld [vmem:[%s209 + $0x18] sm:$0xf]
      %v2173 = vld [vmem:[%s209 + $0x1c] sm:$0xf]
      %v2174 = vld [vmem:[%s209 + $0x20] sm:$0xf]
      %v2175 = vld [vmem:[%s209 + $0x24] sm:$0xf]
      %v2176 = vld [vmem:[%s209 + $0x28] sm:$0xf]
      %v2177 = vld [vmem:[%s209 + $0x2c] sm:$0xf]
      %v2178 = vld [vmem:[%s209 + $0x30] sm:$0xf]
      %v2179 = vld [vmem:[%s209 + $0x34] sm:$0xf]
      %v2180 = vld [vmem:[%s209 + $0x38] sm:$0xf]
      %v2181 = vld [vmem:[%s209 + $0x3c] sm:$0xf]
      %v2182 = vld [vmem:[%s209 + $0x40] sm:$0xf]
      %v2183 = vld [vmem:[%s209 + $0x44] sm:$0xf]
      %v2184 = vld [vmem:[%s209 + $0x48] sm:$0xf]
      %v2185 = vld [vmem:[%s209 + $0x4c] sm:$0xf]
      %v2186 = vld [vmem:[%s209 + $0x50] sm:$0xf]
      %v2187 = vld [vmem:[%s209 + $0x54] sm:$0xf]
      %v2188 = vld [vmem:[%s209 + $0x58] sm:$0xf]
      %v2189 = vld [vmem:[%s209 + $0x5c] sm:$0xf]
      %v2190 = vld [vmem:[%s209 + $0x60] sm:$0xf]
      %v2191 = vld [vmem:[%s209 + $0x64] sm:$0xf]
      %v2192 = vld [vmem:[%s209 + $0x68] sm:$0xf]
      %v2193 = vld [vmem:[%s209 + $0x6c] sm:$0xf]
      %v2194 = vld [vmem:[%s209 + $0x70] sm:$0xf]
      %v2195 = vld [vmem:[%s209 + $0x74] sm:$0xf]
      %v2196 = vld [vmem:[%s209 + $0x78] sm:$0xf]
      %v2197 = vld [vmem:[%s209 + $0x7c] sm:$0xf]
      %v2198 = vld [vmem:[%s209 + $0x80] sm:$0xf]
      %v2199 = vld [vmem:[%s209 + $0x84] sm:$0xf]
      %v2200 = vld [vmem:[%s209 + $0x88] sm:$0xf]
      %v2201 = vld [vmem:[%s209 + $0x8c] sm:$0xf]
      %v2202 = vld [vmem:[%s209 + $0x90] sm:$0xf]
      %v2203 = vld [vmem:[%s209 + $0x94] sm:$0xf]
      %v2204 = vld [vmem:[%s209 + $0x98] sm:$0xf]
      %v2205 = vld [vmem:[%s209 + $0x9c] sm:$0xf]
      %v2206 = vld [vmem:[%s209 + $0xa0] sm:$0xf]
      %v2207 = vld [vmem:[%s209 + $0xa4] sm:$0xf]
      %v2208 = vld [vmem:[%s209 + $0xa8] sm:$0xf]
      %v2209 = vld [vmem:[%s209 + $0xac] sm:$0xf]
      %v2210 = vld [vmem:[%s209 + $0xb0] sm:$0xf]
      %v2211 = vld [vmem:[%s209 + $0xb4] sm:$0xf]
      %v2212 = vld [vmem:[%s209 + $0xb8] sm:$0xf]
      %v2213 = vld [vmem:[%s209 + $0xbc] sm:$0xf]
      %v2214 = vld [vmem:[%s209 + $0xc0] sm:$0xf]
      %v2215 = vld [vmem:[%s209 + $0xc4] sm:$0xf]
      %v2216 = vld [vmem:[%s209 + $0xc8] sm:$0xf]
      %v2217 = vld [vmem:[%s209 + $0xcc] sm:$0x1]
      %s2218 = scalar_lea.vmem %s1, 256
      %v2219 = vld [vmem:[%s2218] sm:$0xf]
      %v2220 = vld [vmem:[%s2218 + $0x4] sm:$0xf]
      %v2221 = vld [vmem:[%s2218 + $0x8] sm:$0xf]
      %v2222 = vld [vmem:[%s2218 + $0xc] sm:$0xf]
      %v2223 = vld [vmem:[%s2218 + $0x10] sm:$0xf]
      %v2224 = vld [vmem:[%s2218 + $0x14] sm:$0xf]
      %v2225 = vld [vmem:[%s2218 + $0x18] sm:$0xf]
      %v2226 = vld [vmem:[%s2218 + $0x1c] sm:$0xf]
      %v2227 = vld [vmem:[%s2218 + $0x20] sm:$0xf]
      %v2228 = vld [vmem:[%s2218 + $0x24] sm:$0xf]
      %v2229 = vld [vmem:[%s2218 + $0x28] sm:$0xf]
      %v2230 = vld [vmem:[%s2218 + $0x2c] sm:$0xf]
      %v2231 = vld [vmem:[%s2218 + $0x30] sm:$0xf]
      %v2232 = vld [vmem:[%s2218 + $0x34] sm:$0xf]
      %v2233 = vld [vmem:[%s2218 + $0x38] sm:$0xf]
      %v2234 = vld [vmem:[%s2218 + $0x3c] sm:$0xf]
      %v2284 = vunpack.c.l.b16 %v2169
      %v2285 = vunpack.c.l.b16 %v2170
      %v2286 = vunpack.c.l.b16 %v2171
      %v2287 = vunpack.c.l.b16 %v2172
      %v2288 = vunpack.c.l.b16 %v2173
      %v2289 = vunpack.c.l.b16 %v2174
      %v2290 = vunpack.c.l.b16 %v2175
      %v2291 = vunpack.c.l.b16 %v2176
      %v2292 = vunpack.c.l.b16 %v2177
      %v2293 = vunpack.c.l.b16 %v2178
      %v2294 = vunpack.c.l.b16 %v2179
      %v2295 = vunpack.c.l.b16 %v2180
      %v2296 = vunpack.c.l.b16 %v2181
      %v2297 = vunpack.c.l.b16 %v2182
      %v2298 = vunpack.c.l.b16 %v2183
      %v2299 = vunpack.c.l.b16 %v2184
      %v2300 = vunpack.c.l.b16 %v2185
      %v2301 = vunpack.c.l.b16 %v2186
      %v2302 = vunpack.c.l.b16 %v2187
      %v2303 = vunpack.c.l.b16 %v2188
      %v2304 = vunpack.c.l.b16 %v2189
      %v2305 = vunpack.c.l.b16 %v2190
      %v2306 = vunpack.c.l.b16 %v2191
      %v2307 = vunpack.c.l.b16 %v2192
      %v2308 = vunpack.c.l.b16 %v2193
      %v2309 = vunpack.c.l.b16 %v2194
      %v2310 = vunpack.c.l.b16 %v2195
      %v2311 = vunpack.c.l.b16 %v2196
      %v2312 = vunpack.c.l.b16 %v2197
      %v2313 = vunpack.c.l.b16 %v2198
      %v2314 = vunpack.c.l.b16 %v2199
      %v2315 = vunpack.c.l.b16 %v2200
      %v2316 = vunpack.c.l.b16 %v2201
      %v2317 = vunpack.c.l.b16 %v2202
      %v2318 = vunpack.c.l.b16 %v2203
      %v2319 = vunpack.c.l.b16 %v2204
      %v2320 = vunpack.c.l.b16 %v2205
      %v2321 = vunpack.c.l.b16 %v2206
      %v2322 = vunpack.c.l.b16 %v2207
      %v2323 = vunpack.c.l.b16 %v2208
      %v2324 = vunpack.c.l.b16 %v2209
      %v2325 = vunpack.c.l.b16 %v2210
      %v2326 = vunpack.c.l.b16 %v2211
      %v2327 = vunpack.c.l.b16 %v2212
      %v2328 = vunpack.c.l.b16 %v2213
      %v2329 = vunpack.c.l.b16 %v2214
      %v2330 = vunpack.c.l.b16 %v2215
      %v2331 = vunpack.c.l.b16 %v2216
      %v2332 = vunpack.c.l.b16 %v2217
      %v2333 = vpack.c.b16 %v2285, %v2284
      %v2334 = vpack.c.b16 %v2287, %v2286
      %v2335 = vpack.c.b16 %v2289, %v2288
      %v2336 = vpack.c.b16 %v2291, %v2290
      %v2337 = vpack.c.b16 %v2293, %v2292
      %v2338 = vpack.c.b16 %v2295, %v2294
      %v2339 = vpack.c.b16 %v2297, %v2296
      %v2340 = vpack.c.b16 %v2299, %v2298
      %v2341 = vpack.c.b16 %v2301, %v2300
      %v2342 = vpack.c.b16 %v2303, %v2302
      %v2343 = vpack.c.b16 %v2305, %v2304
      %v2344 = vpack.c.b16 %v2307, %v2306
      %v2345 = vpack.c.b16 %v2309, %v2308
      %v2346 = vpack.c.b16 %v2311, %v2310
      %v2347 = vpack.c.b16 %v2313, %v2312
      %v2348 = vpack.c.b16 %v2315, %v2314
      %v2349 = vpack.c.b16 %v2317, %v2316
      %v2350 = vpack.c.b16 %v2319, %v2318
      %v2351 = vpack.c.b16 %v2321, %v2320
      %v2352 = vpack.c.b16 %v2323, %v2322
      %v2353 = vpack.c.b16 %v2325, %v2324
      %v2354 = vpack.c.b16 %v2327, %v2326
      %v2355 = vpack.c.b16 %v2329, %v2328
      %v2356 = vpack.c.b16 %v2331, %v2330
      %v2357 = vpack.c.b16 %v2332, %v2332
      %v2359 = vshrl.u32 %v2333, 16
      %v2361 = vshll.u32 %v2333, 16
      %v2363 = vrot.slane %v2361, 1
      %v2364 = vor.u32 %v2359, %v2363
      %v2366 = vshll.u32 %v2334, 16
      %v2368 = vrot.slane %v2366, 1
      %v2369 = vsel %vm432, %v2364, %v2368
      %v2370 = vshrl.u32 %v2334, 16
      %v2372 = vor.u32 %v2370, %v2368
      %v2374 = vshll.u32 %v2335, 16
      %v2376 = vrot.slane %v2374, 1
      %v2377 = vsel %vm432, %v2372, %v2376
      %v2378 = vshrl.u32 %v2335, 16
      %v2380 = vor.u32 %v2378, %v2376
      %v2382 = vshll.u32 %v2336, 16
      %v2384 = vrot.slane %v2382, 1
      %v2385 = vsel %vm432, %v2380, %v2384
      %v2386 = vshrl.u32 %v2336, 16
      %v2388 = vor.u32 %v2386, %v2384
      %v2390 = vshll.u32 %v2337, 16
      %v2392 = vrot.slane %v2390, 1
      %v2393 = vsel %vm432, %v2388, %v2392
      %v2394 = vshrl.u32 %v2337, 16
      %v2396 = vor.u32 %v2394, %v2392
      %v2398 = vshll.u32 %v2338, 16
      %v2400 = vrot.slane %v2398, 1
      %v2401 = vsel %vm432, %v2396, %v2400
      %v2402 = vshrl.u32 %v2338, 16
      %v2404 = vor.u32 %v2402, %v2400
      %v2406 = vshll.u32 %v2339, 16
      %v2408 = vrot.slane %v2406, 1
      %v2409 = vsel %vm432, %v2404, %v2408
      %v2410 = vshrl.u32 %v2339, 16
      %v2412 = vor.u32 %v2410, %v2408
      %v2414 = vshll.u32 %v2340, 16
      %v2416 = vrot.slane %v2414, 1
      %v2417 = vsel %vm432, %v2412, %v2416
      %v2418 = vshrl.u32 %v2340, 16
      %v2420 = vor.u32 %v2418, %v2416
      %v2422 = vshll.u32 %v2341, 16
      %v2424 = vrot.slane %v2422, 1
      %v2425 = vsel %vm432, %v2420, %v2424
      %v2426 = vshrl.u32 %v2341, 16
      %v2428 = vor.u32 %v2426, %v2424
      %v2430 = vshll.u32 %v2342, 16
      %v2432 = vrot.slane %v2430, 1
      %v2433 = vsel %vm432, %v2428, %v2432
      %v2434 = vshrl.u32 %v2342, 16
      %v2436 = vor.u32 %v2434, %v2432
      %v2438 = vshll.u32 %v2343, 16
      %v2440 = vrot.slane %v2438, 1
      %v2441 = vsel %vm432, %v2436, %v2440
      %v2442 = vshrl.u32 %v2343, 16
      %v2444 = vor.u32 %v2442, %v2440
      %v2446 = vshll.u32 %v2344, 16
      %v2448 = vrot.slane %v2446, 1
      %v2449 = vsel %vm432, %v2444, %v2448
      %v2450 = vshrl.u32 %v2344, 16
      %v2452 = vor.u32 %v2450, %v2448
      %v2454 = vshll.u32 %v2345, 16
      %v2456 = vrot.slane %v2454, 1
      %v2457 = vsel %vm432, %v2452, %v2456
      %v2458 = vshrl.u32 %v2345, 16
      %v2460 = vor.u32 %v2458, %v2456
      %v2462 = vshll.u32 %v2346, 16
      %v2464 = vrot.slane %v2462, 1
      %v2465 = vsel %vm432, %v2460, %v2464
      %v2466 = vshrl.u32 %v2346, 16
      %v2468 = vor.u32 %v2466, %v2464
      %v2470 = vshll.u32 %v2347, 16
      %v2472 = vrot.slane %v2470, 1
      %v2473 = vsel %vm432, %v2468, %v2472
      %v2474 = vshrl.u32 %v2347, 16
      %v2476 = vor.u32 %v2474, %v2472
      %v2478 = vshll.u32 %v2348, 16
      %v2480 = vrot.slane %v2478, 1
      %v2481 = vsel %vm432, %v2476, %v2480
      %v2482 = vshrl.u32 %v2348, 16
      %v2484 = vor.u32 %v2482, %v2480
      %v2486 = vshll.u32 %v2349, 16
      %v2488 = vrot.slane %v2486, 1
      %v2489 = vsel %vm432, %v2484, %v2488
      %v2490 = vshrl.u32 %v2349, 16
      %v2492 = vor.u32 %v2490, %v2488
      %v2494 = vshll.u32 %v2350, 16
      %v2496 = vrot.slane %v2494, 1
      %v2497 = vsel %vm432, %v2492, %v2496
      %v2498 = vshrl.u32 %v2350, 16
      %v2500 = vor.u32 %v2498, %v2496
      %v2502 = vshll.u32 %v2351, 16
      %v2504 = vrot.slane %v2502, 1
      %v2505 = vsel %vm432, %v2500, %v2504
      %v2506 = vshrl.u32 %v2351, 16
      %v2508 = vor.u32 %v2506, %v2504
      %v2510 = vshll.u32 %v2352, 16
      %v2512 = vrot.slane %v2510, 1
      %v2513 = vsel %vm432, %v2508, %v2512
      %v2514 = vshrl.u32 %v2352, 16
      %v2516 = vor.u32 %v2514, %v2512
      %v2518 = vshll.u32 %v2353, 16
      %v2520 = vrot.slane %v2518, 1
      %v2521 = vsel %vm432, %v2516, %v2520
      %v2522 = vshrl.u32 %v2353, 16
      %v2524 = vor.u32 %v2522, %v2520
      %v2526 = vshll.u32 %v2354, 16
      %v2528 = vrot.slane %v2526, 1
      %v2529 = vsel %vm432, %v2524, %v2528
      %v2530 = vshrl.u32 %v2354, 16
      %v2532 = vor.u32 %v2530, %v2528
      %v2534 = vshll.u32 %v2355, 16
      %v2536 = vrot.slane %v2534, 1
      %v2537 = vsel %vm432, %v2532, %v2536
      %v2538 = vshrl.u32 %v2355, 16
      %v2540 = vor.u32 %v2538, %v2536
      %v2542 = vshll.u32 %v2356, 16
      %v2544 = vrot.slane %v2542, 1
      %v2545 = vsel %vm432, %v2540, %v2544
      %v2546 = vshrl.u32 %v2356, 16
      %v2548 = vor.u32 %v2546, %v2544
      %v2550 = vshll.u32 %v2357, 16
      %v2552 = vrot.slane %v2550, 1
      %v2553 = vsel %vm432, %v2548, %v2552
      %v2594 = vunpack.c.l.b16 %v2219
      %v2595 = vunpack.c.l.b16 %v2220
      %v2596 = vunpack.c.l.b16 %v2221
      %v2597 = vunpack.c.l.b16 %v2222
      %v2598 = vunpack.c.l.b16 %v2223
      %v2599 = vunpack.c.l.b16 %v2224
      %v2600 = vunpack.c.l.b16 %v2225
      %v2601 = vunpack.c.l.b16 %v2226
      %v2602 = vunpack.c.l.b16 %v2227
      %v2603 = vunpack.c.l.b16 %v2228
      %v2604 = vunpack.c.l.b16 %v2229
      %v2605 = vunpack.c.l.b16 %v2230
      %v2606 = vunpack.c.l.b16 %v2231
      %v2607 = vunpack.c.l.b16 %v2232
      %v2608 = vunpack.c.l.b16 %v2233
      %v2609 = vunpack.c.l.b16 %v2234
      %v2610 = vpack.c.b16 %v2595, %v2594
      %v2611 = vpack.c.b16 %v2597, %v2596
      %v2612 = vpack.c.b16 %v2599, %v2598
      %v2613 = vpack.c.b16 %v2601, %v2600
      %v2614 = vpack.c.b16 %v2603, %v2602
      %v2615 = vpack.c.b16 %v2605, %v2604
      %v2616 = vpack.c.b16 %v2607, %v2606
      %v2617 = vpack.c.b16 %v2609, %v2608
      %2626 = vmatprep.subr.bf16.mxu0 0
      %2627 = vmatpush1.bf16.msra.mxu0 %v2610
      %2628 = vmatprep.subr.bf16.mxu0 0
      %2629 = vmatpush1.bf16.msra.mxu0 %v2611
      %2630 = vmatprep.subr.bf16.mxu0 0
      %2631 = vmatpush1.bf16.msra.mxu0 %v2612
      %2632 = vmatprep.subr.bf16.mxu0 0
      %2633 = vmatpush1.bf16.msra.mxu0 %v2613
      %2634 = vmatprep.subr.bf16.mxu0 0
      %2635 = vmatpush1.bf16.msra.mxu0 %v2614
      %2636 = vmatprep.subr.bf16.mxu0 0
      %2637 = vmatpush1.bf16.msra.mxu0 %v2615
      %2638 = vmatprep.subr.bf16.mxu0 0
      %2639 = vmatpush1.bf16.msra.mxu0 %v2616
      %2640 = vmatprep.subr.bf16.mxu0 0
      %2641 = vmatpush1.bf16.msra.mxu0 %v2617
      %2642 = vmatprep.subr.bf16.mxu0 0
      %2643 = vmatpush1.bf16.msra.mxu0 0
      %2644 = vmatprep.subr.bf16.mxu0 0
      %2645 = vmatpush1.bf16.msra.mxu0 0
      %2646 = vmatprep.subr.bf16.mxu0 0
      %2647 = vmatpush1.bf16.msra.mxu0 0
      %2648 = vmatprep.subr.bf16.mxu0 0
      %2649 = vmatpush1.bf16.msra.mxu0 0
      %2650 = vmatprep.subr.bf16.mxu0 0
      %2651 = vmatpush1.bf16.msra.mxu0 0
      %2652 = vmatprep.subr.bf16.mxu0 0
      %2653 = vmatpush1.bf16.msra.mxu0 0
      %2654 = vmatprep.subr.bf16.mxu0 0
      %2655 = vmatpush1.bf16.msra.mxu0 0
      %2656 = vmatprep.subr.bf16.mxu0 0
      %2657 = vmatpush1.bf16.msra.mxu0 0
      %2658 = vmatprep.mubr.bf16.mxu0 0
      %2659 = vmatmul.mubr.bf16.gmra.mrb[0].mxu0 %v2369
      %v2660 = vpop.f32.mrb[0].mxu0
      %v2661 = vadd.f32 0.0, %v2660
      %v2662 = vpop.f32.mrb[0].mxu0
      %v2663 = vpop.f32.mrb[0].mxu0
      %v2664 = vadd.f32 0.0, %v2663
      %v2665 = vpop.f32.mrb[0].mxu0
      %2666 = vmatprep.mubr.bf16.mxu0 0
      %2667 = vmatmul.mubr.bf16.gmra.mrb[0].mxu0 %v2377
      %v2668 = vpop.f32.mrb[0].mxu0
      %v2669 = vadd.f32 0.0, %v2668
      %v2670 = vpop.f32.mrb[0].mxu0
      %v2671 = vpop.f32.mrb[0].mxu0
      %v2672 = vadd.f32 0.0, %v2671
      %v2673 = vpop.f32.mrb[0].mxu0
      %2674 = vmatprep.mubr.bf16.mxu0 0
      %2675 = vmatmul.mubr.bf16.gmra.mrb[0].mxu0 %v2385
      %v2676 = vpop.f32.mrb[0].mxu0
      %v2677 = vadd.f32 0.0, %v2676
      %v2678 = vpop.f32.mrb[0].mxu0
      %v2679 = vpop.f32.mrb[0].mxu0
      %v2680 = vadd.f32 0.0, %v2679
      %v2681 = vpop.f32.mrb[0].mxu0
      %2682 = vmatprep.mubr.bf16.mxu0 0
      %2683 = vmatmul.mubr.bf16.gmra.mrb[0].mxu0 %v2393
      %v2684 = vpop.f32.mrb[0].mxu0
      %v2685 = vadd.f32 0.0, %v2684
      %v2686 = vpop.f32.mrb[0].mxu0
      %v2687 = vpop.f32.mrb[0].mxu0
      %v2688 = vadd.f32 0.0, %v2687
      %v2689 = vpop.f32.mrb[0].mxu0
      %2690 = vmatprep.mubr.bf16.mxu0 0
      %2691 = vmatmul.mubr.bf16.gmra.mrb[0].mxu0 %v2401
      %v2692 = vpop.f32.mrb[0].mxu0
      %v2693 = vadd.f32 0.0, %v2692
      %v2694 = vpop.f32.mrb[0].mxu0
      %v2695 = vpop.f32.mrb[0].mxu0
      %v2696 = vadd.f32 0.0, %v2695
      %v2697 = vpop.f32.mrb[0].mxu0
      %2698 = vmatprep.mubr.bf16.mxu0 0
      %2699 = vmatmul.mubr.bf16.gmra.mrb[0].mxu0 %v2409
      %v2700 = vpop.f32.mrb[0].mxu0
      %v2701 = vadd.f32 0.0, %v2700
      %v2702 = vpop.f32.mrb[0].mxu0
      %v2703 = vpop.f32.mrb[0].mxu0
      %v2704 = vadd.f32 0.0, %v2703
      %v2705 = vpop.f32.mrb[0].mxu0
      %2706 = vmatprep.mubr.bf16.mxu0 0
      %2707 = vmatmul.mubr.bf16.gmra.mrb[0].mxu0 %v2417
      %v2708 = vpop.f32.mrb[0].mxu0
      %v2709 = vadd.f32 0.0, %v2708
      %v2710 = vpop.f32.mrb[0].mxu0
      %v2711 = vpop.f32.mrb[0].mxu0
      %v2712 = vadd.f32 0.0, %v2711
      %v2713 = vpop.f32.mrb[0].mxu0
      %2714 = vmatprep.mubr.bf16.mxu0 0
      %2715 = vmatmul.mubr.bf16.gmra.mrb[0].mxu0 %v2425
      %v2716 = vpop.f32.mrb[0].mxu0
      %v2717 = vadd.f32 0.0, %v2716
      %v2718 = vpop.f32.mrb[0].mxu0
      %v2719 = vpop.f32.mrb[0].mxu0
      %v2720 = vadd.f32 0.0, %v2719
      %v2721 = vpop.f32.mrb[0].mxu0
      %2722 = vmatprep.mubr.bf16.mxu0 0
      %2723 = vmatmul.mubr.bf16.gmra.mrb[0].mxu0 %v2433
      %v2724 = vpop.f32.mrb[0].mxu0
      %v2725 = vadd.f32 0.0, %v2724
      %v2726 = vpop.f32.mrb[0].mxu0
      %v2727 = vpop.f32.mrb[0].mxu0
      %v2728 = vadd.f32 0.0, %v2727
      %v2729 = vpop.f32.mrb[0].mxu0
      %2730 = vmatprep.mubr.bf16.mxu0 0
      %2731 = vmatmul.mubr.bf16.gmra.mrb[0].mxu0 %v2441
      %v2732 = vpop.f32.mrb[0].mxu0
      %v2733 = vadd.f32 0.0, %v2732
      %v2734 = vpop.f32.mrb[0].mxu0
      %v2735 = vpop.f32.mrb[0].mxu0
      %v2736 = vadd.f32 0.0, %v2735
      %v2737 = vpop.f32.mrb[0].mxu0
      %2738 = vmatprep.mubr.bf16.mxu0 0
      %2739 = vmatmul.mubr.bf16.gmra.mrb[0].mxu0 %v2449
      %v2740 = vpop.f32.mrb[0].mxu0
      %v2741 = vadd.f32 0.0, %v2740
      %v2742 = vpop.f32.mrb[0].mxu0
      %v2743 = vpop.f32.mrb[0].mxu0
      %v2744 = vadd.f32 0.0, %v2743
      %v2745 = vpop.f32.mrb[0].mxu0
      %2746 = vmatprep.mubr.bf16.mxu0 0
      %2747 = vmatmul.mubr.bf16.gmra.mrb[0].mxu0 %v2457
      %v2748 = vpop.f32.mrb[0].mxu0
      %v2749 = vadd.f32 0.0, %v2748
      %v2750 = vpop.f32.mrb[0].mxu0
      %v2751 = vpop.f32.mrb[0].mxu0
      %v2752 = vadd.f32 0.0, %v2751
      %v2753 = vpop.f32.mrb[0].mxu0
      %2754 = vmatprep.mubr.bf16.mxu0 0
      %2755 = vmatmul.mubr.bf16.gmra.mrb[0].mxu0 %v2465
      %v2756 = vpop.f32.mrb[0].mxu0
      %v2757 = vadd.f32 0.0, %v2756
      %v2758 = vpop.f32.mrb[0].mxu0
      %v2759 = vpop.f32.mrb[0].mxu0
      %v2760 = vadd.f32 0.0, %v2759
      %v2761 = vpop.f32.mrb[0].mxu0
      %2762 = vmatprep.mubr.bf16.mxu0 0
      %2763 = vmatmul.mubr.bf16.gmra.mrb[0].mxu0 %v2473
      %v2764 = vpop.f32.mrb[0].mxu0
      %v2765 = vadd.f32 0.0, %v2764
      %v2766 = vpop.f32.mrb[0].mxu0
      %v2767 = vpop.f32.mrb[0].mxu0
      %v2768 = vadd.f32 0.0, %v2767
      %v2769 = vpop.f32.mrb[0].mxu0
      %2770 = vmatprep.mubr.bf16.mxu0 0
      %2771 = vmatmul.mubr.bf16.gmra.mrb[0].mxu0 %v2481
      %v2772 = vpop.f32.mrb[0].mxu0
      %v2773 = vadd.f32 0.0, %v2772
      %v2774 = vpop.f32.mrb[0].mxu0
      %v2775 = vpop.f32.mrb[0].mxu0
      %v2776 = vadd.f32 0.0, %v2775
      %v2777 = vpop.f32.mrb[0].mxu0
      %2778 = vmatprep.mubr.bf16.mxu0 0
      %2779 = vmatmul.mubr.bf16.gmra.mrb[0].mxu0 %v2489
      %v2780 = vpop.f32.mrb[0].mxu0
      %v2781 = vadd.f32 0.0, %v2780
      %v2782 = vpop.f32.mrb[0].mxu0
      %v2783 = vpop.f32.mrb[0].mxu0
      %v2784 = vadd.f32 0.0, %v2783
      %v2785 = vpop.f32.mrb[0].mxu0
      %2786 = vmatprep.mubr.bf16.mxu0 0
      %2787 = vmatmul.mubr.bf16.gmra.mrb[0].mxu0 %v2497
      %v2788 = vpop.f32.mrb[0].mxu0
      %v2789 = vadd.f32 0.0, %v2788
      %v2790 = vpop.f32.mrb[0].mxu0
      %v2791 = vpop.f32.mrb[0].mxu0
      %v2792 = vadd.f32 0.0, %v2791
      %v2793 = vpop.f32.mrb[0].mxu0
      %2794 = vmatprep.mubr.bf16.mxu0 0
      %2795 = vmatmul.mubr.bf16.gmra.mrb[0].mxu0 %v2505
      %v2796 = vpop.f32.mrb[0].mxu0
      %v2797 = vadd.f32 0.0, %v2796
      %v2798 = vpop.f32.mrb[0].mxu0
      %v2799 = vpop.f32.mrb[0].mxu0
      %v2800 = vadd.f32 0.0, %v2799
      %v2801 = vpop.f32.mrb[0].mxu0
      %2802 = vmatprep.mubr.bf16.mxu0 0
      %2803 = vmatmul.mubr.bf16.gmra.mrb[0].mxu0 %v2513
      %v2804 = vpop.f32.mrb[0].mxu0
      %v2805 = vadd.f32 0.0, %v2804
      %v2806 = vpop.f32.mrb[0].mxu0
      %v2807 = vpop.f32.mrb[0].mxu0
      %v2808 = vadd.f32 0.0, %v2807
      %v2809 = vpop.f32.mrb[0].mxu0
      %2810 = vmatprep.mubr.bf16.mxu0 0
      %2811 = vmatmul.mubr.bf16.gmra.mrb[0].mxu0 %v2521
      %v2812 = vpop.f32.mrb[0].mxu0
      %v2813 = vadd.f32 0.0, %v2812
      %v2814 = vpop.f32.mrb[0].mxu0
      %v2815 = vpop.f32.mrb[0].mxu0
      %v2816 = vadd.f32 0.0, %v2815
      %v2817 = vpop.f32.mrb[0].mxu0
      %2818 = vmatprep.mubr.bf16.mxu0 0
      %2819 = vmatmul.mubr.bf16.gmra.mrb[0].mxu0 %v2529
      %v2820 = vpop.f32.mrb[0].mxu0
      %v2821 = vadd.f32 0.0, %v2820
      %v2822 = vpop.f32.mrb[0].mxu0
      %v2823 = vpop.f32.mrb[0].mxu0
      %v2824 = vadd.f32 0.0, %v2823
      %v2825 = vpop.f32.mrb[0].mxu0
      %2826 = vmatprep.mubr.bf16.mxu0 0
      %2827 = vmatmul.mubr.bf16.gmra.mrb[0].mxu0 %v2537
      %v2828 = vpop.f32.mrb[0].mxu0
      %v2829 = vadd.f32 0.0, %v2828
      %v2830 = vpop.f32.mrb[0].mxu0
      %v2831 = vpop.f32.mrb[0].mxu0
      %v2832 = vadd.f32 0.0, %v2831
      %v2833 = vpop.f32.mrb[0].mxu0
      %2834 = vmatprep.mubr.bf16.mxu0 0
      %2835 = vmatmul.mubr.bf16.gmra.mrb[0].mxu0 %v2545
      %v2836 = vpop.f32.mrb[0].mxu0
      %v2837 = vadd.f32 0.0, %v2836
      %v2838 = vpop.f32.mrb[0].mxu0
      %v2839 = vpop.f32.mrb[0].mxu0
      %v2840 = vadd.f32 0.0, %v2839
      %v2841 = vpop.f32.mrb[0].mxu0
      %2842 = vmatprep.mubr.bf16.mxu0 0
      %2843 = vmatmul.mubr.bf16.gmra.mrb[0].mxu0 %v2553
      %v2844 = vpop.f32.mrb[0].mxu0
      %v2845 = vadd.f32 0.0, %v2844
      %v2846 = vpop.f32.mrb[0].mxu0
      %v2847 = vpop.f32.mrb[0].mxu0
      %v2848 = vadd.f32 0.0, %v2847
      %v2849 = vpop.f32.mrb[0].mxu0
      %2850 = vdwg.mxu0
      %v2851 = vadd.f32 %v2121, %v2661
      %v2852 = vadd.f32 %v2122, %v2664
      %v2853 = vadd.f32 %v2123, %v2669
      %v2854 = vadd.f32 %v2124, %v2672
      %v2855 = vadd.f32 %v2125, %v2677
      %v2856 = vadd.f32 %v2126, %v2680
      %v2857 = vadd.f32 %v2127, %v2685
      %v2858 = vadd.f32 %v2128, %v2688
      %v2859 = vadd.f32 %v2129, %v2693
      %v2860 = vadd.f32 %v2130, %v2696
      %v2861 = vadd.f32 %v2131, %v2701
      %v2862 = vadd.f32 %v2132, %v2704
      %v2863 = vadd.f32 %v2133, %v2709
      %v2864 = vadd.f32 %v2134, %v2712
      %v2865 = vadd.f32 %v2135, %v2717
      %v2866 = vadd.f32 %v2136, %v2720
      %v2867 = vadd.f32 %v2137, %v2725
      %v2868 = vadd.f32 %v2138, %v2728
      %v2869 = vadd.f32 %v2139, %v2733
      %v2870 = vadd.f32 %v2140, %v2736
      %v2871 = vadd.f32 %v2141, %v2741
      %v2872 = vadd.f32 %v2142, %v2744
      %v2873 = vadd.f32 %v2143, %v2749
      %v2874 = vadd.f32 %v2144, %v2752
      %v2875 = vadd.f32 %v2145, %v2757
      %v2876 = vadd.f32 %v2146, %v2760
      %v2877 = vadd.f32 %v2147, %v2765
      %v2878 = vadd.f32 %v2148, %v2768
      %v2879 = vadd.f32 %v2149, %v2773
      %v2880 = vadd.f32 %v2150, %v2776
      %v2881 = vadd.f32 %v2151, %v2781
      %v2882 = vadd.f32 %v2152, %v2784
      %v2883 = vadd.f32 %v2153, %v2789
      %v2884 = vadd.f32 %v2154, %v2792
      %v2885 = vadd.f32 %v2155, %v2797
      %v2886 = vadd.f32 %v2156, %v2800
      %v2887 = vadd.f32 %v2157, %v2805
      %v2888 = vadd.f32 %v2158, %v2808
      %v2889 = vadd.f32 %v2159, %v2813
      %v2890 = vadd.f32 %v2160, %v2816
      %v2891 = vadd.f32 %v2161, %v2821
      %v2892 = vadd.f32 %v2162, %v2824
      %v2893 = vadd.f32 %v2163, %v2829
      %v2894 = vadd.f32 %v2164, %v2832
      %v2895 = vadd.f32 %v2165, %v2837
      %v2896 = vadd.f32 %v2166, %v2840
      %v2897 = vadd.f32 %v2167, %v2845
      %v2898 = vadd.f32 %v2168, %v2848
      %v2899 = vld [vmem:[%s209 + $0xc] sm:$0xe]
      %s2900 = scalar_lea.vmem %s1, 320
      %v2901 = vld [vmem:[%s2900] sm:$0xf]
      %v2902 = vld [vmem:[%s2900 + $0x4] sm:$0xf]
      %v2903 = vld [vmem:[%s2900 + $0x8] sm:$0xf]
      %v2904 = vld [vmem:[%s2900 + $0xc] sm:$0xf]
      %v2905 = vld [vmem:[%s2900 + $0x10] sm:$0xf]
      %v2906 = vld [vmem:[%s2900 + $0x14] sm:$0xf]
      %v2907 = vld [vmem:[%s2900 + $0x18] sm:$0xf]
      %v2908 = vld [vmem:[%s2900 + $0x1c] sm:$0xf]
      %v2909 = vld [vmem:[%s2900 + $0x20] sm:$0xf]
      %v2910 = vld [vmem:[%s2900 + $0x24] sm:$0xf]
      %v2911 = vld [vmem:[%s2900 + $0x28] sm:$0xf]
      %v2912 = vld [vmem:[%s2900 + $0x2c] sm:$0xf]
      %v2913 = vld [vmem:[%s2900 + $0x30] sm:$0xf]
      %v2914 = vld [vmem:[%s2900 + $0x34] sm:$0xf]
      %v2915 = vld [vmem:[%s2900 + $0x38] sm:$0xf]
      %v2916 = vld [vmem:[%s2900 + $0x3c] sm:$0xf]
      %v2918 = vunpack.c.l.b16 %v2899
      %v2919 = vpack.c.b16 %v2285, %v2918
      %v2920 = vrot.slane %v2919, 1
      %v2921 = vrot.slane %v2334, 1
      %v2922 = vsel %vm1244, %v2920, %v2921
      %v2923 = vrot.slane %v2335, 1
      %v2924 = vsel %vm1244, %v2921, %v2923
      %v2925 = vrot.slane %v2336, 1
      %v2926 = vsel %vm1244, %v2923, %v2925
      %v2927 = vrot.slane %v2337, 1
      %v2928 = vsel %vm1244, %v2925, %v2927
      %v2929 = vrot.slane %v2338, 1
      %v2930 = vsel %vm1244, %v2927, %v2929
      %v2931 = vrot.slane %v2339, 1
      %v2932 = vsel %vm1244, %v2929, %v2931
      %v2933 = vrot.slane %v2340, 1
      %v2934 = vsel %vm1244, %v2931, %v2933
      %v2935 = vrot.slane %v2341, 1
      %v2936 = vsel %vm1244, %v2933, %v2935
      %v2937 = vrot.slane %v2342, 1
      %v2938 = vsel %vm1244, %v2935, %v2937
      %v2939 = vrot.slane %v2343, 1
      %v2940 = vsel %vm1244, %v2937, %v2939
      %v2941 = vrot.slane %v2344, 1
      %v2942 = vsel %vm1244, %v2939, %v2941
      %v2943 = vrot.slane %v2345, 1
      %v2944 = vsel %vm1244, %v2941, %v2943
      %v2945 = vrot.slane %v2346, 1
      %v2946 = vsel %vm1244, %v2943, %v2945
      %v2947 = vrot.slane %v2347, 1
      %v2948 = vsel %vm1244, %v2945, %v2947
      %v2949 = vrot.slane %v2348, 1
      %v2950 = vsel %vm1244, %v2947, %v2949
      %v2951 = vrot.slane %v2349, 1
      %v2952 = vsel %vm1244, %v2949, %v2951
      %v2953 = vrot.slane %v2350, 1
      %v2954 = vsel %vm1244, %v2951, %v2953
      %v2955 = vrot.slane %v2351, 1
      %v2956 = vsel %vm1244, %v2953, %v2955
      %v2957 = vrot.slane %v2352, 1
      %v2958 = vsel %vm1244, %v2955, %v2957
      %v2959 = vrot.slane %v2353, 1
      %v2960 = vsel %vm1244, %v2957, %v2959
      %v2961 = vrot.slane %v2354, 1
      %v2962 = vsel %vm1244, %v2959, %v2961
      %v2963 = vrot.slane %v2355, 1
      %v2964 = vsel %vm1244, %v2961, %v2963
      %v2965 = vrot.slane %v2356, 1
      %v2966 = vsel %vm1244, %v2963, %v2965
      %v2967 = vrot.slane %v2357, 1
      %v2968 = vsel %vm1244, %v2965, %v2967
      %v3009 = vunpack.c.l.b16 %v2901
      %v3010 = vunpack.c.l.b16 %v2902
      %v3011 = vunpack.c.l.b16 %v2903
      %v3012 = vunpack.c.l.b16 %v2904
      %v3013 = vunpack.c.l.b16 %v2905
      %v3014 = vunpack.c.l.b16 %v2906
      %v3015 = vunpack.c.l.b16 %v2907
      %v3016 = vunpack.c.l.b16 %v2908
      %v3017 = vunpack.c.l.b16 %v2909
      %v3018 = vunpack.c.l.b16 %v2910
      %v3019 = vunpack.c.l.b16 %v2911
      %v3020 = vunpack.c.l.b16 %v2912
      %v3021 = vunpack.c.l.b16 %v2913
      %v3022 = vunpack.c.l.b16 %v2914
      %v3023 = vunpack.c.l.b16 %v2915
      %v3024 = vunpack.c.l.b16 %v2916
      %v3025 = vpack.c.b16 %v3010, %v3009
      %v3026 = vpack.c.b16 %v3012, %v3011
      %v3027 = vpack.c.b16 %v3014, %v3013
      %v3028 = vpack.c.b16 %v3016, %v3015
      %v3029 = vpack.c.b16 %v3018, %v3017
      %v3030 = vpack.c.b16 %v3020, %v3019
      %v3031 = vpack.c.b16 %v3022, %v3021
      %v3032 = vpack.c.b16 %v3024, %v3023
      %3041 = vmatprep.subr.bf16.mxu0 0
      %3042 = vmatpush1.bf16.msra.mxu0 %v3025
      %3043 = vmatprep.subr.bf16.mxu0 0
      %3044 = vmatpush1.bf16.msra.mxu0 %v3026
      %3045 = vmatprep.subr.bf16.mxu0 0
      %3046 = vmatpush1.bf16.msra.mxu0 %v3027
      %3047 = vmatprep.subr.bf16.mxu0 0
      %3048 = vmatpush1.bf16.msra.mxu0 %v3028
      %3049 = vmatprep.subr.bf16.mxu0 0
      %3050 = vmatpush1.bf16.msra.mxu0 %v3029
      %3051 = vmatprep.subr.bf16.mxu0 0
      %3052 = vmatpush1.bf16.msra.mxu0 %v3030
      %3053 = vmatprep.subr.bf16.mxu0 0
      %3054 = vmatpush1.bf16.msra.mxu0 %v3031
      %3055 = vmatprep.subr.bf16.mxu0 0
      %3056 = vmatpush1.bf16.msra.mxu0 %v3032
      %3057 = vmatprep.subr.bf16.mxu0 0
      %3058 = vmatpush1.bf16.msra.mxu0 0
      %3059 = vmatprep.subr.bf16.mxu0 0
      %3060 = vmatpush1.bf16.msra.mxu0 0
      %3061 = vmatprep.subr.bf16.mxu0 0
      %3062 = vmatpush1.bf16.msra.mxu0 0
      %3063 = vmatprep.subr.bf16.mxu0 0
      %3064 = vmatpush1.bf16.msra.mxu0 0
      %3065 = vmatprep.subr.bf16.mxu0 0
      %3066 = vmatpush1.bf16.msra.mxu0 0
      %3067 = vmatprep.subr.bf16.mxu0 0
      %3068 = vmatpush1.bf16.msra.mxu0 0
      %3069 = vmatprep.subr.bf16.mxu0 0
      %3070 = vmatpush1.bf16.msra.mxu0 0
      %3071 = vmatprep.subr.bf16.mxu0 0
      %3072 = vmatpush1.bf16.msra.mxu0 0
      %3073 = vmatprep.mubr.bf16.mxu0 0
      %3074 = vmatmul.mubr.bf16.gmra.mrb[0].mxu0 %v2922
      %v3075 = vpop.f32.mrb[0].mxu0
      %v3076 = vadd.f32 0.0, %v3075
      %v3077 = vpop.f32.mrb[0].mxu0
      %v3078 = vpop.f32.mrb[0].mxu0
      %v3079 = vadd.f32 0.0, %v3078
      %v3080 = vpop.f32.mrb[0].mxu0
      %3081 = vmatprep.mubr.bf16.mxu0 0
      %3082 = vmatmul.mubr.bf16.gmra.mrb[0].mxu0 %v2924
      %v3083 = vpop.f32.mrb[0].mxu0
      %v3084 = vadd.f32 0.0, %v3083
      %v3085 = vpop.f32.mrb[0].mxu0
      %v3086 = vpop.f32.mrb[0].mxu0
      %v3087 = vadd.f32 0.0, %v3086
      %v3088 = vpop.f32.mrb[0].mxu0
      %3089 = vmatprep.mubr.bf16.mxu0 0
      %3090 = vmatmul.mubr.bf16.gmra.mrb[0].mxu0 %v2926
      %v3091 = vpop.f32.mrb[0].mxu0
      %v3092 = vadd.f32 0.0, %v3091
      %v3093 = vpop.f32.mrb[0].mxu0
      %v3094 = vpop.f32.mrb[0].mxu0
      %v3095 = vadd.f32 0.0, %v3094
      %v3096 = vpop.f32.mrb[0].mxu0
      %3097 = vmatprep.mubr.bf16.mxu0 0
      %3098 = vmatmul.mubr.bf16.gmra.mrb[0].mxu0 %v2928
      %v3099 = vpop.f32.mrb[0].mxu0
      %v3100 = vadd.f32 0.0, %v3099
      %v3101 = vpop.f32.mrb[0].mxu0
      %v3102 = vpop.f32.mrb[0].mxu0
      %v3103 = vadd.f32 0.0, %v3102
      %v3104 = vpop.f32.mrb[0].mxu0
      %3105 = vmatprep.mubr.bf16.mxu0 0
      %3106 = vmatmul.mubr.bf16.gmra.mrb[0].mxu0 %v2930
      %v3107 = vpop.f32.mrb[0].mxu0
      %v3108 = vadd.f32 0.0, %v3107
      %v3109 = vpop.f32.mrb[0].mxu0
      %v3110 = vpop.f32.mrb[0].mxu0
      %v3111 = vadd.f32 0.0, %v3110
      %v3112 = vpop.f32.mrb[0].mxu0
      %3113 = vmatprep.mubr.bf16.mxu0 0
      %3114 = vmatmul.mubr.bf16.gmra.mrb[0].mxu0 %v2932
      %v3115 = vpop.f32.mrb[0].mxu0
      %v3116 = vadd.f32 0.0, %v3115
      %v3117 = vpop.f32.mrb[0].mxu0
      %v3118 = vpop.f32.mrb[0].mxu0
      %v3119 = vadd.f32 0.0, %v3118
      %v3120 = vpop.f32.mrb[0].mxu0
      %3121 = vmatprep.mubr.bf16.mxu0 0
      %3122 = vmatmul.mubr.bf16.gmra.mrb[0].mxu0 %v2934
      %v3123 = vpop.f32.mrb[0].mxu0
      %v3124 = vadd.f32 0.0, %v3123
      %v3125 = vpop.f32.mrb[0].mxu0
      %v3126 = vpop.f32.mrb[0].mxu0
      %v3127 = vadd.f32 0.0, %v3126
      %v3128 = vpop.f32.mrb[0].mxu0
      %3129 = vmatprep.mubr.bf16.mxu0 0
      %3130 = vmatmul.mubr.bf16.gmra.mrb[0].mxu0 %v2936
      %v3131 = vpop.f32.mrb[0].mxu0
      %v3132 = vadd.f32 0.0, %v3131
      %v3133 = vpop.f32.mrb[0].mxu0
      %v3134 = vpop.f32.mrb[0].mxu0
      %v3135 = vadd.f32 0.0, %v3134
      %v3136 = vpop.f32.mrb[0].mxu0
      %3137 = vmatprep.mubr.bf16.mxu0 0
      %3138 = vmatmul.mubr.bf16.gmra.mrb[0].mxu0 %v2938
      %v3139 = vpop.f32.mrb[0].mxu0
      %v3140 = vadd.f32 0.0, %v3139
      %v3141 = vpop.f32.mrb[0].mxu0
      %v3142 = vpop.f32.mrb[0].mxu0
      %v3143 = vadd.f32 0.0, %v3142
      %v3144 = vpop.f32.mrb[0].mxu0
      %3145 = vmatprep.mubr.bf16.mxu0 0
      %3146 = vmatmul.mubr.bf16.gmra.mrb[0].mxu0 %v2940
      %v3147 = vpop.f32.mrb[0].mxu0
      %v3148 = vadd.f32 0.0, %v3147
      %v3149 = vpop.f32.mrb[0].mxu0
      %v3150 = vpop.f32.mrb[0].mxu0
      %v3151 = vadd.f32 0.0, %v3150
      %v3152 = vpop.f32.mrb[0].mxu0
      %3153 = vmatprep.mubr.bf16.mxu0 0
      %3154 = vmatmul.mubr.bf16.gmra.mrb[0].mxu0 %v2942
      %v3155 = vpop.f32.mrb[0].mxu0
      %v3156 = vadd.f32 0.0, %v3155
      %v3157 = vpop.f32.mrb[0].mxu0
      %v3158 = vpop.f32.mrb[0].mxu0
      %v3159 = vadd.f32 0.0, %v3158
      %v3160 = vpop.f32.mrb[0].mxu0
      %3161 = vmatprep.mubr.bf16.mxu0 0
      %3162 = vmatmul.mubr.bf16.gmra.mrb[0].mxu0 %v2944
      %v3163 = vpop.f32.mrb[0].mxu0
      %v3164 = vadd.f32 0.0, %v3163
      %v3165 = vpop.f32.mrb[0].mxu0
      %v3166 = vpop.f32.mrb[0].mxu0
      %v3167 = vadd.f32 0.0, %v3166
      %v3168 = vpop.f32.mrb[0].mxu0
      %3169 = vmatprep.mubr.bf16.mxu0 0
      %3170 = vmatmul.mubr.bf16.gmra.mrb[0].mxu0 %v2946
      %v3171 = vpop.f32.mrb[0].mxu0
      %v3172 = vadd.f32 0.0, %v3171
      %v3173 = vpop.f32.mrb[0].mxu0
      %v3174 = vpop.f32.mrb[0].mxu0
      %v3175 = vadd.f32 0.0, %v3174
      %v3176 = vpop.f32.mrb[0].mxu0
      %3177 = vmatprep.mubr.bf16.mxu0 0
      %3178 = vmatmul.mubr.bf16.gmra.mrb[0].mxu0 %v2948
      %v3179 = vpop.f32.mrb[0].mxu0
      %v3180 = vadd.f32 0.0, %v3179
      %v3181 = vpop.f32.mrb[0].mxu0
      %v3182 = vpop.f32.mrb[0].mxu0
      %v3183 = vadd.f32 0.0, %v3182
      %v3184 = vpop.f32.mrb[0].mxu0
      %3185 = vmatprep.mubr.bf16.mxu0 0
      %3186 = vmatmul.mubr.bf16.gmra.mrb[0].mxu0 %v2950
      %v3187 = vpop.f32.mrb[0].mxu0
      %v3188 = vadd.f32 0.0, %v3187
      %v3189 = vpop.f32.mrb[0].mxu0
      %v3190 = vpop.f32.mrb[0].mxu0
      %v3191 = vadd.f32 0.0, %v3190
      %v3192 = vpop.f32.mrb[0].mxu0
      %3193 = vmatprep.mubr.bf16.mxu0 0
      %3194 = vmatmul.mubr.bf16.gmra.mrb[0].mxu0 %v2952
      %v3195 = vpop.f32.mrb[0].mxu0
      %v3196 = vadd.f32 0.0, %v3195
      %v3197 = vpop.f32.mrb[0].mxu0
      %v3198 = vpop.f32.mrb[0].mxu0
      %v3199 = vadd.f32 0.0, %v3198
      %v3200 = vpop.f32.mrb[0].mxu0
      %3201 = vmatprep.mubr.bf16.mxu0 0
      %3202 = vmatmul.mubr.bf16.gmra.mrb[0].mxu0 %v2954
      %v3203 = vpop.f32.mrb[0].mxu0
      %v3204 = vadd.f32 0.0, %v3203
      %v3205 = vpop.f32.mrb[0].mxu0
      %v3206 = vpop.f32.mrb[0].mxu0
      %v3207 = vadd.f32 0.0, %v3206
      %v3208 = vpop.f32.mrb[0].mxu0
      %3209 = vmatprep.mubr.bf16.mxu0 0
      %3210 = vmatmul.mubr.bf16.gmra.mrb[0].mxu0 %v2956
      %v3211 = vpop.f32.mrb[0].mxu0
      %v3212 = vadd.f32 0.0, %v3211
      %v3213 = vpop.f32.mrb[0].mxu0
      %v3214 = vpop.f32.mrb[0].mxu0
      %v3215 = vadd.f32 0.0, %v3214
      %v3216 = vpop.f32.mrb[0].mxu0
      %3217 = vmatprep.mubr.bf16.mxu0 0
      %3218 = vmatmul.mubr.bf16.gmra.mrb[0].mxu0 %v2958
      %v3219 = vpop.f32.mrb[0].mxu0
      %v3220 = vadd.f32 0.0, %v3219
      %v3221 = vpop.f32.mrb[0].mxu0
      %v3222 = vpop.f32.mrb[0].mxu0
      %v3223 = vadd.f32 0.0, %v3222
      %v3224 = vpop.f32.mrb[0].mxu0
      %3225 = vmatprep.mubr.bf16.mxu0 0
      %3226 = vmatmul.mubr.bf16.gmra.mrb[0].mxu0 %v2960
      %v3227 = vpop.f32.mrb[0].mxu0
      %v3228 = vadd.f32 0.0, %v3227
      %v3229 = vpop.f32.mrb[0].mxu0
      %v3230 = vpop.f32.mrb[0].mxu0
      %v3231 = vadd.f32 0.0, %v3230
      %v3232 = vpop.f32.mrb[0].mxu0
      %3233 = vmatprep.mubr.bf16.mxu0 0
      %3234 = vmatmul.mubr.bf16.gmra.mrb[0].mxu0 %v2962
      %v3235 = vpop.f32.mrb[0].mxu0
      %v3236 = vadd.f32 0.0, %v3235
      %v3237 = vpop.f32.mrb[0].mxu0
      %v3238 = vpop.f32.mrb[0].mxu0
      %v3239 = vadd.f32 0.0, %v3238
      %v3240 = vpop.f32.mrb[0].mxu0
      %3241 = vmatprep.mubr.bf16.mxu0 0
      %3242 = vmatmul.mubr.bf16.gmra.mrb[0].mxu0 %v2964
      %v3243 = vpop.f32.mrb[0].mxu0
      %v3244 = vadd.f32 0.0, %v3243
      %v3245 = vpop.f32.mrb[0].mxu0
      %v3246 = vpop.f32.mrb[0].mxu0
      %v3247 = vadd.f32 0.0, %v3246
      %v3248 = vpop.f32.mrb[0].mxu0
      %3249 = vmatprep.mubr.bf16.mxu0 0
      %3250 = vmatmul.mubr.bf16.gmra.mrb[0].mxu0 %v2966
      %v3251 = vpop.f32.mrb[0].mxu0
      %v3252 = vadd.f32 0.0, %v3251
      %v3253 = vpop.f32.mrb[0].mxu0
      %v3254 = vpop.f32.mrb[0].mxu0
      %v3255 = vadd.f32 0.0, %v3254
      %v3256 = vpop.f32.mrb[0].mxu0
      %3257 = vmatprep.mubr.bf16.mxu0 0
      %3258 = vmatmul.mubr.bf16.gmra.mrb[0].mxu0 %v2968
      %v3259 = vpop.f32.mrb[0].mxu0
      %v3260 = vadd.f32 0.0, %v3259
      %v3261 = vpop.f32.mrb[0].mxu0
      %v3262 = vpop.f32.mrb[0].mxu0
      %v3263 = vadd.f32 0.0, %v3262
      %v3264 = vpop.f32.mrb[0].mxu0
      %3265 = vdwg.mxu0
      %v3266 = vadd.f32 %v2851, %v3076
      %v3267 = vadd.f32 %v2852, %v3079
      %v3268 = vadd.f32 %v2853, %v3084
      %v3269 = vadd.f32 %v2854, %v3087
      %v3270 = vadd.f32 %v2855, %v3092
      %v3271 = vadd.f32 %v2856, %v3095
      %v3272 = vadd.f32 %v2857, %v3100
      %v3273 = vadd.f32 %v2858, %v3103
      %v3274 = vadd.f32 %v2859, %v3108
      %v3275 = vadd.f32 %v2860, %v3111
      %v3276 = vadd.f32 %v2861, %v3116
      %v3277 = vadd.f32 %v2862, %v3119
      %v3278 = vadd.f32 %v2863, %v3124
      %v3279 = vadd.f32 %v2864, %v3127
      %v3280 = vadd.f32 %v2865, %v3132
      %v3281 = vadd.f32 %v2866, %v3135
      %v3282 = vadd.f32 %v2867, %v3140
      %v3283 = vadd.f32 %v2868, %v3143
      %v3284 = vadd.f32 %v2869, %v3148
      %v3285 = vadd.f32 %v2870, %v3151
      %v3286 = vadd.f32 %v2871, %v3156
      %v3287 = vadd.f32 %v2872, %v3159
      %v3288 = vadd.f32 %v2873, %v3164
      %v3289 = vadd.f32 %v2874, %v3167
      %v3290 = vadd.f32 %v2875, %v3172
      %v3291 = vadd.f32 %v2876, %v3175
      %v3292 = vadd.f32 %v2877, %v3180
      %v3293 = vadd.f32 %v2878, %v3183
      %v3294 = vadd.f32 %v2879, %v3188
      %v3295 = vadd.f32 %v2880, %v3191
      %v3296 = vadd.f32 %v2881, %v3196
      %v3297 = vadd.f32 %v2882, %v3199
      %v3298 = vadd.f32 %v2883, %v3204
      %v3299 = vadd.f32 %v2884, %v3207
      %v3300 = vadd.f32 %v2885, %v3212
      %v3301 = vadd.f32 %v2886, %v3215
      %v3302 = vadd.f32 %v2887, %v3220
      %v3303 = vadd.f32 %v2888, %v3223
      %v3304 = vadd.f32 %v2889, %v3228
      %v3305 = vadd.f32 %v2890, %v3231
      %v3306 = vadd.f32 %v2891, %v3236
      %v3307 = vadd.f32 %v2892, %v3239
      %v3308 = vadd.f32 %v2893, %v3244
      %v3309 = vadd.f32 %v2894, %v3247
      %v3310 = vadd.f32 %v2895, %v3252
      %v3311 = vadd.f32 %v2896, %v3255
      %v3312 = vadd.f32 %v2897, %v3260
      %v3313 = vadd.f32 %v2898, %v3263
      %v3314 = vld [vmem:[%s209 + $0x18] sm:$0xf]
      %v3315 = vld [vmem:[%s209 + $0x1c] sm:$0xf]
      %v3316 = vld [vmem:[%s209 + $0x20] sm:$0xf]
      %v3317 = vld [vmem:[%s209 + $0x24] sm:$0xf]
      %v3318 = vld [vmem:[%s209 + $0x28] sm:$0xf]
      %v3319 = vld [vmem:[%s209 + $0x2c] sm:$0xf]
      %v3320 = vld [vmem:[%s209 + $0x30] sm:$0xf]
      %v3321 = vld [vmem:[%s209 + $0x34] sm:$0xf]
      %v3322 = vld [vmem:[%s209 + $0x38] sm:$0xf]
      %v3323 = vld [vmem:[%s209 + $0x3c] sm:$0xf]
      %v3324 = vld [vmem:[%s209 + $0x40] sm:$0xf]
      %v3325 = vld [vmem:[%s209 + $0x44] sm:$0xf]
      %v3326 = vld [vmem:[%s209 + $0x48] sm:$0xf]
      %v3327 = vld [vmem:[%s209 + $0x4c] sm:$0xf]
      %v3328 = vld [vmem:[%s209 + $0x50] sm:$0xf]
      %v3329 = vld [vmem:[%s209 + $0x54] sm:$0xf]
      %v3330 = vld [vmem:[%s209 + $0x58] sm:$0xf]
      %v3331 = vld [vmem:[%s209 + $0x5c] sm:$0xf]
      %v3332 = vld [vmem:[%s209 + $0x60] sm:$0xf]
      %v3333 = vld [vmem:[%s209 + $0x64] sm:$0xf]
      %v3334 = vld [vmem:[%s209 + $0x68] sm:$0xf]
      %v3335 = vld [vmem:[%s209 + $0x6c] sm:$0xf]
      %v3336 = vld [vmem:[%s209 + $0x70] sm:$0xf]
      %v3337 = vld [vmem:[%s209 + $0x74] sm:$0xf]
      %v3338 = vld [vmem:[%s209 + $0x78] sm:$0xf]
      %v3339 = vld [vmem:[%s209 + $0x7c] sm:$0xf]
      %v3340 = vld [vmem:[%s209 + $0x80] sm:$0xf]
      %v3341 = vld [vmem:[%s209 + $0x84] sm:$0xf]
      %v3342 = vld [vmem:[%s209 + $0x88] sm:$0xf]
      %v3343 = vld [vmem:[%s209 + $0x8c] sm:$0xf]
      %v3344 = vld [vmem:[%s209 + $0x90] sm:$0xf]
      %v3345 = vld [vmem:[%s209 + $0x94] sm:$0xf]
      %v3346 = vld [vmem:[%s209 + $0x98] sm:$0xf]
      %v3347 = vld [vmem:[%s209 + $0x9c] sm:$0xf]
      %v3348 = vld [vmem:[%s209 + $0xa0] sm:$0xf]
      %v3349 = vld [vmem:[%s209 + $0xa4] sm:$0xf]
      %v3350 = vld [vmem:[%s209 + $0xa8] sm:$0xf]
      %v3351 = vld [vmem:[%s209 + $0xac] sm:$0xf]
      %v3352 = vld [vmem:[%s209 + $0xb0] sm:$0xf]
      %v3353 = vld [vmem:[%s209 + $0xb4] sm:$0xf]
      %v3354 = vld [vmem:[%s209 + $0xb8] sm:$0xf]
      %v3355 = vld [vmem:[%s209 + $0xbc] sm:$0xf]
      %v3356 = vld [vmem:[%s209 + $0xc0] sm:$0xf]
      %v3357 = vld [vmem:[%s209 + $0xc4] sm:$0xf]
      %v3358 = vld [vmem:[%s209 + $0xc8] sm:$0xf]
      %v3359 = vld [vmem:[%s209 + $0xcc] sm:$0xf]
      %v3360 = vld [vmem:[%s209 + $0xd0] sm:$0xf]
      %v3361 = vld [vmem:[%s209 + $0xd4] sm:$0xf]
      %s3362 = scalar_lea.vmem %s1, 384
      %v3363 = vld [vmem:[%s3362] sm:$0xf]
      %v3364 = vld [vmem:[%s3362 + $0x4] sm:$0xf]
      %v3365 = vld [vmem:[%s3362 + $0x8] sm:$0xf]
      %v3366 = vld [vmem:[%s3362 + $0xc] sm:$0xf]
      %v3367 = vld [vmem:[%s3362 + $0x10] sm:$0xf]
      %v3368 = vld [vmem:[%s3362 + $0x14] sm:$0xf]
      %v3369 = vld [vmem:[%s3362 + $0x18] sm:$0xf]
      %v3370 = vld [vmem:[%s3362 + $0x1c] sm:$0xf]
      %v3371 = vld [vmem:[%s3362 + $0x20] sm:$0xf]
      %v3372 = vld [vmem:[%s3362 + $0x24] sm:$0xf]
      %v3373 = vld [vmem:[%s3362 + $0x28] sm:$0xf]
      %v3374 = vld [vmem:[%s3362 + $0x2c] sm:$0xf]
      %v3375 = vld [vmem:[%s3362 + $0x30] sm:$0xf]
      %v3376 = vld [vmem:[%s3362 + $0x34] sm:$0xf]
      %v3377 = vld [vmem:[%s3362 + $0x38] sm:$0xf]
      %v3378 = vld [vmem:[%s3362 + $0x3c] sm:$0xf]
      %v3427 = vunpack.c.l.b16 %v3314
      %v3428 = vunpack.c.l.b16 %v3315
      %v3429 = vunpack.c.l.b16 %v3316
      %v3430 = vunpack.c.l.b16 %v3317
      %v3431 = vunpack.c.l.b16 %v3318
      %v3432 = vunpack.c.l.b16 %v3319
      %v3433 = vunpack.c.l.b16 %v3320
      %v3434 = vunpack.c.l.b16 %v3321
      %v3435 = vunpack.c.l.b16 %v3322
      %v3436 = vunpack.c.l.b16 %v3323
      %v3437 = vunpack.c.l.b16 %v3324
      %v3438 = vunpack.c.l.b16 %v3325
      %v3439 = vunpack.c.l.b16 %v3326
      %v3440 = vunpack.c.l.b16 %v3327
      %v3441 = vunpack.c.l.b16 %v3328
      %v3442 = vunpack.c.l.b16 %v3329
      %v3443 = vunpack.c.l.b16 %v3330
      %v3444 = vunpack.c.l.b16 %v3331
      %v3445 = vunpack.c.l.b16 %v3332
      %v3446 = vunpack.c.l.b16 %v3333
      %v3447 = vunpack.c.l.b16 %v3334
      %v3448 = vunpack.c.l.b16 %v3335
      %v3449 = vunpack.c.l.b16 %v3336
      %v3450 = vunpack.c.l.b16 %v3337
      %v3451 = vunpack.c.l.b16 %v3338
      %v3452 = vunpack.c.l.b16 %v3339
      %v3453 = vunpack.c.l.b16 %v3340
      %v3454 = vunpack.c.l.b16 %v3341
      %v3455 = vunpack.c.l.b16 %v3342
      %v3456 = vunpack.c.l.b16 %v3343
      %v3457 = vunpack.c.l.b16 %v3344
      %v3458 = vunpack.c.l.b16 %v3345
      %v3459 = vunpack.c.l.b16 %v3346
      %v3460 = vunpack.c.l.b16 %v3347
      %v3461 = vunpack.c.l.b16 %v3348
      %v3462 = vunpack.c.l.b16 %v3349
      %v3463 = vunpack.c.l.b16 %v3350
      %v3464 = vunpack.c.l.b16 %v3351
      %v3465 = vunpack.c.l.b16 %v3352
      %v3466 = vunpack.c.l.b16 %v3353
      %v3467 = vunpack.c.l.b16 %v3354
      %v3468 = vunpack.c.l.b16 %v3355
      %v3469 = vunpack.c.l.b16 %v3356
      %v3470 = vunpack.c.l.b16 %v3357
      %v3471 = vunpack.c.l.b16 %v3358
      %v3472 = vunpack.c.l.b16 %v3359
      %v3473 = vunpack.c.l.b16 %v3360
      %v3474 = vunpack.c.l.b16 %v3361
      %v3475 = vpack.c.b16 %v3428, %v3427
      %v3476 = vpack.c.b16 %v3430, %v3429
      %v3477 = vpack.c.b16 %v3432, %v3431
      %v3478 = vpack.c.b16 %v3434, %v3433
      %v3479 = vpack.c.b16 %v3436, %v3435
      %v3480 = vpack.c.b16 %v3438, %v3437
      %v3481 = vpack.c.b16 %v3440, %v3439
      %v3482 = vpack.c.b16 %v3442, %v3441
      %v3483 = vpack.c.b16 %v3444, %v3443
      %v3484 = vpack.c.b16 %v3446, %v3445
      %v3485 = vpack.c.b16 %v3448, %v3447
      %v3486 = vpack.c.b16 %v3450, %v3449
      %v3487 = vpack.c.b16 %v3452, %v3451
      %v3488 = vpack.c.b16 %v3454, %v3453
      %v3489 = vpack.c.b16 %v3456, %v3455
      %v3490 = vpack.c.b16 %v3458, %v3457
      %v3491 = vpack.c.b16 %v3460, %v3459
      %v3492 = vpack.c.b16 %v3462, %v3461
      %v3493 = vpack.c.b16 %v3464, %v3463
      %v3494 = vpack.c.b16 %v3466, %v3465
      %v3495 = vpack.c.b16 %v3468, %v3467
      %v3496 = vpack.c.b16 %v3470, %v3469
      %v3497 = vpack.c.b16 %v3472, %v3471
      %v3498 = vpack.c.b16 %v3474, %v3473
      %v3539 = vunpack.c.l.b16 %v3363
      %v3540 = vunpack.c.l.b16 %v3364
      %v3541 = vunpack.c.l.b16 %v3365
      %v3542 = vunpack.c.l.b16 %v3366
      %v3543 = vunpack.c.l.b16 %v3367
      %v3544 = vunpack.c.l.b16 %v3368
      %v3545 = vunpack.c.l.b16 %v3369
      %v3546 = vunpack.c.l.b16 %v3370
      %v3547 = vunpack.c.l.b16 %v3371
      %v3548 = vunpack.c.l.b16 %v3372
      %v3549 = vunpack.c.l.b16 %v3373
      %v3550 = vunpack.c.l.b16 %v3374
      %v3551 = vunpack.c.l.b16 %v3375
      %v3552 = vunpack.c.l.b16 %v3376
      %v3553 = vunpack.c.l.b16 %v3377
      %v3554 = vunpack.c.l.b16 %v3378
      %v3555 = vpack.c.b16 %v3540, %v3539
      %v3556 = vpack.c.b16 %v3542, %v3541
      %v3557 = vpack.c.b16 %v3544, %v3543
      %v3558 = vpack.c.b16 %v3546, %v3545
      %v3559 = vpack.c.b16 %v3548, %v3547
      %v3560 = vpack.c.b16 %v3550, %v3549
      %v3561 = vpack.c.b16 %v3552, %v3551
      %v3562 = vpack.c.b16 %v3554, %v3553
      %3571 = vmatprep.subr.bf16.mxu0 0
      %3572 = vmatpush1.bf16.msra.mxu0 %v3555
      %3573 = vmatprep.subr.bf16.mxu0 0
      %3574 = vmatpush1.bf16.msra.mxu0 %v3556
      %3575 = vmatprep.subr.bf16.mxu0 0
      %3576 = vmatpush1.bf16.msra.mxu0 %v3557
      %3577 = vmatprep.subr.bf16.mxu0 0
      %3578 = vmatpush1.bf16.msra.mxu0 %v3558
      %3579 = vmatprep.subr.bf16.mxu0 0
      %3580 = vmatpush1.bf16.msra.mxu0 %v3559
      %3581 = vmatprep.subr.bf16.mxu0 0
      %3582 = vmatpush1.bf16.msra.mxu0 %v3560
      %3583 = vmatprep.subr.bf16.mxu0 0
      %3584 = vmatpush1.bf16.msra.mxu0 %v3561
      %3585 = vmatprep.subr.bf16.mxu0 0
      %3586 = vmatpush1.bf16.msra.mxu0 %v3562
      %3587 = vmatprep.subr.bf16.mxu0 0
      %3588 = vmatpush1.bf16.msra.mxu0 0
      %3589 = vmatprep.subr.bf16.mxu0 0
      %3590 = vmatpush1.bf16.msra.mxu0 0
      %3591 = vmatprep.subr.bf16.mxu0 0
      %3592 = vmatpush1.bf16.msra.mxu0 0
      %3593 = vmatprep.subr.bf16.mxu0 0
      %3594 = vmatpush1.bf16.msra.mxu0 0
      %3595 = vmatprep.subr.bf16.mxu0 0
      %3596 = vmatpush1.bf16.msra.mxu0 0
      %3597 = vmatprep.subr.bf16.mxu0 0
      %3598 = vmatpush1.bf16.msra.mxu0 0
      %3599 = vmatprep.subr.bf16.mxu0 0
      %3600 = vmatpush1.bf16.msra.mxu0 0
      %3601 = vmatprep.subr.bf16.mxu0 0
      %3602 = vmatpush1.bf16.msra.mxu0 0
      %3603 = vmatprep.mubr.bf16.mxu0 0
      %3604 = vmatmul.mubr.bf16.gmra.mrb[0].mxu0 %v3475
      %v3605 = vpop.f32.mrb[0].mxu0
      %v3606 = vadd.f32 0.0, %v3605
      %v3607 = vpop.f32.mrb[0].mxu0
      %v3608 = vpop.f32.mrb[0].mxu0
      %v3609 = vadd.f32 0.0, %v3608
      %v3610 = vpop.f32.mrb[0].mxu0
      %3611 = vmatprep.mubr.bf16.mxu0 0
      %3612 = vmatmul.mubr.bf16.gmra.mrb[0].mxu0 %v3476
      %v3613 = vpop.f32.mrb[0].mxu0
      %v3614 = vadd.f32 0.0, %v3613
      %v3615 = vpop.f32.mrb[0].mxu0
      %v3616 = vpop.f32.mrb[0].mxu0
      %v3617 = vadd.f32 0.0, %v3616
      %v3618 = vpop.f32.mrb[0].mxu0
      %3619 = vmatprep.mubr.bf16.mxu0 0
      %3620 = vmatmul.mubr.bf16.gmra.mrb[0].mxu0 %v3477
      %v3621 = vpop.f32.mrb[0].mxu0
      %v3622 = vadd.f32 0.0, %v3621
      %v3623 = vpop.f32.mrb[0].mxu0
      %v3624 = vpop.f32.mrb[0].mxu0
      %v3625 = vadd.f32 0.0, %v3624
      %v3626 = vpop.f32.mrb[0].mxu0
      %3627 = vmatprep.mubr.bf16.mxu0 0
      %3628 = vmatmul.mubr.bf16.gmra.mrb[0].mxu0 %v3478
      %v3629 = vpop.f32.mrb[0].mxu0
      %v3630 = vadd.f32 0.0, %v3629
      %v3631 = vpop.f32.mrb[0].mxu0
      %v3632 = vpop.f32.mrb[0].mxu0
      %v3633 = vadd.f32 0.0, %v3632
      %v3634 = vpop.f32.mrb[0].mxu0
      %3635 = vmatprep.mubr.bf16.mxu0 0
      %3636 = vmatmul.mubr.bf16.gmra.mrb[0].mxu0 %v3479
      %v3637 = vpop.f32.mrb[0].mxu0
      %v3638 = vadd.f32 0.0, %v3637
      %v3639 = vpop.f32.mrb[0].mxu0
      %v3640 = vpop.f32.mrb[0].mxu0
      %v3641 = vadd.f32 0.0, %v3640
      %v3642 = vpop.f32.mrb[0].mxu0
      %3643 = vmatprep.mubr.bf16.mxu0 0
      %3644 = vmatmul.mubr.bf16.gmra.mrb[0].mxu0 %v3480
      %v3645 = vpop.f32.mrb[0].mxu0
      %v3646 = vadd.f32 0.0, %v3645
      %v3647 = vpop.f32.mrb[0].mxu0
      %v3648 = vpop.f32.mrb[0].mxu0
      %v3649 = vadd.f32 0.0, %v3648
      %v3650 = vpop.f32.mrb[0].mxu0
      %3651 = vmatprep.mubr.bf16.mxu0 0
      %3652 = vmatmul.mubr.bf16.gmra.mrb[0].mxu0 %v3481
      %v3653 = vpop.f32.mrb[0].mxu0
      %v3654 = vadd.f32 0.0, %v3653
      %v3655 = vpop.f32.mrb[0].mxu0
      %v3656 = vpop.f32.mrb[0].mxu0
      %v3657 = vadd.f32 0.0, %v3656
      %v3658 = vpop.f32.mrb[0].mxu0
      %3659 = vmatprep.mubr.bf16.mxu0 0
      %3660 = vmatmul.mubr.bf16.gmra.mrb[0].mxu0 %v3482
      %v3661 = vpop.f32.mrb[0].mxu0
      %v3662 = vadd.f32 0.0, %v3661
      %v3663 = vpop.f32.mrb[0].mxu0
      %v3664 = vpop.f32.mrb[0].mxu0
      %v3665 = vadd.f32 0.0, %v3664
      %v3666 = vpop.f32.mrb[0].mxu0
      %3667 = vmatprep.mubr.bf16.mxu0 0
      %3668 = vmatmul.mubr.bf16.gmra.mrb[0].mxu0 %v3483
      %v3669 = vpop.f32.mrb[0].mxu0
      %v3670 = vadd.f32 0.0, %v3669
      %v3671 = vpop.f32.mrb[0].mxu0
      %v3672 = vpop.f32.mrb[0].mxu0
      %v3673 = vadd.f32 0.0, %v3672
      %v3674 = vpop.f32.mrb[0].mxu0
      %3675 = vmatprep.mubr.bf16.mxu0 0
      %3676 = vmatmul.mubr.bf16.gmra.mrb[0].mxu0 %v3484
      %v3677 = vpop.f32.mrb[0].mxu0
      %v3678 = vadd.f32 0.0, %v3677
      %v3679 = vpop.f32.mrb[0].mxu0
      %v3680 = vpop.f32.mrb[0].mxu0
      %v3681 = vadd.f32 0.0, %v3680
      %v3682 = vpop.f32.mrb[0].mxu0
      %3683 = vmatprep.mubr.bf16.mxu0 0
      %3684 = vmatmul.mubr.bf16.gmra.mrb[0].mxu0 %v3485
      %v3685 = vpop.f32.mrb[0].mxu0
      %v3686 = vadd.f32 0.0, %v3685
      %v3687 = vpop.f32.mrb[0].mxu0
      %v3688 = vpop.f32.mrb[0].mxu0
      %v3689 = vadd.f32 0.0, %v3688
      %v3690 = vpop.f32.mrb[0].mxu0
      %3691 = vmatprep.mubr.bf16.mxu0 0
      %3692 = vmatmul.mubr.bf16.gmra.mrb[0].mxu0 %v3486
      %v3693 = vpop.f32.mrb[0].mxu0
      %v3694 = vadd.f32 0.0, %v3693
      %v3695 = vpop.f32.mrb[0].mxu0
      %v3696 = vpop.f32.mrb[0].mxu0
      %v3697 = vadd.f32 0.0, %v3696
      %v3698 = vpop.f32.mrb[0].mxu0
      %3699 = vmatprep.mubr.bf16.mxu0 0
      %3700 = vmatmul.mubr.bf16.gmra.mrb[0].mxu0 %v3487
      %v3701 = vpop.f32.mrb[0].mxu0
      %v3702 = vadd.f32 0.0, %v3701
      %v3703 = vpop.f32.mrb[0].mxu0
      %v3704 = vpop.f32.mrb[0].mxu0
      %v3705 = vadd.f32 0.0, %v3704
      %v3706 = vpop.f32.mrb[0].mxu0
      %3707 = vmatprep.mubr.bf16.mxu0 0
      %3708 = vmatmul.mubr.bf16.gmra.mrb[0].mxu0 %v3488
      %v3709 = vpop.f32.mrb[0].mxu0
      %v3710 = vadd.f32 0.0, %v3709
      %v3711 = vpop.f32.mrb[0].mxu0
      %v3712 = vpop.f32.mrb[0].mxu0
      %v3713 = vadd.f32 0.0, %v3712
      %v3714 = vpop.f32.mrb[0].mxu0
      %3715 = vmatprep.mubr.bf16.mxu0 0
      %3716 = vmatmul.mubr.bf16.gmra.mrb[0].mxu0 %v3489
      %v3717 = vpop.f32.mrb[0].mxu0
      %v3718 = vadd.f32 0.0, %v3717
      %v3719 = vpop.f32.mrb[0].mxu0
      %v3720 = vpop.f32.mrb[0].mxu0
      %v3721 = vadd.f32 0.0, %v3720
      %v3722 = vpop.f32.mrb[0].mxu0
      %3723 = vmatprep.mubr.bf16.mxu0 0
      %3724 = vmatmul.mubr.bf16.gmra.mrb[0].mxu0 %v3490
      %v3725 = vpop.f32.mrb[0].mxu0
      %v3726 = vadd.f32 0.0, %v3725
      %v3727 = vpop.f32.mrb[0].mxu0
      %v3728 = vpop.f32.mrb[0].mxu0
      %v3729 = vadd.f32 0.0, %v3728
      %v3730 = vpop.f32.mrb[0].mxu0
      %3731 = vmatprep.mubr.bf16.mxu0 0
      %3732 = vmatmul.mubr.bf16.gmra.mrb[0].mxu0 %v3491
      %v3733 = vpop.f32.mrb[0].mxu0
      %v3734 = vadd.f32 0.0, %v3733
      %v3735 = vpop.f32.mrb[0].mxu0
      %v3736 = vpop.f32.mrb[0].mxu0
      %v3737 = vadd.f32 0.0, %v3736
      %v3738 = vpop.f32.mrb[0].mxu0
      %3739 = vmatprep.mubr.bf16.mxu0 0
      %3740 = vmatmul.mubr.bf16.gmra.mrb[0].mxu0 %v3492
      %v3741 = vpop.f32.mrb[0].mxu0
      %v3742 = vadd.f32 0.0, %v3741
      %v3743 = vpop.f32.mrb[0].mxu0
      %v3744 = vpop.f32.mrb[0].mxu0
      %v3745 = vadd.f32 0.0, %v3744
      %v3746 = vpop.f32.mrb[0].mxu0
      %3747 = vmatprep.mubr.bf16.mxu0 0
      %3748 = vmatmul.mubr.bf16.gmra.mrb[0].mxu0 %v3493
      %v3749 = vpop.f32.mrb[0].mxu0
      %v3750 = vadd.f32 0.0, %v3749
      %v3751 = vpop.f32.mrb[0].mxu0
      %v3752 = vpop.f32.mrb[0].mxu0
      %v3753 = vadd.f32 0.0, %v3752
      %v3754 = vpop.f32.mrb[0].mxu0
      %3755 = vmatprep.mubr.bf16.mxu0 0
      %3756 = vmatmul.mubr.bf16.gmra.mrb[0].mxu0 %v3494
      %v3757 = vpop.f32.mrb[0].mxu0
      %v3758 = vadd.f32 0.0, %v3757
      %v3759 = vpop.f32.mrb[0].mxu0
      %v3760 = vpop.f32.mrb[0].mxu0
      %v3761 = vadd.f32 0.0, %v3760
      %v3762 = vpop.f32.mrb[0].mxu0
      %3763 = vmatprep.mubr.bf16.mxu0 0
      %3764 = vmatmul.mubr.bf16.gmra.mrb[0].mxu0 %v3495
      %v3765 = vpop.f32.mrb[0].mxu0
      %v3766 = vadd.f32 0.0, %v3765
      %v3767 = vpop.f32.mrb[0].mxu0
      %v3768 = vpop.f32.mrb[0].mxu0
      %v3769 = vadd.f32 0.0, %v3768
      %v3770 = vpop.f32.mrb[0].mxu0
      %3771 = vmatprep.mubr.bf16.mxu0 0
      %3772 = vmatmul.mubr.bf16.gmra.mrb[0].mxu0 %v3496
      %v3773 = vpop.f32.mrb[0].mxu0
      %v3774 = vadd.f32 0.0, %v3773
      %v3775 = vpop.f32.mrb[0].mxu0
      %v3776 = vpop.f32.mrb[0].mxu0
      %v3777 = vadd.f32 0.0, %v3776
      %v3778 = vpop.f32.mrb[0].mxu0
      %3779 = vmatprep.mubr.bf16.mxu0 0
      %3780 = vmatmul.mubr.bf16.gmra.mrb[0].mxu0 %v3497
      %v3781 = vpop.f32.mrb[0].mxu0
      %v3782 = vadd.f32 0.0, %v3781
      %v3783 = vpop.f32.mrb[0].mxu0
      %v3784 = vpop.f32.mrb[0].mxu0
      %v3785 = vadd.f32 0.0, %v3784
      %v3786 = vpop.f32.mrb[0].mxu0
      %3787 = vmatprep.mubr.bf16.mxu0 0
      %3788 = vmatmul.mubr.bf16.gmra.mrb[0].mxu0 %v3498
      %v3789 = vpop.f32.mrb[0].mxu0
      %v3790 = vadd.f32 0.0, %v3789
      %v3791 = vpop.f32.mrb[0].mxu0
      %v3792 = vpop.f32.mrb[0].mxu0
      %v3793 = vadd.f32 0.0, %v3792
      %v3794 = vpop.f32.mrb[0].mxu0
      %3795 = vdwg.mxu0
      %v3796 = vadd.f32 %v3266, %v3606
      %v3797 = vadd.f32 %v3267, %v3609
      %v3798 = vadd.f32 %v3268, %v3614
      %v3799 = vadd.f32 %v3269, %v3617
      %v3800 = vadd.f32 %v3270, %v3622
      %v3801 = vadd.f32 %v3271, %v3625
      %v3802 = vadd.f32 %v3272, %v3630
      %v3803 = vadd.f32 %v3273, %v3633
      %v3804 = vadd.f32 %v3274, %v3638
      %v3805 = vadd.f32 %v3275, %v3641
      %v3806 = vadd.f32 %v3276, %v3646
      %v3807 = vadd.f32 %v3277, %v3649
      %v3808 = vadd.f32 %v3278, %v3654
      %v3809 = vadd.f32 %v3279, %v3657
      %v3810 = vadd.f32 %v3280, %v3662
      %v3811 = vadd.f32 %v3281, %v3665
      %v3812 = vadd.f32 %v3282, %v3670
      %v3813 = vadd.f32 %v3283, %v3673
      %v3814 = vadd.f32 %v3284, %v3678
      %v3815 = vadd.f32 %v3285, %v3681
      %v3816 = vadd.f32 %v3286, %v3686
      %v3817 = vadd.f32 %v3287, %v3689
      %v3818 = vadd.f32 %v3288, %v3694
      %v3819 = vadd.f32 %v3289, %v3697
      %v3820 = vadd.f32 %v3290, %v3702
      %v3821 = vadd.f32 %v3291, %v3705
      %v3822 = vadd.f32 %v3292, %v3710
      %v3823 = vadd.f32 %v3293, %v3713
      %v3824 = vadd.f32 %v3294, %v3718
      %v3825 = vadd.f32 %v3295, %v3721
      %v3826 = vadd.f32 %v3296, %v3726
      %v3827 = vadd.f32 %v3297, %v3729
      %v3828 = vadd.f32 %v3298, %v3734
      %v3829 = vadd.f32 %v3299, %v3737
      %v3830 = vadd.f32 %v3300, %v3742
      %v3831 = vadd.f32 %v3301, %v3745
      %v3832 = vadd.f32 %v3302, %v3750
      %v3833 = vadd.f32 %v3303, %v3753
      %v3834 = vadd.f32 %v3304, %v3758
      %v3835 = vadd.f32 %v3305, %v3761
      %v3836 = vadd.f32 %v3306, %v3766
      %v3837 = vadd.f32 %v3307, %v3769
      %v3838 = vadd.f32 %v3308, %v3774
      %v3839 = vadd.f32 %v3309, %v3777
      %v3840 = vadd.f32 %v3310, %v3782
      %v3841 = vadd.f32 %v3311, %v3785
      %v3842 = vadd.f32 %v3312, %v3790
      %v3843 = vadd.f32 %v3313, %v3793
      %v3844 = vld [vmem:[%s209 + $0x18] sm:$0xf]
      %v3845 = vld [vmem:[%s209 + $0x1c] sm:$0xf]
      %v3846 = vld [vmem:[%s209 + $0x20] sm:$0xf]
      %v3847 = vld [vmem:[%s209 + $0x24] sm:$0xf]
      %v3848 = vld [vmem:[%s209 + $0x28] sm:$0xf]
      %v3849 = vld [vmem:[%s209 + $0x2c] sm:$0xf]
      %v3850 = vld [vmem:[%s209 + $0x30] sm:$0xf]
      %v3851 = vld [vmem:[%s209 + $0x34] sm:$0xf]
      %v3852 = vld [vmem:[%s209 + $0x38] sm:$0xf]
      %v3853 = vld [vmem:[%s209 + $0x3c] sm:$0xf]
      %v3854 = vld [vmem:[%s209 + $0x40] sm:$0xf]
      %v3855 = vld [vmem:[%s209 + $0x44] sm:$0xf]
      %v3856 = vld [vmem:[%s209 + $0x48] sm:$0xf]
      %v3857 = vld [vmem:[%s209 + $0x4c] sm:$0xf]
      %v3858 = vld [vmem:[%s209 + $0x50] sm:$0xf]
      %v3859 = vld [vmem:[%s209 + $0x54] sm:$0xf]
      %v3860 = vld [vmem:[%s209 + $0x58] sm:$0xf]
      %v3861 = vld [vmem:[%s209 + $0x5c] sm:$0xf]
      %v3862 = vld [vmem:[%s209 + $0x60] sm:$0xf]
      %v3863 = vld [vmem:[%s209 + $0x64] sm:$0xf]
      %v3864 = vld [vmem:[%s209 + $0x68] sm:$0xf]
      %v3865 = vld [vmem:[%s209 + $0x6c] sm:$0xf]
      %v3866 = vld [vmem:[%s209 + $0x70] sm:$0xf]
      %v3867 = vld [vmem:[%s209 + $0x74] sm:$0xf]
      %v3868 = vld [vmem:[%s209 + $0x78] sm:$0xf]
      %v3869 = vld [vmem:[%s209 + $0x7c] sm:$0xf]
      %v3870 = vld [vmem:[%s209 + $0x80] sm:$0xf]
      %v3871 = vld [vmem:[%s209 + $0x84] sm:$0xf]
      %v3872 = vld [vmem:[%s209 + $0x88] sm:$0xf]
      %v3873 = vld [vmem:[%s209 + $0x8c] sm:$0xf]
      %v3874 = vld [vmem:[%s209 + $0x90] sm:$0xf]
      %v3875 = vld [vmem:[%s209 + $0x94] sm:$0xf]
      %v3876 = vld [vmem:[%s209 + $0x98] sm:$0xf]
      %v3877 = vld [vmem:[%s209 + $0x9c] sm:$0xf]
      %v3878 = vld [vmem:[%s209 + $0xa0] sm:$0xf]
      %v3879 = vld [vmem:[%s209 + $0xa4] sm:$0xf]
      %v3880 = vld [vmem:[%s209 + $0xa8] sm:$0xf]
      %v3881 = vld [vmem:[%s209 + $0xac] sm:$0xf]
      %v3882 = vld [vmem:[%s209 + $0xb0] sm:$0xf]
      %v3883 = vld [vmem:[%s209 + $0xb4] sm:$0xf]
      %v3884 = vld [vmem:[%s209 + $0xb8] sm:$0xf]
      %v3885 = vld [vmem:[%s209 + $0xbc] sm:$0xf]
      %v3886 = vld [vmem:[%s209 + $0xc0] sm:$0xf]
      %v3887 = vld [vmem:[%s209 + $0xc4] sm:$0xf]
      %v3888 = vld [vmem:[%s209 + $0xc8] sm:$0xf]
      %v3889 = vld [vmem:[%s209 + $0xcc] sm:$0xf]
      %v3890 = vld [vmem:[%s209 + $0xd0] sm:$0xf]
      %v3891 = vld [vmem:[%s209 + $0xd4] sm:$0xf]
      %v3892 = vld [vmem:[%s209 + $0xd8] sm:$0x1]
      %s3893 = scalar_lea.vmem %s1, 448
      %v3894 = vld [vmem:[%s3893] sm:$0xf]
      %v3895 = vld [vmem:[%s3893 + $0x4] sm:$0xf]
      %v3896 = vld [vmem:[%s3893 + $0x8] sm:$0xf]
      %v3897 = vld [vmem:[%s3893 + $0xc] sm:$0xf]
      %v3898 = vld [vmem:[%s3893 + $0x10] sm:$0xf]
      %v3899 = vld [vmem:[%s3893 + $0x14] sm:$0xf]
      %v3900 = vld [vmem:[%s3893 + $0x18] sm:$0xf]
      %v3901 = vld [vmem:[%s3893 + $0x1c] sm:$0xf]
      %v3902 = vld [vmem:[%s3893 + $0x20] sm:$0xf]
      %v3903 = vld [vmem:[%s3893 + $0x24] sm:$0xf]
      %v3904 = vld [vmem:[%s3893 + $0x28] sm:$0xf]
      %v3905 = vld [vmem:[%s3893 + $0x2c] sm:$0xf]
      %v3906 = vld [vmem:[%s3893 + $0x30] sm:$0xf]
      %v3907 = vld [vmem:[%s3893 + $0x34] sm:$0xf]
      %v3908 = vld [vmem:[%s3893 + $0x38] sm:$0xf]
      %v3909 = vld [vmem:[%s3893 + $0x3c] sm:$0xf]
      %v3959 = vunpack.c.l.b16 %v3844
      %v3960 = vunpack.c.l.b16 %v3845
      %v3961 = vunpack.c.l.b16 %v3846
      %v3962 = vunpack.c.l.b16 %v3847
      %v3963 = vunpack.c.l.b16 %v3848
      %v3964 = vunpack.c.l.b16 %v3849
      %v3965 = vunpack.c.l.b16 %v3850
      %v3966 = vunpack.c.l.b16 %v3851
      %v3967 = vunpack.c.l.b16 %v3852
      %v3968 = vunpack.c.l.b16 %v3853
      %v3969 = vunpack.c.l.b16 %v3854
      %v3970 = vunpack.c.l.b16 %v3855
      %v3971 = vunpack.c.l.b16 %v3856
      %v3972 = vunpack.c.l.b16 %v3857
      %v3973 = vunpack.c.l.b16 %v3858
      %v3974 = vunpack.c.l.b16 %v3859
      %v3975 = vunpack.c.l.b16 %v3860
      %v3976 = vunpack.c.l.b16 %v3861
      %v3977 = vunpack.c.l.b16 %v3862
      %v3978 = vunpack.c.l.b16 %v3863
      %v3979 = vunpack.c.l.b16 %v3864
      %v3980 = vunpack.c.l.b16 %v3865
      %v3981 = vunpack.c.l.b16 %v3866
      %v3982 = vunpack.c.l.b16 %v3867
      %v3983 = vunpack.c.l.b16 %v3868
      %v3984 = vunpack.c.l.b16 %v3869
      %v3985 = vunpack.c.l.b16 %v3870
      %v3986 = vunpack.c.l.b16 %v3871
      %v3987 = vunpack.c.l.b16 %v3872
      %v3988 = vunpack.c.l.b16 %v3873
      %v3989 = vunpack.c.l.b16 %v3874
      %v3990 = vunpack.c.l.b16 %v3875
      %v3991 = vunpack.c.l.b16 %v3876
      %v3992 = vunpack.c.l.b16 %v3877
      %v3993 = vunpack.c.l.b16 %v3878
      %v3994 = vunpack.c.l.b16 %v3879
      %v3995 = vunpack.c.l.b16 %v3880
      %v3996 = vunpack.c.l.b16 %v3881
      %v3997 = vunpack.c.l.b16 %v3882
      %v3998 = vunpack.c.l.b16 %v3883
      %v3999 = vunpack.c.l.b16 %v3884
      %v4000 = vunpack.c.l.b16 %v3885
      %v4001 = vunpack.c.l.b16 %v3886
      %v4002 = vunpack.c.l.b16 %v3887
      %v4003 = vunpack.c.l.b16 %v3888
      %v4004 = vunpack.c.l.b16 %v3889
      %v4005 = vunpack.c.l.b16 %v3890
      %v4006 = vunpack.c.l.b16 %v3891
      %v4007 = vunpack.c.l.b16 %v3892
      %v4008 = vpack.c.b16 %v3960, %v3959
      %v4009 = vpack.c.b16 %v3962, %v3961
      %v4010 = vpack.c.b16 %v3964, %v3963
      %v4011 = vpack.c.b16 %v3966, %v3965
      %v4012 = vpack.c.b16 %v3968, %v3967
      %v4013 = vpack.c.b16 %v3970, %v3969
      %v4014 = vpack.c.b16 %v3972, %v3971
      %v4015 = vpack.c.b16 %v3974, %v3973
      %v4016 = vpack.c.b16 %v3976, %v3975
      %v4017 = vpack.c.b16 %v3978, %v3977
      %v4018 = vpack.c.b16 %v3980, %v3979
      %v4019 = vpack.c.b16 %v3982, %v3981
      %v4020 = vpack.c.b16 %v3984, %v3983
      %v4021 = vpack.c.b16 %v3986, %v3985
      %v4022 = vpack.c.b16 %v3988, %v3987
      %v4023 = vpack.c.b16 %v3990, %v3989
      %v4024 = vpack.c.b16 %v3992, %v3991
      %v4025 = vpack.c.b16 %v3994, %v3993
      %v4026 = vpack.c.b16 %v3996, %v3995
      %v4027 = vpack.c.b16 %v3998, %v3997
      %v4028 = vpack.c.b16 %v4000, %v3999
      %v4029 = vpack.c.b16 %v4002, %v4001
      %v4030 = vpack.c.b16 %v4004, %v4003
      %v4031 = vpack.c.b16 %v4006, %v4005
      %v4032 = vpack.c.b16 %v4007, %v4007
      %v4034 = vshrl.u32 %v4008, 16
      %v4036 = vshll.u32 %v4008, 16
      %v4038 = vrot.slane %v4036, 1
      %v4039 = vor.u32 %v4034, %v4038
      %v4041 = vshll.u32 %v4009, 16
      %v4043 = vrot.slane %v4041, 1
      %v4044 = vsel %vm432, %v4039, %v4043
      %v4045 = vshrl.u32 %v4009, 16
      %v4047 = vor.u32 %v4045, %v4043
      %v4049 = vshll.u32 %v4010, 16
      %v4051 = vrot.slane %v4049, 1
      %v4052 = vsel %vm432, %v4047, %v4051
      %v4053 = vshrl.u32 %v4010, 16
      %v4055 = vor.u32 %v4053, %v4051
      %v4057 = vshll.u32 %v4011, 16
      %v4059 = vrot.slane %v4057, 1
      %v4060 = vsel %vm432, %v4055, %v4059
      %v4061 = vshrl.u32 %v4011, 16
      %v4063 = vor.u32 %v4061, %v4059
      %v4065 = vshll.u32 %v4012, 16
      %v4067 = vrot.slane %v4065, 1
      %v4068 = vsel %vm432, %v4063, %v4067
      %v4069 = vshrl.u32 %v4012, 16
      %v4071 = vor.u32 %v4069, %v4067
      %v4073 = vshll.u32 %v4013, 16
      %v4075 = vrot.slane %v4073, 1
      %v4076 = vsel %vm432, %v4071, %v4075
      %v4077 = vshrl.u32 %v4013, 16
      %v4079 = vor.u32 %v4077, %v4075
      %v4081 = vshll.u32 %v4014, 16
      %v4083 = vrot.slane %v4081, 1
      %v4084 = vsel %vm432, %v4079, %v4083
      %v4085 = vshrl.u32 %v4014, 16
      %v4087 = vor.u32 %v4085, %v4083
      %v4089 = vshll.u32 %v4015, 16
      %v4091 = vrot.slane %v4089, 1
      %v4092 = vsel %vm432, %v4087, %v4091
      %v4093 = vshrl.u32 %v4015, 16
      %v4095 = vor.u32 %v4093, %v4091
      %v4097 = vshll.u32 %v4016, 16
      %v4099 = vrot.slane %v4097, 1
      %v4100 = vsel %vm432, %v4095, %v4099
      %v4101 = vshrl.u32 %v4016, 16
      %v4103 = vor.u32 %v4101, %v4099
      %v4105 = vshll.u32 %v4017, 16
      %v4107 = vrot.slane %v4105, 1
      %v4108 = vsel %vm432, %v4103, %v4107
      %v4109 = vshrl.u32 %v4017, 16
      %v4111 = vor.u32 %v4109, %v4107
      %v4113 = vshll.u32 %v4018, 16
      %v4115 = vrot.slane %v4113, 1
      %v4116 = vsel %vm432, %v4111, %v4115
      %v4117 = vshrl.u32 %v4018, 16
      %v4119 = vor.u32 %v4117, %v4115
      %v4121 = vshll.u32 %v4019, 16
      %v4123 = vrot.slane %v4121, 1
      %v4124 = vsel %vm432, %v4119, %v4123
      %v4125 = vshrl.u32 %v4019, 16
      %v4127 = vor.u32 %v4125, %v4123
      %v4129 = vshll.u32 %v4020, 16
      %v4131 = vrot.slane %v4129, 1
      %v4132 = vsel %vm432, %v4127, %v4131
      %v4133 = vshrl.u32 %v4020, 16
      %v4135 = vor.u32 %v4133, %v4131
      %v4137 = vshll.u32 %v4021, 16
      %v4139 = vrot.slane %v4137, 1
      %v4140 = vsel %vm432, %v4135, %v4139
      %v4141 = vshrl.u32 %v4021, 16
      %v4143 = vor.u32 %v4141, %v4139
      %v4145 = vshll.u32 %v4022, 16
      %v4147 = vrot.slane %v4145, 1
      %v4148 = vsel %vm432, %v4143, %v4147
      %v4149 = vshrl.u32 %v4022, 16
      %v4151 = vor.u32 %v4149, %v4147
      %v4153 = vshll.u32 %v4023, 16
      %v4155 = vrot.slane %v4153, 1
      %v4156 = vsel %vm432, %v4151, %v4155
      %v4157 = vshrl.u32 %v4023, 16
      %v4159 = vor.u32 %v4157, %v4155
      %v4161 = vshll.u32 %v4024, 16
      %v4163 = vrot.slane %v4161, 1
      %v4164 = vsel %vm432, %v4159, %v4163
      %v4165 = vshrl.u32 %v4024, 16
      %v4167 = vor.u32 %v4165, %v4163
      %v4169 = vshll.u32 %v4025, 16
      %v4171 = vrot.slane %v4169, 1
      %v4172 = vsel %vm432, %v4167, %v4171
      %v4173 = vshrl.u32 %v4025, 16
      %v4175 = vor.u32 %v4173, %v4171
      %v4177 = vshll.u32 %v4026, 16
      %v4179 = vrot.slane %v4177, 1
      %v4180 = vsel %vm432, %v4175, %v4179
      %v4181 = vshrl.u32 %v4026, 16
      %v4183 = vor.u32 %v4181, %v4179
      %v4185 = vshll.u32 %v4027, 16
      %v4187 = vrot.slane %v4185, 1
      %v4188 = vsel %vm432, %v4183, %v4187
      %v4189 = vshrl.u32 %v4027, 16
      %v4191 = vor.u32 %v4189, %v4187
      %v4193 = vshll.u32 %v4028, 16
      %v4195 = vrot.slane %v4193, 1
      %v4196 = vsel %vm432, %v4191, %v4195
      %v4197 = vshrl.u32 %v4028, 16
      %v4199 = vor.u32 %v4197, %v4195
      %v4201 = vshll.u32 %v4029, 16
      %v4203 = vrot.slane %v4201, 1
      %v4204 = vsel %vm432, %v4199, %v4203
      %v4205 = vshrl.u32 %v4029, 16
      %v4207 = vor.u32 %v4205, %v4203
      %v4209 = vshll.u32 %v4030, 16
      %v4211 = vrot.slane %v4209, 1
      %v4212 = vsel %vm432, %v4207, %v4211
      %v4213 = vshrl.u32 %v4030, 16
      %v4215 = vor.u32 %v4213, %v4211
      %v4217 = vshll.u32 %v4031, 16
      %v4219 = vrot.slane %v4217, 1
      %v4220 = vsel %vm432, %v4215, %v4219
      %v4221 = vshrl.u32 %v4031, 16
      %v4223 = vor.u32 %v4221, %v4219
      %v4225 = vshll.u32 %v4032, 16
      %v4227 = vrot.slane %v4225, 1
      %v4228 = vsel %vm432, %v4223, %v4227
      %v4269 = vunpack.c.l.b16 %v3894
      %v4270 = vunpack.c.l.b16 %v3895
      %v4271 = vunpack.c.l.b16 %v3896
      %v4272 = vunpack.c.l.b16 %v3897
      %v4273 = vunpack.c.l.b16 %v3898
      %v4274 = vunpack.c.l.b16 %v3899
      %v4275 = vunpack.c.l.b16 %v3900
      %v4276 = vunpack.c.l.b16 %v3901
      %v4277 = vunpack.c.l.b16 %v3902
      %v4278 = vunpack.c.l.b16 %v3903
      %v4279 = vunpack.c.l.b16 %v3904
      %v4280 = vunpack.c.l.b16 %v3905
      %v4281 = vunpack.c.l.b16 %v3906
      %v4282 = vunpack.c.l.b16 %v3907
      %v4283 = vunpack.c.l.b16 %v3908
      %v4284 = vunpack.c.l.b16 %v3909
      %v4285 = vpack.c.b16 %v4270, %v4269
      %v4286 = vpack.c.b16 %v4272, %v4271
      %v4287 = vpack.c.b16 %v4274, %v4273
      %v4288 = vpack.c.b16 %v4276, %v4275
      %v4289 = vpack.c.b16 %v4278, %v4277
      %v4290 = vpack.c.b16 %v4280, %v4279
      %v4291 = vpack.c.b16 %v4282, %v4281
      %v4292 = vpack.c.b16 %v4284, %v4283
      %4301 = vmatprep.subr.bf16.mxu0 0
      %4302 = vmatpush1.bf16.msra.mxu0 %v4285
      %4303 = vmatprep.subr.bf16.mxu0 0
      %4304 = vmatpush1.bf16.msra.mxu0 %v4286
      %4305 = vmatprep.subr.bf16.mxu0 0
      %4306 = vmatpush1.bf16.msra.mxu0 %v4287
      %4307 = vmatprep.subr.bf16.mxu0 0
      %4308 = vmatpush1.bf16.msra.mxu0 %v4288
      %4309 = vmatprep.subr.bf16.mxu0 0
      %4310 = vmatpush1.bf16.msra.mxu0 %v4289
      %4311 = vmatprep.subr.bf16.mxu0 0
      %4312 = vmatpush1.bf16.msra.mxu0 %v4290
      %4313 = vmatprep.subr.bf16.mxu0 0
      %4314 = vmatpush1.bf16.msra.mxu0 %v4291
      %4315 = vmatprep.subr.bf16.mxu0 0
      %4316 = vmatpush1.bf16.msra.mxu0 %v4292
      %4317 = vmatprep.subr.bf16.mxu0 0
      %4318 = vmatpush1.bf16.msra.mxu0 0
      %4319 = vmatprep.subr.bf16.mxu0 0
      %4320 = vmatpush1.bf16.msra.mxu0 0
      %4321 = vmatprep.subr.bf16.mxu0 0
      %4322 = vmatpush1.bf16.msra.mxu0 0
      %4323 = vmatprep.subr.bf16.mxu0 0
      %4324 = vmatpush1.bf16.msra.mxu0 0
      %4325 = vmatprep.subr.bf16.mxu0 0
      %4326 = vmatpush1.bf16.msra.mxu0 0
      %4327 = vmatprep.subr.bf16.mxu0 0
      %4328 = vmatpush1.bf16.msra.mxu0 0
      %4329 = vmatprep.subr.bf16.mxu0 0
      %4330 = vmatpush1.bf16.msra.mxu0 0
      %4331 = vmatprep.subr.bf16.mxu0 0
      %4332 = vmatpush1.bf16.msra.mxu0 0
      %4333 = vmatprep.mubr.bf16.mxu0 0
      %4334 = vmatmul.mubr.bf16.gmra.mrb[0].mxu0 %v4044
      %v4335 = vpop.f32.mrb[0].mxu0
      %v4336 = vadd.f32 0.0, %v4335
      %v4337 = vpop.f32.mrb[0].mxu0
      %v4338 = vpop.f32.mrb[0].mxu0
      %v4339 = vadd.f32 0.0, %v4338
      %v4340 = vpop.f32.mrb[0].mxu0
      %4341 = vmatprep.mubr.bf16.mxu0 0
      %4342 = vmatmul.mubr.bf16.gmra.mrb[0].mxu0 %v4052
      %v4343 = vpop.f32.mrb[0].mxu0
      %v4344 = vadd.f32 0.0, %v4343
      %v4345 = vpop.f32.mrb[0].mxu0
      %v4346 = vpop.f32.mrb[0].mxu0
      %v4347 = vadd.f32 0.0, %v4346
      %v4348 = vpop.f32.mrb[0].mxu0
      %4349 = vmatprep.mubr.bf16.mxu0 0
      %4350 = vmatmul.mubr.bf16.gmra.mrb[0].mxu0 %v4060
      %v4351 = vpop.f32.mrb[0].mxu0
      %v4352 = vadd.f32 0.0, %v4351
      %v4353 = vpop.f32.mrb[0].mxu0
      %v4354 = vpop.f32.mrb[0].mxu0
      %v4355 = vadd.f32 0.0, %v4354
      %v4356 = vpop.f32.mrb[0].mxu0
      %4357 = vmatprep.mubr.bf16.mxu0 0
      %4358 = vmatmul.mubr.bf16.gmra.mrb[0].mxu0 %v4068
      %v4359 = vpop.f32.mrb[0].mxu0
      %v4360 = vadd.f32 0.0, %v4359
      %v4361 = vpop.f32.mrb[0].mxu0
      %v4362 = vpop.f32.mrb[0].mxu0
      %v4363 = vadd.f32 0.0, %v4362
      %v4364 = vpop.f32.mrb[0].mxu0
      %4365 = vmatprep.mubr.bf16.mxu0 0
      %4366 = vmatmul.mubr.bf16.gmra.mrb[0].mxu0 %v4076
      %v4367 = vpop.f32.mrb[0].mxu0
      %v4368 = vadd.f32 0.0, %v4367
      %v4369 = vpop.f32.mrb[0].mxu0
      %v4370 = vpop.f32.mrb[0].mxu0
      %v4371 = vadd.f32 0.0, %v4370
      %v4372 = vpop.f32.mrb[0].mxu0
      %4373 = vmatprep.mubr.bf16.mxu0 0
      %4374 = vmatmul.mubr.bf16.gmra.mrb[0].mxu0 %v4084
      %v4375 = vpop.f32.mrb[0].mxu0
      %v4376 = vadd.f32 0.0, %v4375
      %v4377 = vpop.f32.mrb[0].mxu0
      %v4378 = vpop.f32.mrb[0].mxu0
      %v4379 = vadd.f32 0.0, %v4378
      %v4380 = vpop.f32.mrb[0].mxu0
      %4381 = vmatprep.mubr.bf16.mxu0 0
      %4382 = vmatmul.mubr.bf16.gmra.mrb[0].mxu0 %v4092
      %v4383 = vpop.f32.mrb[0].mxu0
      %v4384 = vadd.f32 0.0, %v4383
      %v4385 = vpop.f32.mrb[0].mxu0
      %v4386 = vpop.f32.mrb[0].mxu0
      %v4387 = vadd.f32 0.0, %v4386
      %v4388 = vpop.f32.mrb[0].mxu0
      %4389 = vmatprep.mubr.bf16.mxu0 0
      %4390 = vmatmul.mubr.bf16.gmra.mrb[0].mxu0 %v4100
      %v4391 = vpop.f32.mrb[0].mxu0
      %v4392 = vadd.f32 0.0, %v4391
      %v4393 = vpop.f32.mrb[0].mxu0
      %v4394 = vpop.f32.mrb[0].mxu0
      %v4395 = vadd.f32 0.0, %v4394
      %v4396 = vpop.f32.mrb[0].mxu0
      %4397 = vmatprep.mubr.bf16.mxu0 0
      %4398 = vmatmul.mubr.bf16.gmra.mrb[0].mxu0 %v4108
      %v4399 = vpop.f32.mrb[0].mxu0
      %v4400 = vadd.f32 0.0, %v4399
      %v4401 = vpop.f32.mrb[0].mxu0
      %v4402 = vpop.f32.mrb[0].mxu0
      %v4403 = vadd.f32 0.0, %v4402
      %v4404 = vpop.f32.mrb[0].mxu0
      %4405 = vmatprep.mubr.bf16.mxu0 0
      %4406 = vmatmul.mubr.bf16.gmra.mrb[0].mxu0 %v4116
      %v4407 = vpop.f32.mrb[0].mxu0
      %v4408 = vadd.f32 0.0, %v4407
      %v4409 = vpop.f32.mrb[0].mxu0
      %v4410 = vpop.f32.mrb[0].mxu0
      %v4411 = vadd.f32 0.0, %v4410
      %v4412 = vpop.f32.mrb[0].mxu0
      %4413 = vmatprep.mubr.bf16.mxu0 0
      %4414 = vmatmul.mubr.bf16.gmra.mrb[0].mxu0 %v4124
      %v4415 = vpop.f32.mrb[0].mxu0
      %v4416 = vadd.f32 0.0, %v4415
      %v4417 = vpop.f32.mrb[0].mxu0
      %v4418 = vpop.f32.mrb[0].mxu0
      %v4419 = vadd.f32 0.0, %v4418
      %v4420 = vpop.f32.mrb[0].mxu0
      %4421 = vmatprep.mubr.bf16.mxu0 0
      %4422 = vmatmul.mubr.bf16.gmra.mrb[0].mxu0 %v4132
      %v4423 = vpop.f32.mrb[0].mxu0
      %v4424 = vadd.f32 0.0, %v4423
      %v4425 = vpop.f32.mrb[0].mxu0
      %v4426 = vpop.f32.mrb[0].mxu0
      %v4427 = vadd.f32 0.0, %v4426
      %v4428 = vpop.f32.mrb[0].mxu0
      %4429 = vmatprep.mubr.bf16.mxu0 0
      %4430 = vmatmul.mubr.bf16.gmra.mrb[0].mxu0 %v4140
      %v4431 = vpop.f32.mrb[0].mxu0
      %v4432 = vadd.f32 0.0, %v4431
      %v4433 = vpop.f32.mrb[0].mxu0
      %v4434 = vpop.f32.mrb[0].mxu0
      %v4435 = vadd.f32 0.0, %v4434
      %v4436 = vpop.f32.mrb[0].mxu0
      %4437 = vmatprep.mubr.bf16.mxu0 0
      %4438 = vmatmul.mubr.bf16.gmra.mrb[0].mxu0 %v4148
      %v4439 = vpop.f32.mrb[0].mxu0
      %v4440 = vadd.f32 0.0, %v4439
      %v4441 = vpop.f32.mrb[0].mxu0
      %v4442 = vpop.f32.mrb[0].mxu0
      %v4443 = vadd.f32 0.0, %v4442
      %v4444 = vpop.f32.mrb[0].mxu0
      %4445 = vmatprep.mubr.bf16.mxu0 0
      %4446 = vmatmul.mubr.bf16.gmra.mrb[0].mxu0 %v4156
      %v4447 = vpop.f32.mrb[0].mxu0
      %v4448 = vadd.f32 0.0, %v4447
      %v4449 = vpop.f32.mrb[0].mxu0
      %v4450 = vpop.f32.mrb[0].mxu0
      %v4451 = vadd.f32 0.0, %v4450
      %v4452 = vpop.f32.mrb[0].mxu0
      %4453 = vmatprep.mubr.bf16.mxu0 0
      %4454 = vmatmul.mubr.bf16.gmra.mrb[0].mxu0 %v4164
      %v4455 = vpop.f32.mrb[0].mxu0
      %v4456 = vadd.f32 0.0, %v4455
      %v4457 = vpop.f32.mrb[0].mxu0
      %v4458 = vpop.f32.mrb[0].mxu0
      %v4459 = vadd.f32 0.0, %v4458
      %v4460 = vpop.f32.mrb[0].mxu0
      %4461 = vmatprep.mubr.bf16.mxu0 0
      %4462 = vmatmul.mubr.bf16.gmra.mrb[0].mxu0 %v4172
      %v4463 = vpop.f32.mrb[0].mxu0
      %v4464 = vadd.f32 0.0, %v4463
      %v4465 = vpop.f32.mrb[0].mxu0
      %v4466 = vpop.f32.mrb[0].mxu0
      %v4467 = vadd.f32 0.0, %v4466
      %v4468 = vpop.f32.mrb[0].mxu0
      %4469 = vmatprep.mubr.bf16.mxu0 0
      %4470 = vmatmul.mubr.bf16.gmra.mrb[0].mxu0 %v4180
      %v4471 = vpop.f32.mrb[0].mxu0
      %v4472 = vadd.f32 0.0, %v4471
      %v4473 = vpop.f32.mrb[0].mxu0
      %v4474 = vpop.f32.mrb[0].mxu0
      %v4475 = vadd.f32 0.0, %v4474
      %v4476 = vpop.f32.mrb[0].mxu0
      %4477 = vmatprep.mubr.bf16.mxu0 0
      %4478 = vmatmul.mubr.bf16.gmra.mrb[0].mxu0 %v4188
      %v4479 = vpop.f32.mrb[0].mxu0
      %v4480 = vadd.f32 0.0, %v4479
      %v4481 = vpop.f32.mrb[0].mxu0
      %v4482 = vpop.f32.mrb[0].mxu0
      %v4483 = vadd.f32 0.0, %v4482
      %v4484 = vpop.f32.mrb[0].mxu0
      %4485 = vmatprep.mubr.bf16.mxu0 0
      %4486 = vmatmul.mubr.bf16.gmra.mrb[0].mxu0 %v4196
      %v4487 = vpop.f32.mrb[0].mxu0
      %v4488 = vadd.f32 0.0, %v4487
      %v4489 = vpop.f32.mrb[0].mxu0
      %v4490 = vpop.f32.mrb[0].mxu0
      %v4491 = vadd.f32 0.0, %v4490
      %v4492 = vpop.f32.mrb[0].mxu0
      %4493 = vmatprep.mubr.bf16.mxu0 0
      %4494 = vmatmul.mubr.bf16.gmra.mrb[0].mxu0 %v4204
      %v4495 = vpop.f32.mrb[0].mxu0
      %v4496 = vadd.f32 0.0, %v4495
      %v4497 = vpop.f32.mrb[0].mxu0
      %v4498 = vpop.f32.mrb[0].mxu0
      %v4499 = vadd.f32 0.0, %v4498
      %v4500 = vpop.f32.mrb[0].mxu0
      %4501 = vmatprep.mubr.bf16.mxu0 0
      %4502 = vmatmul.mubr.bf16.gmra.mrb[0].mxu0 %v4212
      %v4503 = vpop.f32.mrb[0].mxu0
      %v4504 = vadd.f32 0.0, %v4503
      %v4505 = vpop.f32.mrb[0].mxu0
      %v4506 = vpop.f32.mrb[0].mxu0
      %v4507 = vadd.f32 0.0, %v4506
      %v4508 = vpop.f32.mrb[0].mxu0
      %4509 = vmatprep.mubr.bf16.mxu0 0
      %4510 = vmatmul.mubr.bf16.gmra.mrb[0].mxu0 %v4220
      %v4511 = vpop.f32.mrb[0].mxu0
      %v4512 = vadd.f32 0.0, %v4511
      %v4513 = vpop.f32.mrb[0].mxu0
      %v4514 = vpop.f32.mrb[0].mxu0
      %v4515 = vadd.f32 0.0, %v4514
      %v4516 = vpop.f32.mrb[0].mxu0
      %4517 = vmatprep.mubr.bf16.mxu0 0
      %4518 = vmatmul.mubr.bf16.gmra.mrb[0].mxu0 %v4228
      %v4519 = vpop.f32.mrb[0].mxu0
      %v4520 = vadd.f32 0.0, %v4519
      %v4521 = vpop.f32.mrb[0].mxu0
      %v4522 = vpop.f32.mrb[0].mxu0
      %v4523 = vadd.f32 0.0, %v4522
      %v4524 = vpop.f32.mrb[0].mxu0
      %4525 = vdwg.mxu0
      %v4526 = vadd.f32 %v3796, %v4336
      %v4527 = vadd.f32 %v3797, %v4339
      %v4528 = vadd.f32 %v3798, %v4344
      %v4529 = vadd.f32 %v3799, %v4347
      %v4530 = vadd.f32 %v3800, %v4352
      %v4531 = vadd.f32 %v3801, %v4355
      %v4532 = vadd.f32 %v3802, %v4360
      %v4533 = vadd.f32 %v3803, %v4363
      %v4534 = vadd.f32 %v3804, %v4368
      %v4535 = vadd.f32 %v3805, %v4371
      %v4536 = vadd.f32 %v3806, %v4376
      %v4537 = vadd.f32 %v3807, %v4379
      %v4538 = vadd.f32 %v3808, %v4384
      %v4539 = vadd.f32 %v3809, %v4387
      %v4540 = vadd.f32 %v3810, %v4392
      %v4541 = vadd.f32 %v3811, %v4395
      %v4542 = vadd.f32 %v3812, %v4400
      %v4543 = vadd.f32 %v3813, %v4403
      %v4544 = vadd.f32 %v3814, %v4408
      %v4545 = vadd.f32 %v3815, %v4411
      %v4546 = vadd.f32 %v3816, %v4416
      %v4547 = vadd.f32 %v3817, %v4419
      %v4548 = vadd.f32 %v3818, %v4424
      %v4549 = vadd.f32 %v3819, %v4427
      %v4550 = vadd.f32 %v3820, %v4432
      %v4551 = vadd.f32 %v3821, %v4435
      %v4552 = vadd.f32 %v3822, %v4440
      %v4553 = vadd.f32 %v3823, %v4443
      %v4554 = vadd.f32 %v3824, %v4448
      %v4555 = vadd.f32 %v3825, %v4451
      %v4556 = vadd.f32 %v3826, %v4456
      %v4557 = vadd.f32 %v3827, %v4459
      %v4558 = vadd.f32 %v3828, %v4464
      %v4559 = vadd.f32 %v3829, %v4467
      %v4560 = vadd.f32 %v3830, %v4472
      %v4561 = vadd.f32 %v3831, %v4475
      %v4562 = vadd.f32 %v3832, %v4480
      %v4563 = vadd.f32 %v3833, %v4483
      %v4564 = vadd.f32 %v3834, %v4488
      %v4565 = vadd.f32 %v3835, %v4491
      %v4566 = vadd.f32 %v3836, %v4496
      %v4567 = vadd.f32 %v3837, %v4499
      %v4568 = vadd.f32 %v3838, %v4504
      %v4569 = vadd.f32 %v3839, %v4507
      %v4570 = vadd.f32 %v3840, %v4512
      %v4571 = vadd.f32 %v3841, %v4515
      %v4572 = vadd.f32 %v3842, %v4520
      %v4573 = vadd.f32 %v3843, %v4523
      %v4574 = vld [vmem:[%s209 + $0x18] sm:$0xe]
      %s4575 = scalar_lea.vmem %s1, 512
      %v4576 = vld [vmem:[%s4575] sm:$0xf]
      %v4577 = vld [vmem:[%s4575 + $0x4] sm:$0xf]
      %v4578 = vld [vmem:[%s4575 + $0x8] sm:$0xf]
      %v4579 = vld [vmem:[%s4575 + $0xc] sm:$0xf]
      %v4580 = vld [vmem:[%s4575 + $0x10] sm:$0xf]
      %v4581 = vld [vmem:[%s4575 + $0x14] sm:$0xf]
      %v4582 = vld [vmem:[%s4575 + $0x18] sm:$0xf]
      %v4583 = vld [vmem:[%s4575 + $0x1c] sm:$0xf]
      %v4584 = vld [vmem:[%s4575 + $0x20] sm:$0xf]
      %v4585 = vld [vmem:[%s4575 + $0x24] sm:$0xf]
      %v4586 = vld [vmem:[%s4575 + $0x28] sm:$0xf]
      %v4587 = vld [vmem:[%s4575 + $0x2c] sm:$0xf]
      %v4588 = vld [vmem:[%s4575 + $0x30] sm:$0xf]
      %v4589 = vld [vmem:[%s4575 + $0x34] sm:$0xf]
      %v4590 = vld [vmem:[%s4575 + $0x38] sm:$0xf]
      %v4591 = vld [vmem:[%s4575 + $0x3c] sm:$0xf]
      %v4593 = vunpack.c.l.b16 %v4574
      %v4594 = vpack.c.b16 %v3960, %v4593
      %v4595 = vrot.slane %v4594, 1
      %v4596 = vrot.slane %v4009, 1
      %v4597 = vsel %vm1244, %v4595, %v4596
      %v4598 = vrot.slane %v4010, 1
      %v4599 = vsel %vm1244, %v4596, %v4598
      %v4600 = vrot.slane %v4011, 1
      %v4601 = vsel %vm1244, %v4598, %v4600
      %v4602 = vrot.slane %v4012, 1
      %v4603 = vsel %vm1244, %v4600, %v4602
      %v4604 = vrot.slane %v4013, 1
      %v4605 = vsel %vm1244, %v4602, %v4604
      %v4606 = vrot.slane %v4014, 1
      %v4607 = vsel %vm1244, %v4604, %v4606
      %v4608 = vrot.slane %v4015, 1
      %v4609 = vsel %vm1244, %v4606, %v4608
      %v4610 = vrot.slane %v4016, 1
      %v4611 = vsel %vm1244, %v4608, %v4610
      %v4612 = vrot.slane %v4017, 1
      %v4613 = vsel %vm1244, %v4610, %v4612
      %v4614 = vrot.slane %v4018, 1
      %v4615 = vsel %vm1244, %v4612, %v4614
      %v4616 = vrot.slane %v4019, 1
      %v4617 = vsel %vm1244, %v4614, %v4616
      %v4618 = vrot.slane %v4020, 1
      %v4619 = vsel %vm1244, %v4616, %v4618
      %v4620 = vrot.slane %v4021, 1
      %v4621 = vsel %vm1244, %v4618, %v4620
      %v4622 = vrot.slane %v4022, 1
      %v4623 = vsel %vm1244, %v4620, %v4622
      %v4624 = vrot.slane %v4023, 1
      %v4625 = vsel %vm1244, %v4622, %v4624
      %v4626 = vrot.slane %v4024, 1
      %v4627 = vsel %vm1244, %v4624, %v4626
      %v4628 = vrot.slane %v4025, 1
      %v4629 = vsel %vm1244, %v4626, %v4628
      %v4630 = vrot.slane %v4026, 1
      %v4631 = vsel %vm1244, %v4628, %v4630
      %v4632 = vrot.slane %v4027, 1
      %v4633 = vsel %vm1244, %v4630, %v4632
      %v4634 = vrot.slane %v4028, 1
      %v4635 = vsel %vm1244, %v4632, %v4634
      %v4636 = vrot.slane %v4029, 1
      %v4637 = vsel %vm1244, %v4634, %v4636
      %v4638 = vrot.slane %v4030, 1
      %v4639 = vsel %vm1244, %v4636, %v4638
      %v4640 = vrot.slane %v4031, 1
      %v4641 = vsel %vm1244, %v4638, %v4640
      %v4642 = vrot.slane %v4032, 1
      %v4643 = vsel %vm1244, %v4640, %v4642
      %v4684 = vunpack.c.l.b16 %v4576
      %v4685 = vunpack.c.l.b16 %v4577
      %v4686 = vunpack.c.l.b16 %v4578
      %v4687 = vunpack.c.l.b16 %v4579
      %v4688 = vunpack.c.l.b16 %v4580
      %v4689 = vunpack.c.l.b16 %v4581
      %v4690 = vunpack.c.l.b16 %v4582
      %v4691 = vunpack.c.l.b16 %v4583
      %v4692 = vunpack.c.l.b16 %v4584
      %v4693 = vunpack.c.l.b16 %v4585
      %v4694 = vunpack.c.l.b16 %v4586
      %v4695 = vunpack.c.l.b16 %v4587
      %v4696 = vunpack.c.l.b16 %v4588
      %v4697 = vunpack.c.l.b16 %v4589
      %v4698 = vunpack.c.l.b16 %v4590
      %v4699 = vunpack.c.l.b16 %v4591
      %v4700 = vpack.c.b16 %v4685, %v4684
      %v4701 = vpack.c.b16 %v4687, %v4686
      %v4702 = vpack.c.b16 %v4689, %v4688
      %v4703 = vpack.c.b16 %v4691, %v4690
      %v4704 = vpack.c.b16 %v4693, %v4692
      %v4705 = vpack.c.b16 %v4695, %v4694
      %v4706 = vpack.c.b16 %v4697, %v4696
      %v4707 = vpack.c.b16 %v4699, %v4698
      %4716 = vmatprep.subr.bf16.mxu0 0
      %4717 = vmatpush1.bf16.msra.mxu0 %v4700
      %4718 = vmatprep.subr.bf16.mxu0 0
      %4719 = vmatpush1.bf16.msra.mxu0 %v4701
      %4720 = vmatprep.subr.bf16.mxu0 0
      %4721 = vmatpush1.bf16.msra.mxu0 %v4702
      %4722 = vmatprep.subr.bf16.mxu0 0
      %4723 = vmatpush1.bf16.msra.mxu0 %v4703
      %4724 = vmatprep.subr.bf16.mxu0 0
      %4725 = vmatpush1.bf16.msra.mxu0 %v4704
      %4726 = vmatprep.subr.bf16.mxu0 0
      %4727 = vmatpush1.bf16.msra.mxu0 %v4705
      %4728 = vmatprep.subr.bf16.mxu0 0
      %4729 = vmatpush1.bf16.msra.mxu0 %v4706
      %4730 = vmatprep.subr.bf16.mxu0 0
      %4731 = vmatpush1.bf16.msra.mxu0 %v4707
      %4732 = vmatprep.subr.bf16.mxu0 0
      %4733 = vmatpush1.bf16.msra.mxu0 0
      %4734 = vmatprep.subr.bf16.mxu0 0
      %4735 = vmatpush1.bf16.msra.mxu0 0
      %4736 = vmatprep.subr.bf16.mxu0 0
      %4737 = vmatpush1.bf16.msra.mxu0 0
      %4738 = vmatprep.subr.bf16.mxu0 0
      %4739 = vmatpush1.bf16.msra.mxu0 0
      %4740 = vmatprep.subr.bf16.mxu0 0
      %4741 = vmatpush1.bf16.msra.mxu0 0
      %4742 = vmatprep.subr.bf16.mxu0 0
      %4743 = vmatpush1.bf16.msra.mxu0 0
      %4744 = vmatprep.subr.bf16.mxu0 0
      %4745 = vmatpush1.bf16.msra.mxu0 0
      %4746 = vmatprep.subr.bf16.mxu0 0
      %4747 = vmatpush1.bf16.msra.mxu0 0
      %4748 = vmatprep.mubr.bf16.mxu0 0
      %4749 = vmatmul.mubr.bf16.gmra.mrb[0].mxu0 %v4597
      %v4750 = vpop.f32.mrb[0].mxu0
      %v4751 = vadd.f32 0.0, %v4750
      %v4752 = vpop.f32.mrb[0].mxu0
      %v4753 = vpop.f32.mrb[0].mxu0
      %v4754 = vadd.f32 0.0, %v4753
      %v4755 = vpop.f32.mrb[0].mxu0
      %4756 = vmatprep.mubr.bf16.mxu0 0
      %4757 = vmatmul.mubr.bf16.gmra.mrb[0].mxu0 %v4599
      %v4758 = vpop.f32.mrb[0].mxu0
      %v4759 = vadd.f32 0.0, %v4758
      %v4760 = vpop.f32.mrb[0].mxu0
      %v4761 = vpop.f32.mrb[0].mxu0
      %v4762 = vadd.f32 0.0, %v4761
      %v4763 = vpop.f32.mrb[0].mxu0
      %4764 = vmatprep.mubr.bf16.mxu0 0
      %4765 = vmatmul.mubr.bf16.gmra.mrb[0].mxu0 %v4601
      %v4766 = vpop.f32.mrb[0].mxu0
      %v4767 = vadd.f32 0.0, %v4766
      %v4768 = vpop.f32.mrb[0].mxu0
      %v4769 = vpop.f32.mrb[0].mxu0
      %v4770 = vadd.f32 0.0, %v4769
      %v4771 = vpop.f32.mrb[0].mxu0
      %4772 = vmatprep.mubr.bf16.mxu0 0
      %4773 = vmatmul.mubr.bf16.gmra.mrb[0].mxu0 %v4603
      %v4774 = vpop.f32.mrb[0].mxu0
      %v4775 = vadd.f32 0.0, %v4774
      %v4776 = vpop.f32.mrb[0].mxu0
      %v4777 = vpop.f32.mrb[0].mxu0
      %v4778 = vadd.f32 0.0, %v4777
      %v4779 = vpop.f32.mrb[0].mxu0
      %4780 = vmatprep.mubr.bf16.mxu0 0
      %4781 = vmatmul.mubr.bf16.gmra.mrb[0].mxu0 %v4605
      %v4782 = vpop.f32.mrb[0].mxu0
      %v4783 = vadd.f32 0.0, %v4782
      %v4784 = vpop.f32.mrb[0].mxu0
      %v4785 = vpop.f32.mrb[0].mxu0
      %v4786 = vadd.f32 0.0, %v4785
      %v4787 = vpop.f32.mrb[0].mxu0
      %4788 = vmatprep.mubr.bf16.mxu0 0
      %4789 = vmatmul.mubr.bf16.gmra.mrb[0].mxu0 %v4607
      %v4790 = vpop.f32.mrb[0].mxu0
      %v4791 = vadd.f32 0.0, %v4790
      %v4792 = vpop.f32.mrb[0].mxu0
      %v4793 = vpop.f32.mrb[0].mxu0
      %v4794 = vadd.f32 0.0, %v4793
      %v4795 = vpop.f32.mrb[0].mxu0
      %4796 = vmatprep.mubr.bf16.mxu0 0
      %4797 = vmatmul.mubr.bf16.gmra.mrb[0].mxu0 %v4609
      %v4798 = vpop.f32.mrb[0].mxu0
      %v4799 = vadd.f32 0.0, %v4798
      %v4800 = vpop.f32.mrb[0].mxu0
      %v4801 = vpop.f32.mrb[0].mxu0
      %v4802 = vadd.f32 0.0, %v4801
      %v4803 = vpop.f32.mrb[0].mxu0
      %4804 = vmatprep.mubr.bf16.mxu0 0
      %4805 = vmatmul.mubr.bf16.gmra.mrb[0].mxu0 %v4611
      %v4806 = vpop.f32.mrb[0].mxu0
      %v4807 = vadd.f32 0.0, %v4806
      %v4808 = vpop.f32.mrb[0].mxu0
      %v4809 = vpop.f32.mrb[0].mxu0
      %v4810 = vadd.f32 0.0, %v4809
      %v4811 = vpop.f32.mrb[0].mxu0
      %4812 = vmatprep.mubr.bf16.mxu0 0
      %4813 = vmatmul.mubr.bf16.gmra.mrb[0].mxu0 %v4613
      %v4814 = vpop.f32.mrb[0].mxu0
      %v4815 = vadd.f32 0.0, %v4814
      %v4816 = vpop.f32.mrb[0].mxu0
      %v4817 = vpop.f32.mrb[0].mxu0
      %v4818 = vadd.f32 0.0, %v4817
      %v4819 = vpop.f32.mrb[0].mxu0
      %4820 = vmatprep.mubr.bf16.mxu0 0
      %4821 = vmatmul.mubr.bf16.gmra.mrb[0].mxu0 %v4615
      %v4822 = vpop.f32.mrb[0].mxu0
      %v4823 = vadd.f32 0.0, %v4822
      %v4824 = vpop.f32.mrb[0].mxu0
      %v4825 = vpop.f32.mrb[0].mxu0
      %v4826 = vadd.f32 0.0, %v4825
      %v4827 = vpop.f32.mrb[0].mxu0
      %4828 = vmatprep.mubr.bf16.mxu0 0
      %4829 = vmatmul.mubr.bf16.gmra.mrb[0].mxu0 %v4617
      %v4830 = vpop.f32.mrb[0].mxu0
      %v4831 = vadd.f32 0.0, %v4830
      %v4832 = vpop.f32.mrb[0].mxu0
      %v4833 = vpop.f32.mrb[0].mxu0
      %v4834 = vadd.f32 0.0, %v4833
      %v4835 = vpop.f32.mrb[0].mxu0
      %4836 = vmatprep.mubr.bf16.mxu0 0
      %4837 = vmatmul.mubr.bf16.gmra.mrb[0].mxu0 %v4619
      %v4838 = vpop.f32.mrb[0].mxu0
      %v4839 = vadd.f32 0.0, %v4838
      %v4840 = vpop.f32.mrb[0].mxu0
      %v4841 = vpop.f32.mrb[0].mxu0
      %v4842 = vadd.f32 0.0, %v4841
      %v4843 = vpop.f32.mrb[0].mxu0
      %4844 = vmatprep.mubr.bf16.mxu0 0
      %4845 = vmatmul.mubr.bf16.gmra.mrb[0].mxu0 %v4621
      %v4846 = vpop.f32.mrb[0].mxu0
      %v4847 = vadd.f32 0.0, %v4846
      %v4848 = vpop.f32.mrb[0].mxu0
      %v4849 = vpop.f32.mrb[0].mxu0
      %v4850 = vadd.f32 0.0, %v4849
      %v4851 = vpop.f32.mrb[0].mxu0
      %4852 = vmatprep.mubr.bf16.mxu0 0
      %4853 = vmatmul.mubr.bf16.gmra.mrb[0].mxu0 %v4623
      %v4854 = vpop.f32.mrb[0].mxu0
      %v4855 = vadd.f32 0.0, %v4854
      %v4856 = vpop.f32.mrb[0].mxu0
      %v4857 = vpop.f32.mrb[0].mxu0
      %v4858 = vadd.f32 0.0, %v4857
      %v4859 = vpop.f32.mrb[0].mxu0
      %4860 = vmatprep.mubr.bf16.mxu0 0
      %4861 = vmatmul.mubr.bf16.gmra.mrb[0].mxu0 %v4625
      %v4862 = vpop.f32.mrb[0].mxu0
      %v4863 = vadd.f32 0.0, %v4862
      %v4864 = vpop.f32.mrb[0].mxu0
      %v4865 = vpop.f32.mrb[0].mxu0
      %v4866 = vadd.f32 0.0, %v4865
      %v4867 = vpop.f32.mrb[0].mxu0
      %4868 = vmatprep.mubr.bf16.mxu0 0
      %4869 = vmatmul.mubr.bf16.gmra.mrb[0].mxu0 %v4627
      %v4870 = vpop.f32.mrb[0].mxu0
      %v4871 = vadd.f32 0.0, %v4870
      %v4872 = vpop.f32.mrb[0].mxu0
      %v4873 = vpop.f32.mrb[0].mxu0
      %v4874 = vadd.f32 0.0, %v4873
      %v4875 = vpop.f32.mrb[0].mxu0
      %4876 = vmatprep.mubr.bf16.mxu0 0
      %4877 = vmatmul.mubr.bf16.gmra.mrb[0].mxu0 %v4629
      %v4878 = vpop.f32.mrb[0].mxu0
      %v4879 = vadd.f32 0.0, %v4878
      %v4880 = vpop.f32.mrb[0].mxu0
      %v4881 = vpop.f32.mrb[0].mxu0
      %v4882 = vadd.f32 0.0, %v4881
      %v4883 = vpop.f32.mrb[0].mxu0
      %4884 = vmatprep.mubr.bf16.mxu0 0
      %4885 = vmatmul.mubr.bf16.gmra.mrb[0].mxu0 %v4631
      %v4886 = vpop.f32.mrb[0].mxu0
      %v4887 = vadd.f32 0.0, %v4886
      %v4888 = vpop.f32.mrb[0].mxu0
      %v4889 = vpop.f32.mrb[0].mxu0
      %v4890 = vadd.f32 0.0, %v4889
      %v4891 = vpop.f32.mrb[0].mxu0
      %4892 = vmatprep.mubr.bf16.mxu0 0
      %4893 = vmatmul.mubr.bf16.gmra.mrb[0].mxu0 %v4633
      %v4894 = vpop.f32.mrb[0].mxu0
      %v4895 = vadd.f32 0.0, %v4894
      %v4896 = vpop.f32.mrb[0].mxu0
      %v4897 = vpop.f32.mrb[0].mxu0
      %v4898 = vadd.f32 0.0, %v4897
      %v4899 = vpop.f32.mrb[0].mxu0
      %4900 = vmatprep.mubr.bf16.mxu0 0
      %4901 = vmatmul.mubr.bf16.gmra.mrb[0].mxu0 %v4635
      %v4902 = vpop.f32.mrb[0].mxu0
      %v4903 = vadd.f32 0.0, %v4902
      %v4904 = vpop.f32.mrb[0].mxu0
      %v4905 = vpop.f32.mrb[0].mxu0
      %v4906 = vadd.f32 0.0, %v4905
      %v4907 = vpop.f32.mrb[0].mxu0
      %4908 = vmatprep.mubr.bf16.mxu0 0
      %4909 = vmatmul.mubr.bf16.gmra.mrb[0].mxu0 %v4637
      %v4910 = vpop.f32.mrb[0].mxu0
      %v4911 = vadd.f32 0.0, %v4910
      %v4912 = vpop.f32.mrb[0].mxu0
      %v4913 = vpop.f32.mrb[0].mxu0
      %v4914 = vadd.f32 0.0, %v4913
      %v4915 = vpop.f32.mrb[0].mxu0
      %4916 = vmatprep.mubr.bf16.mxu0 0
      %4917 = vmatmul.mubr.bf16.gmra.mrb[0].mxu0 %v4639
      %v4918 = vpop.f32.mrb[0].mxu0
      %v4919 = vadd.f32 0.0, %v4918
      %v4920 = vpop.f32.mrb[0].mxu0
      %v4921 = vpop.f32.mrb[0].mxu0
      %v4922 = vadd.f32 0.0, %v4921
      %v4923 = vpop.f32.mrb[0].mxu0
      %4924 = vmatprep.mubr.bf16.mxu0 0
      %4925 = vmatmul.mubr.bf16.gmra.mrb[0].mxu0 %v4641
      %v4926 = vpop.f32.mrb[0].mxu0
      %v4927 = vadd.f32 0.0, %v4926
      %v4928 = vpop.f32.mrb[0].mxu0
      %v4929 = vpop.f32.mrb[0].mxu0
      %v4930 = vadd.f32 0.0, %v4929
      %v4931 = vpop.f32.mrb[0].mxu0
      %4932 = vmatprep.mubr.bf16.mxu0 0
      %4933 = vmatmul.mubr.bf16.gmra.mrb[0].mxu0 %v4643
      %v4934 = vpop.f32.mrb[0].mxu0
      %v4935 = vadd.f32 0.0, %v4934
      %v4936 = vpop.f32.mrb[0].mxu0
      %v4937 = vpop.f32.mrb[0].mxu0
      %v4938 = vadd.f32 0.0, %v4937
      %v4939 = vpop.f32.mrb[0].mxu0
      %4940 = vdwg.mxu0
      %v4941 = vadd.f32 %v4526, %v4751
      %v4942 = vadd.f32 %v4527, %v4754
      %v4943 = vadd.f32 %v4528, %v4759
      %v4944 = vadd.f32 %v4529, %v4762
      %v4945 = vadd.f32 %v4530, %v4767
      %v4946 = vadd.f32 %v4531, %v4770
      %v4947 = vadd.f32 %v4532, %v4775
      %v4948 = vadd.f32 %v4533, %v4778
      %v4949 = vadd.f32 %v4534, %v4783
      %v4950 = vadd.f32 %v4535, %v4786
      %v4951 = vadd.f32 %v4536, %v4791
      %v4952 = vadd.f32 %v4537, %v4794
      %v4953 = vadd.f32 %v4538, %v4799
      %v4954 = vadd.f32 %v4539, %v4802
      %v4955 = vadd.f32 %v4540, %v4807
      %v4956 = vadd.f32 %v4541, %v4810
      %v4957 = vadd.f32 %v4542, %v4815
      %v4958 = vadd.f32 %v4543, %v4818
      %v4959 = vadd.f32 %v4544, %v4823
      %v4960 = vadd.f32 %v4545, %v4826
      %v4961 = vadd.f32 %v4546, %v4831
      %v4962 = vadd.f32 %v4547, %v4834
      %v4963 = vadd.f32 %v4548, %v4839
      %v4964 = vadd.f32 %v4549, %v4842
      %v4965 = vadd.f32 %v4550, %v4847
      %v4966 = vadd.f32 %v4551, %v4850
      %v4967 = vadd.f32 %v4552, %v4855
      %v4968 = vadd.f32 %v4553, %v4858
      %v4969 = vadd.f32 %v4554, %v4863
      %v4970 = vadd.f32 %v4555, %v4866
      %v4971 = vadd.f32 %v4556, %v4871
      %v4972 = vadd.f32 %v4557, %v4874
      %v4973 = vadd.f32 %v4558, %v4879
      %v4974 = vadd.f32 %v4559, %v4882
      %v4975 = vadd.f32 %v4560, %v4887
      %v4976 = vadd.f32 %v4561, %v4890
      %v4977 = vadd.f32 %v4562, %v4895
      %v4978 = vadd.f32 %v4563, %v4898
      %v4979 = vadd.f32 %v4564, %v4903
      %v4980 = vadd.f32 %v4565, %v4906
      %v4981 = vadd.f32 %v4566, %v4911
      %v4982 = vadd.f32 %v4567, %v4914
      %v4983 = vadd.f32 %v4568, %v4919
      %v4984 = vadd.f32 %v4569, %v4922
      %v4985 = vadd.f32 %v4570, %v4927
      %v4986 = vadd.f32 %v4571, %v4930
      %v4987 = vadd.f32 %v4572, %v4935
      %v4988 = vadd.f32 %v4573, %v4938
      %v4989 = vlaneseq
      %v4990 = vshrl.u32 %v4989, 7
      %v4991 = vadd.s32 %v4990, 8
      %v4992 = vadd.s32 %v4990, 16
      %v4993 = vadd.s32 %v4990, 24
      %v4994 = vadd.s32 %v4990, 32
      %v4995 = vadd.s32 %v4990, 40
      %v4996 = vadd.s32 %v4990, 48
      %v4997 = vadd.s32 %v4990, 56
      %v4998 = vadd.s32 %v4990, 64
      %v4999 = vadd.s32 %v4990, 72
      %v5000 = vadd.s32 %v4990, 80
      %v5001 = vadd.s32 %v4990, 88
      %v5002 = vadd.s32 %v4990, 96
      %v5003 = vadd.s32 %v4990, 104
      %v5004 = vadd.s32 %v4990, 112
      %v5005 = vadd.s32 %v4990, 120
      %v5006 = vadd.s32 %v4990, 128
      %v5007 = vadd.s32 %v4990, 136
      %v5008 = vadd.s32 %v4990, 144
      %v5009 = vadd.s32 %v4990, 152
      %v5010 = vadd.s32 %v4990, 160
      %v5011 = vadd.s32 %v4990, 168
      %v5012 = vadd.s32 %v4990, 176
      %v5013 = vadd.s32 %v4990, 184
      %v5014 = vadd.s32 %v4990, 192
      %v5015 = vadd.s32 %v4990, 200
      %v5016 = vadd.s32 %v4990, 208
      %v5017 = vadd.s32 %v4990, 216
      %v5018 = vadd.s32 %v4990, 224
      %v5019 = vadd.s32 %v4990, 232
      %v5020 = vadd.s32 %v4990, 240
      %v5021 = vadd.s32 %v4990, 248
      %v5022 = vadd.s32 %v4990, 256
      %v5023 = vadd.s32 %v4990, 264
      %v5024 = vadd.s32 %v4990, 272
      %v5025 = vadd.s32 %v4990, 280
      %v5026 = vadd.s32 %v4990, 288
      %v5027 = vadd.s32 %v4990, 296
      %v5028 = vadd.s32 %v4990, 304
      %v5029 = vadd.s32 %v4990, 312
      %v5030 = vadd.s32 %v4990, 320
      %v5031 = vadd.s32 %v4990, 328
      %v5032 = vadd.s32 %v4990, 336
      %v5033 = vadd.s32 %v4990, 344
      %v5034 = vadd.s32 %v4990, 352
      %v5035 = vadd.s32 %v4990, 360
      %v5036 = vadd.s32 %v4990, 368
      %v5037 = vadd.s32 %v4990, 376
      %vm5038 = vcmp.lt.s32.totalorder %v4990, 0
      %v5039 = vsub.s32 0, %v4990
      %v5040 = vsel %vm5038, %v5039, %v4990
      %v5041 = vmul.u32.u64.compose %v5040, 2863311531
      %v5042 = vextract.low.u32 %v5041
      %v5043 = vextract.high.u32 %v5041
      %v5044 = vshrl.u32 %v5043, 4
      %v5045 = vmul.u32 %v5044, 24
      %v5046 = vsub.s32 %v5040, %v5045
      %v5047 = vsub.s32 0, %v5046
      %v5048 = vsel %vm5038, %v5047, %v5046
      %vm5049 = vcmp.lt.s32.totalorder %v4991, 0
      %v5050 = vsub.s32 0, %v4991
      %v5051 = vsel %vm5049, %v5050, %v4991
      %v5052 = vmul.u32.u64.compose %v5051, 2863311531
      %v5053 = vextract.low.u32 %v5052
      %v5054 = vextract.high.u32 %v5052
      %v5055 = vshrl.u32 %v5054, 4
      %v5056 = vmul.u32 %v5055, 24
      %v5057 = vsub.s32 %v5051, %v5056
      %v5058 = vsub.s32 0, %v5057
      %v5059 = vsel %vm5049, %v5058, %v5057
      %vm5060 = vcmp.lt.s32.totalorder %v4992, 0
      %v5061 = vsub.s32 0, %v4992
      %v5062 = vsel %vm5060, %v5061, %v4992
      %v5063 = vmul.u32.u64.compose %v5062, 2863311531
      %v5064 = vextract.low.u32 %v5063
      %v5065 = vextract.high.u32 %v5063
      %v5066 = vshrl.u32 %v5065, 4
      %v5067 = vmul.u32 %v5066, 24
      %v5068 = vsub.s32 %v5062, %v5067
      %v5069 = vsub.s32 0, %v5068
      %v5070 = vsel %vm5060, %v5069, %v5068
      %vm5071 = vcmp.lt.s32.totalorder %v4993, 0
      %v5072 = vsub.s32 0, %v4993
      %v5073 = vsel %vm5071, %v5072, %v4993
      %v5074 = vmul.u32.u64.compose %v5073, 2863311531
      %v5075 = vextract.low.u32 %v5074
      %v5076 = vextract.high.u32 %v5074
      %v5077 = vshrl.u32 %v5076, 4
      %v5078 = vmul.u32 %v5077, 24
      %v5079 = vsub.s32 %v5073, %v5078
      %v5080 = vsub.s32 0, %v5079
      %v5081 = vsel %vm5071, %v5080, %v5079
      %vm5082 = vcmp.lt.s32.totalorder %v4994, 0
      %v5083 = vsub.s32 0, %v4994
      %v5084 = vsel %vm5082, %v5083, %v4994
      %v5085 = vmul.u32.u64.compose %v5084, 2863311531
      %v5086 = vextract.low.u32 %v5085
      %v5087 = vextract.high.u32 %v5085
      %v5088 = vshrl.u32 %v5087, 4
      %v5089 = vmul.u32 %v5088, 24
      %v5090 = vsub.s32 %v5084, %v5089
      %v5091 = vsub.s32 0, %v5090
      %v5092 = vsel %vm5082, %v5091, %v5090
      %vm5093 = vcmp.lt.s32.totalorder %v4995, 0
      %v5094 = vsub.s32 0, %v4995
      %v5095 = vsel %vm5093, %v5094, %v4995
      %v5096 = vmul.u32.u64.compose %v5095, 2863311531
      %v5097 = vextract.low.u32 %v5096
      %v5098 = vextract.high.u32 %v5096
      %v5099 = vshrl.u32 %v5098, 4
      %v5100 = vmul.u32 %v5099, 24
      %v5101 = vsub.s32 %v5095, %v5100
      %v5102 = vsub.s32 0, %v5101
      %v5103 = vsel %vm5093, %v5102, %v5101
      %vm5104 = vcmp.lt.s32.totalorder %v4996, 0
      %v5105 = vsub.s32 0, %v4996
      %v5106 = vsel %vm5104, %v5105, %v4996
      %v5107 = vmul.u32.u64.compose %v5106, 2863311531
      %v5108 = vextract.low.u32 %v5107
      %v5109 = vextract.high.u32 %v5107
      %v5110 = vshrl.u32 %v5109, 4
      %v5111 = vmul.u32 %v5110, 24
      %v5112 = vsub.s32 %v5106, %v5111
      %v5113 = vsub.s32 0, %v5112
      %v5114 = vsel %vm5104, %v5113, %v5112
      %vm5115 = vcmp.lt.s32.totalorder %v4997, 0
      %v5116 = vsub.s32 0, %v4997
      %v5117 = vsel %vm5115, %v5116, %v4997
      %v5118 = vmul.u32.u64.compose %v5117, 2863311531
      %v5119 = vextract.low.u32 %v5118
      %v5120 = vextract.high.u32 %v5118
      %v5121 = vshrl.u32 %v5120, 4
      %v5122 = vmul.u32 %v5121, 24
      %v5123 = vsub.s32 %v5117, %v5122
      %v5124 = vsub.s32 0, %v5123
      %v5125 = vsel %vm5115, %v5124, %v5123
      %vm5126 = vcmp.lt.s32.totalorder %v4998, 0
      %v5127 = vsub.s32 0, %v4998
      %v5128 = vsel %vm5126, %v5127, %v4998
      %v5129 = vmul.u32.u64.compose %v5128, 2863311531
      %v5130 = vextract.low.u32 %v5129
      %v5131 = vextract.high.u32 %v5129
      %v5132 = vshrl.u32 %v5131, 4
      %v5133 = vmul.u32 %v5132, 24
      %v5134 = vsub.s32 %v5128, %v5133
      %v5135 = vsub.s32 0, %v5134
      %v5136 = vsel %vm5126, %v5135, %v5134
      %vm5137 = vcmp.lt.s32.totalorder %v4999, 0
      %v5138 = vsub.s32 0, %v4999
      %v5139 = vsel %vm5137, %v5138, %v4999
      %v5140 = vmul.u32.u64.compose %v5139, 2863311531
      %v5141 = vextract.low.u32 %v5140
      %v5142 = vextract.high.u32 %v5140
      %v5143 = vshrl.u32 %v5142, 4
      %v5144 = vmul.u32 %v5143, 24
      %v5145 = vsub.s32 %v5139, %v5144
      %v5146 = vsub.s32 0, %v5145
      %v5147 = vsel %vm5137, %v5146, %v5145
      %vm5148 = vcmp.lt.s32.totalorder %v5000, 0
      %v5149 = vsub.s32 0, %v5000
      %v5150 = vsel %vm5148, %v5149, %v5000
      %v5151 = vmul.u32.u64.compose %v5150, 2863311531
      %v5152 = vextract.low.u32 %v5151
      %v5153 = vextract.high.u32 %v5151
      %v5154 = vshrl.u32 %v5153, 4
      %v5155 = vmul.u32 %v5154, 24
      %v5156 = vsub.s32 %v5150, %v5155
      %v5157 = vsub.s32 0, %v5156
      %v5158 = vsel %vm5148, %v5157, %v5156
      %vm5159 = vcmp.lt.s32.totalorder %v5001, 0
      %v5160 = vsub.s32 0, %v5001
      %v5161 = vsel %vm5159, %v5160, %v5001
      %v5162 = vmul.u32.u64.compose %v5161, 2863311531
      %v5163 = vextract.low.u32 %v5162
      %v5164 = vextract.high.u32 %v5162
      %v5165 = vshrl.u32 %v5164, 4
      %v5166 = vmul.u32 %v5165, 24
      %v5167 = vsub.s32 %v5161, %v5166
      %v5168 = vsub.s32 0, %v5167
      %v5169 = vsel %vm5159, %v5168, %v5167
      %vm5170 = vcmp.lt.s32.totalorder %v5002, 0
      %v5171 = vsub.s32 0, %v5002
      %v5172 = vsel %vm5170, %v5171, %v5002
      %v5173 = vmul.u32.u64.compose %v5172, 2863311531
      %v5174 = vextract.low.u32 %v5173
      %v5175 = vextract.high.u32 %v5173
      %v5176 = vshrl.u32 %v5175, 4
      %v5177 = vmul.u32 %v5176, 24
      %v5178 = vsub.s32 %v5172, %v5177
      %v5179 = vsub.s32 0, %v5178
      %v5180 = vsel %vm5170, %v5179, %v5178
      %vm5181 = vcmp.lt.s32.totalorder %v5003, 0
      %v5182 = vsub.s32 0, %v5003
      %v5183 = vsel %vm5181, %v5182, %v5003
      %v5184 = vmul.u32.u64.compose %v5183, 2863311531
      %v5185 = vextract.low.u32 %v5184
      %v5186 = vextract.high.u32 %v5184
      %v5187 = vshrl.u32 %v5186, 4
      %v5188 = vmul.u32 %v5187, 24
      %v5189 = vsub.s32 %v5183, %v5188
      %v5190 = vsub.s32 0, %v5189
      %v5191 = vsel %vm5181, %v5190, %v5189
      %vm5192 = vcmp.lt.s32.totalorder %v5004, 0
      %v5193 = vsub.s32 0, %v5004
      %v5194 = vsel %vm5192, %v5193, %v5004
      %v5195 = vmul.u32.u64.compose %v5194, 2863311531
      %v5196 = vextract.low.u32 %v5195
      %v5197 = vextract.high.u32 %v5195
      %v5198 = vshrl.u32 %v5197, 4
      %v5199 = vmul.u32 %v5198, 24
      %v5200 = vsub.s32 %v5194, %v5199
      %v5201 = vsub.s32 0, %v5200
      %v5202 = vsel %vm5192, %v5201, %v5200
      %vm5203 = vcmp.lt.s32.totalorder %v5005, 0
      %v5204 = vsub.s32 0, %v5005
      %v5205 = vsel %vm5203, %v5204, %v5005
      %v5206 = vmul.u32.u64.compose %v5205, 2863311531
      %v5207 = vextract.low.u32 %v5206
      %v5208 = vextract.high.u32 %v5206
      %v5209 = vshrl.u32 %v5208, 4
      %v5210 = vmul.u32 %v5209, 24
      %v5211 = vsub.s32 %v5205, %v5210
      %v5212 = vsub.s32 0, %v5211
      %v5213 = vsel %vm5203, %v5212, %v5211
      %vm5214 = vcmp.lt.s32.totalorder %v5006, 0
      %v5215 = vsub.s32 0, %v5006
      %v5216 = vsel %vm5214, %v5215, %v5006
      %v5217 = vmul.u32.u64.compose %v5216, 2863311531
      %v5218 = vextract.low.u32 %v5217
      %v5219 = vextract.high.u32 %v5217
      %v5220 = vshrl.u32 %v5219, 4
      %v5221 = vmul.u32 %v5220, 24
      %v5222 = vsub.s32 %v5216, %v5221
      %v5223 = vsub.s32 0, %v5222
      %v5224 = vsel %vm5214, %v5223, %v5222
      %vm5225 = vcmp.lt.s32.totalorder %v5007, 0
      %v5226 = vsub.s32 0, %v5007
      %v5227 = vsel %vm5225, %v5226, %v5007
      %v5228 = vmul.u32.u64.compose %v5227, 2863311531
      %v5229 = vextract.low.u32 %v5228
      %v5230 = vextract.high.u32 %v5228
      %v5231 = vshrl.u32 %v5230, 4
      %v5232 = vmul.u32 %v5231, 24
      %v5233 = vsub.s32 %v5227, %v5232
      %v5234 = vsub.s32 0, %v5233
      %v5235 = vsel %vm5225, %v5234, %v5233
      %vm5236 = vcmp.lt.s32.totalorder %v5008, 0
      %v5237 = vsub.s32 0, %v5008
      %v5238 = vsel %vm5236, %v5237, %v5008
      %v5239 = vmul.u32.u64.compose %v5238, 2863311531
      %v5240 = vextract.low.u32 %v5239
      %v5241 = vextract.high.u32 %v5239
      %v5242 = vshrl.u32 %v5241, 4
      %v5243 = vmul.u32 %v5242, 24
      %v5244 = vsub.s32 %v5238, %v5243
      %v5245 = vsub.s32 0, %v5244
      %v5246 = vsel %vm5236, %v5245, %v5244
      %vm5247 = vcmp.lt.s32.totalorder %v5009, 0
      %v5248 = vsub.s32 0, %v5009
      %v5249 = vsel %vm5247, %v5248, %v5009
      %v5250 = vmul.u32.u64.compose %v5249, 2863311531
      %v5251 = vextract.low.u32 %v5250
      %v5252 = vextract.high.u32 %v5250
      %v5253 = vshrl.u32 %v5252, 4
      %v5254 = vmul.u32 %v5253, 24
      %v5255 = vsub.s32 %v5249, %v5254
      %v5256 = vsub.s32 0, %v5255
      %v5257 = vsel %vm5247, %v5256, %v5255
      %vm5258 = vcmp.lt.s32.totalorder %v5010, 0
      %v5259 = vsub.s32 0, %v5010
      %v5260 = vsel %vm5258, %v5259, %v5010
      %v5261 = vmul.u32.u64.compose %v5260, 2863311531
      %v5262 = vextract.low.u32 %v5261
      %v5263 = vextract.high.u32 %v5261
      %v5264 = vshrl.u32 %v5263, 4
      %v5265 = vmul.u32 %v5264, 24
      %v5266 = vsub.s32 %v5260, %v5265
      %v5267 = vsub.s32 0, %v5266
      %v5268 = vsel %vm5258, %v5267, %v5266
      %vm5269 = vcmp.lt.s32.totalorder %v5011, 0
      %v5270 = vsub.s32 0, %v5011
      %v5271 = vsel %vm5269, %v5270, %v5011
      %v5272 = vmul.u32.u64.compose %v5271, 2863311531
      %v5273 = vextract.low.u32 %v5272
      %v5274 = vextract.high.u32 %v5272
      %v5275 = vshrl.u32 %v5274, 4
      %v5276 = vmul.u32 %v5275, 24
      %v5277 = vsub.s32 %v5271, %v5276
      %v5278 = vsub.s32 0, %v5277
      %v5279 = vsel %vm5269, %v5278, %v5277
      %vm5280 = vcmp.lt.s32.totalorder %v5012, 0
      %v5281 = vsub.s32 0, %v5012
      %v5282 = vsel %vm5280, %v5281, %v5012
      %v5283 = vmul.u32.u64.compose %v5282, 2863311531
      %v5284 = vextract.low.u32 %v5283
      %v5285 = vextract.high.u32 %v5283
      %v5286 = vshrl.u32 %v5285, 4
      %v5287 = vmul.u32 %v5286, 24
      %v5288 = vsub.s32 %v5282, %v5287
      %v5289 = vsub.s32 0, %v5288
      %v5290 = vsel %vm5280, %v5289, %v5288
      %vm5291 = vcmp.lt.s32.totalorder %v5013, 0
      %v5292 = vsub.s32 0, %v5013
      %v5293 = vsel %vm5291, %v5292, %v5013
      %v5294 = vmul.u32.u64.compose %v5293, 2863311531
      %v5295 = vextract.low.u32 %v5294
      %v5296 = vextract.high.u32 %v5294
      %v5297 = vshrl.u32 %v5296, 4
      %v5298 = vmul.u32 %v5297, 24
      %v5299 = vsub.s32 %v5293, %v5298
      %v5300 = vsub.s32 0, %v5299
      %v5301 = vsel %vm5291, %v5300, %v5299
      %vm5302 = vcmp.lt.s32.totalorder %v5014, 0
      %v5303 = vsub.s32 0, %v5014
      %v5304 = vsel %vm5302, %v5303, %v5014
      %v5305 = vmul.u32.u64.compose %v5304, 2863311531
      %v5306 = vextract.low.u32 %v5305
      %v5307 = vextract.high.u32 %v5305
      %v5308 = vshrl.u32 %v5307, 4
      %v5309 = vmul.u32 %v5308, 24
      %v5310 = vsub.s32 %v5304, %v5309
      %v5311 = vsub.s32 0, %v5310
      %v5312 = vsel %vm5302, %v5311, %v5310
      %vm5313 = vcmp.lt.s32.totalorder %v5015, 0
      %v5314 = vsub.s32 0, %v5015
      %v5315 = vsel %vm5313, %v5314, %v5015
      %v5316 = vmul.u32.u64.compose %v5315, 2863311531
      %v5317 = vextract.low.u32 %v5316
      %v5318 = vextract.high.u32 %v5316
      %v5319 = vshrl.u32 %v5318, 4
      %v5320 = vmul.u32 %v5319, 24
      %v5321 = vsub.s32 %v5315, %v5320
      %v5322 = vsub.s32 0, %v5321
      %v5323 = vsel %vm5313, %v5322, %v5321
      %vm5324 = vcmp.lt.s32.totalorder %v5016, 0
      %v5325 = vsub.s32 0, %v5016
      %v5326 = vsel %vm5324, %v5325, %v5016
      %v5327 = vmul.u32.u64.compose %v5326, 2863311531
      %v5328 = vextract.low.u32 %v5327
      %v5329 = vextract.high.u32 %v5327
      %v5330 = vshrl.u32 %v5329, 4
      %v5331 = vmul.u32 %v5330, 24
      %v5332 = vsub.s32 %v5326, %v5331
      %v5333 = vsub.s32 0, %v5332
      %v5334 = vsel %vm5324, %v5333, %v5332
      %vm5335 = vcmp.lt.s32.totalorder %v5017, 0
      %v5336 = vsub.s32 0, %v5017
      %v5337 = vsel %vm5335, %v5336, %v5017
      %v5338 = vmul.u32.u64.compose %v5337, 2863311531
      %v5339 = vextract.low.u32 %v5338
      %v5340 = vextract.high.u32 %v5338
      %v5341 = vshrl.u32 %v5340, 4
      %v5342 = vmul.u32 %v5341, 24
      %v5343 = vsub.s32 %v5337, %v5342
      %v5344 = vsub.s32 0, %v5343
      %v5345 = vsel %vm5335, %v5344, %v5343
      %vm5346 = vcmp.lt.s32.totalorder %v5018, 0
      %v5347 = vsub.s32 0, %v5018
      %v5348 = vsel %vm5346, %v5347, %v5018
      %v5349 = vmul.u32.u64.compose %v5348, 2863311531
      %v5350 = vextract.low.u32 %v5349
      %v5351 = vextract.high.u32 %v5349
      %v5352 = vshrl.u32 %v5351, 4
      %v5353 = vmul.u32 %v5352, 24
      %v5354 = vsub.s32 %v5348, %v5353
      %v5355 = vsub.s32 0, %v5354
      %v5356 = vsel %vm5346, %v5355, %v5354
      %vm5357 = vcmp.lt.s32.totalorder %v5019, 0
      %v5358 = vsub.s32 0, %v5019
      %v5359 = vsel %vm5357, %v5358, %v5019
      %v5360 = vmul.u32.u64.compose %v5359, 2863311531
      %v5361 = vextract.low.u32 %v5360
      %v5362 = vextract.high.u32 %v5360
      %v5363 = vshrl.u32 %v5362, 4
      %v5364 = vmul.u32 %v5363, 24
      %v5365 = vsub.s32 %v5359, %v5364
      %v5366 = vsub.s32 0, %v5365
      %v5367 = vsel %vm5357, %v5366, %v5365
      %vm5368 = vcmp.lt.s32.totalorder %v5020, 0
      %v5369 = vsub.s32 0, %v5020
      %v5370 = vsel %vm5368, %v5369, %v5020
      %v5371 = vmul.u32.u64.compose %v5370, 2863311531
      %v5372 = vextract.low.u32 %v5371
      %v5373 = vextract.high.u32 %v5371
      %v5374 = vshrl.u32 %v5373, 4
      %v5375 = vmul.u32 %v5374, 24
      %v5376 = vsub.s32 %v5370, %v5375
      %v5377 = vsub.s32 0, %v5376
      %v5378 = vsel %vm5368, %v5377, %v5376
      %vm5379 = vcmp.lt.s32.totalorder %v5021, 0
      %v5380 = vsub.s32 0, %v5021
      %v5381 = vsel %vm5379, %v5380, %v5021
      %v5382 = vmul.u32.u64.compose %v5381, 2863311531
      %v5383 = vextract.low.u32 %v5382
      %v5384 = vextract.high.u32 %v5382
      %v5385 = vshrl.u32 %v5384, 4
      %v5386 = vmul.u32 %v5385, 24
      %v5387 = vsub.s32 %v5381, %v5386
      %v5388 = vsub.s32 0, %v5387
      %v5389 = vsel %vm5379, %v5388, %v5387
      %vm5390 = vcmp.lt.s32.totalorder %v5022, 0
      %v5391 = vsub.s32 0, %v5022
      %v5392 = vsel %vm5390, %v5391, %v5022
      %v5393 = vmul.u32.u64.compose %v5392, 2863311531
      %v5394 = vextract.low.u32 %v5393
      %v5395 = vextract.high.u32 %v5393
      %v5396 = vshrl.u32 %v5395, 4
      %v5397 = vmul.u32 %v5396, 24
      %v5398 = vsub.s32 %v5392, %v5397
      %v5399 = vsub.s32 0, %v5398
      %v5400 = vsel %vm5390, %v5399, %v5398
      %vm5401 = vcmp.lt.s32.totalorder %v5023, 0
      %v5402 = vsub.s32 0, %v5023
      %v5403 = vsel %vm5401, %v5402, %v5023
      %v5404 = vmul.u32.u64.compose %v5403, 2863311531
      %v5405 = vextract.low.u32 %v5404
      %v5406 = vextract.high.u32 %v5404
      %v5407 = vshrl.u32 %v5406, 4
      %v5408 = vmul.u32 %v5407, 24
      %v5409 = vsub.s32 %v5403, %v5408
      %v5410 = vsub.s32 0, %v5409
      %v5411 = vsel %vm5401, %v5410, %v5409
      %vm5412 = vcmp.lt.s32.totalorder %v5024, 0
      %v5413 = vsub.s32 0, %v5024
      %v5414 = vsel %vm5412, %v5413, %v5024
      %v5415 = vmul.u32.u64.compose %v5414, 2863311531
      %v5416 = vextract.low.u32 %v5415
      %v5417 = vextract.high.u32 %v5415
      %v5418 = vshrl.u32 %v5417, 4
      %v5419 = vmul.u32 %v5418, 24
      %v5420 = vsub.s32 %v5414, %v5419
      %v5421 = vsub.s32 0, %v5420
      %v5422 = vsel %vm5412, %v5421, %v5420
      %vm5423 = vcmp.lt.s32.totalorder %v5025, 0
      %v5424 = vsub.s32 0, %v5025
      %v5425 = vsel %vm5423, %v5424, %v5025
      %v5426 = vmul.u32.u64.compose %v5425, 2863311531
      %v5427 = vextract.low.u32 %v5426
      %v5428 = vextract.high.u32 %v5426
      %v5429 = vshrl.u32 %v5428, 4
      %v5430 = vmul.u32 %v5429, 24
      %v5431 = vsub.s32 %v5425, %v5430
      %v5432 = vsub.s32 0, %v5431
      %v5433 = vsel %vm5423, %v5432, %v5431
      %vm5434 = vcmp.lt.s32.totalorder %v5026, 0
      %v5435 = vsub.s32 0, %v5026
      %v5436 = vsel %vm5434, %v5435, %v5026
      %v5437 = vmul.u32.u64.compose %v5436, 2863311531
      %v5438 = vextract.low.u32 %v5437
      %v5439 = vextract.high.u32 %v5437
      %v5440 = vshrl.u32 %v5439, 4
      %v5441 = vmul.u32 %v5440, 24
      %v5442 = vsub.s32 %v5436, %v5441
      %v5443 = vsub.s32 0, %v5442
      %v5444 = vsel %vm5434, %v5443, %v5442
      %vm5445 = vcmp.lt.s32.totalorder %v5027, 0
      %v5446 = vsub.s32 0, %v5027
      %v5447 = vsel %vm5445, %v5446, %v5027
      %v5448 = vmul.u32.u64.compose %v5447, 2863311531
      %v5449 = vextract.low.u32 %v5448
      %v5450 = vextract.high.u32 %v5448
      %v5451 = vshrl.u32 %v5450, 4
      %v5452 = vmul.u32 %v5451, 24
      %v5453 = vsub.s32 %v5447, %v5452
      %v5454 = vsub.s32 0, %v5453
      %v5455 = vsel %vm5445, %v5454, %v5453
      %vm5456 = vcmp.lt.s32.totalorder %v5028, 0
      %v5457 = vsub.s32 0, %v5028
      %v5458 = vsel %vm5456, %v5457, %v5028
      %v5459 = vmul.u32.u64.compose %v5458, 2863311531
      %v5460 = vextract.low.u32 %v5459
      %v5461 = vextract.high.u32 %v5459
      %v5462 = vshrl.u32 %v5461, 4
      %v5463 = vmul.u32 %v5462, 24
      %v5464 = vsub.s32 %v5458, %v5463
      %v5465 = vsub.s32 0, %v5464
      %v5466 = vsel %vm5456, %v5465, %v5464
      %vm5467 = vcmp.lt.s32.totalorder %v5029, 0
      %v5468 = vsub.s32 0, %v5029
      %v5469 = vsel %vm5467, %v5468, %v5029
      %v5470 = vmul.u32.u64.compose %v5469, 2863311531
      %v5471 = vextract.low.u32 %v5470
      %v5472 = vextract.high.u32 %v5470
      %v5473 = vshrl.u32 %v5472, 4
      %v5474 = vmul.u32 %v5473, 24
      %v5475 = vsub.s32 %v5469, %v5474
      %v5476 = vsub.s32 0, %v5475
      %v5477 = vsel %vm5467, %v5476, %v5475
      %vm5478 = vcmp.lt.s32.totalorder %v5030, 0
      %v5479 = vsub.s32 0, %v5030
      %v5480 = vsel %vm5478, %v5479, %v5030
      %v5481 = vmul.u32.u64.compose %v5480, 2863311531
      %v5482 = vextract.low.u32 %v5481
      %v5483 = vextract.high.u32 %v5481
      %v5484 = vshrl.u32 %v5483, 4
      %v5485 = vmul.u32 %v5484, 24
      %v5486 = vsub.s32 %v5480, %v5485
      %v5487 = vsub.s32 0, %v5486
      %v5488 = vsel %vm5478, %v5487, %v5486
      %vm5489 = vcmp.lt.s32.totalorder %v5031, 0
      %v5490 = vsub.s32 0, %v5031
      %v5491 = vsel %vm5489, %v5490, %v5031
      %v5492 = vmul.u32.u64.compose %v5491, 2863311531
      %v5493 = vextract.low.u32 %v5492
      %v5494 = vextract.high.u32 %v5492
      %v5495 = vshrl.u32 %v5494, 4
      %v5496 = vmul.u32 %v5495, 24
      %v5497 = vsub.s32 %v5491, %v5496
      %v5498 = vsub.s32 0, %v5497
      %v5499 = vsel %vm5489, %v5498, %v5497
      %vm5500 = vcmp.lt.s32.totalorder %v5032, 0
      %v5501 = vsub.s32 0, %v5032
      %v5502 = vsel %vm5500, %v5501, %v5032
      %v5503 = vmul.u32.u64.compose %v5502, 2863311531
      %v5504 = vextract.low.u32 %v5503
      %v5505 = vextract.high.u32 %v5503
      %v5506 = vshrl.u32 %v5505, 4
      %v5507 = vmul.u32 %v5506, 24
      %v5508 = vsub.s32 %v5502, %v5507
      %v5509 = vsub.s32 0, %v5508
      %v5510 = vsel %vm5500, %v5509, %v5508
      %vm5511 = vcmp.lt.s32.totalorder %v5033, 0
      %v5512 = vsub.s32 0, %v5033
      %v5513 = vsel %vm5511, %v5512, %v5033
      %v5514 = vmul.u32.u64.compose %v5513, 2863311531
      %v5515 = vextract.low.u32 %v5514
      %v5516 = vextract.high.u32 %v5514
      %v5517 = vshrl.u32 %v5516, 4
      %v5518 = vmul.u32 %v5517, 24
      %v5519 = vsub.s32 %v5513, %v5518
      %v5520 = vsub.s32 0, %v5519
      %v5521 = vsel %vm5511, %v5520, %v5519
      %vm5522 = vcmp.lt.s32.totalorder %v5034, 0
      %v5523 = vsub.s32 0, %v5034
      %v5524 = vsel %vm5522, %v5523, %v5034
      %v5525 = vmul.u32.u64.compose %v5524, 2863311531
      %v5526 = vextract.low.u32 %v5525
      %v5527 = vextract.high.u32 %v5525
      %v5528 = vshrl.u32 %v5527, 4
      %v5529 = vmul.u32 %v5528, 24
      %v5530 = vsub.s32 %v5524, %v5529
      %v5531 = vsub.s32 0, %v5530
      %v5532 = vsel %vm5522, %v5531, %v5530
      %vm5533 = vcmp.lt.s32.totalorder %v5035, 0
      %v5534 = vsub.s32 0, %v5035
      %v5535 = vsel %vm5533, %v5534, %v5035
      %v5536 = vmul.u32.u64.compose %v5535, 2863311531
      %v5537 = vextract.low.u32 %v5536
      %v5538 = vextract.high.u32 %v5536
      %v5539 = vshrl.u32 %v5538, 4
      %v5540 = vmul.u32 %v5539, 24
      %v5541 = vsub.s32 %v5535, %v5540
      %v5542 = vsub.s32 0, %v5541
      %v5543 = vsel %vm5533, %v5542, %v5541
      %vm5544 = vcmp.lt.s32.totalorder %v5036, 0
      %v5545 = vsub.s32 0, %v5036
      %v5546 = vsel %vm5544, %v5545, %v5036
      %v5547 = vmul.u32.u64.compose %v5546, 2863311531
      %v5548 = vextract.low.u32 %v5547
      %v5549 = vextract.high.u32 %v5547
      %v5550 = vshrl.u32 %v5549, 4
      %v5551 = vmul.u32 %v5550, 24
      %v5552 = vsub.s32 %v5546, %v5551
      %v5553 = vsub.s32 0, %v5552
      %v5554 = vsel %vm5544, %v5553, %v5552
      %vm5555 = vcmp.lt.s32.totalorder %v5037, 0
      %v5556 = vsub.s32 0, %v5037
      %v5557 = vsel %vm5555, %v5556, %v5037
      %v5558 = vmul.u32.u64.compose %v5557, 2863311531
      %v5559 = vextract.low.u32 %v5558
      %v5560 = vextract.high.u32 %v5558
      %v5561 = vshrl.u32 %v5560, 4
      %v5562 = vmul.u32 %v5561, 24
      %v5563 = vsub.s32 %v5557, %v5562
      %v5564 = vsub.s32 0, %v5563
      %v5565 = vsel %vm5555, %v5564, %v5563
      %vm5566 = vcmp.ne.s32.totalorder %v5048, 0
      %vm5567 = vcmp.ne.s32.totalorder %v5059, 0
      %vm5568 = vcmp.ne.s32.totalorder %v5070, 0
      %vm5569 = vcmp.ne.s32.totalorder %v5081, 0
      %vm5570 = vcmp.ne.s32.totalorder %v5092, 0
      %vm5571 = vcmp.ne.s32.totalorder %v5103, 0
      %vm5572 = vcmp.ne.s32.totalorder %v5114, 0
      %vm5573 = vcmp.ne.s32.totalorder %v5125, 0
      %vm5574 = vcmp.ne.s32.totalorder %v5136, 0
      %vm5575 = vcmp.ne.s32.totalorder %v5147, 0
      %vm5576 = vcmp.ne.s32.totalorder %v5158, 0
      %vm5577 = vcmp.ne.s32.totalorder %v5169, 0
      %vm5578 = vcmp.ne.s32.totalorder %v5180, 0
      %vm5579 = vcmp.ne.s32.totalorder %v5191, 0
      %vm5580 = vcmp.ne.s32.totalorder %v5202, 0
      %vm5581 = vcmp.ne.s32.totalorder %v5213, 0
      %vm5582 = vcmp.ne.s32.totalorder %v5224, 0
      %vm5583 = vcmp.ne.s32.totalorder %v5235, 0
      %vm5584 = vcmp.ne.s32.totalorder %v5246, 0
      %vm5585 = vcmp.ne.s32.totalorder %v5257, 0
      %vm5586 = vcmp.ne.s32.totalorder %v5268, 0
      %vm5587 = vcmp.ne.s32.totalorder %v5279, 0
      %vm5588 = vcmp.ne.s32.totalorder %v5290, 0
      %vm5589 = vcmp.ne.s32.totalorder %v5301, 0
      %vm5590 = vcmp.ne.s32.totalorder %v5312, 0
      %vm5591 = vcmp.ne.s32.totalorder %v5323, 0
      %vm5592 = vcmp.ne.s32.totalorder %v5334, 0
      %vm5593 = vcmp.ne.s32.totalorder %v5345, 0
      %vm5594 = vcmp.ne.s32.totalorder %v5356, 0
      %vm5595 = vcmp.ne.s32.totalorder %v5367, 0
      %vm5596 = vcmp.ne.s32.totalorder %v5378, 0
      %vm5597 = vcmp.ne.s32.totalorder %v5389, 0
      %vm5598 = vcmp.ne.s32.totalorder %v5400, 0
      %vm5599 = vcmp.ne.s32.totalorder %v5411, 0
      %vm5600 = vcmp.ne.s32.totalorder %v5422, 0
      %vm5601 = vcmp.ne.s32.totalorder %v5433, 0
      %vm5602 = vcmp.ne.s32.totalorder %v5444, 0
      %vm5603 = vcmp.ne.s32.totalorder %v5455, 0
      %vm5604 = vcmp.ne.s32.totalorder %v5466, 0
      %vm5605 = vcmp.ne.s32.totalorder %v5477, 0
      %vm5606 = vcmp.ne.s32.totalorder %v5488, 0
      %vm5607 = vcmp.ne.s32.totalorder %v5499, 0
      %vm5608 = vcmp.ne.s32.totalorder %v5510, 0
      %vm5609 = vcmp.ne.s32.totalorder %v5521, 0
      %vm5610 = vcmp.ne.s32.totalorder %v5532, 0
      %vm5611 = vcmp.ne.s32.totalorder %v5543, 0
      %vm5612 = vcmp.ne.s32.totalorder %v5554, 0
      %vm5613 = vcmp.ne.s32.totalorder %v5565, 0
      %vm5614 = vcmp.lt.s32.totalorder %v5048, 0
      %vm5615 = vcmp.lt.s32.totalorder %v5059, 0
      %vm5616 = vcmp.lt.s32.totalorder %v5070, 0
      %vm5617 = vcmp.lt.s32.totalorder %v5081, 0
      %vm5618 = vcmp.lt.s32.totalorder %v5092, 0
      %vm5619 = vcmp.lt.s32.totalorder %v5103, 0
      %vm5620 = vcmp.lt.s32.totalorder %v5114, 0
      %vm5621 = vcmp.lt.s32.totalorder %v5125, 0
      %vm5622 = vcmp.lt.s32.totalorder %v5136, 0
      %vm5623 = vcmp.lt.s32.totalorder %v5147, 0
      %vm5624 = vcmp.lt.s32.totalorder %v5158, 0
      %vm5625 = vcmp.lt.s32.totalorder %v5169, 0
      %vm5626 = vcmp.lt.s32.totalorder %v5180, 0
      %vm5627 = vcmp.lt.s32.totalorder %v5191, 0
      %vm5628 = vcmp.lt.s32.totalorder %v5202, 0
      %vm5629 = vcmp.lt.s32.totalorder %v5213, 0
      %vm5630 = vcmp.lt.s32.totalorder %v5224, 0
      %vm5631 = vcmp.lt.s32.totalorder %v5235, 0
      %vm5632 = vcmp.lt.s32.totalorder %v5246, 0
      %vm5633 = vcmp.lt.s32.totalorder %v5257, 0
      %vm5634 = vcmp.lt.s32.totalorder %v5268, 0
      %vm5635 = vcmp.lt.s32.totalorder %v5279, 0
      %vm5636 = vcmp.lt.s32.totalorder %v5290, 0
      %vm5637 = vcmp.lt.s32.totalorder %v5301, 0
      %vm5638 = vcmp.lt.s32.totalorder %v5312, 0
      %vm5639 = vcmp.lt.s32.totalorder %v5323, 0
      %vm5640 = vcmp.lt.s32.totalorder %v5334, 0
      %vm5641 = vcmp.lt.s32.totalorder %v5345, 0
      %vm5642 = vcmp.lt.s32.totalorder %v5356, 0
      %vm5643 = vcmp.lt.s32.totalorder %v5367, 0
      %vm5644 = vcmp.lt.s32.totalorder %v5378, 0
      %vm5645 = vcmp.lt.s32.totalorder %v5389, 0
      %vm5646 = vcmp.lt.s32.totalorder %v5400, 0
      %vm5647 = vcmp.lt.s32.totalorder %v5411, 0
      %vm5648 = vcmp.lt.s32.totalorder %v5422, 0
      %vm5649 = vcmp.lt.s32.totalorder %v5433, 0
      %vm5650 = vcmp.lt.s32.totalorder %v5444, 0
      %vm5651 = vcmp.lt.s32.totalorder %v5455, 0
      %vm5652 = vcmp.lt.s32.totalorder %v5466, 0
      %vm5653 = vcmp.lt.s32.totalorder %v5477, 0
      %vm5654 = vcmp.lt.s32.totalorder %v5488, 0
      %vm5655 = vcmp.lt.s32.totalorder %v5499, 0
      %vm5656 = vcmp.lt.s32.totalorder %v5510, 0
      %vm5657 = vcmp.lt.s32.totalorder %v5521, 0
      %vm5658 = vcmp.lt.s32.totalorder %v5532, 0
      %vm5659 = vcmp.lt.s32.totalorder %v5543, 0
      %vm5660 = vcmp.lt.s32.totalorder %v5554, 0
      %vm5661 = vcmp.lt.s32.totalorder %v5565, 0
      %vm5662 = vmand %vm5614, %vm5566
      %vm5663 = vmand %vm5615, %vm5567
      %vm5664 = vmand %vm5616, %vm5568
      %vm5665 = vmand %vm5617, %vm5569
      %vm5666 = vmand %vm5618, %vm5570
      %vm5667 = vmand %vm5619, %vm5571
      %vm5668 = vmand %vm5620, %vm5572
      %vm5669 = vmand %vm5621, %vm5573
      %vm5670 = vmand %vm5622, %vm5574
      %vm5671 = vmand %vm5623, %vm5575
      %vm5672 = vmand %vm5624, %vm5576
      %vm5673 = vmand %vm5625, %vm5577
      %vm5674 = vmand %vm5626, %vm5578
      %vm5675 = vmand %vm5627, %vm5579
      %vm5676 = vmand %vm5628, %vm5580
      %vm5677 = vmand %vm5629, %vm5581
      %vm5678 = vmand %vm5630, %vm5582
      %vm5679 = vmand %vm5631, %vm5583
      %vm5680 = vmand %vm5632, %vm5584
      %vm5681 = vmand %vm5633, %vm5585
      %vm5682 = vmand %vm5634, %vm5586
      %vm5683 = vmand %vm5635, %vm5587
      %vm5684 = vmand %vm5636, %vm5588
      %vm5685 = vmand %vm5637, %vm5589
      %vm5686 = vmand %vm5638, %vm5590
      %vm5687 = vmand %vm5639, %vm5591
      %vm5688 = vmand %vm5640, %vm5592
      %vm5689 = vmand %vm5641, %vm5593
      %vm5690 = vmand %vm5642, %vm5594
      %vm5691 = vmand %vm5643, %vm5595
      %vm5692 = vmand %vm5644, %vm5596
      %vm5693 = vmand %vm5645, %vm5597
      %vm5694 = vmand %vm5646, %vm5598
      %vm5695 = vmand %vm5647, %vm5599
      %vm5696 = vmand %vm5648, %vm5600
      %vm5697 = vmand %vm5649, %vm5601
      %vm5698 = vmand %vm5650, %vm5602
      %vm5699 = vmand %vm5651, %vm5603
      %vm5700 = vmand %vm5652, %vm5604
      %vm5701 = vmand %vm5653, %vm5605
      %vm5702 = vmand %vm5654, %vm5606
      %vm5703 = vmand %vm5655, %vm5607
      %vm5704 = vmand %vm5656, %vm5608
      %vm5705 = vmand %vm5657, %vm5609
      %vm5706 = vmand %vm5658, %vm5610
      %vm5707 = vmand %vm5659, %vm5611
      %vm5708 = vmand %vm5660, %vm5612
      %vm5709 = vmand %vm5661, %vm5613
      %v5710 = vadd.s32 %v5048, 24
      %v5711 = vadd.s32 %v5059, 24
      %v5712 = vadd.s32 %v5070, 24
      %v5713 = vadd.s32 %v5081, 24
      %v5714 = vadd.s32 %v5092, 24
      %v5715 = vadd.s32 %v5103, 24
      %v5716 = vadd.s32 %v5114, 24
      %v5717 = vadd.s32 %v5125, 24
      %v5718 = vadd.s32 %v5136, 24
      %v5719 = vadd.s32 %v5147, 24
      %v5720 = vadd.s32 %v5158, 24
      %v5721 = vadd.s32 %v5169, 24
      %v5722 = vadd.s32 %v5180, 24
      %v5723 = vadd.s32 %v5191, 24
      %v5724 = vadd.s32 %v5202, 24
      %v5725 = vadd.s32 %v5213, 24
      %v5726 = vadd.s32 %v5224, 24
      %v5727 = vadd.s32 %v5235, 24
      %v5728 = vadd.s32 %v5246, 24
      %v5729 = vadd.s32 %v5257, 24
      %v5730 = vadd.s32 %v5268, 24
      %v5731 = vadd.s32 %v5279, 24
      %v5732 = vadd.s32 %v5290, 24
      %v5733 = vadd.s32 %v5301, 24
      %v5734 = vadd.s32 %v5312, 24
      %v5735 = vadd.s32 %v5323, 24
      %v5736 = vadd.s32 %v5334, 24
      %v5737 = vadd.s32 %v5345, 24
      %v5738 = vadd.s32 %v5356, 24
      %v5739 = vadd.s32 %v5367, 24
      %v5740 = vadd.s32 %v5378, 24
      %v5741 = vadd.s32 %v5389, 24
      %v5742 = vadd.s32 %v5400, 24
      %v5743 = vadd.s32 %v5411, 24
      %v5744 = vadd.s32 %v5422, 24
      %v5745 = vadd.s32 %v5433, 24
      %v5746 = vadd.s32 %v5444, 24
      %v5747 = vadd.s32 %v5455, 24
      %v5748 = vadd.s32 %v5466, 24
      %v5749 = vadd.s32 %v5477, 24
      %v5750 = vadd.s32 %v5488, 24
      %v5751 = vadd.s32 %v5499, 24
      %v5752 = vadd.s32 %v5510, 24
      %v5753 = vadd.s32 %v5521, 24
      %v5754 = vadd.s32 %v5532, 24
      %v5755 = vadd.s32 %v5543, 24
      %v5756 = vadd.s32 %v5554, 24
      %v5757 = vadd.s32 %v5565, 24
      %v5758 = vsel %vm5662, %v5710, %v5048
      %v5759 = vsel %vm5663, %v5711, %v5059
      %v5760 = vsel %vm5664, %v5712, %v5070
      %v5761 = vsel %vm5665, %v5713, %v5081
      %v5762 = vsel %vm5666, %v5714, %v5092
      %v5763 = vsel %vm5667, %v5715, %v5103
      %v5764 = vsel %vm5668, %v5716, %v5114
      %v5765 = vsel %vm5669, %v5717, %v5125
      %v5766 = vsel %vm5670, %v5718, %v5136
      %v5767 = vsel %vm5671, %v5719, %v5147
      %v5768 = vsel %vm5672, %v5720, %v5158
      %v5769 = vsel %vm5673, %v5721, %v5169
      %v5770 = vsel %vm5674, %v5722, %v5180
      %v5771 = vsel %vm5675, %v5723, %v5191
      %v5772 = vsel %vm5676, %v5724, %v5202
      %v5773 = vsel %vm5677, %v5725, %v5213
      %v5774 = vsel %vm5678, %v5726, %v5224
      %v5775 = vsel %vm5679, %v5727, %v5235
      %v5776 = vsel %vm5680, %v5728, %v5246
      %v5777 = vsel %vm5681, %v5729, %v5257
      %v5778 = vsel %vm5682, %v5730, %v5268
      %v5779 = vsel %vm5683, %v5731, %v5279
      %v5780 = vsel %vm5684, %v5732, %v5290
      %v5781 = vsel %vm5685, %v5733, %v5301
      %v5782 = vsel %vm5686, %v5734, %v5312
      %v5783 = vsel %vm5687, %v5735, %v5323
      %v5784 = vsel %vm5688, %v5736, %v5334
      %v5785 = vsel %vm5689, %v5737, %v5345
      %v5786 = vsel %vm5690, %v5738, %v5356
      %v5787 = vsel %vm5691, %v5739, %v5367
      %v5788 = vsel %vm5692, %v5740, %v5378
      %v5789 = vsel %vm5693, %v5741, %v5389
      %v5790 = vsel %vm5694, %v5742, %v5400
      %v5791 = vsel %vm5695, %v5743, %v5411
      %v5792 = vsel %vm5696, %v5744, %v5422
      %v5793 = vsel %vm5697, %v5745, %v5433
      %v5794 = vsel %vm5698, %v5746, %v5444
      %v5795 = vsel %vm5699, %v5747, %v5455
      %v5796 = vsel %vm5700, %v5748, %v5466
      %v5797 = vsel %vm5701, %v5749, %v5477
      %v5798 = vsel %vm5702, %v5750, %v5488
      %v5799 = vsel %vm5703, %v5751, %v5499
      %v5800 = vsel %vm5704, %v5752, %v5510
      %v5801 = vsel %vm5705, %v5753, %v5521
      %v5802 = vsel %vm5706, %v5754, %v5532
      %v5803 = vsel %vm5707, %v5755, %v5543
      %v5804 = vsel %vm5708, %v5756, %v5554
      %v5805 = vsel %vm5709, %v5757, %v5565
      %vm5806 = vcmp.lt.s32.totalorder %v5758, 16
      %vm5807 = vcmp.lt.s32.totalorder %v5759, 16
      %vm5808 = vcmp.lt.s32.totalorder %v5760, 16
      %vm5809 = vcmp.lt.s32.totalorder %v5761, 16
      %vm5810 = vcmp.lt.s32.totalorder %v5762, 16
      %vm5811 = vcmp.lt.s32.totalorder %v5763, 16
      %vm5812 = vcmp.lt.s32.totalorder %v5764, 16
      %vm5813 = vcmp.lt.s32.totalorder %v5765, 16
      %vm5814 = vcmp.lt.s32.totalorder %v5766, 16
      %vm5815 = vcmp.lt.s32.totalorder %v5767, 16
      %vm5816 = vcmp.lt.s32.totalorder %v5768, 16
      %vm5817 = vcmp.lt.s32.totalorder %v5769, 16
      %vm5818 = vcmp.lt.s32.totalorder %v5770, 16
      %vm5819 = vcmp.lt.s32.totalorder %v5771, 16
      %vm5820 = vcmp.lt.s32.totalorder %v5772, 16
      %vm5821 = vcmp.lt.s32.totalorder %v5773, 16
      %vm5822 = vcmp.lt.s32.totalorder %v5774, 16
      %vm5823 = vcmp.lt.s32.totalorder %v5775, 16
      %vm5824 = vcmp.lt.s32.totalorder %v5776, 16
      %vm5825 = vcmp.lt.s32.totalorder %v5777, 16
      %vm5826 = vcmp.lt.s32.totalorder %v5778, 16
      %vm5827 = vcmp.lt.s32.totalorder %v5779, 16
      %vm5828 = vcmp.lt.s32.totalorder %v5780, 16
      %vm5829 = vcmp.lt.s32.totalorder %v5781, 16
      %vm5830 = vcmp.lt.s32.totalorder %v5782, 16
      %vm5831 = vcmp.lt.s32.totalorder %v5783, 16
      %vm5832 = vcmp.lt.s32.totalorder %v5784, 16
      %vm5833 = vcmp.lt.s32.totalorder %v5785, 16
      %vm5834 = vcmp.lt.s32.totalorder %v5786, 16
      %vm5835 = vcmp.lt.s32.totalorder %v5787, 16
      %vm5836 = vcmp.lt.s32.totalorder %v5788, 16
      %vm5837 = vcmp.lt.s32.totalorder %v5789, 16
      %vm5838 = vcmp.lt.s32.totalorder %v5790, 16
      %vm5839 = vcmp.lt.s32.totalorder %v5791, 16
      %vm5840 = vcmp.lt.s32.totalorder %v5792, 16
      %vm5841 = vcmp.lt.s32.totalorder %v5793, 16
      %vm5842 = vcmp.lt.s32.totalorder %v5794, 16
      %vm5843 = vcmp.lt.s32.totalorder %v5795, 16
      %vm5844 = vcmp.lt.s32.totalorder %v5796, 16
      %vm5845 = vcmp.lt.s32.totalorder %v5797, 16
      %vm5846 = vcmp.lt.s32.totalorder %v5798, 16
      %vm5847 = vcmp.lt.s32.totalorder %v5799, 16
      %vm5848 = vcmp.lt.s32.totalorder %v5800, 16
      %vm5849 = vcmp.lt.s32.totalorder %v5801, 16
      %vm5850 = vcmp.lt.s32.totalorder %v5802, 16
      %vm5851 = vcmp.lt.s32.totalorder %v5803, 16
      %vm5852 = vcmp.lt.s32.totalorder %v5804, 16
      %vm5853 = vcmp.lt.s32.totalorder %v5805, 16
      %v5854 = vsel %vm5806, 1, 0
      %v5855 = vsel %vm5807, 1, 0
      %v5856 = vsel %vm5808, 1, 0
      %v5857 = vsel %vm5809, 1, 0
      %v5858 = vsel %vm5810, 1, 0
      %v5859 = vsel %vm5811, 1, 0
      %v5860 = vsel %vm5812, 1, 0
      %v5861 = vsel %vm5813, 1, 0
      %v5862 = vsel %vm5814, 1, 0
      %v5863 = vsel %vm5815, 1, 0
      %v5864 = vsel %vm5816, 1, 0
      %v5865 = vsel %vm5817, 1, 0
      %v5866 = vsel %vm5818, 1, 0
      %v5867 = vsel %vm5819, 1, 0
      %v5868 = vsel %vm5820, 1, 0
      %v5869 = vsel %vm5821, 1, 0
      %v5870 = vsel %vm5822, 1, 0
      %v5871 = vsel %vm5823, 1, 0
      %v5872 = vsel %vm5824, 1, 0
      %v5873 = vsel %vm5825, 1, 0
      %v5874 = vsel %vm5826, 1, 0
      %v5875 = vsel %vm5827, 1, 0
      %v5876 = vsel %vm5828, 1, 0
      %v5877 = vsel %vm5829, 1, 0
      %v5878 = vsel %vm5830, 1, 0
      %v5879 = vsel %vm5831, 1, 0
      %v5880 = vsel %vm5832, 1, 0
      %v5881 = vsel %vm5833, 1, 0
      %v5882 = vsel %vm5834, 1, 0
      %v5883 = vsel %vm5835, 1, 0
      %v5884 = vsel %vm5836, 1, 0
      %v5885 = vsel %vm5837, 1, 0
      %v5886 = vsel %vm5838, 1, 0
      %v5887 = vsel %vm5839, 1, 0
      %v5888 = vsel %vm5840, 1, 0
      %v5889 = vsel %vm5841, 1, 0
      %v5890 = vsel %vm5842, 1, 0
      %v5891 = vsel %vm5843, 1, 0
      %v5892 = vsel %vm5844, 1, 0
      %v5893 = vsel %vm5845, 1, 0
      %v5894 = vsel %vm5846, 1, 0
      %v5895 = vsel %vm5847, 1, 0
      %v5896 = vsel %vm5848, 1, 0
      %v5897 = vsel %vm5849, 1, 0
      %v5898 = vsel %vm5850, 1, 0
      %v5899 = vsel %vm5851, 1, 0
      %v5900 = vsel %vm5852, 1, 0
      %v5901 = vsel %vm5853, 1, 0
      %v5902 = vcvt.s32.f32 %v5854
      %v5903 = vcvt.s32.f32 %v5855
      %v5904 = vcvt.s32.f32 %v5856
      %v5905 = vcvt.s32.f32 %v5857
      %v5906 = vcvt.s32.f32 %v5858
      %v5907 = vcvt.s32.f32 %v5859
      %v5908 = vcvt.s32.f32 %v5860
      %v5909 = vcvt.s32.f32 %v5861
      %v5910 = vcvt.s32.f32 %v5862
      %v5911 = vcvt.s32.f32 %v5863
      %v5912 = vcvt.s32.f32 %v5864
      %v5913 = vcvt.s32.f32 %v5865
      %v5914 = vcvt.s32.f32 %v5866
      %v5915 = vcvt.s32.f32 %v5867
      %v5916 = vcvt.s32.f32 %v5868
      %v5917 = vcvt.s32.f32 %v5869
      %v5918 = vcvt.s32.f32 %v5870
      %v5919 = vcvt.s32.f32 %v5871
      %v5920 = vcvt.s32.f32 %v5872
      %v5921 = vcvt.s32.f32 %v5873
      %v5922 = vcvt.s32.f32 %v5874
      %v5923 = vcvt.s32.f32 %v5875
      %v5924 = vcvt.s32.f32 %v5876
      %v5925 = vcvt.s32.f32 %v5877
      %v5926 = vcvt.s32.f32 %v5878
      %v5927 = vcvt.s32.f32 %v5879
      %v5928 = vcvt.s32.f32 %v5880
      %v5929 = vcvt.s32.f32 %v5881
      %v5930 = vcvt.s32.f32 %v5882
      %v5931 = vcvt.s32.f32 %v5883
      %v5932 = vcvt.s32.f32 %v5884
      %v5933 = vcvt.s32.f32 %v5885
      %v5934 = vcvt.s32.f32 %v5886
      %v5935 = vcvt.s32.f32 %v5887
      %v5936 = vcvt.s32.f32 %v5888
      %v5937 = vcvt.s32.f32 %v5889
      %v5938 = vcvt.s32.f32 %v5890
      %v5939 = vcvt.s32.f32 %v5891
      %v5940 = vcvt.s32.f32 %v5892
      %v5941 = vcvt.s32.f32 %v5893
      %v5942 = vcvt.s32.f32 %v5894
      %v5943 = vcvt.s32.f32 %v5895
      %v5944 = vcvt.s32.f32 %v5896
      %v5945 = vcvt.s32.f32 %v5897
      %v5946 = vcvt.s32.f32 %v5898
      %v5947 = vcvt.s32.f32 %v5899
      %v5948 = vcvt.s32.f32 %v5900
      %v5949 = vcvt.s32.f32 %v5901
      %v5950 = vmul.f32 %v4941, %v5902
      %v5951 = vmul.f32 %v4942, %v5903
      %v5952 = vmul.f32 %v4943, %v5904
      %v5953 = vmul.f32 %v4944, %v5905
      %v5954 = vmul.f32 %v4945, %v5906
      %v5955 = vmul.f32 %v4946, %v5907
      %v5956 = vmul.f32 %v4947, %v5908
      %v5957 = vmul.f32 %v4948, %v5909
      %v5958 = vmul.f32 %v4949, %v5910
      %v5959 = vmul.f32 %v4950, %v5911
      %v5960 = vmul.f32 %v4951, %v5912
      %v5961 = vmul.f32 %v4952, %v5913
      %v5962 = vmul.f32 %v4953, %v5914
      %v5963 = vmul.f32 %v4954, %v5915
      %v5964 = vmul.f32 %v4955, %v5916
      %v5965 = vmul.f32 %v4956, %v5917
      %v5966 = vmul.f32 %v4957, %v5918
      %v5967 = vmul.f32 %v4958, %v5919
      %v5968 = vmul.f32 %v4959, %v5920
      %v5969 = vmul.f32 %v4960, %v5921
      %v5970 = vmul.f32 %v4961, %v5922
      %v5971 = vmul.f32 %v4962, %v5923
      %v5972 = vmul.f32 %v4963, %v5924
      %v5973 = vmul.f32 %v4964, %v5925
      %v5974 = vmul.f32 %v4965, %v5926
      %v5975 = vmul.f32 %v4966, %v5927
      %v5976 = vmul.f32 %v4967, %v5928
      %v5977 = vmul.f32 %v4968, %v5929
      %v5978 = vmul.f32 %v4969, %v5930
      %v5979 = vmul.f32 %v4970, %v5931
      %v5980 = vmul.f32 %v4971, %v5932
      %v5981 = vmul.f32 %v4972, %v5933
      %v5982 = vmul.f32 %v4973, %v5934
      %v5983 = vmul.f32 %v4974, %v5935
      %v5984 = vmul.f32 %v4975, %v5936
      %v5985 = vmul.f32 %v4976, %v5937
      %v5986 = vmul.f32 %v4977, %v5938
      %v5987 = vmul.f32 %v4978, %v5939
      %v5988 = vmul.f32 %v4979, %v5940
      %v5989 = vmul.f32 %v4980, %v5941
      %v5990 = vmul.f32 %v4981, %v5942
      %v5991 = vmul.f32 %v4982, %v5943
      %v5992 = vmul.f32 %v4983, %v5944
      %v5993 = vmul.f32 %v4984, %v5945
      %v5994 = vmul.f32 %v4985, %v5946
      %v5995 = vmul.f32 %v4986, %v5947
      %v5996 = vmul.f32 %v4987, %v5948
      %v5997 = vmul.f32 %v4988, %v5949
      %v5998 = vadd.f32 %v5950, %v5951
      %v5999 = vadd.f32 %v5998, %v5952
      %v6000 = vadd.f32 %v5999, %v5953
      %v6001 = vadd.f32 %v6000, %v5954
      %v6002 = vadd.f32 %v6001, %v5955
      %v6003 = vadd.f32 %v6002, %v5956
      %v6004 = vadd.f32 %v6003, %v5957
      %v6005 = vadd.f32 %v6004, %v5958
      %v6006 = vadd.f32 %v6005, %v5959
      %v6007 = vadd.f32 %v6006, %v5960
      %v6008 = vadd.f32 %v6007, %v5961
      %v6009 = vadd.f32 %v6008, %v5962
      %v6010 = vadd.f32 %v6009, %v5963
      %v6011 = vadd.f32 %v6010, %v5964
      %v6012 = vadd.f32 %v6011, %v5965
      %v6013 = vadd.f32 %v6012, %v5966
      %v6014 = vadd.f32 %v6013, %v5967
      %v6015 = vadd.f32 %v6014, %v5968
      %v6016 = vadd.f32 %v6015, %v5969
      %v6017 = vadd.f32 %v6016, %v5970
      %v6018 = vadd.f32 %v6017, %v5971
      %v6019 = vadd.f32 %v6018, %v5972
      %v6020 = vadd.f32 %v6019, %v5973
      %v6021 = vadd.f32 %v6020, %v5974
      %v6022 = vadd.f32 %v6021, %v5975
      %v6023 = vadd.f32 %v6022, %v5976
      %v6024 = vadd.f32 %v6023, %v5977
      %v6025 = vadd.f32 %v6024, %v5978
      %v6026 = vadd.f32 %v6025, %v5979
      %v6027 = vadd.f32 %v6026, %v5980
      %v6028 = vadd.f32 %v6027, %v5981
      %v6029 = vadd.f32 %v6028, %v5982
      %v6030 = vadd.f32 %v6029, %v5983
      %v6031 = vadd.f32 %v6030, %v5984
      %v6032 = vadd.f32 %v6031, %v5985
      %v6033 = vadd.f32 %v6032, %v5986
      %v6034 = vadd.f32 %v6033, %v5987
      %v6035 = vadd.f32 %v6034, %v5988
      %v6036 = vadd.f32 %v6035, %v5989
      %v6037 = vadd.f32 %v6036, %v5990
      %v6038 = vadd.f32 %v6037, %v5991
      %v6039 = vadd.f32 %v6038, %v5992
      %v6040 = vadd.f32 %v6039, %v5993
      %v6041 = vadd.f32 %v6040, %v5994
      %v6042 = vadd.f32 %v6041, %v5995
      %v6043 = vadd.f32 %v6042, %v5996
      %v6044 = vadd.f32 %v6043, %v5997
      %v6045 = vrot.slane %v6044, 4
      %v6046 = vadd.f32 %v6044, %v6045
      %v6047 = vrot.slane %v6046, 2
      %v6048 = vadd.f32 %v6046, %v6047
      %v6049 = vrot.slane %v6048, 1
      %v6050 = vadd.f32 %v6048, %v6049
      %6051 = vst [vmem:[%s225] sm:$0x1] %v6050
      %v6052 = vmul.f32 %v5950, %v5950
      %v6053 = vmul.f32 %v5951, %v5951
      %v6054 = vmul.f32 %v5952, %v5952
      %v6055 = vmul.f32 %v5953, %v5953
      %v6056 = vmul.f32 %v5954, %v5954
      %v6057 = vmul.f32 %v5955, %v5955
      %v6058 = vmul.f32 %v5956, %v5956
      %v6059 = vmul.f32 %v5957, %v5957
      %v6060 = vmul.f32 %v5958, %v5958
      %v6061 = vmul.f32 %v5959, %v5959
      %v6062 = vmul.f32 %v5960, %v5960
      %v6063 = vmul.f32 %v5961, %v5961
      %v6064 = vmul.f32 %v5962, %v5962
      %v6065 = vmul.f32 %v5963, %v5963
      %v6066 = vmul.f32 %v5964, %v5964
      %v6067 = vmul.f32 %v5965, %v5965
      %v6068 = vmul.f32 %v5966, %v5966
      %v6069 = vmul.f32 %v5967, %v5967
      %v6070 = vmul.f32 %v5968, %v5968
      %v6071 = vmul.f32 %v5969, %v5969
      %v6072 = vmul.f32 %v5970, %v5970
      %v6073 = vmul.f32 %v5971, %v5971
      %v6074 = vmul.f32 %v5972, %v5972
      %v6075 = vmul.f32 %v5973, %v5973
      %v6076 = vmul.f32 %v5974, %v5974
      %v6077 = vmul.f32 %v5975, %v5975
      %v6078 = vmul.f32 %v5976, %v5976
      %v6079 = vmul.f32 %v5977, %v5977
      %v6080 = vmul.f32 %v5978, %v5978
      %v6081 = vmul.f32 %v5979, %v5979
      %v6082 = vmul.f32 %v5980, %v5980
      %v6083 = vmul.f32 %v5981, %v5981
      %v6084 = vmul.f32 %v5982, %v5982
      %v6085 = vmul.f32 %v5983, %v5983
      %v6086 = vmul.f32 %v5984, %v5984
      %v6087 = vmul.f32 %v5985, %v5985
      %v6088 = vmul.f32 %v5986, %v5986
      %v6089 = vmul.f32 %v5987, %v5987
      %v6090 = vmul.f32 %v5988, %v5988
      %v6091 = vmul.f32 %v5989, %v5989
      %v6092 = vmul.f32 %v5990, %v5990
      %v6093 = vmul.f32 %v5991, %v5991
      %v6094 = vmul.f32 %v5992, %v5992
      %v6095 = vmul.f32 %v5993, %v5993
      %v6096 = vmul.f32 %v5994, %v5994
      %v6097 = vmul.f32 %v5995, %v5995
      %v6098 = vmul.f32 %v5996, %v5996
      %v6099 = vmul.f32 %v5997, %v5997
      %v6100 = vadd.f32 %v6052, %v6053
      %v6101 = vadd.f32 %v6100, %v6054
      %v6102 = vadd.f32 %v6101, %v6055
      %v6103 = vadd.f32 %v6102, %v6056
      %v6104 = vadd.f32 %v6103, %v6057
      %v6105 = vadd.f32 %v6104, %v6058
      %v6106 = vadd.f32 %v6105, %v6059
      %v6107 = vadd.f32 %v6106, %v6060
      %v6108 = vadd.f32 %v6107, %v6061
      %v6109 = vadd.f32 %v6108, %v6062
      %v6110 = vadd.f32 %v6109, %v6063
      %v6111 = vadd.f32 %v6110, %v6064
      %v6112 = vadd.f32 %v6111, %v6065
      %v6113 = vadd.f32 %v6112, %v6066
      %v6114 = vadd.f32 %v6113, %v6067
      %v6115 = vadd.f32 %v6114, %v6068
      %v6116 = vadd.f32 %v6115, %v6069
      %v6117 = vadd.f32 %v6116, %v6070
      %v6118 = vadd.f32 %v6117, %v6071
      %v6119 = vadd.f32 %v6118, %v6072
      %v6120 = vadd.f32 %v6119, %v6073
      %v6121 = vadd.f32 %v6120, %v6074
      %v6122 = vadd.f32 %v6121, %v6075
      %v6123 = vadd.f32 %v6122, %v6076
      %v6124 = vadd.f32 %v6123, %v6077
      %v6125 = vadd.f32 %v6124, %v6078
      %v6126 = vadd.f32 %v6125, %v6079
      %v6127 = vadd.f32 %v6126, %v6080
      %v6128 = vadd.f32 %v6127, %v6081
      %v6129 = vadd.f32 %v6128, %v6082
      %v6130 = vadd.f32 %v6129, %v6083
      %v6131 = vadd.f32 %v6130, %v6084
      %v6132 = vadd.f32 %v6131, %v6085
      %v6133 = vadd.f32 %v6132, %v6086
      %v6134 = vadd.f32 %v6133, %v6087
      %v6135 = vadd.f32 %v6134, %v6088
      %v6136 = vadd.f32 %v6135, %v6089
      %v6137 = vadd.f32 %v6136, %v6090
      %v6138 = vadd.f32 %v6137, %v6091
      %v6139 = vadd.f32 %v6138, %v6092
      %v6140 = vadd.f32 %v6139, %v6093
      %v6141 = vadd.f32 %v6140, %v6094
      %v6142 = vadd.f32 %v6141, %v6095
      %v6143 = vadd.f32 %v6142, %v6096
      %v6144 = vadd.f32 %v6143, %v6097
      %v6145 = vadd.f32 %v6144, %v6098
      %v6146 = vadd.f32 %v6145, %v6099
      %v6147 = vrot.slane %v6146, 4
      %v6148 = vadd.f32 %v6146, %v6147
      %v6149 = vrot.slane %v6148, 2
      %v6150 = vadd.f32 %v6148, %v6149
      %v6151 = vrot.slane %v6150, 1
      %v6152 = vadd.f32 %v6150, %v6151
      %6153 = vst [vmem:[%s225 + $0x1] sm:$0x1] %v6152
      %v6154 = vpack.c.bf16 %v4942, %v4941
      %v6155 = vpack.c.bf16 %v4944, %v4943
      %v6156 = vpack.c.bf16 %v4946, %v4945
      %v6157 = vpack.c.bf16 %v4948, %v4947
      %v6158 = vpack.c.bf16 %v4950, %v4949
      %v6159 = vpack.c.bf16 %v4952, %v4951
      %v6160 = vpack.c.bf16 %v4954, %v4953
      %v6161 = vpack.c.bf16 %v4956, %v4955
      %v6162 = vpack.c.bf16 %v4958, %v4957
      %v6163 = vpack.c.bf16 %v4960, %v4959
      %v6164 = vpack.c.bf16 %v4962, %v4961
      %v6165 = vpack.c.bf16 %v4964, %v4963
      %v6166 = vpack.c.bf16 %v4966, %v4965
      %v6167 = vpack.c.bf16 %v4968, %v4967
      %v6168 = vpack.c.bf16 %v4970, %v4969
      %v6169 = vpack.c.bf16 %v4972, %v4971
      %v6170 = vpack.c.bf16 %v4974, %v4973
      %v6171 = vpack.c.bf16 %v4976, %v4975
      %v6172 = vpack.c.bf16 %v4978, %v4977
      %v6173 = vpack.c.bf16 %v4980, %v4979
      %v6174 = vpack.c.bf16 %v4982, %v4981
      %v6175 = vpack.c.bf16 %v4984, %v4983
      %v6176 = vpack.c.bf16 %v4986, %v4985
      %v6177 = vpack.c.bf16 %v4988, %v4987
      %v6202 = vunpack.c.l.b16 %v6154
      %v6203 = vunpack.c.h.b16 %v6154
      %v6204 = vunpack.c.l.b16 %v6155
      %v6205 = vunpack.c.h.b16 %v6155
      %v6206 = vunpack.c.l.b16 %v6156
      %v6207 = vunpack.c.h.b16 %v6156
      %v6208 = vunpack.c.l.b16 %v6157
      %v6209 = vunpack.c.h.b16 %v6157
      %v6210 = vunpack.c.l.b16 %v6158
      %v6211 = vunpack.c.h.b16 %v6158
      %v6212 = vunpack.c.l.b16 %v6159
      %v6213 = vunpack.c.h.b16 %v6159
      %v6214 = vunpack.c.l.b16 %v6160
      %v6215 = vunpack.c.h.b16 %v6160
      %v6216 = vunpack.c.l.b16 %v6161
      %v6217 = vunpack.c.h.b16 %v6161
      %v6218 = vunpack.c.l.b16 %v6162
      %v6219 = vunpack.c.h.b16 %v6162
      %v6220 = vunpack.c.l.b16 %v6163
      %v6221 = vunpack.c.h.b16 %v6163
      %v6222 = vunpack.c.l.b16 %v6164
      %v6223 = vunpack.c.h.b16 %v6164
      %v6224 = vunpack.c.l.b16 %v6165
      %v6225 = vunpack.c.h.b16 %v6165
      %v6226 = vunpack.c.l.b16 %v6166
      %v6227 = vunpack.c.h.b16 %v6166
      %v6228 = vunpack.c.l.b16 %v6167
      %v6229 = vunpack.c.h.b16 %v6167
      %v6230 = vunpack.c.l.b16 %v6168
      %v6231 = vunpack.c.h.b16 %v6168
      %v6232 = vunpack.c.l.b16 %v6169
      %v6233 = vunpack.c.h.b16 %v6169
      %v6234 = vunpack.c.l.b16 %v6170
      %v6235 = vunpack.c.h.b16 %v6170
      %v6236 = vunpack.c.l.b16 %v6171
      %v6237 = vunpack.c.h.b16 %v6171
      %v6238 = vunpack.c.l.b16 %v6172
      %v6239 = vunpack.c.h.b16 %v6172
      %v6240 = vunpack.c.l.b16 %v6173
      %v6241 = vunpack.c.h.b16 %v6173
      %v6242 = vunpack.c.l.b16 %v6174
      %v6243 = vunpack.c.h.b16 %v6174
      %v6244 = vunpack.c.l.b16 %v6175
      %v6245 = vunpack.c.h.b16 %v6175
      %v6246 = vunpack.c.l.b16 %v6176
      %v6247 = vunpack.c.h.b16 %v6176
      %v6248 = vunpack.c.l.b16 %v6177
      %v6249 = vunpack.c.h.b16 %v6177
      %v6250 = vpack.c.b16 %v6202, %v6202
      %v6251 = vpack.c.b16 %v6203, %v6203
      %v6252 = vpack.c.b16 %v6204, %v6204
      %v6253 = vpack.c.b16 %v6205, %v6205
      %v6254 = vpack.c.b16 %v6206, %v6206
      %v6255 = vpack.c.b16 %v6207, %v6207
      %v6256 = vpack.c.b16 %v6208, %v6208
      %v6257 = vpack.c.b16 %v6209, %v6209
      %v6258 = vpack.c.b16 %v6210, %v6210
      %v6259 = vpack.c.b16 %v6211, %v6211
      %v6260 = vpack.c.b16 %v6212, %v6212
      %v6261 = vpack.c.b16 %v6213, %v6213
      %v6262 = vpack.c.b16 %v6214, %v6214
      %v6263 = vpack.c.b16 %v6215, %v6215
      %v6264 = vpack.c.b16 %v6216, %v6216
      %v6265 = vpack.c.b16 %v6217, %v6217
      %v6266 = vpack.c.b16 %v6218, %v6218
      %v6267 = vpack.c.b16 %v6219, %v6219
      %v6268 = vpack.c.b16 %v6220, %v6220
      %v6269 = vpack.c.b16 %v6221, %v6221
      %v6270 = vpack.c.b16 %v6222, %v6222
      %v6271 = vpack.c.b16 %v6223, %v6223
      %v6272 = vpack.c.b16 %v6224, %v6224
      %v6273 = vpack.c.b16 %v6225, %v6225
      %v6274 = vpack.c.b16 %v6226, %v6226
      %v6275 = vpack.c.b16 %v6227, %v6227
      %v6276 = vpack.c.b16 %v6228, %v6228
      %v6277 = vpack.c.b16 %v6229, %v6229
      %v6278 = vpack.c.b16 %v6230, %v6230
      %v6279 = vpack.c.b16 %v6231, %v6231
      %v6280 = vpack.c.b16 %v6232, %v6232
      %v6281 = vpack.c.b16 %v6233, %v6233
      %v6282 = vpack.c.b16 %v6234, %v6234
      %v6283 = vpack.c.b16 %v6235, %v6235
      %v6284 = vpack.c.b16 %v6236, %v6236
      %v6285 = vpack.c.b16 %v6237, %v6237
      %v6286 = vpack.c.b16 %v6238, %v6238
      %v6287 = vpack.c.b16 %v6239, %v6239
      %v6288 = vpack.c.b16 %v6240, %v6240
      %v6289 = vpack.c.b16 %v6241, %v6241
      %v6290 = vpack.c.b16 %v6242, %v6242
      %v6291 = vpack.c.b16 %v6243, %v6243
      %v6292 = vpack.c.b16 %v6244, %v6244
      %v6293 = vpack.c.b16 %v6245, %v6245
      %v6294 = vpack.c.b16 %v6246, %v6246
      %v6295 = vpack.c.b16 %v6247, %v6247
      %v6296 = vpack.c.b16 %v6248, %v6248
      %v6297 = vpack.c.b16 %v6249, %v6249
      %6346 = vst [vmem:[%s218] sm:$0xf] %v6250
      %6347 = vst [vmem:[%s218 + $0x4] sm:$0xf] %v6251
      %6348 = vst [vmem:[%s218 + $0x8] sm:$0xf] %v6252
      %6349 = vst [vmem:[%s218 + $0xc] sm:$0xf] %v6253
      %6350 = vst [vmem:[%s218 + $0x10] sm:$0xf] %v6254
      %6351 = vst [vmem:[%s218 + $0x14] sm:$0xf] %v6255
      %6352 = vst [vmem:[%s218 + $0x18] sm:$0xf] %v6256
      %6353 = vst [vmem:[%s218 + $0x1c] sm:$0xf] %v6257
      %6354 = vst [vmem:[%s218 + $0x20] sm:$0xf] %v6258
      %6355 = vst [vmem:[%s218 + $0x24] sm:$0xf] %v6259
      %6356 = vst [vmem:[%s218 + $0x28] sm:$0xf] %v6260
      %6357 = vst [vmem:[%s218 + $0x2c] sm:$0xf] %v6261
      %6358 = vst [vmem:[%s218 + $0x30] sm:$0xf] %v6262
      %6359 = vst [vmem:[%s218 + $0x34] sm:$0xf] %v6263
      %6360 = vst [vmem:[%s218 + $0x38] sm:$0xf] %v6264
      %6361 = vst [vmem:[%s218 + $0x3c] sm:$0xf] %v6265
      %6362 = vst [vmem:[%s218 + $0x40] sm:$0xf] %v6266
      %6363 = vst [vmem:[%s218 + $0x44] sm:$0xf] %v6267
      %6364 = vst [vmem:[%s218 + $0x48] sm:$0xf] %v6268
      %6365 = vst [vmem:[%s218 + $0x4c] sm:$0xf] %v6269
      %6366 = vst [vmem:[%s218 + $0x50] sm:$0xf] %v6270
      %6367 = vst [vmem:[%s218 + $0x54] sm:$0xf] %v6271
      %6368 = vst [vmem:[%s218 + $0x58] sm:$0xf] %v6272
      %6369 = vst [vmem:[%s218 + $0x5c] sm:$0xf] %v6273
      %6370 = vst [vmem:[%s218 + $0x60] sm:$0xf] %v6274
      %6371 = vst [vmem:[%s218 + $0x64] sm:$0xf] %v6275
      %6372 = vst [vmem:[%s218 + $0x68] sm:$0xf] %v6276
      %6373 = vst [vmem:[%s218 + $0x6c] sm:$0xf] %v6277
      %6374 = vst [vmem:[%s218 + $0x70] sm:$0xf] %v6278
      %6375 = vst [vmem:[%s218 + $0x74] sm:$0xf] %v6279
      %6376 = vst [vmem:[%s218 + $0x78] sm:$0xf] %v6280
      %6377 = vst [vmem:[%s218 + $0x7c] sm:$0xf] %v6281
      %6378 = vst [vmem:[%s218 + $0x80] sm:$0xf] %v6282
      %6379 = vst [vmem:[%s218 + $0x84] sm:$0xf] %v6283
      %6380 = vst [vmem:[%s218 + $0x88] sm:$0xf] %v6284
      %6381 = vst [vmem:[%s218 + $0x8c] sm:$0xf] %v6285
      %6382 = vst [vmem:[%s218 + $0x90] sm:$0xf] %v6286
      %6383 = vst [vmem:[%s218 + $0x94] sm:$0xf] %v6287
      %6384 = vst [vmem:[%s218 + $0x98] sm:$0xf] %v6288
      %6385 = vst [vmem:[%s218 + $0x9c] sm:$0xf] %v6289
      %6386 = vst [vmem:[%s218 + $0xa0] sm:$0xf] %v6290
      %6387 = vst [vmem:[%s218 + $0xa4] sm:$0xf] %v6291
      %6388 = vst [vmem:[%s218 + $0xa8] sm:$0xf] %v6292
      %6389 = vst [vmem:[%s218 + $0xac] sm:$0xf] %v6293
      %6390 = vst [vmem:[%s218 + $0xb0] sm:$0xf] %v6294
      %6391 = vst [vmem:[%s218 + $0xb4] sm:$0xf] %v6295
      %6392 = vst [vmem:[%s218 + $0xb8] sm:$0xf] %v6296
      %6393 = vst [vmem:[%s218 + $0xbc] sm:$0xf] %v6297
      %p6394 = scmp.lt.s32.totalorder %s19, 1
      %s6395 = scalar_select %p6394, %s19, 1
      %p6396 = scmp.lt.s32.totalorder %s20, 0
      %s6397 = scalar_select %p6396, %s20, 0
      %s6398 = smul.addr %s6397, 48
      %s6399 = smul.addr %s6395, 48
      %s6400 = sadd.s32 %s6398, %s6399
      %s6401 = smul.addr %s6400, 4
      %s6402 = scalar_lea.vmem %s2, %s6401
      %p6403 = scmp.lt.s32.totalorder %s19, 1
      %s6404 = scalar_select %p6403, %s19, 1
      %p6405 = scmp.lt.s32.totalorder %s20, 0
      %s6406 = scalar_select %p6405, %s20, 0
      %s6407 = sadd.s32 %s6406, %s6404
      %s6408 = smul.addr %s6407, 8
      %s6409 = scalar_lea.vmem %s3, %s6408
      // Predicated region
      $region29: #{up_forward.2} parent=27 // pred_check
        %p6410 = pneg %p96
      $region30: #{up_forward.2} parent=27 // pred_check_branch
        %6412 = sbr.rel (%p6410) target = $region32
      $region31: #{up_forward.2} parent=27 // pred_region
        _
      $region32: #{up_forward.2} parent=27 // pred_fallthru
        _
      // Predicated region
      $region33: #{up_forward.2} parent=27 // pred_check
        %p6413 = pneg %p124
      $region34: #{up_forward.2} parent=27 // pred_check_branch
        %6415 = sbr.rel (%p6413) target = $region36
      $region35: #{up_forward.2} parent=27 // pred_region
        _
      $region36: #{up_forward.2} parent=27 // pred_fallthru
        _
    $region28: #{up_forward.2} parent=5 // pred_fallthru
      _
    %p6416 = scmp.le.s32.totalorder 2, %s10
    // Predicated region
    $region37: #{up_forward.2} parent=5 // pred_check
      %p6417 = pneg %p6416
    $region38: #{up_forward.2} parent=5 // pred_check_branch
      %6419 = sbr.rel (%p6417) target = $region40
    $region39: #{up_forward.2} parent=5 // pred_region
      %s6420 = ssub.s32 %s10, 2
      // Predicated region
      $region41: #{up_forward.2} parent=39 // pred_check
        %p6421 = pneg %p102
      $region42: #{up_forward.2} parent=39 // pred_check_branch
        %6423 = sbr.rel (%p6421) target = $region44
      $region43: #{up_forward.2} parent=39 // pred_region
        %p6424 = scmp.lt.s32.totalorder %s21, 1
        %s6425 = scalar_select %p6424, %s21, 1
        %p6426 = scmp.lt.s32.totalorder %s22, 0
        %s6427 = scalar_select %p6426, %s22, 0
        %s6428 = smul.addr %s6427, 48
        %s6429 = smul.addr %s6425, 48
        %s6430 = sadd.s32 %s6428, %s6429
        %s6431 = smul.addr %s6430, 4
        %s6432 = scalar_lea.vmem %s2, %s6431
      $region44: #{up_forward.2} parent=39 // pred_fallthru
        _
      // Predicated region
      $region45: #{up_forward.2} parent=39 // pred_check
        %p6433 = pneg %p130
      $region46: #{up_forward.2} parent=39 // pred_check_branch
        %6435 = sbr.rel (%p6433) target = $region48
      $region47: #{up_forward.2} parent=39 // pred_region
        %p6436 = scmp.lt.s32.totalorder %s21, 1
        %s6437 = scalar_select %p6436, %s21, 1
        %p6438 = scmp.lt.s32.totalorder %s22, 0
        %s6439 = scalar_select %p6438, %s22, 0
        %s6440 = sadd.s32 %s6439, %s6437
        %s6441 = smul.addr %s6440, 8
        %s6442 = scalar_lea.vmem %s3, %s6441
      $region48: #{up_forward.2} parent=39 // pred_fallthru
        _
    $region40: #{up_forward.2} parent=5 // pred_fallthru
      _
  $region6: #{up_forward.2} parent=0 // loop_footer
    %s14 = sadd.s32 1, %s10
  $region7: #{up_forward.2} parent=0 // loop_footer_branch
    %9 = sbr.rel target = $region3
  $region8: #{up_forward.2} parent=0 // loop_exit
    _

</llo_original>
